<compile_context>
chip_gen: v7x
topology: tpu7x:2x2x1
jax: 0.10.0
libtpu: 0.0.40
codegen_flags: <defaults>
</compile_context>

<pallas_src>
import jax
import jax.numpy as jnp
from jax import lax
from jax.experimental import pallas as pl
from jax.experimental.pallas import tpu as pltpu


# -----------------------------------------------------------------------------
# Network geometry (fixed by the PyTorch module + 16x16 input).
# -----------------------------------------------------------------------------
H1 = W1 = 16
H2 = W2 = 8
H3 = W3 = 4
W3E = 8                      # stage-3 width extended to 8 (sublane alignment)
C0, C1, C2, C3 = 16, 16, 64, 128


# -----------------------------------------------------------------------------
# In-kernel helpers (traced inside the fused kernel body).
# -----------------------------------------------------------------------------
def _conv3x3_relu(pad_ref, slab_ref, w_ref, b_ref, H, W_ext, Cin, Cout):
    """3x3 / pad=1 conv + bias + ReLU as one whole-image matmul.

    pad_ref : (H+2, W_ext+2, Cin) zero-bordered VMEM scratch holding the input.
    slab_ref: (H*W_ext, 9*Cin) VMEM scratch for the im2col slab.
    w_ref   : (9*Cin, Cout) flattened weights, row index = (dy*3+dx)*Cin + c.
    b_ref   : (1, Cout) bias.
    Returns the post-ReLU activation as an (H, W_ext, Cout) f32 value.
    """
    # Build the im2col slab: 9 shifted views of the padded image, tap-major
    # along the lane (channel) axis.
    for k in range(9):
        dy, dx = divmod(k, 3)
        patch = pad_ref[pl.ds(dy, H), pl.ds(dx, W_ext), :]        # (H, W_ext, Cin)
        slab_ref[:, k * Cin:(k + 1) * Cin] = patch.reshape(H * W_ext, Cin)
    # One MXU matmul + one bias/ReLU epilogue for the whole image.
    acc = jnp.dot(slab_ref[...], w_ref[...], preferred_element_type=jnp.float32)
    y = jnp.maximum(acc + b_ref[...], 0.0)                        # (H*W_ext, Cout)
    return y.reshape(H, W_ext, Cout)


def _maxpool2x2_into(y, H, W, dst_ref):
    """2x2 stride-2 max-pool of y (H, W_ext, C), valid columns [0, W).

    Writes the (H//2, W//2, C) result into dst_ref interior
    [1:1+H//2, 1:1+W//2, :] (the next stage's zero-bordered padded scratch).
    """
    Ho, Wo = H // 2, W // 2
    Wx, C = y.shape[1], y.shape[2]
    rmax = jnp.max(y.reshape(Ho, 2, Wx, C), axis=1)               # (Ho, Wx, C)
    for j in range(Wo):                                           # Wo <= 8, static
        col = jnp.maximum(rmax[:, 2 * j, :], rmax[:, 2 * j + 1, :])   # (Ho, C)
        dst_ref[pl.ds(1, Ho), 1 + j, :] = col


# -----------------------------------------------------------------------------
# The fused kernel: one image per grid step.
# -----------------------------------------------------------------------------
def _fused_kernel(x_ref,
                  w1, b1, w2, b2, w3, b3, w4, b4, w5, b5, w6, b6,
                  s1_ref, s2_ref, s3_ref,
                  p1a, p1b, p2a, p2b, p3a, p3b,
                  sl1, sl2, sl3, sl4, sl5):
    # ---------------- stage 1: 16x16, 16 -> 16 -> 16 ----------------
    p1a[...] = jnp.zeros_like(p1a)
    p1a[pl.ds(1, H1), pl.ds(1, W1), :] = x_ref[0]
    y = _conv3x3_relu(p1a, sl1, w1, b1, H1, W1, C0, C1)

    p1b[...] = jnp.zeros_like(p1b)
    p1b[pl.ds(1, H1), pl.ds(1, W1), :] = y
    y = _conv3x3_relu(p1b, sl1, w2, b2, H1, W1, C1, C1)
    s1_ref[0] = y.astype(s1_ref.dtype)

    # pool 16x16 -> 8x8 straight into stage-2 padded scratch
    p2a[...] = jnp.zeros_like(p2a)
    _maxpool2x2_into(y, H1, W1, p2a)

    # ---------------- stage 2: 8x8, 16 -> 64 -> 64 ----------------
    y = _conv3x3_relu(p2a, sl2, w3, b3, H2, W2, C1, C2)

    p2b[...] = jnp.zeros_like(p2b)
    p2b[pl.ds(1, H2), pl.ds(1, W2), :] = y
    y = _conv3x3_relu(p2b, sl3, w4, b4, H2, W2, C2, C2)
    s2_ref[0] = y.astype(s2_ref.dtype)

    # pool 8x8 -> 4x4 straight into stage-3 padded scratch
    p3a[...] = jnp.zeros_like(p3a)
    _maxpool2x2_into(y, H2, W2, p3a)

    # -------- stage 3: 4x4 (width extended to 8), 64 -> 128 -> 128 --------
    y = _conv3x3_relu(p3a, sl4, w5, b5, H3, W3E, C2, C3)   # valid cols [0, 4)

    p3b[...] = jnp.zeros_like(p3b)
    p3b[pl.ds(1, H3), pl.ds(1, W3), :] = y[:, 0:W3, :]
    y = _conv3x3_relu(p3b, sl5, w6, b6, H3, W3E, C3, C3)
    s3_ref[0] = y[:, 0:W3, :].astype(s3_ref.dtype)


# -----------------------------------------------------------------------------
# Wrapper: parameter layout + the single pallas_call.
# -----------------------------------------------------------------------------
def _flatten_weight(w_oihw):
    # (Cout, Cin, 3, 3) -> (3, 3, Cin, Cout) -> (9*Cin, Cout); row = k*Cin + c.
    cout, cin = w_oihw.shape[0], w_oihw.shape[1]
    return jnp.transpose(w_oihw, (2, 3, 1, 0)).reshape(9 * cin, cout)


_LAYER_NAMES = ("s1c1", "s1c2", "s2c1", "s2c2", "s3c1", "s3c2")


@jax.jit
def vgg_channel2_forward(x_nchw, params):
    """Matches VGG_channel2.forward: returns (stage1, stage2, stage3), NCHW."""
    N = x_nchw.shape[0]
    x = jnp.transpose(x_nchw, (0, 2, 3, 1)).astype(jnp.float32)   # NCHW -> NHWC

    flat_args, wb_specs = [], []
    for nm in _LAYER_NAMES:
        w, b = params[nm]
        cin, cout = w.shape[1], w.shape[0]
        flat_args.append(_flatten_weight(w))
        flat_args.append(b.reshape(1, -1).astype(jnp.float32))
        wb_specs.append(pl.BlockSpec((9 * cin, cout), lambda n: (0, 0)))
        wb_specs.append(pl.BlockSpec((1, cout), lambda n: (0, 0)))

    out_shape = (
        jax.ShapeDtypeStruct((N, H1, W1, C1), jnp.float32),
        jax.ShapeDtypeStruct((N, H2, W2, C2), jnp.float32),
        jax.ShapeDtypeStruct((N, H3, W3, C3), jnp.float32),
    )
    out_specs = (
        pl.BlockSpec((1, H1, W1, C1), lambda n: (n, 0, 0, 0)),
        pl.BlockSpec((1, H2, W2, C2), lambda n: (n, 0, 0, 0)),
        pl.BlockSpec((1, H3, W3, C3), lambda n: (n, 0, 0, 0)),
    )
    scratch_shapes = [
        pltpu.VMEM((H1 + 2, W1 + 2, C0), jnp.float32),    # p1a
        pltpu.VMEM((H1 + 2, W1 + 2, C1), jnp.float32),    # p1b
        pltpu.VMEM((H2 + 2, W2 + 2, C1), jnp.float32),    # p2a
        pltpu.VMEM((H2 + 2, W2 + 2, C2), jnp.float32),    # p2b
        pltpu.VMEM((H3 + 2, W3E + 2, C2), jnp.float32),   # p3a
        pltpu.VMEM((H3 + 2, W3E + 2, C3), jnp.float32),   # p3b
        pltpu.VMEM((H1 * W1, 9 * C0), jnp.float32),       # sl1 (both stage-1 convs)
        pltpu.VMEM((H2 * W2, 9 * C1), jnp.float32),       # sl2
        pltpu.VMEM((H2 * W2, 9 * C2), jnp.float32),       # sl3
        pltpu.VMEM((H3 * W3E, 9 * C2), jnp.float32),      # sl4
        pltpu.VMEM((H3 * W3E, 9 * C3), jnp.float32),      # sl5
    ]

    s1, s2, s3 = pl.pallas_call(
        _fused_kernel,
        out_shape=out_shape,
        grid=(N,),
        in_specs=[pl.BlockSpec((1, H1, W1, C0), lambda n: (n, 0, 0, 0))] + wb_specs,
        out_specs=out_specs,
        scratch_shapes=scratch_shapes,
        compiler_params=pltpu.CompilerParams(
            dimension_semantics=("parallel",)),
    )(x, *flat_args)

    to_nchw = lambda a: jnp.transpose(a, (0, 3, 1, 2))    # NHWC -> NCHW
    return to_nchw(s1), to_nchw(s2), to_nchw(s3)


# -----------------------------------------------------------------------------
# Parameter setup (deterministic, synthetic — shapes match the nn.Conv2d's).
# -----------------------------------------------------------------------------
def init_conv_params(key, cin, cout):
    kw, kb = jax.random.split(key)
    fan_in = cin * 9
    w = jax.random.normal(kw, (cout, cin, 3, 3), jnp.float32) / jnp.sqrt(
        jnp.float32(fan_in))
    b = jax.random.normal(kb, (cout,), jnp.float32) * 0.01
    return w, b


def make_params(key):
    specs = {
        "s1c1": (16, 16), "s1c2": (16, 16),
        "s2c1": (16, 64), "s2c2": (64, 64),
        "s3c1": (64, 128), "s3c2": (128, 128),
    }
    keys = jax.random.split(key, len(specs))
    return {name: init_conv_params(k, cin, cout)
            for k, (name, (cin, cout)) in zip(keys, specs.items())}


# -----------------------------------------------------------------------------
# Pure-JAX reference (correctness check only).
# -----------------------------------------------------------------------------
def ref_conv_block(x_nhwc, wb):
    w, b = wb
    out = lax.conv_general_dilated(
        x_nhwc, jnp.transpose(w, (2, 3, 1, 0)),           # OIHW -> HWIO
        window_strides=(1, 1), padding="SAME",
        dimension_numbers=("NHWC", "HWIO", "NHWC"))
    return jnp.maximum(out + b, 0.0)


def ref_pool(x_nhwc):
    return lax.reduce_window(
        x_nhwc, -jnp.inf, lax.max, (1, 2, 2, 1), (1, 2, 2, 1), "VALID")


def ref_forward(x_nchw, params):
    x = jnp.transpose(x_nchw, (0, 2, 3, 1))
    s1 = ref_conv_block(ref_conv_block(x, params["s1c1"]), params["s1c2"])
    p1 = ref_pool(s1)
    s2 = ref_conv_block(ref_conv_block(p1, params["s2c1"]), params["s2c2"])
    p2 = ref_pool(s2)
    s3 = ref_conv_block(ref_conv_block(p2, params["s3c1"]), params["s3c2"])
    to_nchw = lambda a: jnp.transpose(a, (0, 3, 1, 2))
    return to_nchw(s1), to_nchw(s2), to_nchw(s3)


if __name__ == "__main__":
    key = jax.random.PRNGKey(0)
    k_x, k_p = jax.random.split(key)

    # Module's first conv requires 16 input channels; small spatial = 16.
    x = jax.random.normal(k_x, (2, 16, 16, 16), jnp.float32)   # NCHW
    params = make_params(k_p)

    outs = jax.block_until_ready(vgg_channel2_forward(x, params))

    # Shape checks (match the PyTorch module's three outputs).
    assert outs[0].shape == (2, 16, 16, 16)
    assert outs[1].shape == (2, 64, 8, 8)
    assert outs[2].shape == (2, 128, 4, 4)

    # Numerical check vs pure-JAX reference.
    refs = ref_forward(x, params)
    for o, r in zip(outs, refs):
        assert jnp.allclose(o, r, atol=2e-4, rtol=2e-4), "mismatch vs reference"

    print("KERNEL_OK")
</pallas_src>

<mosaic_0001>
module attributes {stable_mosaic.version = 11 : i64} {
  func.func @_fused_kernel(%arg0: i32, %arg1: memref<1x16x16x16xf32, #tpu.memory_space<vmem>>, %arg2: memref<144x16xf32, #tpu.memory_space<vmem>>, %arg3: memref<1x16xf32, #tpu.memory_space<vmem>>, %arg4: memref<144x16xf32, #tpu.memory_space<vmem>>, %arg5: memref<1x16xf32, #tpu.memory_space<vmem>>, %arg6: memref<144x64xf32, #tpu.memory_space<vmem>>, %arg7: memref<1x64xf32, #tpu.memory_space<vmem>>, %arg8: memref<576x64xf32, #tpu.memory_space<vmem>>, %arg9: memref<1x64xf32, #tpu.memory_space<vmem>>, %arg10: memref<576x128xf32, #tpu.memory_space<vmem>>, %arg11: memref<1x128xf32, #tpu.memory_space<vmem>>, %arg12: memref<1152x128xf32, #tpu.memory_space<vmem>>, %arg13: memref<1x128xf32, #tpu.memory_space<vmem>>, %arg14: memref<1x16x16x16xf32, #tpu.memory_space<vmem>>, %arg15: memref<1x8x8x64xf32, #tpu.memory_space<vmem>>, %arg16: memref<1x4x4x128xf32, #tpu.memory_space<vmem>>, %arg17: memref<18x18x16xf32, #tpu.memory_space<vmem>>, %arg18: memref<18x18x16xf32, #tpu.memory_space<vmem>>, %arg19: memref<10x10x16xf32, #tpu.memory_space<vmem>>, %arg20: memref<10x10x64xf32, #tpu.memory_space<vmem>>, %arg21: memref<6x10x64xf32, #tpu.memory_space<vmem>>, %arg22: memref<6x10x128xf32, #tpu.memory_space<vmem>>, %arg23: memref<256x144xf32, #tpu.memory_space<vmem>>, %arg24: memref<64x144xf32, #tpu.memory_space<vmem>>, %arg25: memref<64x576xf32, #tpu.memory_space<vmem>>, %arg26: memref<32x576xf32, #tpu.memory_space<vmem>>, %arg27: memref<32x1152xf32, #tpu.memory_space<vmem>>) attributes {dimension_semantics = [#tpu.dimension_semantics<parallel>], iteration_bounds = array<i64: 2>, scalar_prefetch = 0 : i64, scratch_operands = 11 : i64, tpu.core_type = #tpu.core_type<tc>, window_params = [{transform_indices = @transform_0, window_bounds = array<i64: 1, 16, 16, 16>}, {pipeline_mode = #tpu.pipeline_mode<synchronous>, transform_indices = @transform_1, window_bounds = array<i64: 144, 16>}, {pipeline_mode = #tpu.pipeline_mode<synchronous>, transform_indices = @transform_2, window_bounds = array<i64: 1, 16>}, {pipeline_mode = #tpu.pipeline_mode<synchronous>, transform_indices = @transform_3, window_bounds = array<i64: 144, 16>}, {pipeline_mode = #tpu.pipeline_mode<synchronous>, transform_indices = @transform_4, window_bounds = array<i64: 1, 16>}, {pipeline_mode = #tpu.pipeline_mode<synchronous>, transform_indices = @transform_5, window_bounds = array<i64: 144, 64>}, {pipeline_mode = #tpu.pipeline_mode<synchronous>, transform_indices = @transform_6, window_bounds = array<i64: 1, 64>}, {pipeline_mode = #tpu.pipeline_mode<synchronous>, transform_indices = @transform_7, window_bounds = array<i64: 576, 64>}, {pipeline_mode = #tpu.pipeline_mode<synchronous>, transform_indices = @transform_8, window_bounds = array<i64: 1, 64>}, {pipeline_mode = #tpu.pipeline_mode<synchronous>, transform_indices = @transform_9, window_bounds = array<i64: 576, 128>}, {pipeline_mode = #tpu.pipeline_mode<synchronous>, transform_indices = @transform_10, window_bounds = array<i64: 1, 128>}, {pipeline_mode = #tpu.pipeline_mode<synchronous>, transform_indices = @transform_11, window_bounds = array<i64: 1152, 128>}, {pipeline_mode = #tpu.pipeline_mode<synchronous>, transform_indices = @transform_12, window_bounds = array<i64: 1, 128>}, {transform_indices = @transform_13, window_bounds = array<i64: 1, 16, 16, 16>}, {transform_indices = @transform_14, window_bounds = array<i64: 1, 8, 8, 64>}, {transform_indices = @transform_15, window_bounds = array<i64: 1, 4, 4, 128>}]} {
    %cst = arith.constant 0.000000e+00 : f32
    %0 = vector.broadcast %cst : f32 to vector<18x18x16xf32>
    %c0 = arith.constant 0 : index
    %c0_0 = arith.constant 0 : index
    %c0_1 = arith.constant 0 : index
    %1 = vector.load %arg17[%c0, %c0_0, %c0_1] : memref<18x18x16xf32, #tpu.memory_space<vmem>>, vector<18x18x16xf32>
    tpu.vector_store %arg17[%c0, %c0_0, %c0_1], %0 {strides = array<i32>} : memref<18x18x16xf32, #tpu.memory_space<vmem>>, vector<18x18x16xf32>,
    %c0_2 = arith.constant 0 : index
    %c0_3 = arith.constant 0 : index
    %c0_4 = arith.constant 0 : index
    %c0_5 = arith.constant 0 : index
    %2 = vector.load %arg1[%c0_2, %c0_3, %c0_4, %c0_5] : memref<1x16x16x16xf32, #tpu.memory_space<vmem>>, vector<1x16x16x16xf32>
    %3 = vector.shape_cast %2 : vector<1x16x16x16xf32> to vector<16x16x16xf32>
    %c1 = arith.constant 1 : index
    %c1_6 = arith.constant 1 : index
    %c0_7 = arith.constant 0 : index
    %4 = vector.load %arg17[%c1, %c1_6, %c0_7] : memref<18x18x16xf32, #tpu.memory_space<vmem>>, vector<16x16x16xf32>
    tpu.vector_store %arg17[%c1, %c1_6, %c0_7], %3 {strides = array<i32>} : memref<18x18x16xf32, #tpu.memory_space<vmem>>, vector<16x16x16xf32>,
    %c0_8 = arith.constant 0 : index
    %c0_9 = arith.constant 0 : index
    %c0_10 = arith.constant 0 : index
    %5 = vector.load %arg17[%c0_8, %c0_9, %c0_10] : memref<18x18x16xf32, #tpu.memory_space<vmem>>, vector<16x16x16xf32>
    %6 = vector.shape_cast %5 : vector<16x16x16xf32> to vector<256x16xf32>
    %c0_11 = arith.constant 0 : index
    %c0_12 = arith.constant 0 : index
    %7 = vector.load %arg23[%c0_11, %c0_12] : memref<256x144xf32, #tpu.memory_space<vmem>>, vector<256x16xf32>
    tpu.vector_store %arg23[%c0_11, %c0_12], %6 {strides = array<i32>} : memref<256x144xf32, #tpu.memory_space<vmem>>, vector<256x16xf32>,
    %c0_13 = arith.constant 0 : index
    %c1_14 = arith.constant 1 : index
    %c0_15 = arith.constant 0 : index
    %8 = vector.load %arg17[%c0_13, %c1_14, %c0_15] : memref<18x18x16xf32, #tpu.memory_space<vmem>>, vector<16x16x16xf32>
    %9 = vector.shape_cast %8 : vector<16x16x16xf32> to vector<256x16xf32>
    %c0_16 = arith.constant 0 : index
    %c16 = arith.constant 16 : index
    %10 = vector.load %arg23[%c0_16, %c16] : memref<256x144xf32, #tpu.memory_space<vmem>>, vector<256x16xf32>
    tpu.vector_store %arg23[%c0_16, %c16], %9 {strides = array<i32>} : memref<256x144xf32, #tpu.memory_space<vmem>>, vector<256x16xf32>,
    %c0_17 = arith.constant 0 : index
    %c2 = arith.constant 2 : index
    %c0_18 = arith.constant 0 : index
    %11 = vector.load %arg17[%c0_17, %c2, %c0_18] : memref<18x18x16xf32, #tpu.memory_space<vmem>>, vector<16x16x16xf32>
    %12 = vector.shape_cast %11 : vector<16x16x16xf32> to vector<256x16xf32>
    %c0_19 = arith.constant 0 : index
    %c32 = arith.constant 32 : index
    %13 = vector.load %arg23[%c0_19, %c32] : memref<256x144xf32, #tpu.memory_space<vmem>>, vector<256x16xf32>
    tpu.vector_store %arg23[%c0_19, %c32], %12 {strides = array<i32>} : memref<256x144xf32, #tpu.memory_space<vmem>>, vector<256x16xf32>,
    %c1_20 = arith.constant 1 : index
    %c0_21 = arith.constant 0 : index
    %c0_22 = arith.constant 0 : index
    %14 = vector.load %arg17[%c1_20, %c0_21, %c0_22] : memref<18x18x16xf32, #tpu.memory_space<vmem>>, vector<16x16x16xf32>
    %15 = vector.shape_cast %14 : vector<16x16x16xf32> to vector<256x16xf32>
    %c0_23 = arith.constant 0 : index
    %c48 = arith.constant 48 : index
    %16 = vector.load %arg23[%c0_23, %c48] : memref<256x144xf32, #tpu.memory_space<vmem>>, vector<256x16xf32>
    tpu.vector_store %arg23[%c0_23, %c48], %15 {strides = array<i32>} : memref<256x144xf32, #tpu.memory_space<vmem>>, vector<256x16xf32>,
    %c1_24 = arith.constant 1 : index
    %c1_25 = arith.constant 1 : index
    %c0_26 = arith.constant 0 : index
    %17 = vector.load %arg17[%c1_24, %c1_25, %c0_26] : memref<18x18x16xf32, #tpu.memory_space<vmem>>, vector<16x16x16xf32>
    %18 = vector.shape_cast %17 : vector<16x16x16xf32> to vector<256x16xf32>
    %c0_27 = arith.constant 0 : index
    %c64 = arith.constant 64 : index
    %19 = vector.load %arg23[%c0_27, %c64] : memref<256x144xf32, #tpu.memory_space<vmem>>, vector<256x16xf32>
    tpu.vector_store %arg23[%c0_27, %c64], %18 {strides = array<i32>} : memref<256x144xf32, #tpu.memory_space<vmem>>, vector<256x16xf32>,
    %c1_28 = arith.constant 1 : index
    %c2_29 = arith.constant 2 : index
    %c0_30 = arith.constant 0 : index
    %20 = vector.load %arg17[%c1_28, %c2_29, %c0_30] : memref<18x18x16xf32, #tpu.memory_space<vmem>>, vector<16x16x16xf32>
    %21 = vector.shape_cast %20 : vector<16x16x16xf32> to vector<256x16xf32>
    %c0_31 = arith.constant 0 : index
    %c80 = arith.constant 80 : index
    %22 = vector.load %arg23[%c0_31, %c80] : memref<256x144xf32, #tpu.memory_space<vmem>>, vector<256x16xf32>
    tpu.vector_store %arg23[%c0_31, %c80], %21 {strides = array<i32>} : memref<256x144xf32, #tpu.memory_space<vmem>>, vector<256x16xf32>,
    %c2_32 = arith.constant 2 : index
    %c0_33 = arith.constant 0 : index
    %c0_34 = arith.constant 0 : index
    %23 = vector.load %arg17[%c2_32, %c0_33, %c0_34] : memref<18x18x16xf32, #tpu.memory_space<vmem>>, vector<16x16x16xf32>
    %24 = vector.shape_cast %23 : vector<16x16x16xf32> to vector<256x16xf32>
    %c0_35 = arith.constant 0 : index
    %c96 = arith.constant 96 : index
    %25 = vector.load %arg23[%c0_35, %c96] : memref<256x144xf32, #tpu.memory_space<vmem>>, vector<256x16xf32>
    tpu.vector_store %arg23[%c0_35, %c96], %24 {strides = array<i32>} : memref<256x144xf32, #tpu.memory_space<vmem>>, vector<256x16xf32>,
    %c2_36 = arith.constant 2 : index
    %c1_37 = arith.constant 1 : index
    %c0_38 = arith.constant 0 : index
    %26 = vector.load %arg17[%c2_36, %c1_37, %c0_38] : memref<18x18x16xf32, #tpu.memory_space<vmem>>, vector<16x16x16xf32>
    %27 = vector.shape_cast %26 : vector<16x16x16xf32> to vector<256x16xf32>
    %c0_39 = arith.constant 0 : index
    %c112 = arith.constant 112 : index
    %28 = vector.load %arg23[%c0_39, %c112] : memref<256x144xf32, #tpu.memory_space<vmem>>, vector<256x16xf32>
    tpu.vector_store %arg23[%c0_39, %c112], %27 {strides = array<i32>} : memref<256x144xf32, #tpu.memory_space<vmem>>, vector<256x16xf32>,
    %c2_40 = arith.constant 2 : index
    %c2_41 = arith.constant 2 : index
    %c0_42 = arith.constant 0 : index
    %29 = vector.load %arg17[%c2_40, %c2_41, %c0_42] : memref<18x18x16xf32, #tpu.memory_space<vmem>>, vector<16x16x16xf32>
    %30 = vector.shape_cast %29 : vector<16x16x16xf32> to vector<256x16xf32>
    %c0_43 = arith.constant 0 : index
    %c128 = arith.constant 128 : index
    %31 = vector.load %arg23[%c0_43, %c128] : memref<256x144xf32, #tpu.memory_space<vmem>>, vector<256x16xf32>
    tpu.vector_store %arg23[%c0_43, %c128], %30 {strides = array<i32>} : memref<256x144xf32, #tpu.memory_space<vmem>>, vector<256x16xf32>,
    %c0_44 = arith.constant 0 : index
    %c0_45 = arith.constant 0 : index
    %32 = vector.load %arg23[%c0_44, %c0_45] : memref<256x144xf32, #tpu.memory_space<vmem>>, vector<256x144xf32>
    %c0_46 = arith.constant 0 : index
    %c0_47 = arith.constant 0 : index
    %33 = vector.load %arg2[%c0_46, %c0_47] : memref<144x16xf32, #tpu.memory_space<vmem>>, vector<144x16xf32>
    %cst_48 = arith.constant dense<0.000000e+00> : vector<256x16xf32>
    %34 = tpu.matmul %32, %33, %cst_48 {dimension_numbers = #tpu.dot_dimension_numbers<[1], [0], [0], [1], [0, 0, 1, 1], [], []>} : vector<256x144xf32>, vector<144x16xf32>, vector<256x16xf32> -> vector<256x16xf32>
    %c0_49 = arith.constant 0 : index
    %c0_50 = arith.constant 0 : index
    %35 = vector.load %arg3[%c0_49, %c0_50] : memref<1x16xf32, #tpu.memory_space<vmem>>, vector<1x16xf32>
    %36 = vector.broadcast %35 : vector<1x16xf32> to vector<256x16xf32>
    %37 = arith.addf %34, %36 : vector<256x16xf32>
    %cst_51 = arith.constant 0.000000e+00 : f32
    %38 = vector.broadcast %cst_51 : f32 to vector<256x16xf32>
    %39 = arith.maximumf %37, %38 : vector<256x16xf32>
    %40 = vector.shape_cast %39 : vector<256x16xf32> to vector<16x16x16xf32>
    %cst_52 = arith.constant 0.000000e+00 : f32
    %41 = vector.broadcast %cst_52 : f32 to vector<18x18x16xf32>
    %c0_53 = arith.constant 0 : index
    %c0_54 = arith.constant 0 : index
    %c0_55 = arith.constant 0 : index
    %42 = vector.load %arg18[%c0_53, %c0_54, %c0_55] : memref<18x18x16xf32, #tpu.memory_space<vmem>>, vector<18x18x16xf32>
    tpu.vector_store %arg18[%c0_53, %c0_54, %c0_55], %41 {strides = array<i32>} : memref<18x18x16xf32, #tpu.memory_space<vmem>>, vector<18x18x16xf32>,
    %c1_56 = arith.constant 1 : index
    %c1_57 = arith.constant 1 : index
    %c0_58 = arith.constant 0 : index
    %43 = vector.load %arg18[%c1_56, %c1_57, %c0_58] : memref<18x18x16xf32, #tpu.memory_space<vmem>>, vector<16x16x16xf32>
    tpu.vector_store %arg18[%c1_56, %c1_57, %c0_58], %40 {strides = array<i32>} : memref<18x18x16xf32, #tpu.memory_space<vmem>>, vector<16x16x16xf32>,
    %c0_59 = arith.constant 0 : index
    %c0_60 = arith.constant 0 : index
    %c0_61 = arith.constant 0 : index
    %44 = vector.load %arg18[%c0_59, %c0_60, %c0_61] : memref<18x18x16xf32, #tpu.memory_space<vmem>>, vector<16x16x16xf32>
    %45 = vector.shape_cast %44 : vector<16x16x16xf32> to vector<256x16xf32>
    %c0_62 = arith.constant 0 : index
    %c0_63 = arith.constant 0 : index
    %46 = vector.load %arg23[%c0_62, %c0_63] : memref<256x144xf32, #tpu.memory_space<vmem>>, vector<256x16xf32>
    tpu.vector_store %arg23[%c0_62, %c0_63], %45 {strides = array<i32>} : memref<256x144xf32, #tpu.memory_space<vmem>>, vector<256x16xf32>,
    %c0_64 = arith.constant 0 : index
    %c1_65 = arith.constant 1 : index
    %c0_66 = arith.constant 0 : index
    %47 = vector.load %arg18[%c0_64, %c1_65, %c0_66] : memref<18x18x16xf32, #tpu.memory_space<vmem>>, vector<16x16x16xf32>
    %48 = vector.shape_cast %47 : vector<16x16x16xf32> to vector<256x16xf32>
    %c0_67 = arith.constant 0 : index
    %c16_68 = arith.constant 16 : index
    %49 = vector.load %arg23[%c0_67, %c16_68] : memref<256x144xf32, #tpu.memory_space<vmem>>, vector<256x16xf32>
    tpu.vector_store %arg23[%c0_67, %c16_68], %48 {strides = array<i32>} : memref<256x144xf32, #tpu.memory_space<vmem>>, vector<256x16xf32>,
    %c0_69 = arith.constant 0 : index
    %c2_70 = arith.constant 2 : index
    %c0_71 = arith.constant 0 : index
    %50 = vector.load %arg18[%c0_69, %c2_70, %c0_71] : memref<18x18x16xf32, #tpu.memory_space<vmem>>, vector<16x16x16xf32>
    %51 = vector.shape_cast %50 : vector<16x16x16xf32> to vector<256x16xf32>
    %c0_72 = arith.constant 0 : index
    %c32_73 = arith.constant 32 : index
    %52 = vector.load %arg23[%c0_72, %c32_73] : memref<256x144xf32, #tpu.memory_space<vmem>>, vector<256x16xf32>
    tpu.vector_store %arg23[%c0_72, %c32_73], %51 {strides = array<i32>} : memref<256x144xf32, #tpu.memory_space<vmem>>, vector<256x16xf32>,
    %c1_74 = arith.constant 1 : index
    %c0_75 = arith.constant 0 : index
    %c0_76 = arith.constant 0 : index
    %53 = vector.load %arg18[%c1_74, %c0_75, %c0_76] : memref<18x18x16xf32, #tpu.memory_space<vmem>>, vector<16x16x16xf32>
    %54 = vector.shape_cast %53 : vector<16x16x16xf32> to vector<256x16xf32>
    %c0_77 = arith.constant 0 : index
    %c48_78 = arith.constant 48 : index
    %55 = vector.load %arg23[%c0_77, %c48_78] : memref<256x144xf32, #tpu.memory_space<vmem>>, vector<256x16xf32>
    tpu.vector_store %arg23[%c0_77, %c48_78], %54 {strides = array<i32>} : memref<256x144xf32, #tpu.memory_space<vmem>>, vector<256x16xf32>,
    %c1_79 = arith.constant 1 : index
    %c1_80 = arith.constant 1 : index
    %c0_81 = arith.constant 0 : index
    %56 = vector.load %arg18[%c1_79, %c1_80, %c0_81] : memref<18x18x16xf32, #tpu.memory_space<vmem>>, vector<16x16x16xf32>
    %57 = vector.shape_cast %56 : vector<16x16x16xf32> to vector<256x16xf32>
    %c0_82 = arith.constant 0 : index
    %c64_83 = arith.constant 64 : index
    %58 = vector.load %arg23[%c0_82, %c64_83] : memref<256x144xf32, #tpu.memory_space<vmem>>, vector<256x16xf32>
    tpu.vector_store %arg23[%c0_82, %c64_83], %57 {strides = array<i32>} : memref<256x144xf32, #tpu.memory_space<vmem>>, vector<256x16xf32>,
    %c1_84 = arith.constant 1 : index
    %c2_85 = arith.constant 2 : index
    %c0_86 = arith.constant 0 : index
    %59 = vector.load %arg18[%c1_84, %c2_85, %c0_86] : memref<18x18x16xf32, #tpu.memory_space<vmem>>, vector<16x16x16xf32>
    %60 = vector.shape_cast %59 : vector<16x16x16xf32> to vector<256x16xf32>
    %c0_87 = arith.constant 0 : index
    %c80_88 = arith.constant 80 : index
    %61 = vector.load %arg23[%c0_87, %c80_88] : memref<256x144xf32, #tpu.memory_space<vmem>>, vector<256x16xf32>
    tpu.vector_store %arg23[%c0_87, %c80_88], %60 {strides = array<i32>} : memref<256x144xf32, #tpu.memory_space<vmem>>, vector<256x16xf32>,
    %c2_89 = arith.constant 2 : index
    %c0_90 = arith.constant 0 : index
    %c0_91 = arith.constant 0 : index
    %62 = vector.load %arg18[%c2_89, %c0_90, %c0_91] : memref<18x18x16xf32, #tpu.memory_space<vmem>>, vector<16x16x16xf32>
    %63 = vector.shape_cast %62 : vector<16x16x16xf32> to vector<256x16xf32>
    %c0_92 = arith.constant 0 : index
    %c96_93 = arith.constant 96 : index
    %64 = vector.load %arg23[%c0_92, %c96_93] : memref<256x144xf32, #tpu.memory_space<vmem>>, vector<256x16xf32>
    tpu.vector_store %arg23[%c0_92, %c96_93], %63 {strides = array<i32>} : memref<256x144xf32, #tpu.memory_space<vmem>>, vector<256x16xf32>,
    %c2_94 = arith.constant 2 : index
    %c1_95 = arith.constant 1 : index
    %c0_96 = arith.constant 0 : index
    %65 = vector.load %arg18[%c2_94, %c1_95, %c0_96] : memref<18x18x16xf32, #tpu.memory_space<vmem>>, vector<16x16x16xf32>
    %66 = vector.shape_cast %65 : vector<16x16x16xf32> to vector<256x16xf32>
    %c0_97 = arith.constant 0 : index
    %c112_98 = arith.constant 112 : index
    %67 = vector.load %arg23[%c0_97, %c112_98] : memref<256x144xf32, #tpu.memory_space<vmem>>, vector<256x16xf32>
    tpu.vector_store %arg23[%c0_97, %c112_98], %66 {strides = array<i32>} : memref<256x144xf32, #tpu.memory_space<vmem>>, vector<256x16xf32>,
    %c2_99 = arith.constant 2 : index
    %c2_100 = arith.constant 2 : index
    %c0_101 = arith.constant 0 : index
    %68 = vector.load %arg18[%c2_99, %c2_100, %c0_101] : memref<18x18x16xf32, #tpu.memory_space<vmem>>, vector<16x16x16xf32>
    %69 = vector.shape_cast %68 : vector<16x16x16xf32> to vector<256x16xf32>
    %c0_102 = arith.constant 0 : index
    %c128_103 = arith.constant 128 : index
    %70 = vector.load %arg23[%c0_102, %c128_103] : memref<256x144xf32, #tpu.memory_space<vmem>>, vector<256x16xf32>
    tpu.vector_store %arg23[%c0_102, %c128_103], %69 {strides = array<i32>} : memref<256x144xf32, #tpu.memory_space<vmem>>, vector<256x16xf32>,
    %c0_104 = arith.constant 0 : index
    %c0_105 = arith.constant 0 : index
    %71 = vector.load %arg23[%c0_104, %c0_105] : memref<256x144xf32, #tpu.memory_space<vmem>>, vector<256x144xf32>
    %c0_106 = arith.constant 0 : index
    %c0_107 = arith.constant 0 : index
    %72 = vector.load %arg4[%c0_106, %c0_107] : memref<144x16xf32, #tpu.memory_space<vmem>>, vector<144x16xf32>
    %cst_108 = arith.constant dense<0.000000e+00> : vector<256x16xf32>
    %73 = tpu.matmul %71, %72, %cst_108 {dimension_numbers = #tpu.dot_dimension_numbers<[1], [0], [0], [1], [0, 0, 1, 1], [], []>} : vector<256x144xf32>, vector<144x16xf32>, vector<256x16xf32> -> vector<256x16xf32>
    %c0_109 = arith.constant 0 : index
    %c0_110 = arith.constant 0 : index
    %74 = vector.load %arg5[%c0_109, %c0_110] : memref<1x16xf32, #tpu.memory_space<vmem>>, vector<1x16xf32>
    %75 = vector.broadcast %74 : vector<1x16xf32> to vector<256x16xf32>
    %76 = arith.addf %73, %75 : vector<256x16xf32>
    %cst_111 = arith.constant 0.000000e+00 : f32
    %77 = vector.broadcast %cst_111 : f32 to vector<256x16xf32>
    %78 = arith.maximumf %76, %77 : vector<256x16xf32>
    %79 = vector.shape_cast %78 : vector<256x16xf32> to vector<16x16x16xf32>
    %c0_112 = arith.constant 0 : index
    %c0_113 = arith.constant 0 : index
    %c0_114 = arith.constant 0 : index
    %c0_115 = arith.constant 0 : index
    %80 = vector.load %arg14[%c0_112, %c0_113, %c0_114, %c0_115] : memref<1x16x16x16xf32, #tpu.memory_space<vmem>>, vector<1x16x16x16xf32>
    %81 = vector.shape_cast %80 : vector<1x16x16x16xf32> to vector<16x16x16xf32>
    %82 = vector.shape_cast %79 : vector<16x16x16xf32> to vector<1x16x16x16xf32>
    tpu.vector_store %arg14[%c0_112, %c0_113, %c0_114, %c0_115], %82 {strides = array<i32>} : memref<1x16x16x16xf32, #tpu.memory_space<vmem>>, vector<1x16x16x16xf32>,
    %cst_116 = arith.constant 0.000000e+00 : f32
    %83 = vector.broadcast %cst_116 : f32 to vector<10x10x16xf32>
    %c0_117 = arith.constant 0 : index
    %c0_118 = arith.constant 0 : index
    %c0_119 = arith.constant 0 : index
    %84 = vector.load %arg19[%c0_117, %c0_118, %c0_119] : memref<10x10x16xf32, #tpu.memory_space<vmem>>, vector<10x10x16xf32>
    tpu.vector_store %arg19[%c0_117, %c0_118, %c0_119], %83 {strides = array<i32>} : memref<10x10x16xf32, #tpu.memory_space<vmem>>, vector<10x10x16xf32>,
    %85 = vector.shape_cast %79 : vector<16x16x16xf32> to vector<8x2x16x16xf32>
    %cst_120 = arith.constant dense<0xFF800000> : vector<8x16x16xf32>
    %86 = vector.multi_reduction <maximumf>, %85, %cst_120 [1] : vector<8x2x16x16xf32> to vector<8x16x16xf32>
    %87 = vector.extract_strided_slice %86 {offsets = [0, 0, 0], sizes = [8, 1, 16], strides = [1, 1, 1]} : vector<8x16x16xf32> to vector<8x1x16xf32>
    %88 = vector.shape_cast %87 : vector<8x1x16xf32> to vector<8x16xf32>
    %89 = vector.extract_strided_slice %86 {offsets = [0, 1, 0], sizes = [8, 1, 16], strides = [1, 1, 1]} : vector<8x16x16xf32> to vector<8x1x16xf32>
    %90 = vector.shape_cast %89 : vector<8x1x16xf32> to vector<8x16xf32>
    %91 = arith.maximumf %88, %90 : vector<8x16xf32>
    %c1_121 = arith.constant 1 : index
    %c1_122 = arith.constant 1 : index
    %c0_123 = arith.constant 0 : index
    %92 = vector.load %arg19[%c1_121, %c1_122, %c0_123] : memref<10x10x16xf32, #tpu.memory_space<vmem>>, vector<8x1x16xf32>
    %93 = vector.shape_cast %92 : vector<8x1x16xf32> to vector<8x16xf32>
    %94 = vector.shape_cast %91 : vector<8x16xf32> to vector<8x1x16xf32>
    tpu.vector_store %arg19[%c1_121, %c1_122, %c0_123], %94 {strides = array<i32>} : memref<10x10x16xf32, #tpu.memory_space<vmem>>, vector<8x1x16xf32>,
    %95 = vector.extract_strided_slice %86 {offsets = [0, 2, 0], sizes = [8, 1, 16], strides = [1, 1, 1]} : vector<8x16x16xf32> to vector<8x1x16xf32>
    %96 = vector.shape_cast %95 : vector<8x1x16xf32> to vector<8x16xf32>
    %97 = vector.extract_strided_slice %86 {offsets = [0, 3, 0], sizes = [8, 1, 16], strides = [1, 1, 1]} : vector<8x16x16xf32> to vector<8x1x16xf32>
    %98 = vector.shape_cast %97 : vector<8x1x16xf32> to vector<8x16xf32>
    %99 = arith.maximumf %96, %98 : vector<8x16xf32>
    %c1_124 = arith.constant 1 : index
    %c2_125 = arith.constant 2 : index
    %c0_126 = arith.constant 0 : index
    %100 = vector.load %arg19[%c1_124, %c2_125, %c0_126] : memref<10x10x16xf32, #tpu.memory_space<vmem>>, vector<8x1x16xf32>
    %101 = vector.shape_cast %100 : vector<8x1x16xf32> to vector<8x16xf32>
    %102 = vector.shape_cast %99 : vector<8x16xf32> to vector<8x1x16xf32>
    tpu.vector_store %arg19[%c1_124, %c2_125, %c0_126], %102 {strides = array<i32>} : memref<10x10x16xf32, #tpu.memory_space<vmem>>, vector<8x1x16xf32>,
    %103 = vector.extract_strided_slice %86 {offsets = [0, 4, 0], sizes = [8, 1, 16], strides = [1, 1, 1]} : vector<8x16x16xf32> to vector<8x1x16xf32>
    %104 = vector.shape_cast %103 : vector<8x1x16xf32> to vector<8x16xf32>
    %105 = vector.extract_strided_slice %86 {offsets = [0, 5, 0], sizes = [8, 1, 16], strides = [1, 1, 1]} : vector<8x16x16xf32> to vector<8x1x16xf32>
    %106 = vector.shape_cast %105 : vector<8x1x16xf32> to vector<8x16xf32>
    %107 = arith.maximumf %104, %106 : vector<8x16xf32>
    %c1_127 = arith.constant 1 : index
    %c3 = arith.constant 3 : index
    %c0_128 = arith.constant 0 : index
    %108 = vector.load %arg19[%c1_127, %c3, %c0_128] : memref<10x10x16xf32, #tpu.memory_space<vmem>>, vector<8x1x16xf32>
    %109 = vector.shape_cast %108 : vector<8x1x16xf32> to vector<8x16xf32>
    %110 = vector.shape_cast %107 : vector<8x16xf32> to vector<8x1x16xf32>
    tpu.vector_store %arg19[%c1_127, %c3, %c0_128], %110 {strides = array<i32>} : memref<10x10x16xf32, #tpu.memory_space<vmem>>, vector<8x1x16xf32>,
    %111 = vector.extract_strided_slice %86 {offsets = [0, 6, 0], sizes = [8, 1, 16], strides = [1, 1, 1]} : vector<8x16x16xf32> to vector<8x1x16xf32>
    %112 = vector.shape_cast %111 : vector<8x1x16xf32> to vector<8x16xf32>
    %113 = vector.extract_strided_slice %86 {offsets = [0, 7, 0], sizes = [8, 1, 16], strides = [1, 1, 1]} : vector<8x16x16xf32> to vector<8x1x16xf32>
    %114 = vector.shape_cast %113 : vector<8x1x16xf32> to vector<8x16xf32>
    %115 = arith.maximumf %112, %114 : vector<8x16xf32>
    %c1_129 = arith.constant 1 : index
    %c4 = arith.constant 4 : index
    %c0_130 = arith.constant 0 : index
    %116 = vector.load %arg19[%c1_129, %c4, %c0_130] : memref<10x10x16xf32, #tpu.memory_space<vmem>>, vector<8x1x16xf32>
    %117 = vector.shape_cast %116 : vector<8x1x16xf32> to vector<8x16xf32>
    %118 = vector.shape_cast %115 : vector<8x16xf32> to vector<8x1x16xf32>
    tpu.vector_store %arg19[%c1_129, %c4, %c0_130], %118 {strides = array<i32>} : memref<10x10x16xf32, #tpu.memory_space<vmem>>, vector<8x1x16xf32>,
    %119 = vector.extract_strided_slice %86 {offsets = [0, 8, 0], sizes = [8, 1, 16], strides = [1, 1, 1]} : vector<8x16x16xf32> to vector<8x1x16xf32>
    %120 = vector.shape_cast %119 : vector<8x1x16xf32> to vector<8x16xf32>
    %121 = vector.extract_strided_slice %86 {offsets = [0, 9, 0], sizes = [8, 1, 16], strides = [1, 1, 1]} : vector<8x16x16xf32> to vector<8x1x16xf32>
    %122 = vector.shape_cast %121 : vector<8x1x16xf32> to vector<8x16xf32>
    %123 = arith.maximumf %120, %122 : vector<8x16xf32>
    %c1_131 = arith.constant 1 : index
    %c5 = arith.constant 5 : index
    %c0_132 = arith.constant 0 : index
    %124 = vector.load %arg19[%c1_131, %c5, %c0_132] : memref<10x10x16xf32, #tpu.memory_space<vmem>>, vector<8x1x16xf32>
    %125 = vector.shape_cast %124 : vector<8x1x16xf32> to vector<8x16xf32>
    %126 = vector.shape_cast %123 : vector<8x16xf32> to vector<8x1x16xf32>
    tpu.vector_store %arg19[%c1_131, %c5, %c0_132], %126 {strides = array<i32>} : memref<10x10x16xf32, #tpu.memory_space<vmem>>, vector<8x1x16xf32>,
    %127 = vector.extract_strided_slice %86 {offsets = [0, 10, 0], sizes = [8, 1, 16], strides = [1, 1, 1]} : vector<8x16x16xf32> to vector<8x1x16xf32>
    %128 = vector.shape_cast %127 : vector<8x1x16xf32> to vector<8x16xf32>
    %129 = vector.extract_strided_slice %86 {offsets = [0, 11, 0], sizes = [8, 1, 16], strides = [1, 1, 1]} : vector<8x16x16xf32> to vector<8x1x16xf32>
    %130 = vector.shape_cast %129 : vector<8x1x16xf32> to vector<8x16xf32>
    %131 = arith.maximumf %128, %130 : vector<8x16xf32>
    %c1_133 = arith.constant 1 : index
    %c6 = arith.constant 6 : index
    %c0_134 = arith.constant 0 : index
    %132 = vector.load %arg19[%c1_133, %c6, %c0_134] : memref<10x10x16xf32, #tpu.memory_space<vmem>>, vector<8x1x16xf32>
    %133 = vector.shape_cast %132 : vector<8x1x16xf32> to vector<8x16xf32>
    %134 = vector.shape_cast %131 : vector<8x16xf32> to vector<8x1x16xf32>
    tpu.vector_store %arg19[%c1_133, %c6, %c0_134], %134 {strides = array<i32>} : memref<10x10x16xf32, #tpu.memory_space<vmem>>, vector<8x1x16xf32>,
    %135 = vector.extract_strided_slice %86 {offsets = [0, 12, 0], sizes = [8, 1, 16], strides = [1, 1, 1]} : vector<8x16x16xf32> to vector<8x1x16xf32>
    %136 = vector.shape_cast %135 : vector<8x1x16xf32> to vector<8x16xf32>
    %137 = vector.extract_strided_slice %86 {offsets = [0, 13, 0], sizes = [8, 1, 16], strides = [1, 1, 1]} : vector<8x16x16xf32> to vector<8x1x16xf32>
    %138 = vector.shape_cast %137 : vector<8x1x16xf32> to vector<8x16xf32>
    %139 = arith.maximumf %136, %138 : vector<8x16xf32>
    %c1_135 = arith.constant 1 : index
    %c7 = arith.constant 7 : index
    %c0_136 = arith.constant 0 : index
    %140 = vector.load %arg19[%c1_135, %c7, %c0_136] : memref<10x10x16xf32, #tpu.memory_space<vmem>>, vector<8x1x16xf32>
    %141 = vector.shape_cast %140 : vector<8x1x16xf32> to vector<8x16xf32>
    %142 = vector.shape_cast %139 : vector<8x16xf32> to vector<8x1x16xf32>
    tpu.vector_store %arg19[%c1_135, %c7, %c0_136], %142 {strides = array<i32>} : memref<10x10x16xf32, #tpu.memory_space<vmem>>, vector<8x1x16xf32>,
    %143 = vector.extract_strided_slice %86 {offsets = [0, 14, 0], sizes = [8, 1, 16], strides = [1, 1, 1]} : vector<8x16x16xf32> to vector<8x1x16xf32>
    %144 = vector.shape_cast %143 : vector<8x1x16xf32> to vector<8x16xf32>
    %145 = vector.extract_strided_slice %86 {offsets = [0, 15, 0], sizes = [8, 1, 16], strides = [1, 1, 1]} : vector<8x16x16xf32> to vector<8x1x16xf32>
    %146 = vector.shape_cast %145 : vector<8x1x16xf32> to vector<8x16xf32>
    %147 = arith.maximumf %144, %146 : vector<8x16xf32>
    %c1_137 = arith.constant 1 : index
    %c8 = arith.constant 8 : index
    %c0_138 = arith.constant 0 : index
    %148 = vector.load %arg19[%c1_137, %c8, %c0_138] : memref<10x10x16xf32, #tpu.memory_space<vmem>>, vector<8x1x16xf32>
    %149 = vector.shape_cast %148 : vector<8x1x16xf32> to vector<8x16xf32>
    %150 = vector.shape_cast %147 : vector<8x16xf32> to vector<8x1x16xf32>
    tpu.vector_store %arg19[%c1_137, %c8, %c0_138], %150 {strides = array<i32>} : memref<10x10x16xf32, #tpu.memory_space<vmem>>, vector<8x1x16xf32>,
    %c0_139 = arith.constant 0 : index
    %c0_140 = arith.constant 0 : index
    %c0_141 = arith.constant 0 : index
    %151 = vector.load %arg19[%c0_139, %c0_140, %c0_141] : memref<10x10x16xf32, #tpu.memory_space<vmem>>, vector<8x8x16xf32>
    %152 = vector.shape_cast %151 : vector<8x8x16xf32> to vector<64x16xf32>
    %c0_142 = arith.constant 0 : index
    %c0_143 = arith.constant 0 : index
    %153 = vector.load %arg24[%c0_142, %c0_143] : memref<64x144xf32, #tpu.memory_space<vmem>>, vector<64x16xf32>
    tpu.vector_store %arg24[%c0_142, %c0_143], %152 {strides = array<i32>} : memref<64x144xf32, #tpu.memory_space<vmem>>, vector<64x16xf32>,
    %c0_144 = arith.constant 0 : index
    %c1_145 = arith.constant 1 : index
    %c0_146 = arith.constant 0 : index
    %154 = vector.load %arg19[%c0_144, %c1_145, %c0_146] : memref<10x10x16xf32, #tpu.memory_space<vmem>>, vector<8x8x16xf32>
    %155 = vector.shape_cast %154 : vector<8x8x16xf32> to vector<64x16xf32>
    %c0_147 = arith.constant 0 : index
    %c16_148 = arith.constant 16 : index
    %156 = vector.load %arg24[%c0_147, %c16_148] : memref<64x144xf32, #tpu.memory_space<vmem>>, vector<64x16xf32>
    tpu.vector_store %arg24[%c0_147, %c16_148], %155 {strides = array<i32>} : memref<64x144xf32, #tpu.memory_space<vmem>>, vector<64x16xf32>,
    %c0_149 = arith.constant 0 : index
    %c2_150 = arith.constant 2 : index
    %c0_151 = arith.constant 0 : index
    %157 = vector.load %arg19[%c0_149, %c2_150, %c0_151] : memref<10x10x16xf32, #tpu.memory_space<vmem>>, vector<8x8x16xf32>
    %158 = vector.shape_cast %157 : vector<8x8x16xf32> to vector<64x16xf32>
    %c0_152 = arith.constant 0 : index
    %c32_153 = arith.constant 32 : index
    %159 = vector.load %arg24[%c0_152, %c32_153] : memref<64x144xf32, #tpu.memory_space<vmem>>, vector<64x16xf32>
    tpu.vector_store %arg24[%c0_152, %c32_153], %158 {strides = array<i32>} : memref<64x144xf32, #tpu.memory_space<vmem>>, vector<64x16xf32>,
    %c1_154 = arith.constant 1 : index
    %c0_155 = arith.constant 0 : index
    %c0_156 = arith.constant 0 : index
    %160 = vector.load %arg19[%c1_154, %c0_155, %c0_156] : memref<10x10x16xf32, #tpu.memory_space<vmem>>, vector<8x8x16xf32>
    %161 = vector.shape_cast %160 : vector<8x8x16xf32> to vector<64x16xf32>
    %c0_157 = arith.constant 0 : index
    %c48_158 = arith.constant 48 : index
    %162 = vector.load %arg24[%c0_157, %c48_158] : memref<64x144xf32, #tpu.memory_space<vmem>>, vector<64x16xf32>
    tpu.vector_store %arg24[%c0_157, %c48_158], %161 {strides = array<i32>} : memref<64x144xf32, #tpu.memory_space<vmem>>, vector<64x16xf32>,
    %c1_159 = arith.constant 1 : index
    %c1_160 = arith.constant 1 : index
    %c0_161 = arith.constant 0 : index
    %163 = vector.load %arg19[%c1_159, %c1_160, %c0_161] : memref<10x10x16xf32, #tpu.memory_space<vmem>>, vector<8x8x16xf32>
    %164 = vector.shape_cast %163 : vector<8x8x16xf32> to vector<64x16xf32>
    %c0_162 = arith.constant 0 : index
    %c64_163 = arith.constant 64 : index
    %165 = vector.load %arg24[%c0_162, %c64_163] : memref<64x144xf32, #tpu.memory_space<vmem>>, vector<64x16xf32>
    tpu.vector_store %arg24[%c0_162, %c64_163], %164 {strides = array<i32>} : memref<64x144xf32, #tpu.memory_space<vmem>>, vector<64x16xf32>,
    %c1_164 = arith.constant 1 : index
    %c2_165 = arith.constant 2 : index
    %c0_166 = arith.constant 0 : index
    %166 = vector.load %arg19[%c1_164, %c2_165, %c0_166] : memref<10x10x16xf32, #tpu.memory_space<vmem>>, vector<8x8x16xf32>
    %167 = vector.shape_cast %166 : vector<8x8x16xf32> to vector<64x16xf32>
    %c0_167 = arith.constant 0 : index
    %c80_168 = arith.constant 80 : index
    %168 = vector.load %arg24[%c0_167, %c80_168] : memref<64x144xf32, #tpu.memory_space<vmem>>, vector<64x16xf32>
    tpu.vector_store %arg24[%c0_167, %c80_168], %167 {strides = array<i32>} : memref<64x144xf32, #tpu.memory_space<vmem>>, vector<64x16xf32>,
    %c2_169 = arith.constant 2 : index
    %c0_170 = arith.constant 0 : index
    %c0_171 = arith.constant 0 : index
    %169 = vector.load %arg19[%c2_169, %c0_170, %c0_171] : memref<10x10x16xf32, #tpu.memory_space<vmem>>, vector<8x8x16xf32>
    %170 = vector.shape_cast %169 : vector<8x8x16xf32> to vector<64x16xf32>
    %c0_172 = arith.constant 0 : index
    %c96_173 = arith.constant 96 : index
    %171 = vector.load %arg24[%c0_172, %c96_173] : memref<64x144xf32, #tpu.memory_space<vmem>>, vector<64x16xf32>
    tpu.vector_store %arg24[%c0_172, %c96_173], %170 {strides = array<i32>} : memref<64x144xf32, #tpu.memory_space<vmem>>, vector<64x16xf32>,
    %c2_174 = arith.constant 2 : index
    %c1_175 = arith.constant 1 : index
    %c0_176 = arith.constant 0 : index
    %172 = vector.load %arg19[%c2_174, %c1_175, %c0_176] : memref<10x10x16xf32, #tpu.memory_space<vmem>>, vector<8x8x16xf32>
    %173 = vector.shape_cast %172 : vector<8x8x16xf32> to vector<64x16xf32>
    %c0_177 = arith.constant 0 : index
    %c112_178 = arith.constant 112 : index
    %174 = vector.load %arg24[%c0_177, %c112_178] : memref<64x144xf32, #tpu.memory_space<vmem>>, vector<64x16xf32>
    tpu.vector_store %arg24[%c0_177, %c112_178], %173 {strides = array<i32>} : memref<64x144xf32, #tpu.memory_space<vmem>>, vector<64x16xf32>,
    %c2_179 = arith.constant 2 : index
    %c2_180 = arith.constant 2 : index
    %c0_181 = arith.constant 0 : index
    %175 = vector.load %arg19[%c2_179, %c2_180, %c0_181] : memref<10x10x16xf32, #tpu.memory_space<vmem>>, vector<8x8x16xf32>
    %176 = vector.shape_cast %175 : vector<8x8x16xf32> to vector<64x16xf32>
    %c0_182 = arith.constant 0 : index
    %c128_183 = arith.constant 128 : index
    %177 = vector.load %arg24[%c0_182, %c128_183] : memref<64x144xf32, #tpu.memory_space<vmem>>, vector<64x16xf32>
    tpu.vector_store %arg24[%c0_182, %c128_183], %176 {strides = array<i32>} : memref<64x144xf32, #tpu.memory_space<vmem>>, vector<64x16xf32>,
    %c0_184 = arith.constant 0 : index
    %c0_185 = arith.constant 0 : index
    %178 = vector.load %arg24[%c0_184, %c0_185] : memref<64x144xf32, #tpu.memory_space<vmem>>, vector<64x144xf32>
    %c0_186 = arith.constant 0 : index
    %c0_187 = arith.constant 0 : index
    %179 = vector.load %arg6[%c0_186, %c0_187] : memref<144x64xf32, #tpu.memory_space<vmem>>, vector<144x64xf32>
    %cst_188 = arith.constant dense<0.000000e+00> : vector<64x64xf32>
    %180 = tpu.matmul %178, %179, %cst_188 {dimension_numbers = #tpu.dot_dimension_numbers<[1], [0], [0], [1], [0, 0, 1, 1], [], []>} : vector<64x144xf32>, vector<144x64xf32>, vector<64x64xf32> -> vector<64x64xf32>
    %c0_189 = arith.constant 0 : index
    %c0_190 = arith.constant 0 : index
    %181 = vector.load %arg7[%c0_189, %c0_190] : memref<1x64xf32, #tpu.memory_space<vmem>>, vector<1x64xf32>
    %182 = vector.broadcast %181 : vector<1x64xf32> to vector<64x64xf32>
    %183 = arith.addf %180, %182 : vector<64x64xf32>
    %cst_191 = arith.constant 0.000000e+00 : f32
    %184 = vector.broadcast %cst_191 : f32 to vector<64x64xf32>
    %185 = arith.maximumf %183, %184 : vector<64x64xf32>
    %186 = vector.shape_cast %185 : vector<64x64xf32> to vector<8x8x64xf32>
    %cst_192 = arith.constant 0.000000e+00 : f32
    %187 = vector.broadcast %cst_192 : f32 to vector<10x10x64xf32>
    %c0_193 = arith.constant 0 : index
    %c0_194 = arith.constant 0 : index
    %c0_195 = arith.constant 0 : index
    %188 = vector.load %arg20[%c0_193, %c0_194, %c0_195] : memref<10x10x64xf32, #tpu.memory_space<vmem>>, vector<10x10x64xf32>
    tpu.vector_store %arg20[%c0_193, %c0_194, %c0_195], %187 {strides = array<i32>} : memref<10x10x64xf32, #tpu.memory_space<vmem>>, vector<10x10x64xf32>,
    %c1_196 = arith.constant 1 : index
    %c1_197 = arith.constant 1 : index
    %c0_198 = arith.constant 0 : index
    %189 = vector.load %arg20[%c1_196, %c1_197, %c0_198] : memref<10x10x64xf32, #tpu.memory_space<vmem>>, vector<8x8x64xf32>
    tpu.vector_store %arg20[%c1_196, %c1_197, %c0_198], %186 {strides = array<i32>} : memref<10x10x64xf32, #tpu.memory_space<vmem>>, vector<8x8x64xf32>,
    %c0_199 = arith.constant 0 : index
    %c0_200 = arith.constant 0 : index
    %c0_201 = arith.constant 0 : index
    %190 = vector.load %arg20[%c0_199, %c0_200, %c0_201] : memref<10x10x64xf32, #tpu.memory_space<vmem>>, vector<8x8x64xf32>
    %191 = vector.shape_cast %190 : vector<8x8x64xf32> to vector<64x64xf32>
    %c0_202 = arith.constant 0 : index
    %c0_203 = arith.constant 0 : index
    %192 = vector.load %arg25[%c0_202, %c0_203] : memref<64x576xf32, #tpu.memory_space<vmem>>, vector<64x64xf32>
    tpu.vector_store %arg25[%c0_202, %c0_203], %191 {strides = array<i32>} : memref<64x576xf32, #tpu.memory_space<vmem>>, vector<64x64xf32>,
    %c0_204 = arith.constant 0 : index
    %c1_205 = arith.constant 1 : index
    %c0_206 = arith.constant 0 : index
    %193 = vector.load %arg20[%c0_204, %c1_205, %c0_206] : memref<10x10x64xf32, #tpu.memory_space<vmem>>, vector<8x8x64xf32>
    %194 = vector.shape_cast %193 : vector<8x8x64xf32> to vector<64x64xf32>
    %c0_207 = arith.constant 0 : index
    %c64_208 = arith.constant 64 : index
    %195 = vector.load %arg25[%c0_207, %c64_208] : memref<64x576xf32, #tpu.memory_space<vmem>>, vector<64x64xf32>
    tpu.vector_store %arg25[%c0_207, %c64_208], %194 {strides = array<i32>} : memref<64x576xf32, #tpu.memory_space<vmem>>, vector<64x64xf32>,
    %c0_209 = arith.constant 0 : index
    %c2_210 = arith.constant 2 : index
    %c0_211 = arith.constant 0 : index
    %196 = vector.load %arg20[%c0_209, %c2_210, %c0_211] : memref<10x10x64xf32, #tpu.memory_space<vmem>>, vector<8x8x64xf32>
    %197 = vector.shape_cast %196 : vector<8x8x64xf32> to vector<64x64xf32>
    %c0_212 = arith.constant 0 : index
    %c128_213 = arith.constant 128 : index
    %198 = vector.load %arg25[%c0_212, %c128_213] : memref<64x576xf32, #tpu.memory_space<vmem>>, vector<64x64xf32>
    tpu.vector_store %arg25[%c0_212, %c128_213], %197 {strides = array<i32>} : memref<64x576xf32, #tpu.memory_space<vmem>>, vector<64x64xf32>,
    %c1_214 = arith.constant 1 : index
    %c0_215 = arith.constant 0 : index
    %c0_216 = arith.constant 0 : index
    %199 = vector.load %arg20[%c1_214, %c0_215, %c0_216] : memref<10x10x64xf32, #tpu.memory_space<vmem>>, vector<8x8x64xf32>
    %200 = vector.shape_cast %199 : vector<8x8x64xf32> to vector<64x64xf32>
    %c0_217 = arith.constant 0 : index
    %c192 = arith.constant 192 : index
    %201 = vector.load %arg25[%c0_217, %c192] : memref<64x576xf32, #tpu.memory_space<vmem>>, vector<64x64xf32>
    tpu.vector_store %arg25[%c0_217, %c192], %200 {strides = array<i32>} : memref<64x576xf32, #tpu.memory_space<vmem>>, vector<64x64xf32>,
    %c1_218 = arith.constant 1 : index
    %c1_219 = arith.constant 1 : index
    %c0_220 = arith.constant 0 : index
    %202 = vector.load %arg20[%c1_218, %c1_219, %c0_220] : memref<10x10x64xf32, #tpu.memory_space<vmem>>, vector<8x8x64xf32>
    %203 = vector.shape_cast %202 : vector<8x8x64xf32> to vector<64x64xf32>
    %c0_221 = arith.constant 0 : index
    %c256 = arith.constant 256 : index
    %204 = vector.load %arg25[%c0_221, %c256] : memref<64x576xf32, #tpu.memory_space<vmem>>, vector<64x64xf32>
    tpu.vector_store %arg25[%c0_221, %c256], %203 {strides = array<i32>} : memref<64x576xf32, #tpu.memory_space<vmem>>, vector<64x64xf32>,
    %c1_222 = arith.constant 1 : index
    %c2_223 = arith.constant 2 : index
    %c0_224 = arith.constant 0 : index
    %205 = vector.load %arg20[%c1_222, %c2_223, %c0_224] : memref<10x10x64xf32, #tpu.memory_space<vmem>>, vector<8x8x64xf32>
    %206 = vector.shape_cast %205 : vector<8x8x64xf32> to vector<64x64xf32>
    %c0_225 = arith.constant 0 : index
    %c320 = arith.constant 320 : index
    %207 = vector.load %arg25[%c0_225, %c320] : memref<64x576xf32, #tpu.memory_space<vmem>>, vector<64x64xf32>
    tpu.vector_store %arg25[%c0_225, %c320], %206 {strides = array<i32>} : memref<64x576xf32, #tpu.memory_space<vmem>>, vector<64x64xf32>,
    %c2_226 = arith.constant 2 : index
    %c0_227 = arith.constant 0 : index
    %c0_228 = arith.constant 0 : index
    %208 = vector.load %arg20[%c2_226, %c0_227, %c0_228] : memref<10x10x64xf32, #tpu.memory_space<vmem>>, vector<8x8x64xf32>
    %209 = vector.shape_cast %208 : vector<8x8x64xf32> to vector<64x64xf32>
    %c0_229 = arith.constant 0 : index
    %c384 = arith.constant 384 : index
    %210 = vector.load %arg25[%c0_229, %c384] : memref<64x576xf32, #tpu.memory_space<vmem>>, vector<64x64xf32>
    tpu.vector_store %arg25[%c0_229, %c384], %209 {strides = array<i32>} : memref<64x576xf32, #tpu.memory_space<vmem>>, vector<64x64xf32>,
    %c2_230 = arith.constant 2 : index
    %c1_231 = arith.constant 1 : index
    %c0_232 = arith.constant 0 : index
    %211 = vector.load %arg20[%c2_230, %c1_231, %c0_232] : memref<10x10x64xf32, #tpu.memory_space<vmem>>, vector<8x8x64xf32>
    %212 = vector.shape_cast %211 : vector<8x8x64xf32> to vector<64x64xf32>
    %c0_233 = arith.constant 0 : index
    %c448 = arith.constant 448 : index
    %213 = vector.load %arg25[%c0_233, %c448] : memref<64x576xf32, #tpu.memory_space<vmem>>, vector<64x64xf32>
    tpu.vector_store %arg25[%c0_233, %c448], %212 {strides = array<i32>} : memref<64x576xf32, #tpu.memory_space<vmem>>, vector<64x64xf32>,
    %c2_234 = arith.constant 2 : index
    %c2_235 = arith.constant 2 : index
    %c0_236 = arith.constant 0 : index
    %214 = vector.load %arg20[%c2_234, %c2_235, %c0_236] : memref<10x10x64xf32, #tpu.memory_space<vmem>>, vector<8x8x64xf32>
    %215 = vector.shape_cast %214 : vector<8x8x64xf32> to vector<64x64xf32>
    %c0_237 = arith.constant 0 : index
    %c512 = arith.constant 512 : index
    %216 = vector.load %arg25[%c0_237, %c512] : memref<64x576xf32, #tpu.memory_space<vmem>>, vector<64x64xf32>
    tpu.vector_store %arg25[%c0_237, %c512], %215 {strides = array<i32>} : memref<64x576xf32, #tpu.memory_space<vmem>>, vector<64x64xf32>,
    %c0_238 = arith.constant 0 : index
    %c0_239 = arith.constant 0 : index
    %217 = vector.load %arg25[%c0_238, %c0_239] : memref<64x576xf32, #tpu.memory_space<vmem>>, vector<64x576xf32>
    %c0_240 = arith.constant 0 : index
    %c0_241 = arith.constant 0 : index
    %218 = vector.load %arg8[%c0_240, %c0_241] : memref<576x64xf32, #tpu.memory_space<vmem>>, vector<576x64xf32>
    %cst_242 = arith.constant dense<0.000000e+00> : vector<64x64xf32>
    %219 = tpu.matmul %217, %218, %cst_242 {dimension_numbers = #tpu.dot_dimension_numbers<[1], [0], [0], [1], [0, 0, 1, 1], [], []>} : vector<64x576xf32>, vector<576x64xf32>, vector<64x64xf32> -> vector<64x64xf32>
    %c0_243 = arith.constant 0 : index
    %c0_244 = arith.constant 0 : index
    %220 = vector.load %arg9[%c0_243, %c0_244] : memref<1x64xf32, #tpu.memory_space<vmem>>, vector<1x64xf32>
    %221 = vector.broadcast %220 : vector<1x64xf32> to vector<64x64xf32>
    %222 = arith.addf %219, %221 : vector<64x64xf32>
    %cst_245 = arith.constant 0.000000e+00 : f32
    %223 = vector.broadcast %cst_245 : f32 to vector<64x64xf32>
    %224 = arith.maximumf %222, %223 : vector<64x64xf32>
    %225 = vector.shape_cast %224 : vector<64x64xf32> to vector<8x8x64xf32>
    %c0_246 = arith.constant 0 : index
    %c0_247 = arith.constant 0 : index
    %c0_248 = arith.constant 0 : index
    %c0_249 = arith.constant 0 : index
    %226 = vector.load %arg15[%c0_246, %c0_247, %c0_248, %c0_249] : memref<1x8x8x64xf32, #tpu.memory_space<vmem>>, vector<1x8x8x64xf32>
    %227 = vector.shape_cast %226 : vector<1x8x8x64xf32> to vector<8x8x64xf32>
    %228 = vector.shape_cast %225 : vector<8x8x64xf32> to vector<1x8x8x64xf32>
    tpu.vector_store %arg15[%c0_246, %c0_247, %c0_248, %c0_249], %228 {strides = array<i32>} : memref<1x8x8x64xf32, #tpu.memory_space<vmem>>, vector<1x8x8x64xf32>,
    %cst_250 = arith.constant 0.000000e+00 : f32
    %229 = vector.broadcast %cst_250 : f32 to vector<6x10x64xf32>
    %c0_251 = arith.constant 0 : index
    %c0_252 = arith.constant 0 : index
    %c0_253 = arith.constant 0 : index
    %230 = vector.load %arg21[%c0_251, %c0_252, %c0_253] : memref<6x10x64xf32, #tpu.memory_space<vmem>>, vector<6x10x64xf32>
    tpu.vector_store %arg21[%c0_251, %c0_252, %c0_253], %229 {strides = array<i32>} : memref<6x10x64xf32, #tpu.memory_space<vmem>>, vector<6x10x64xf32>,
    %231 = vector.shape_cast %225 : vector<8x8x64xf32> to vector<4x2x8x64xf32>
    %cst_254 = arith.constant dense<0xFF800000> : vector<4x8x64xf32>
    %232 = vector.multi_reduction <maximumf>, %231, %cst_254 [1] : vector<4x2x8x64xf32> to vector<4x8x64xf32>
    %233 = vector.extract_strided_slice %232 {offsets = [0, 0, 0], sizes = [4, 1, 64], strides = [1, 1, 1]} : vector<4x8x64xf32> to vector<4x1x64xf32>
    %234 = vector.shape_cast %233 : vector<4x1x64xf32> to vector<4x64xf32>
    %235 = vector.extract_strided_slice %232 {offsets = [0, 1, 0], sizes = [4, 1, 64], strides = [1, 1, 1]} : vector<4x8x64xf32> to vector<4x1x64xf32>
    %236 = vector.shape_cast %235 : vector<4x1x64xf32> to vector<4x64xf32>
    %237 = arith.maximumf %234, %236 : vector<4x64xf32>
    %c1_255 = arith.constant 1 : index
    %c1_256 = arith.constant 1 : index
    %c0_257 = arith.constant 0 : index
    %238 = vector.load %arg21[%c1_255, %c1_256, %c0_257] : memref<6x10x64xf32, #tpu.memory_space<vmem>>, vector<4x1x64xf32>
    %239 = vector.shape_cast %238 : vector<4x1x64xf32> to vector<4x64xf32>
    %240 = vector.shape_cast %237 : vector<4x64xf32> to vector<4x1x64xf32>
    tpu.vector_store %arg21[%c1_255, %c1_256, %c0_257], %240 {strides = array<i32>} : memref<6x10x64xf32, #tpu.memory_space<vmem>>, vector<4x1x64xf32>,
    %241 = vector.extract_strided_slice %232 {offsets = [0, 2, 0], sizes = [4, 1, 64], strides = [1, 1, 1]} : vector<4x8x64xf32> to vector<4x1x64xf32>
    %242 = vector.shape_cast %241 : vector<4x1x64xf32> to vector<4x64xf32>
    %243 = vector.extract_strided_slice %232 {offsets = [0, 3, 0], sizes = [4, 1, 64], strides = [1, 1, 1]} : vector<4x8x64xf32> to vector<4x1x64xf32>
    %244 = vector.shape_cast %243 : vector<4x1x64xf32> to vector<4x64xf32>
    %245 = arith.maximumf %242, %244 : vector<4x64xf32>
    %c1_258 = arith.constant 1 : index
    %c2_259 = arith.constant 2 : index
    %c0_260 = arith.constant 0 : index
    %246 = vector.load %arg21[%c1_258, %c2_259, %c0_260] : memref<6x10x64xf32, #tpu.memory_space<vmem>>, vector<4x1x64xf32>
    %247 = vector.shape_cast %246 : vector<4x1x64xf32> to vector<4x64xf32>
    %248 = vector.shape_cast %245 : vector<4x64xf32> to vector<4x1x64xf32>
    tpu.vector_store %arg21[%c1_258, %c2_259, %c0_260], %248 {strides = array<i32>} : memref<6x10x64xf32, #tpu.memory_space<vmem>>, vector<4x1x64xf32>,
    %249 = vector.extract_strided_slice %232 {offsets = [0, 4, 0], sizes = [4, 1, 64], strides = [1, 1, 1]} : vector<4x8x64xf32> to vector<4x1x64xf32>
    %250 = vector.shape_cast %249 : vector<4x1x64xf32> to vector<4x64xf32>
    %251 = vector.extract_strided_slice %232 {offsets = [0, 5, 0], sizes = [4, 1, 64], strides = [1, 1, 1]} : vector<4x8x64xf32> to vector<4x1x64xf32>
    %252 = vector.shape_cast %251 : vector<4x1x64xf32> to vector<4x64xf32>
    %253 = arith.maximumf %250, %252 : vector<4x64xf32>
    %c1_261 = arith.constant 1 : index
    %c3_262 = arith.constant 3 : index
    %c0_263 = arith.constant 0 : index
    %254 = vector.load %arg21[%c1_261, %c3_262, %c0_263] : memref<6x10x64xf32, #tpu.memory_space<vmem>>, vector<4x1x64xf32>
    %255 = vector.shape_cast %254 : vector<4x1x64xf32> to vector<4x64xf32>
    %256 = vector.shape_cast %253 : vector<4x64xf32> to vector<4x1x64xf32>
    tpu.vector_store %arg21[%c1_261, %c3_262, %c0_263], %256 {strides = array<i32>} : memref<6x10x64xf32, #tpu.memory_space<vmem>>, vector<4x1x64xf32>,
    %257 = vector.extract_strided_slice %232 {offsets = [0, 6, 0], sizes = [4, 1, 64], strides = [1, 1, 1]} : vector<4x8x64xf32> to vector<4x1x64xf32>
    %258 = vector.shape_cast %257 : vector<4x1x64xf32> to vector<4x64xf32>
    %259 = vector.extract_strided_slice %232 {offsets = [0, 7, 0], sizes = [4, 1, 64], strides = [1, 1, 1]} : vector<4x8x64xf32> to vector<4x1x64xf32>
    %260 = vector.shape_cast %259 : vector<4x1x64xf32> to vector<4x64xf32>
    %261 = arith.maximumf %258, %260 : vector<4x64xf32>
    %c1_264 = arith.constant 1 : index
    %c4_265 = arith.constant 4 : index
    %c0_266 = arith.constant 0 : index
    %262 = vector.load %arg21[%c1_264, %c4_265, %c0_266] : memref<6x10x64xf32, #tpu.memory_space<vmem>>, vector<4x1x64xf32>
    %263 = vector.shape_cast %262 : vector<4x1x64xf32> to vector<4x64xf32>
    %264 = vector.shape_cast %261 : vector<4x64xf32> to vector<4x1x64xf32>
    tpu.vector_store %arg21[%c1_264, %c4_265, %c0_266], %264 {strides = array<i32>} : memref<6x10x64xf32, #tpu.memory_space<vmem>>, vector<4x1x64xf32>,
    %c0_267 = arith.constant 0 : index
    %c0_268 = arith.constant 0 : index
    %c0_269 = arith.constant 0 : index
    %265 = vector.load %arg21[%c0_267, %c0_268, %c0_269] : memref<6x10x64xf32, #tpu.memory_space<vmem>>, vector<4x8x64xf32>
    %266 = vector.shape_cast %265 : vector<4x8x64xf32> to vector<32x64xf32>
    %c0_270 = arith.constant 0 : index
    %c0_271 = arith.constant 0 : index
    %267 = vector.load %arg26[%c0_270, %c0_271] : memref<32x576xf32, #tpu.memory_space<vmem>>, vector<32x64xf32>
    tpu.vector_store %arg26[%c0_270, %c0_271], %266 {strides = array<i32>} : memref<32x576xf32, #tpu.memory_space<vmem>>, vector<32x64xf32>,
    %c0_272 = arith.constant 0 : index
    %c1_273 = arith.constant 1 : index
    %c0_274 = arith.constant 0 : index
    %268 = vector.load %arg21[%c0_272, %c1_273, %c0_274] : memref<6x10x64xf32, #tpu.memory_space<vmem>>, vector<4x8x64xf32>
    %269 = vector.shape_cast %268 : vector<4x8x64xf32> to vector<32x64xf32>
    %c0_275 = arith.constant 0 : index
    %c64_276 = arith.constant 64 : index
    %270 = vector.load %arg26[%c0_275, %c64_276] : memref<32x576xf32, #tpu.memory_space<vmem>>, vector<32x64xf32>
    tpu.vector_store %arg26[%c0_275, %c64_276], %269 {strides = array<i32>} : memref<32x576xf32, #tpu.memory_space<vmem>>, vector<32x64xf32>,
    %c0_277 = arith.constant 0 : index
    %c2_278 = arith.constant 2 : index
    %c0_279 = arith.constant 0 : index
    %271 = vector.load %arg21[%c0_277, %c2_278, %c0_279] : memref<6x10x64xf32, #tpu.memory_space<vmem>>, vector<4x8x64xf32>
    %272 = vector.shape_cast %271 : vector<4x8x64xf32> to vector<32x64xf32>
    %c0_280 = arith.constant 0 : index
    %c128_281 = arith.constant 128 : index
    %273 = vector.load %arg26[%c0_280, %c128_281] : memref<32x576xf32, #tpu.memory_space<vmem>>, vector<32x64xf32>
    tpu.vector_store %arg26[%c0_280, %c128_281], %272 {strides = array<i32>} : memref<32x576xf32, #tpu.memory_space<vmem>>, vector<32x64xf32>,
    %c1_282 = arith.constant 1 : index
    %c0_283 = arith.constant 0 : index
    %c0_284 = arith.constant 0 : index
    %274 = vector.load %arg21[%c1_282, %c0_283, %c0_284] : memref<6x10x64xf32, #tpu.memory_space<vmem>>, vector<4x8x64xf32>
    %275 = vector.shape_cast %274 : vector<4x8x64xf32> to vector<32x64xf32>
    %c0_285 = arith.constant 0 : index
    %c192_286 = arith.constant 192 : index
    %276 = vector.load %arg26[%c0_285, %c192_286] : memref<32x576xf32, #tpu.memory_space<vmem>>, vector<32x64xf32>
    tpu.vector_store %arg26[%c0_285, %c192_286], %275 {strides = array<i32>} : memref<32x576xf32, #tpu.memory_space<vmem>>, vector<32x64xf32>,
    %c1_287 = arith.constant 1 : index
    %c1_288 = arith.constant 1 : index
    %c0_289 = arith.constant 0 : index
    %277 = vector.load %arg21[%c1_287, %c1_288, %c0_289] : memref<6x10x64xf32, #tpu.memory_space<vmem>>, vector<4x8x64xf32>
    %278 = vector.shape_cast %277 : vector<4x8x64xf32> to vector<32x64xf32>
    %c0_290 = arith.constant 0 : index
    %c256_291 = arith.constant 256 : index
    %279 = vector.load %arg26[%c0_290, %c256_291] : memref<32x576xf32, #tpu.memory_space<vmem>>, vector<32x64xf32>
    tpu.vector_store %arg26[%c0_290, %c256_291], %278 {strides = array<i32>} : memref<32x576xf32, #tpu.memory_space<vmem>>, vector<32x64xf32>,
    %c1_292 = arith.constant 1 : index
    %c2_293 = arith.constant 2 : index
    %c0_294 = arith.constant 0 : index
    %280 = vector.load %arg21[%c1_292, %c2_293, %c0_294] : memref<6x10x64xf32, #tpu.memory_space<vmem>>, vector<4x8x64xf32>
    %281 = vector.shape_cast %280 : vector<4x8x64xf32> to vector<32x64xf32>
    %c0_295 = arith.constant 0 : index
    %c320_296 = arith.constant 320 : index
    %282 = vector.load %arg26[%c0_295, %c320_296] : memref<32x576xf32, #tpu.memory_space<vmem>>, vector<32x64xf32>
    tpu.vector_store %arg26[%c0_295, %c320_296], %281 {strides = array<i32>} : memref<32x576xf32, #tpu.memory_space<vmem>>, vector<32x64xf32>,
    %c2_297 = arith.constant 2 : index
    %c0_298 = arith.constant 0 : index
    %c0_299 = arith.constant 0 : index
    %283 = vector.load %arg21[%c2_297, %c0_298, %c0_299] : memref<6x10x64xf32, #tpu.memory_space<vmem>>, vector<4x8x64xf32>
    %284 = vector.shape_cast %283 : vector<4x8x64xf32> to vector<32x64xf32>
    %c0_300 = arith.constant 0 : index
    %c384_301 = arith.constant 384 : index
    %285 = vector.load %arg26[%c0_300, %c384_301] : memref<32x576xf32, #tpu.memory_space<vmem>>, vector<32x64xf32>
    tpu.vector_store %arg26[%c0_300, %c384_301], %284 {strides = array<i32>} : memref<32x576xf32, #tpu.memory_space<vmem>>, vector<32x64xf32>,
    %c2_302 = arith.constant 2 : index
    %c1_303 = arith.constant 1 : index
    %c0_304 = arith.constant 0 : index
    %286 = vector.load %arg21[%c2_302, %c1_303, %c0_304] : memref<6x10x64xf32, #tpu.memory_space<vmem>>, vector<4x8x64xf32>
    %287 = vector.shape_cast %286 : vector<4x8x64xf32> to vector<32x64xf32>
    %c0_305 = arith.constant 0 : index
    %c448_306 = arith.constant 448 : index
    %288 = vector.load %arg26[%c0_305, %c448_306] : memref<32x576xf32, #tpu.memory_space<vmem>>, vector<32x64xf32>
    tpu.vector_store %arg26[%c0_305, %c448_306], %287 {strides = array<i32>} : memref<32x576xf32, #tpu.memory_space<vmem>>, vector<32x64xf32>,
    %c2_307 = arith.constant 2 : index
    %c2_308 = arith.constant 2 : index
    %c0_309 = arith.constant 0 : index
    %289 = vector.load %arg21[%c2_307, %c2_308, %c0_309] : memref<6x10x64xf32, #tpu.memory_space<vmem>>, vector<4x8x64xf32>
    %290 = vector.shape_cast %289 : vector<4x8x64xf32> to vector<32x64xf32>
    %c0_310 = arith.constant 0 : index
    %c512_311 = arith.constant 512 : index
    %291 = vector.load %arg26[%c0_310, %c512_311] : memref<32x576xf32, #tpu.memory_space<vmem>>, vector<32x64xf32>
    tpu.vector_store %arg26[%c0_310, %c512_311], %290 {strides = array<i32>} : memref<32x576xf32, #tpu.memory_space<vmem>>, vector<32x64xf32>,
    %c0_312 = arith.constant 0 : index
    %c0_313 = arith.constant 0 : index
    %292 = vector.load %arg26[%c0_312, %c0_313] : memref<32x576xf32, #tpu.memory_space<vmem>>, vector<32x576xf32>
    %c0_314 = arith.constant 0 : index
    %c0_315 = arith.constant 0 : index
    %293 = vector.load %arg10[%c0_314, %c0_315] : memref<576x128xf32, #tpu.memory_space<vmem>>, vector<576x128xf32>
    %cst_316 = arith.constant dense<0.000000e+00> : vector<32x128xf32>
    %294 = tpu.matmul %292, %293, %cst_316 {dimension_numbers = #tpu.dot_dimension_numbers<[1], [0], [0], [1], [0, 0, 1, 1], [], []>} : vector<32x576xf32>, vector<576x128xf32>, vector<32x128xf32> -> vector<32x128xf32>
    %c0_317 = arith.constant 0 : index
    %c0_318 = arith.constant 0 : index
    %295 = vector.load %arg11[%c0_317, %c0_318] : memref<1x128xf32, #tpu.memory_space<vmem>>, vector<1x128xf32>
    %296 = vector.broadcast %295 : vector<1x128xf32> to vector<32x128xf32>
    %297 = arith.addf %294, %296 : vector<32x128xf32>
    %cst_319 = arith.constant 0.000000e+00 : f32
    %298 = vector.broadcast %cst_319 : f32 to vector<32x128xf32>
    %299 = arith.maximumf %297, %298 : vector<32x128xf32>
    %300 = vector.shape_cast %299 : vector<32x128xf32> to vector<4x8x128xf32>
    %cst_320 = arith.constant 0.000000e+00 : f32
    %301 = vector.broadcast %cst_320 : f32 to vector<6x10x128xf32>
    %c0_321 = arith.constant 0 : index
    %c0_322 = arith.constant 0 : index
    %c0_323 = arith.constant 0 : index
    %302 = vector.load %arg22[%c0_321, %c0_322, %c0_323] : memref<6x10x128xf32, #tpu.memory_space<vmem>>, vector<6x10x128xf32>
    tpu.vector_store %arg22[%c0_321, %c0_322, %c0_323], %301 {strides = array<i32>} : memref<6x10x128xf32, #tpu.memory_space<vmem>>, vector<6x10x128xf32>,
    %303 = vector.extract_strided_slice %300 {offsets = [0, 0, 0], sizes = [4, 4, 128], strides = [1, 1, 1]} : vector<4x8x128xf32> to vector<4x4x128xf32>
    %c1_324 = arith.constant 1 : index
    %c1_325 = arith.constant 1 : index
    %c0_326 = arith.constant 0 : index
    %304 = vector.load %arg22[%c1_324, %c1_325, %c0_326] : memref<6x10x128xf32, #tpu.memory_space<vmem>>, vector<4x4x128xf32>
    tpu.vector_store %arg22[%c1_324, %c1_325, %c0_326], %303 {strides = array<i32>} : memref<6x10x128xf32, #tpu.memory_space<vmem>>, vector<4x4x128xf32>,
    %c0_327 = arith.constant 0 : index
    %c0_328 = arith.constant 0 : index
    %c0_329 = arith.constant 0 : index
    %305 = vector.load %arg22[%c0_327, %c0_328, %c0_329] : memref<6x10x128xf32, #tpu.memory_space<vmem>>, vector<4x8x128xf32>
    %306 = vector.shape_cast %305 : vector<4x8x128xf32> to vector<32x128xf32>
    %c0_330 = arith.constant 0 : index
    %c0_331 = arith.constant 0 : index
    %307 = vector.load %arg27[%c0_330, %c0_331] : memref<32x1152xf32, #tpu.memory_space<vmem>>, vector<32x128xf32>
    tpu.vector_store %arg27[%c0_330, %c0_331], %306 {strides = array<i32>} : memref<32x1152xf32, #tpu.memory_space<vmem>>, vector<32x128xf32>,
    %c0_332 = arith.constant 0 : index
    %c1_333 = arith.constant 1 : index
    %c0_334 = arith.constant 0 : index
    %308 = vector.load %arg22[%c0_332, %c1_333, %c0_334] : memref<6x10x128xf32, #tpu.memory_space<vmem>>, vector<4x8x128xf32>
    %309 = vector.shape_cast %308 : vector<4x8x128xf32> to vector<32x128xf32>
    %c0_335 = arith.constant 0 : index
    %c128_336 = arith.constant 128 : index
    %310 = vector.load %arg27[%c0_335, %c128_336] : memref<32x1152xf32, #tpu.memory_space<vmem>>, vector<32x128xf32>
    tpu.vector_store %arg27[%c0_335, %c128_336], %309 {strides = array<i32>} : memref<32x1152xf32, #tpu.memory_space<vmem>>, vector<32x128xf32>,
    %c0_337 = arith.constant 0 : index
    %c2_338 = arith.constant 2 : index
    %c0_339 = arith.constant 0 : index
    %311 = vector.load %arg22[%c0_337, %c2_338, %c0_339] : memref<6x10x128xf32, #tpu.memory_space<vmem>>, vector<4x8x128xf32>
    %312 = vector.shape_cast %311 : vector<4x8x128xf32> to vector<32x128xf32>
    %c0_340 = arith.constant 0 : index
    %c256_341 = arith.constant 256 : index
    %313 = vector.load %arg27[%c0_340, %c256_341] : memref<32x1152xf32, #tpu.memory_space<vmem>>, vector<32x128xf32>
    tpu.vector_store %arg27[%c0_340, %c256_341], %312 {strides = array<i32>} : memref<32x1152xf32, #tpu.memory_space<vmem>>, vector<32x128xf32>,
    %c1_342 = arith.constant 1 : index
    %c0_343 = arith.constant 0 : index
    %c0_344 = arith.constant 0 : index
    %314 = vector.load %arg22[%c1_342, %c0_343, %c0_344] : memref<6x10x128xf32, #tpu.memory_space<vmem>>, vector<4x8x128xf32>
    %315 = vector.shape_cast %314 : vector<4x8x128xf32> to vector<32x128xf32>
    %c0_345 = arith.constant 0 : index
    %c384_346 = arith.constant 384 : index
    %316 = vector.load %arg27[%c0_345, %c384_346] : memref<32x1152xf32, #tpu.memory_space<vmem>>, vector<32x128xf32>
    tpu.vector_store %arg27[%c0_345, %c384_346], %315 {strides = array<i32>} : memref<32x1152xf32, #tpu.memory_space<vmem>>, vector<32x128xf32>,
    %c1_347 = arith.constant 1 : index
    %c1_348 = arith.constant 1 : index
    %c0_349 = arith.constant 0 : index
    %317 = vector.load %arg22[%c1_347, %c1_348, %c0_349] : memref<6x10x128xf32, #tpu.memory_space<vmem>>, vector<4x8x128xf32>
    %318 = vector.shape_cast %317 : vector<4x8x128xf32> to vector<32x128xf32>
    %c0_350 = arith.constant 0 : index
    %c512_351 = arith.constant 512 : index
    %319 = vector.load %arg27[%c0_350, %c512_351] : memref<32x1152xf32, #tpu.memory_space<vmem>>, vector<32x128xf32>
    tpu.vector_store %arg27[%c0_350, %c512_351], %318 {strides = array<i32>} : memref<32x1152xf32, #tpu.memory_space<vmem>>, vector<32x128xf32>,
    %c1_352 = arith.constant 1 : index
    %c2_353 = arith.constant 2 : index
    %c0_354 = arith.constant 0 : index
    %320 = vector.load %arg22[%c1_352, %c2_353, %c0_354] : memref<6x10x128xf32, #tpu.memory_space<vmem>>, vector<4x8x128xf32>
    %321 = vector.shape_cast %320 : vector<4x8x128xf32> to vector<32x128xf32>
    %c0_355 = arith.constant 0 : index
    %c640 = arith.constant 640 : index
    %322 = vector.load %arg27[%c0_355, %c640] : memref<32x1152xf32, #tpu.memory_space<vmem>>, vector<32x128xf32>
    tpu.vector_store %arg27[%c0_355, %c640], %321 {strides = array<i32>} : memref<32x1152xf32, #tpu.memory_space<vmem>>, vector<32x128xf32>,
    %c2_356 = arith.constant 2 : index
    %c0_357 = arith.constant 0 : index
    %c0_358 = arith.constant 0 : index
    %323 = vector.load %arg22[%c2_356, %c0_357, %c0_358] : memref<6x10x128xf32, #tpu.memory_space<vmem>>, vector<4x8x128xf32>
    %324 = vector.shape_cast %323 : vector<4x8x128xf32> to vector<32x128xf32>
    %c0_359 = arith.constant 0 : index
    %c768 = arith.constant 768 : index
    %325 = vector.load %arg27[%c0_359, %c768] : memref<32x1152xf32, #tpu.memory_space<vmem>>, vector<32x128xf32>
    tpu.vector_store %arg27[%c0_359, %c768], %324 {strides = array<i32>} : memref<32x1152xf32, #tpu.memory_space<vmem>>, vector<32x128xf32>,
    %c2_360 = arith.constant 2 : index
    %c1_361 = arith.constant 1 : index
    %c0_362 = arith.constant 0 : index
    %326 = vector.load %arg22[%c2_360, %c1_361, %c0_362] : memref<6x10x128xf32, #tpu.memory_space<vmem>>, vector<4x8x128xf32>
    %327 = vector.shape_cast %326 : vector<4x8x128xf32> to vector<32x128xf32>
    %c0_363 = arith.constant 0 : index
    %c896 = arith.constant 896 : index
    %328 = vector.load %arg27[%c0_363, %c896] : memref<32x1152xf32, #tpu.memory_space<vmem>>, vector<32x128xf32>
    tpu.vector_store %arg27[%c0_363, %c896], %327 {strides = array<i32>} : memref<32x1152xf32, #tpu.memory_space<vmem>>, vector<32x128xf32>,
    %c2_364 = arith.constant 2 : index
    %c2_365 = arith.constant 2 : index
    %c0_366 = arith.constant 0 : index
    %329 = vector.load %arg22[%c2_364, %c2_365, %c0_366] : memref<6x10x128xf32, #tpu.memory_space<vmem>>, vector<4x8x128xf32>
    %330 = vector.shape_cast %329 : vector<4x8x128xf32> to vector<32x128xf32>
    %c0_367 = arith.constant 0 : index
    %c1024 = arith.constant 1024 : index
    %331 = vector.load %arg27[%c0_367, %c1024] : memref<32x1152xf32, #tpu.memory_space<vmem>>, vector<32x128xf32>
    tpu.vector_store %arg27[%c0_367, %c1024], %330 {strides = array<i32>} : memref<32x1152xf32, #tpu.memory_space<vmem>>, vector<32x128xf32>,
    %c0_368 = arith.constant 0 : index
    %c0_369 = arith.constant 0 : index
    %332 = vector.load %arg27[%c0_368, %c0_369] : memref<32x1152xf32, #tpu.memory_space<vmem>>, vector<32x1152xf32>
    %c0_370 = arith.constant 0 : index
    %c0_371 = arith.constant 0 : index
    %333 = vector.load %arg12[%c0_370, %c0_371] : memref<1152x128xf32, #tpu.memory_space<vmem>>, vector<1152x128xf32>
    %cst_372 = arith.constant dense<0.000000e+00> : vector<32x128xf32>
    %334 = tpu.matmul %332, %333, %cst_372 {dimension_numbers = #tpu.dot_dimension_numbers<[1], [0], [0], [1], [0, 0, 1, 1], [], []>} : vector<32x1152xf32>, vector<1152x128xf32>, vector<32x128xf32> -> vector<32x128xf32>
    %c0_373 = arith.constant 0 : index
    %c0_374 = arith.constant 0 : index
    %335 = vector.load %arg13[%c0_373, %c0_374] : memref<1x128xf32, #tpu.memory_space<vmem>>, vector<1x128xf32>
    %336 = vector.broadcast %335 : vector<1x128xf32> to vector<32x128xf32>
    %337 = arith.addf %334, %336 : vector<32x128xf32>
    %cst_375 = arith.constant 0.000000e+00 : f32
    %338 = vector.broadcast %cst_375 : f32 to vector<32x128xf32>
    %339 = arith.maximumf %337, %338 : vector<32x128xf32>
    %340 = vector.shape_cast %339 : vector<32x128xf32> to vector<4x8x128xf32>
    %341 = vector.extract_strided_slice %340 {offsets = [0, 0, 0], sizes = [4, 4, 128], strides = [1, 1, 1]} : vector<4x8x128xf32> to vector<4x4x128xf32>
    %c0_376 = arith.constant 0 : index
    %c0_377 = arith.constant 0 : index
    %c0_378 = arith.constant 0 : index
    %c0_379 = arith.constant 0 : index
    %342 = vector.load %arg16[%c0_376, %c0_377, %c0_378, %c0_379] : memref<1x4x4x128xf32, #tpu.memory_space<vmem>>, vector<1x4x4x128xf32>
    %343 = vector.shape_cast %342 : vector<1x4x4x128xf32> to vector<4x4x128xf32>
    %344 = vector.shape_cast %341 : vector<4x4x128xf32> to vector<1x4x4x128xf32>
    tpu.vector_store %arg16[%c0_376, %c0_377, %c0_378, %c0_379], %344 {strides = array<i32>} : memref<1x4x4x128xf32, #tpu.memory_space<vmem>>, vector<1x4x4x128xf32>,
    return
  }
  func.func @transform_0(%arg0: i32) -> (i32, i32, i32, i32) {
    %c0_i32 = arith.constant 0 : i32
    %c0_i32_0 = arith.constant 0 : i32
    %c0_i32_1 = arith.constant 0 : i32
    %c0_i32_2 = arith.constant 0 : i32
    return %arg0, %c0_i32, %c0_i32_0, %c0_i32_1 : i32, i32, i32, i32
  }
  func.func @transform_1(%arg0: i32) -> (i32, i32) {
    %c0_i32 = arith.constant 0 : i32
    %c0_i32_0 = arith.constant 0 : i32
    %c0_i32_1 = arith.constant 0 : i32
    return %c0_i32, %c0_i32_0 : i32, i32
  }
  func.func @transform_2(%arg0: i32) -> (i32, i32) {
    %c0_i32 = arith.constant 0 : i32
    %c0_i32_0 = arith.constant 0 : i32
    %c0_i32_1 = arith.constant 0 : i32
    return %c0_i32, %c0_i32_0 : i32, i32
  }
  func.func @transform_3(%arg0: i32) -> (i32, i32) {
    %c0_i32 = arith.constant 0 : i32
    %c0_i32_0 = arith.constant 0 : i32
    %c0_i32_1 = arith.constant 0 : i32
    return %c0_i32, %c0_i32_0 : i32, i32
  }
  func.func @transform_4(%arg0: i32) -> (i32, i32) {
    %c0_i32 = arith.constant 0 : i32
    %c0_i32_0 = arith.constant 0 : i32
    %c0_i32_1 = arith.constant 0 : i32
    return %c0_i32, %c0_i32_0 : i32, i32
  }
  func.func @transform_5(%arg0: i32) -> (i32, i32) {
    %c0_i32 = arith.constant 0 : i32
    %c0_i32_0 = arith.constant 0 : i32
    %c0_i32_1 = arith.constant 0 : i32
    return %c0_i32, %c0_i32_0 : i32, i32
  }
  func.func @transform_6(%arg0: i32) -> (i32, i32) {
    %c0_i32 = arith.constant 0 : i32
    %c0_i32_0 = arith.constant 0 : i32
    %c0_i32_1 = arith.constant 0 : i32
    return %c0_i32, %c0_i32_0 : i32, i32
  }
  func.func @transform_7(%arg0: i32) -> (i32, i32) {
    %c0_i32 = arith.constant 0 : i32
    %c0_i32_0 = arith.constant 0 : i32
    %c0_i32_1 = arith.constant 0 : i32
    return %c0_i32, %c0_i32_0 : i32, i32
  }
  func.func @transform_8(%arg0: i32) -> (i32, i32) {
    %c0_i32 = arith.constant 0 : i32
    %c0_i32_0 = arith.constant 0 : i32
    %c0_i32_1 = arith.constant 0 : i32
    return %c0_i32, %c0_i32_0 : i32, i32
  }
  func.func @transform_9(%arg0: i32) -> (i32, i32) {
    %c0_i32 = arith.constant 0 : i32
    %c0_i32_0 = arith.constant 0 : i32
    %c0_i32_1 = arith.constant 0 : i32
    return %c0_i32, %c0_i32_0 : i32, i32
  }
  func.func @transform_10(%arg0: i32) -> (i32, i32) {
    %c0_i32 = arith.constant 0 : i32
    %c0_i32_0 = arith.constant 0 : i32
    %c0_i32_1 = arith.constant 0 : i32
    return %c0_i32, %c0_i32_0 : i32, i32
  }
  func.func @transform_11(%arg0: i32) -> (i32, i32) {
    %c0_i32 = arith.constant 0 : i32
    %c0_i32_0 = arith.constant 0 : i32
    %c0_i32_1 = arith.constant 0 : i32
    return %c0_i32, %c0_i32_0 : i32, i32
  }
  func.func @transform_12(%arg0: i32) -> (i32, i32) {
    %c0_i32 = arith.constant 0 : i32
    %c0_i32_0 = arith.constant 0 : i32
    %c0_i32_1 = arith.constant 0 : i32
    return %c0_i32, %c0_i32_0 : i32, i32
  }
  func.func @transform_13(%arg0: i32) -> (i32, i32, i32, i32) {
    %c0_i32 = arith.constant 0 : i32
    %c0_i32_0 = arith.constant 0 : i32
    %c0_i32_1 = arith.constant 0 : i32
    %c0_i32_2 = arith.constant 0 : i32
    return %arg0, %c0_i32, %c0_i32_0, %c0_i32_1 : i32, i32, i32, i32
  }
  func.func @transform_14(%arg0: i32) -> (i32, i32, i32, i32) {
    %c0_i32 = arith.constant 0 : i32
    %c0_i32_0 = arith.constant 0 : i32
    %c0_i32_1 = arith.constant 0 : i32
    %c0_i32_2 = arith.constant 0 : i32
    return %arg0, %c0_i32, %c0_i32_0, %c0_i32_1 : i32, i32, i32, i32
  }
  func.func @transform_15(%arg0: i32) -> (i32, i32, i32, i32) {
    %c0_i32 = arith.constant 0 : i32
    %c0_i32_0 = arith.constant 0 : i32
    %c0_i32_1 = arith.constant 0 : i32
    %c0_i32_2 = arith.constant 0 : i32
    return %arg0, %c0_i32, %c0_i32_0, %c0_i32_1 : i32, i32, i32, i32
  }
}

</mosaic_0001>

<llo_original>
// kernel: vgg_channel2_forward.1
$region0: #{vgg_channel2_forward.1}
  #allocation0 [shape = 'u32[]', space=smem, size = 0x4, offset = 0x4, fixed_abs, tag = 'smem constant byte address 0x4 - core index']
  #allocation1 [shape = 'u32[144,128]{1,0:T(1,128)}', space=vmem, size = 0x12000, scoped, tag = 'internal scratch']
  #allocation2 [shape = 'f32[18,18,16]{2,1,0:T(8,128)}', space=vmem, size = 0x36000, scoped, tag = 'scratch operand']
  #allocation3 [shape = 'f32[18,18,16]{2,1,0:T(8,128)}', space=vmem, size = 0x36000, scoped, tag = 'scratch operand']
  #allocation4 [shape = 'f32[10,10,16]{2,1,0:T(8,128)}', space=vmem, size = 0x14000, scoped, tag = 'scratch operand']
  #allocation5 [shape = 'f32[10,10,64]{2,1,0:T(8,128)}', space=vmem, size = 0x14000, scoped, tag = 'scratch operand']
  #allocation6 [shape = 'f32[6,10,64]{2,1,0:T(8,128)}', space=vmem, size = 0xc000, scoped, tag = 'scratch operand']
  #allocation7 [shape = 'f32[6,10,128]{2,1,0:T(8,128)}', space=vmem, size = 0xc000, scoped, tag = 'scratch operand']
  #allocation8 [shape = 'f32[256,144]{1,0:T(8,128)}', space=vmem, size = 0x40000, scoped, tag = 'scratch operand']
  #allocation9 [shape = 'f32[64,144]{1,0:T(8,128)}', space=vmem, size = 0x10000, scoped, tag = 'scratch operand']
  #allocation10 [shape = 'f32[64,576]{1,0:T(8,128)}', space=vmem, size = 0x28000, scoped, tag = 'scratch operand']
  #allocation11 [shape = 'f32[32,576]{1,0:T(8,128)}', space=vmem, size = 0x14000, scoped, tag = 'scratch operand']
  #allocation12 [shape = 'f32[32,1152]{1,0:T(8,128)}', space=vmem, size = 0x24000, scoped, tag = 'scratch operand']
  %s0 = inlined_call_operand.vmem [shape: f32[2,16,16,16], index: 0, kind: input, shape index: {}]
  %s1 = inlined_call_operand.vmem [shape: f32[144,16], index: 1, kind: input, shape index: {}]
  %s2 = inlined_call_operand.vmem [shape: f32[1,16], index: 2, kind: input, shape index: {}]
  %s3 = inlined_call_operand.vmem [shape: f32[144,16], index: 3, kind: input, shape index: {}]
  %s4 = inlined_call_operand.vmem [shape: f32[1,16], index: 4, kind: input, shape index: {}]
  %s5 = inlined_call_operand.vmem [shape: f32[144,64], index: 5, kind: input, shape index: {}]
  %s6 = inlined_call_operand.vmem [shape: f32[1,64], index: 6, kind: input, shape index: {}]
  %s7 = inlined_call_operand.vmem [shape: f32[576,64], index: 7, kind: input, shape index: {}]
  %s8 = inlined_call_operand.vmem [shape: f32[1,64], index: 8, kind: input, shape index: {}]
  %s9 = inlined_call_operand.vmem [shape: f32[576,128], index: 9, kind: input, shape index: {}]
  %s10 = inlined_call_operand.vmem [shape: f32[1,128], index: 10, kind: input, shape index: {}]
  %s11 = inlined_call_operand.vmem [shape: f32[1152,128], index: 11, kind: input, shape index: {}]
  %s12 = inlined_call_operand.vmem [shape: f32[1,128], index: 12, kind: input, shape index: {}]
  %s13 = inlined_call_operand.vmem [shape: f32[2,16,16,16], index: 13, kind: output, shape index: {0}]
  %s14 = inlined_call_operand.hbm [shape: f32[2,8,8,64], index: 14, kind: output, shape index: {1}]
  %s15 = inlined_call_operand.hbm [shape: f32[2,4,4,128], index: 15, kind: output, shape index: {2}]
  %16 = xla_tuple %s13, %s14, %s15
  %s17 = sld [smem:[#allocation0]]
  $region101: #{vgg_channel2_forward.1} parent=0
    _
  %s19 = ssub.s32 1, %s17
  %s20 = scalar_select 0, %s19, %s17
  $region1: #{vgg_channel2_forward.1} parent=0
    #allocation13 [shape = 'u8[65536]{0}', space=vmem, size = 0x10000, scoped, tag = 'output window, operand 1']
    #allocation14 [shape = 's32[2]{0}', space=sflag, size = 0x8, scoped, tag = 'scoped memory for vgg_channel2_forward.1']
    #allocation15 [shape = 'u8[16384]{0}', space=vmem, size = 0x4000, scoped, tag = 'output window, operand 2']
    #allocation16 [shape = 's32[2]{0}', space=sflag, size = 0x8, scoped, tag = 'scoped memory for vgg_channel2_forward.1']
    %21 = vsyncpa [#allocation14], 0
    %s22 = scalar_lea.sflag [#allocation14], 1
    %23 = vsyncpa %s22, 0
    %24 = vsyncpa [#allocation16], 0
    %s25 = scalar_lea.sflag [#allocation16], 1
    %26 = vsyncpa %s25, 0
    loop: start=0, step=1, limit=4
    $region2: #{vgg_channel2_forward.1} parent=1 // loop_pre_header
      _
    $region3: #{vgg_channel2_forward.1} parent=1 // loop_header
      %s28 = sphi 0, %s32
      %p29 = scmp.ge.s32.totalorder %s28, 4
      %s38 = sphi 0, %s40
      %s41 = sphi 0, %s38
      %s42 = sphi 0, %s41
      %s58 = sphi 0, %s42
      %s62 = sphi 0, %s62
      %s64 = sphi 0, %s62
      %s65 = sphi 0, %s64
      %s79 = sphi 0, %s65
      %s83 = sphi 0, %s83
      %s85 = sphi 0, %s83
      %s86 = sphi 0, %s85
      %s100 = sphi 0, %s86
      %s104 = sphi 0, %s104
      %s106 = sphi 0, %s104
      %s107 = sphi 0, %s106
      %s121 = sphi 0, %s107
      %s125 = sphi 0, %s125
      %s127 = sphi 0, %s125
      %s128 = sphi 0, %s127
      %s142 = sphi 0, %s128
      %s146 = sphi 0, %s146
      %s148 = sphi 0, %s146
      %s149 = sphi 0, %s148
      %s163 = sphi 0, %s149
      %s167 = sphi 0, %s167
      %s169 = sphi 0, %s167
      %s170 = sphi 0, %s169
      %s184 = sphi 0, %s170
      %s188 = sphi 0, %s188
      %s190 = sphi 0, %s188
      %s191 = sphi 0, %s190
      %s205 = sphi 0, %s191
      %s209 = sphi 0, %s209
      %s211 = sphi 0, %s209
      %s212 = sphi 0, %s211
      %s226 = sphi 0, %s212
      %s230 = sphi 0, %s230
      %s232 = sphi 0, %s230
      %s233 = sphi 0, %s232
      %s247 = sphi 0, %s233
      %s251 = sphi 0, %s251
      %s253 = sphi 0, %s251
      %s254 = sphi 0, %s253
      %s268 = sphi 0, %s254
      %s272 = sphi 0, %s272
      %s274 = sphi 0, %s272
      %s275 = sphi 0, %s274
      %s289 = sphi 0, %s275
      %s293 = sphi 0, %s293
      %s295 = sphi 0, %s293
      %s296 = sphi 0, %s295
      %s310 = sphi 0, %s296
      %s316 = sphi 0, %s318
      %s319 = sphi 0, %s316
      %s320 = sphi 0, %s319
      %s336 = sphi 0, %s320
      %s342 = sphi 0, %s344
      %s345 = sphi 0, %s342
      %s346 = sphi 0, %s345
      %s362 = sphi 0, %s346
      %s368 = sphi 0, %s370
      %s371 = sphi 0, %s368
      %s372 = sphi 0, %s371
      %s388 = sphi 0, %s372
    $region4: #{vgg_channel2_forward.1} parent=1 // loop_header_branch
      %31 = sbr.rel (%p29) target = $region8
    $region5: #{vgg_channel2_forward.1} parent=1 // loop_body
      %s33 = ssub.s32 %s28, 1
      %s34 = ssub.s32 %s28, 2
      %s35 = sadd.s32 %s28, 1
      %s36 = ssub.s32 %s28, %s35
      %p37 = scmp.eq.s32.totalorder %s36, 0
      %s39 = sadd.s32 %s38, 1
      %s40 = scalar_select %p37, %s38, %s39
      %p43 = pneg %p37
      %p44 = scmp.eq.s32.totalorder %s28, 1
      %p45 = por %p43, %p44
      %p46 = scmp.ne.s32.totalorder %s38, %s41
      %p47 = scmp.eq.s32.totalorder %s28, 0
      %p48 = por %p46, %p47
      %p49 = scmp.ne.s32.totalorder %s38, %s41
      %p50 = scmp.eq.s32.totalorder %s33, 1
      %p51 = por %p49, %p50
      %p52 = scmp.ne.s32.totalorder %s41, %s42
      %p53 = scmp.eq.s32.totalorder %s33, 0
      %p54 = por %p52, %p53
      %p55 = scmp.ne.s32.totalorder %s41, %s42
      %p56 = scmp.eq.s32.totalorder %s34, 1
      %p57 = por %p55, %p56
      %p59 = scmp.ne.s32.totalorder %s42, %s58
      %p60 = scmp.eq.s32.totalorder %s34, 0
      %p61 = por %p59, %p60
      %s63 = sadd.s32 %s62, 1
      %p66 = scmp.eq.s32.totalorder %s28, 1
      %p67 = scmp.ne.s32.totalorder %s62, %s64
      %p68 = scmp.eq.s32.totalorder %s28, 0
      %p69 = por %p67, %p68
      %p70 = scmp.ne.s32.totalorder %s62, %s64
      %p71 = scmp.eq.s32.totalorder %s33, 1
      %p72 = por %p70, %p71
      %p73 = scmp.ne.s32.totalorder %s64, %s65
      %p74 = scmp.eq.s32.totalorder %s33, 0
      %p75 = por %p73, %p74
      %p76 = scmp.ne.s32.totalorder %s64, %s65
      %p77 = scmp.eq.s32.totalorder %s34, 1
      %p78 = por %p76, %p77
      %p80 = scmp.ne.s32.totalorder %s65, %s79
      %p81 = scmp.eq.s32.totalorder %s34, 0
      %p82 = por %p80, %p81
      %s84 = sadd.s32 %s83, 1
      %p87 = scmp.eq.s32.totalorder %s28, 1
      %p88 = scmp.ne.s32.totalorder %s83, %s85
      %p89 = scmp.eq.s32.totalorder %s28, 0
      %p90 = por %p88, %p89
      %p91 = scmp.ne.s32.totalorder %s83, %s85
      %p92 = scmp.eq.s32.totalorder %s33, 1
      %p93 = por %p91, %p92
      %p94 = scmp.ne.s32.totalorder %s85, %s86
      %p95 = scmp.eq.s32.totalorder %s33, 0
      %p96 = por %p94, %p95
      %p97 = scmp.ne.s32.totalorder %s85, %s86
      %p98 = scmp.eq.s32.totalorder %s34, 1
      %p99 = por %p97, %p98
      %p101 = scmp.ne.s32.totalorder %s86, %s100
      %p102 = scmp.eq.s32.totalorder %s34, 0
      %p103 = por %p101, %p102
      %s105 = sadd.s32 %s104, 1
      %p108 = scmp.eq.s32.totalorder %s28, 1
      %p109 = scmp.ne.s32.totalorder %s104, %s106
      %p110 = scmp.eq.s32.totalorder %s28, 0
      %p111 = por %p109, %p110
      %p112 = scmp.ne.s32.totalorder %s104, %s106
      %p113 = scmp.eq.s32.totalorder %s33, 1
      %p114 = por %p112, %p113
      %p115 = scmp.ne.s32.totalorder %s106, %s107
      %p116 = scmp.eq.s32.totalorder %s33, 0
      %p117 = por %p115, %p116
      %p118 = scmp.ne.s32.totalorder %s106, %s107
      %p119 = scmp.eq.s32.totalorder %s34, 1
      %p120 = por %p118, %p119
      %p122 = scmp.ne.s32.totalorder %s107, %s121
      %p123 = scmp.eq.s32.totalorder %s34, 0
      %p124 = por %p122, %p123
      %s126 = sadd.s32 %s125, 1
      %p129 = scmp.eq.s32.totalorder %s28, 1
      %p130 = scmp.ne.s32.totalorder %s125, %s127
      %p131 = scmp.eq.s32.totalorder %s28, 0
      %p132 = por %p130, %p131
      %p133 = scmp.ne.s32.totalorder %s125, %s127
      %p134 = scmp.eq.s32.totalorder %s33, 1
      %p135 = por %p133, %p134
      %p136 = scmp.ne.s32.totalorder %s127, %s128
      %p137 = scmp.eq.s32.totalorder %s33, 0
      %p138 = por %p136, %p137
      %p139 = scmp.ne.s32.totalorder %s127, %s128
      %p140 = scmp.eq.s32.totalorder %s34, 1
      %p141 = por %p139, %p140
      %p143 = scmp.ne.s32.totalorder %s128, %s142
      %p144 = scmp.eq.s32.totalorder %s34, 0
      %p145 = por %p143, %p144
      %s147 = sadd.s32 %s146, 1
      %p150 = scmp.eq.s32.totalorder %s28, 1
      %p151 = scmp.ne.s32.totalorder %s146, %s148
      %p152 = scmp.eq.s32.totalorder %s28, 0
      %p153 = por %p151, %p152
      %p154 = scmp.ne.s32.totalorder %s146, %s148
      %p155 = scmp.eq.s32.totalorder %s33, 1
      %p156 = por %p154, %p155
      %p157 = scmp.ne.s32.totalorder %s148, %s149
      %p158 = scmp.eq.s32.totalorder %s33, 0
      %p159 = por %p157, %p158
      %p160 = scmp.ne.s32.totalorder %s148, %s149
      %p161 = scmp.eq.s32.totalorder %s34, 1
      %p162 = por %p160, %p161
      %p164 = scmp.ne.s32.totalorder %s149, %s163
      %p165 = scmp.eq.s32.totalorder %s34, 0
      %p166 = por %p164, %p165
      %s168 = sadd.s32 %s167, 1
      %p171 = scmp.eq.s32.totalorder %s28, 1
      %p172 = scmp.ne.s32.totalorder %s167, %s169
      %p173 = scmp.eq.s32.totalorder %s28, 0
      %p174 = por %p172, %p173
      %p175 = scmp.ne.s32.totalorder %s167, %s169
      %p176 = scmp.eq.s32.totalorder %s33, 1
      %p177 = por %p175, %p176
      %p178 = scmp.ne.s32.totalorder %s169, %s170
      %p179 = scmp.eq.s32.totalorder %s33, 0
      %p180 = por %p178, %p179
      %p181 = scmp.ne.s32.totalorder %s169, %s170
      %p182 = scmp.eq.s32.totalorder %s34, 1
      %p183 = por %p181, %p182
      %p185 = scmp.ne.s32.totalorder %s170, %s184
      %p186 = scmp.eq.s32.totalorder %s34, 0
      %p187 = por %p185, %p186
      %s189 = sadd.s32 %s188, 1
      %p192 = scmp.eq.s32.totalorder %s28, 1
      %p193 = scmp.ne.s32.totalorder %s188, %s190
      %p194 = scmp.eq.s32.totalorder %s28, 0
      %p195 = por %p193, %p194
      %p196 = scmp.ne.s32.totalorder %s188, %s190
      %p197 = scmp.eq.s32.totalorder %s33, 1
      %p198 = por %p196, %p197
      %p199 = scmp.ne.s32.totalorder %s190, %s191
      %p200 = scmp.eq.s32.totalorder %s33, 0
      %p201 = por %p199, %p200
      %p202 = scmp.ne.s32.totalorder %s190, %s191
      %p203 = scmp.eq.s32.totalorder %s34, 1
      %p204 = por %p202, %p203
      %p206 = scmp.ne.s32.totalorder %s191, %s205
      %p207 = scmp.eq.s32.totalorder %s34, 0
      %p208 = por %p206, %p207
      %s210 = sadd.s32 %s209, 1
      %p213 = scmp.eq.s32.totalorder %s28, 1
      %p214 = scmp.ne.s32.totalorder %s209, %s211
      %p215 = scmp.eq.s32.totalorder %s28, 0
      %p216 = por %p214, %p215
      %p217 = scmp.ne.s32.totalorder %s209, %s211
      %p218 = scmp.eq.s32.totalorder %s33, 1
      %p219 = por %p217, %p218
      %p220 = scmp.ne.s32.totalorder %s211, %s212
      %p221 = scmp.eq.s32.totalorder %s33, 0
      %p222 = por %p220, %p221
      %p223 = scmp.ne.s32.totalorder %s211, %s212
      %p224 = scmp.eq.s32.totalorder %s34, 1
      %p225 = por %p223, %p224
      %p227 = scmp.ne.s32.totalorder %s212, %s226
      %p228 = scmp.eq.s32.totalorder %s34, 0
      %p229 = por %p227, %p228
      %s231 = sadd.s32 %s230, 1
      %p234 = scmp.eq.s32.totalorder %s28, 1
      %p235 = scmp.ne.s32.totalorder %s230, %s232
      %p236 = scmp.eq.s32.totalorder %s28, 0
      %p237 = por %p235, %p236
      %p238 = scmp.ne.s32.totalorder %s230, %s232
      %p239 = scmp.eq.s32.totalorder %s33, 1
      %p240 = por %p238, %p239
      %p241 = scmp.ne.s32.totalorder %s232, %s233
      %p242 = scmp.eq.s32.totalorder %s33, 0
      %p243 = por %p241, %p242
      %p244 = scmp.ne.s32.totalorder %s232, %s233
      %p245 = scmp.eq.s32.totalorder %s34, 1
      %p246 = por %p244, %p245
      %p248 = scmp.ne.s32.totalorder %s233, %s247
      %p249 = scmp.eq.s32.totalorder %s34, 0
      %p250 = por %p248, %p249
      %s252 = sadd.s32 %s251, 1
      %p255 = scmp.eq.s32.totalorder %s28, 1
      %p256 = scmp.ne.s32.totalorder %s251, %s253
      %p257 = scmp.eq.s32.totalorder %s28, 0
      %p258 = por %p256, %p257
      %p259 = scmp.ne.s32.totalorder %s251, %s253
      %p260 = scmp.eq.s32.totalorder %s33, 1
      %p261 = por %p259, %p260
      %p262 = scmp.ne.s32.totalorder %s253, %s254
      %p263 = scmp.eq.s32.totalorder %s33, 0
      %p264 = por %p262, %p263
      %p265 = scmp.ne.s32.totalorder %s253, %s254
      %p266 = scmp.eq.s32.totalorder %s34, 1
      %p267 = por %p265, %p266
      %p269 = scmp.ne.s32.totalorder %s254, %s268
      %p270 = scmp.eq.s32.totalorder %s34, 0
      %p271 = por %p269, %p270
      %s273 = sadd.s32 %s272, 1
      %p276 = scmp.eq.s32.totalorder %s28, 1
      %p277 = scmp.ne.s32.totalorder %s272, %s274
      %p278 = scmp.eq.s32.totalorder %s28, 0
      %p279 = por %p277, %p278
      %p280 = scmp.ne.s32.totalorder %s272, %s274
      %p281 = scmp.eq.s32.totalorder %s33, 1
      %p282 = por %p280, %p281
      %p283 = scmp.ne.s32.totalorder %s274, %s275
      %p284 = scmp.eq.s32.totalorder %s33, 0
      %p285 = por %p283, %p284
      %p286 = scmp.ne.s32.totalorder %s274, %s275
      %p287 = scmp.eq.s32.totalorder %s34, 1
      %p288 = por %p286, %p287
      %p290 = scmp.ne.s32.totalorder %s275, %s289
      %p291 = scmp.eq.s32.totalorder %s34, 0
      %p292 = por %p290, %p291
      %s294 = sadd.s32 %s293, 1
      %p297 = scmp.eq.s32.totalorder %s28, 1
      %p298 = scmp.ne.s32.totalorder %s293, %s295
      %p299 = scmp.eq.s32.totalorder %s28, 0
      %p300 = por %p298, %p299
      %p301 = scmp.ne.s32.totalorder %s293, %s295
      %p302 = scmp.eq.s32.totalorder %s33, 1
      %p303 = por %p301, %p302
      %p304 = scmp.ne.s32.totalorder %s295, %s296
      %p305 = scmp.eq.s32.totalorder %s33, 0
      %p306 = por %p304, %p305
      %p307 = scmp.ne.s32.totalorder %s295, %s296
      %p308 = scmp.eq.s32.totalorder %s34, 1
      %p309 = por %p307, %p308
      %p311 = scmp.ne.s32.totalorder %s296, %s310
      %p312 = scmp.eq.s32.totalorder %s34, 0
      %p313 = por %p311, %p312
      %s314 = ssub.s32 %s28, %s35
      %p315 = scmp.eq.s32.totalorder %s314, 0
      %s317 = sadd.s32 %s316, 1
      %s318 = scalar_select %p315, %s316, %s317
      %p321 = pneg %p315
      %p322 = scmp.eq.s32.totalorder %s28, 1
      %p323 = por %p321, %p322
      %p324 = scmp.ne.s32.totalorder %s316, %s319
      %p325 = scmp.eq.s32.totalorder %s28, 0
      %p326 = por %p324, %p325
      %p327 = scmp.ne.s32.totalorder %s316, %s319
      %p328 = scmp.eq.s32.totalorder %s33, 1
      %p329 = por %p327, %p328
      %p330 = scmp.ne.s32.totalorder %s319, %s320
      %p331 = scmp.eq.s32.totalorder %s33, 0
      %p332 = por %p330, %p331
      %p333 = scmp.ne.s32.totalorder %s319, %s320
      %p334 = scmp.eq.s32.totalorder %s34, 1
      %p335 = por %p333, %p334
      %p337 = scmp.ne.s32.totalorder %s320, %s336
      %p338 = scmp.eq.s32.totalorder %s34, 0
      %p339 = por %p337, %p338
      %s340 = ssub.s32 %s28, %s35
      %p341 = scmp.eq.s32.totalorder %s340, 0
      %s343 = sadd.s32 %s342, 1
      %s344 = scalar_select %p341, %s342, %s343
      %p347 = pneg %p341
      %p348 = scmp.eq.s32.totalorder %s28, 1
      %p349 = por %p347, %p348
      %p350 = scmp.ne.s32.totalorder %s342, %s345
      %p351 = scmp.eq.s32.totalorder %s28, 0
      %p352 = por %p350, %p351
      %p353 = scmp.ne.s32.totalorder %s342, %s345
      %p354 = scmp.eq.s32.totalorder %s33, 1
      %p355 = por %p353, %p354
      %p356 = scmp.ne.s32.totalorder %s345, %s346
      %p357 = scmp.eq.s32.totalorder %s33, 0
      %p358 = por %p356, %p357
      %p359 = scmp.ne.s32.totalorder %s345, %s346
      %p360 = scmp.eq.s32.totalorder %s34, 1
      %p361 = por %p359, %p360
      %p363 = scmp.ne.s32.totalorder %s346, %s362
      %p364 = scmp.eq.s32.totalorder %s34, 0
      %p365 = por %p363, %p364
      %s366 = ssub.s32 %s28, %s35
      %p367 = scmp.eq.s32.totalorder %s366, 0
      %s369 = sadd.s32 %s368, 1
      %s370 = scalar_select %p367, %s368, %s369
      %p373 = pneg %p367
      %p374 = scmp.eq.s32.totalorder %s28, 1
      %p375 = por %p373, %p374
      %p376 = scmp.ne.s32.totalorder %s368, %s371
      %p377 = scmp.eq.s32.totalorder %s28, 0
      %p378 = por %p376, %p377
      %p379 = scmp.ne.s32.totalorder %s368, %s371
      %p380 = scmp.eq.s32.totalorder %s33, 1
      %p381 = por %p379, %p380
      %p382 = scmp.ne.s32.totalorder %s371, %s372
      %p383 = scmp.eq.s32.totalorder %s33, 0
      %p384 = por %p382, %p383
      %p385 = scmp.ne.s32.totalorder %s371, %s372
      %p386 = scmp.eq.s32.totalorder %s34, 1
      %p387 = por %p385, %p386
      %p389 = scmp.ne.s32.totalorder %s372, %s388
      %p390 = scmp.eq.s32.totalorder %s34, 0
      %p391 = por %p389, %p390
      %p392 = scmp.le.s32.totalorder 1, %s28
      %p393 = scmp.lt.s32.totalorder %s28, 3
      %p394 = pnand %p392, %p393
      %p395 = pneg %p394
      // Predicated region
      $region9: #{vgg_channel2_forward.1} parent=5 // pred_check
        _
      $region10: #{vgg_channel2_forward.1} parent=5 // pred_check_branch
        %397 = sbr.rel (%p394) target = $region12
      $region11: #{vgg_channel2_forward.1} parent=5 // pred_region
        %s398 = ssub.s32 %s28, 1
        // Predicated region
        $region13: #{vgg_channel2_forward.1} parent=11 // pred_check
          %p399 = pneg %p75
        $region14: #{vgg_channel2_forward.1} parent=11 // pred_check_branch
          %401 = sbr.rel (%p399) target = $region16
        $region15: #{vgg_channel2_forward.1} parent=11 // pred_region
          _
        $region16: #{vgg_channel2_forward.1} parent=11 // pred_fallthru
          _
        // Predicated region
        $region17: #{vgg_channel2_forward.1} parent=11 // pred_check
          %p402 = pneg %p96
        $region18: #{vgg_channel2_forward.1} parent=11 // pred_check_branch
          %404 = sbr.rel (%p402) target = $region20
        $region19: #{vgg_channel2_forward.1} parent=11 // pred_region
          _
        $region20: #{vgg_channel2_forward.1} parent=11 // pred_fallthru
          _
        // Predicated region
        $region21: #{vgg_channel2_forward.1} parent=11 // pred_check
          %p405 = pneg %p117
        $region22: #{vgg_channel2_forward.1} parent=11 // pred_check_branch
          %407 = sbr.rel (%p405) target = $region24
        $region23: #{vgg_channel2_forward.1} parent=11 // pred_region
          _
        $region24: #{vgg_channel2_forward.1} parent=11 // pred_fallthru
          _
        // Predicated region
        $region25: #{vgg_channel2_forward.1} parent=11 // pred_check
          %p408 = pneg %p138
        $region26: #{vgg_channel2_forward.1} parent=11 // pred_check_branch
          %410 = sbr.rel (%p408) target = $region28
        $region27: #{vgg_channel2_forward.1} parent=11 // pred_region
          _
        $region28: #{vgg_channel2_forward.1} parent=11 // pred_fallthru
          _
        // Predicated region
        $region29: #{vgg_channel2_forward.1} parent=11 // pred_check
          %p411 = pneg %p159
        $region30: #{vgg_channel2_forward.1} parent=11 // pred_check_branch
          %413 = sbr.rel (%p411) target = $region32
        $region31: #{vgg_channel2_forward.1} parent=11 // pred_region
          _
        $region32: #{vgg_channel2_forward.1} parent=11 // pred_fallthru
          _
        // Predicated region
        $region33: #{vgg_channel2_forward.1} parent=11 // pred_check
          %p414 = pneg %p180
        $region34: #{vgg_channel2_forward.1} parent=11 // pred_check_branch
          %416 = sbr.rel (%p414) target = $region36
        $region35: #{vgg_channel2_forward.1} parent=11 // pred_region
          _
        $region36: #{vgg_channel2_forward.1} parent=11 // pred_fallthru
          _
        // Predicated region
        $region37: #{vgg_channel2_forward.1} parent=11 // pred_check
          %p417 = pneg %p201
        $region38: #{vgg_channel2_forward.1} parent=11 // pred_check_branch
          %419 = sbr.rel (%p417) target = $region40
        $region39: #{vgg_channel2_forward.1} parent=11 // pred_region
          _
        $region40: #{vgg_channel2_forward.1} parent=11 // pred_fallthru
          _
        // Predicated region
        $region41: #{vgg_channel2_forward.1} parent=11 // pred_check
          %p420 = pneg %p222
        $region42: #{vgg_channel2_forward.1} parent=11 // pred_check_branch
          %422 = sbr.rel (%p420) target = $region44
        $region43: #{vgg_channel2_forward.1} parent=11 // pred_region
          _
        $region44: #{vgg_channel2_forward.1} parent=11 // pred_fallthru
          _
        // Predicated region
        $region45: #{vgg_channel2_forward.1} parent=11 // pred_check
          %p423 = pneg %p243
        $region46: #{vgg_channel2_forward.1} parent=11 // pred_check_branch
          %425 = sbr.rel (%p423) target = $region48
        $region47: #{vgg_channel2_forward.1} parent=11 // pred_region
          _
        $region48: #{vgg_channel2_forward.1} parent=11 // pred_fallthru
          _
        // Predicated region
        $region49: #{vgg_channel2_forward.1} parent=11 // pred_check
          %p426 = pneg %p264
        $region50: #{vgg_channel2_forward.1} parent=11 // pred_check_branch
          %428 = sbr.rel (%p426) target = $region52
        $region51: #{vgg_channel2_forward.1} parent=11 // pred_region
          _
        $region52: #{vgg_channel2_forward.1} parent=11 // pred_fallthru
          _
        // Predicated region
        $region53: #{vgg_channel2_forward.1} parent=11 // pred_check
          %p429 = pneg %p285
        $region54: #{vgg_channel2_forward.1} parent=11 // pred_check_branch
          %431 = sbr.rel (%p429) target = $region56
        $region55: #{vgg_channel2_forward.1} parent=11 // pred_region
          _
        $region56: #{vgg_channel2_forward.1} parent=11 // pred_fallthru
          _
        // Predicated region
        $region57: #{vgg_channel2_forward.1} parent=11 // pred_check
          %p432 = pneg %p306
        $region58: #{vgg_channel2_forward.1} parent=11 // pred_check_branch
          %434 = sbr.rel (%p432) target = $region60
        $region59: #{vgg_channel2_forward.1} parent=11 // pred_region
          _
        $region60: #{vgg_channel2_forward.1} parent=11 // pred_fallthru
          _
      $region12: #{vgg_channel2_forward.1} parent=5 // pred_fallthru
        _
      %p435 = scmp.lt.s32.totalorder %s28, 2
      // Predicated region
      $region61: #{vgg_channel2_forward.1} parent=5 // pred_check
        %p436 = pneg %p435
      $region62: #{vgg_channel2_forward.1} parent=5 // pred_check_branch
        %438 = sbr.rel (%p436) target = $region64
      $region63: #{vgg_channel2_forward.1} parent=5 // pred_region
        // Predicated region
        $region65: #{vgg_channel2_forward.1} parent=63 // pred_check
          %p439 = pneg %p48
        $region66: #{vgg_channel2_forward.1} parent=63 // pred_check_branch
          %441 = sbr.rel (%p439) target = $region68
        $region67: #{vgg_channel2_forward.1} parent=63 // pred_region
          %p442 = scmp.lt.s32.totalorder %s28, 1
          %s443 = scalar_select %p442, %s28, 1
          %s444 = smul.addr %s443, 32
          %s445 = smul.addr %s444, 8
          %s446 = scalar_lea.vmem %s0, %s445
        $region68: #{vgg_channel2_forward.1} parent=63 // pred_fallthru
          _
      $region64: #{vgg_channel2_forward.1} parent=5 // pred_fallthru
        _
      %p447 = scmp.le.s32.totalorder 1, %s28
      %p448 = scmp.lt.s32.totalorder %s28, 3
      %p449 = pnand %p447, %p448
      %p450 = pneg %p449
      // Predicated region
      $region69: #{vgg_channel2_forward.1} parent=5 // pred_check
        _
      $region70: #{vgg_channel2_forward.1} parent=5 // pred_check_branch
        %452 = sbr.rel (%p449) target = $region72
      $region71: #{vgg_channel2_forward.1} parent=5 // pred_region
        %s453 = ssub.s32 %s28, 1
        %p454 = scmp.lt.s32.totalorder %s33, 1
        %s455 = scalar_select %p454, %s33, 1
        %s456 = smul.addr %s455, 32
        %s457 = smul.addr %s456, 8
        %s458 = scalar_lea.vmem %s0, %s457
        %p459 = pneg %p54
        %p460 = pneg %p51
        %p461 = pneg %p75
        %p462 = pneg %p72
        %p463 = pneg %p96
        %p464 = pneg %p93
        %p465 = pneg %p117
        %p466 = pneg %p114
        %p467 = pneg %p138
        %p468 = pneg %p135
        %p469 = pneg %p159
        %p470 = pneg %p156
        %p471 = pneg %p180
        %p472 = pneg %p177
        %p473 = pneg %p201
        %p474 = pneg %p198
        %p475 = pneg %p222
        %p476 = pneg %p219
        %p477 = pneg %p243
        %p478 = pneg %p240
        %p479 = pneg %p264
        %p480 = pneg %p261
        %p481 = pneg %p285
        %p482 = pneg %p282
        %p483 = pneg %p306
        %p484 = pneg %p303
        %p485 = pneg %p332
        %p486 = pneg %p329
        %p487 = scmp.lt.s32.totalorder %s33, 1
        %s488 = scalar_select %p487, %s33, 1
        %s489 = smul.addr %s488, 32
        %s490 = smul.addr %s489, 8
        %s491 = scalar_lea.vmem %s13, %s490
        %p492 = pneg %p358
        %p493 = pneg %p355
        %s494 = sand.u32 %s345, 1
        %s495 = scalar_lea.sflag [#allocation14], %s494
        %s496 = sand.u32 %s345, 1
        %s497 = smul.addr %s496, 64
        %s498 = scalar_lea.vmem [#allocation13], %s497
        %p499 = pneg %p384
        %p500 = pneg %p381
        %s501 = sand.u32 %s371, 1
        %s502 = scalar_lea.sflag [#allocation16], %s501
        %s503 = sand.u32 %s371, 1
        %s504 = smul.addr %s503, 16
        %s505 = scalar_lea.vmem [#allocation15], %s504
        %p506 = scmp.lt.s32.totalorder %s33, 1
        %s507 = scalar_select %p506, %s33, 1
        %s508 = smul.addr %s507, 32
        %s509 = smul.addr %s508, 8
        %s510 = scalar_lea.vmem %s0, %s509
        %p511 = scmp.lt.s32.totalorder %s33, 1
        %s512 = scalar_select %p511, %s33, 1
        %s513 = smul.addr %s512, 32
        %s514 = smul.addr %s513, 8
        %s515 = scalar_lea.vmem %s13, %s514
        %vm516 = vcmask 130048
        %517 = vst.msk [vmem:[#allocation2] sm:$0xff] %vm516, 0.0
        %518 = vst.msk [vmem:[#allocation2 + $0x8] sm:$0xff] %vm516, 0.0
        %vm519 = vcmask 123904
        %520 = vst.msk [vmem:[#allocation2 + $0x10] sm:$0x3] %vm519, 0.0
        %521 = vst.msk [vmem:[#allocation2 + $0x18] sm:$0xff] %vm516, 0.0
        %522 = vst.msk [vmem:[#allocation2 + $0x20] sm:$0xff] %vm516, 0.0
        %523 = vst.msk [vmem:[#allocation2 + $0x28] sm:$0x3] %vm519, 0.0
        %524 = vst.msk [vmem:[#allocation2 + $0x30] sm:$0xff] %vm516, 0.0
        %525 = vst.msk [vmem:[#allocation2 + $0x38] sm:$0xff] %vm516, 0.0
        %526 = vst.msk [vmem:[#allocation2 + $0x40] sm:$0x3] %vm519, 0.0
        %527 = vst.msk [vmem:[#allocation2 + $0x48] sm:$0xff] %vm516, 0.0
        %528 = vst.msk [vmem:[#allocation2 + $0x50] sm:$0xff] %vm516, 0.0
        %529 = vst.msk [vmem:[#allocation2 + $0x58] sm:$0x3] %vm519, 0.0
        %530 = vst.msk [vmem:[#allocation2 + $0x60] sm:$0xff] %vm516, 0.0
        %531 = vst.msk [vmem:[#allocation2 + $0x68] sm:$0xff] %vm516, 0.0
        %532 = vst.msk [vmem:[#allocation2 + $0x70] sm:$0x3] %vm519, 0.0
        %533 = vst.msk [vmem:[#allocation2 + $0x78] sm:$0xff] %vm516, 0.0
        %534 = vst.msk [vmem:[#allocation2 + $0x80] sm:$0xff] %vm516, 0.0
        %535 = vst.msk [vmem:[#allocation2 + $0x88] sm:$0x3] %vm519, 0.0
        %536 = vst.msk [vmem:[#allocation2 + $0x90] sm:$0xff] %vm516, 0.0
        %537 = vst.msk [vmem:[#allocation2 + $0x98] sm:$0xff] %vm516, 0.0
        %538 = vst.msk [vmem:[#allocation2 + $0xa0] sm:$0x3] %vm519, 0.0
        %539 = vst.msk [vmem:[#allocation2 + $0xa8] sm:$0xff] %vm516, 0.0
        %540 = vst.msk [vmem:[#allocation2 + $0xb0] sm:$0xff] %vm516, 0.0
        %541 = vst.msk [vmem:[#allocation2 + $0xb8] sm:$0x3] %vm519, 0.0
        %542 = vst.msk [vmem:[#allocation2 + $0xc0] sm:$0xff] %vm516, 0.0
        %543 = vst.msk [vmem:[#allocation2 + $0xc8] sm:$0xff] %vm516, 0.0
        %544 = vst.msk [vmem:[#allocation2 + $0xd0] sm:$0x3] %vm519, 0.0
        %545 = vst.msk [vmem:[#allocation2 + $0xd8] sm:$0xff] %vm516, 0.0
        %546 = vst.msk [vmem:[#allocation2 + $0xe0] sm:$0xff] %vm516, 0.0
        %547 = vst.msk [vmem:[#allocation2 + $0xe8] sm:$0x3] %vm519, 0.0
        %548 = vst.msk [vmem:[#allocation2 + $0xf0] sm:$0xff] %vm516, 0.0
        %549 = vst.msk [vmem:[#allocation2 + $0xf8] sm:$0xff] %vm516, 0.0
        %550 = vst.msk [vmem:[#allocation2 + $0x100] sm:$0x3] %vm519, 0.0
        %551 = vst.msk [vmem:[#allocation2 + $0x108] sm:$0xff] %vm516, 0.0
        %552 = vst.msk [vmem:[#allocation2 + $0x110] sm:$0xff] %vm516, 0.0
        %553 = vst.msk [vmem:[#allocation2 + $0x118] sm:$0x3] %vm519, 0.0
        %554 = vst.msk [vmem:[#allocation2 + $0x120] sm:$0xff] %vm516, 0.0
        %555 = vst.msk [vmem:[#allocation2 + $0x128] sm:$0xff] %vm516, 0.0
        %556 = vst.msk [vmem:[#allocation2 + $0x130] sm:$0x3] %vm519, 0.0
        %557 = vst.msk [vmem:[#allocation2 + $0x138] sm:$0xff] %vm516, 0.0
        %558 = vst.msk [vmem:[#allocation2 + $0x140] sm:$0xff] %vm516, 0.0
        %559 = vst.msk [vmem:[#allocation2 + $0x148] sm:$0x3] %vm519, 0.0
        %560 = vst.msk [vmem:[#allocation2 + $0x150] sm:$0xff] %vm516, 0.0
        %561 = vst.msk [vmem:[#allocation2 + $0x158] sm:$0xff] %vm516, 0.0
        %562 = vst.msk [vmem:[#allocation2 + $0x160] sm:$0x3] %vm519, 0.0
        %563 = vst.msk [vmem:[#allocation2 + $0x168] sm:$0xff] %vm516, 0.0
        %564 = vst.msk [vmem:[#allocation2 + $0x170] sm:$0xff] %vm516, 0.0
        %565 = vst.msk [vmem:[#allocation2 + $0x178] sm:$0x3] %vm519, 0.0
        %566 = vst.msk [vmem:[#allocation2 + $0x180] sm:$0xff] %vm516, 0.0
        %567 = vst.msk [vmem:[#allocation2 + $0x188] sm:$0xff] %vm516, 0.0
        %568 = vst.msk [vmem:[#allocation2 + $0x190] sm:$0x3] %vm519, 0.0
        %569 = vst.msk [vmem:[#allocation2 + $0x198] sm:$0xff] %vm516, 0.0
        %570 = vst.msk [vmem:[#allocation2 + $0x1a0] sm:$0xff] %vm516, 0.0
        %571 = vst.msk [vmem:[#allocation2 + $0x1a8] sm:$0x3] %vm519, 0.0
        %v572 = vld [vmem:[%s510] sm:$0xff]
        %v573 = vld [vmem:[%s510 + $0x8] sm:$0xff]
        %v574 = vld [vmem:[%s510 + $0x10] sm:$0xff]
        %v575 = vld [vmem:[%s510 + $0x18] sm:$0xff]
        %v576 = vld [vmem:[%s510 + $0x20] sm:$0xff]
        %v577 = vld [vmem:[%s510 + $0x28] sm:$0xff]
        %v578 = vld [vmem:[%s510 + $0x30] sm:$0xff]
        %v579 = vld [vmem:[%s510 + $0x38] sm:$0xff]
        %v580 = vld [vmem:[%s510 + $0x40] sm:$0xff]
        %v581 = vld [vmem:[%s510 + $0x48] sm:$0xff]
        %v582 = vld [vmem:[%s510 + $0x50] sm:$0xff]
        %v583 = vld [vmem:[%s510 + $0x58] sm:$0xff]
        %v584 = vld [vmem:[%s510 + $0x60] sm:$0xff]
        %v585 = vld [vmem:[%s510 + $0x68] sm:$0xff]
        %v586 = vld [vmem:[%s510 + $0x70] sm:$0xff]
        %v587 = vld [vmem:[%s510 + $0x78] sm:$0xff]
        %v588 = vld [vmem:[%s510 + $0x80] sm:$0xff]
        %v589 = vld [vmem:[%s510 + $0x88] sm:$0xff]
        %v590 = vld [vmem:[%s510 + $0x90] sm:$0xff]
        %v591 = vld [vmem:[%s510 + $0x98] sm:$0xff]
        %v592 = vld [vmem:[%s510 + $0xa0] sm:$0xff]
        %v593 = vld [vmem:[%s510 + $0xa8] sm:$0xff]
        %v594 = vld [vmem:[%s510 + $0xb0] sm:$0xff]
        %v595 = vld [vmem:[%s510 + $0xb8] sm:$0xff]
        %v596 = vld [vmem:[%s510 + $0xc0] sm:$0xff]
        %v597 = vld [vmem:[%s510 + $0xc8] sm:$0xff]
        %v598 = vld [vmem:[%s510 + $0xd0] sm:$0xff]
        %v599 = vld [vmem:[%s510 + $0xd8] sm:$0xff]
        %v600 = vld [vmem:[%s510 + $0xe0] sm:$0xff]
        %v601 = vld [vmem:[%s510 + $0xe8] sm:$0xff]
        %v602 = vld [vmem:[%s510 + $0xf0] sm:$0xff]
        %v603 = vld [vmem:[%s510 + $0xf8] sm:$0xff]
        %s604 = scalar_lea.vmem [#allocation2], 24
        %605 = vst.msk [vmem:[%s604 + $0x1] sm:$0xff] %vm516, %v572
        %606 = vst.msk [vmem:[%s604 + $0x9] sm:$0xff] %vm516, %v573
        %607 = vst.msk [vmem:[%s604 + $0x19] sm:$0xff] %vm516, %v574
        %608 = vst.msk [vmem:[%s604 + $0x21] sm:$0xff] %vm516, %v575
        %609 = vst.msk [vmem:[%s604 + $0x31] sm:$0xff] %vm516, %v576
        %610 = vst.msk [vmem:[%s604 + $0x39] sm:$0xff] %vm516, %v577
        %611 = vst.msk [vmem:[%s604 + $0x49] sm:$0xff] %vm516, %v578
        %612 = vst.msk [vmem:[%s604 + $0x51] sm:$0xff] %vm516, %v579
        %613 = vst.msk [vmem:[%s604 + $0x61] sm:$0xff] %vm516, %v580
        %614 = vst.msk [vmem:[%s604 + $0x69] sm:$0xff] %vm516, %v581
        %615 = vst.msk [vmem:[%s604 + $0x79] sm:$0xff] %vm516, %v582
        %616 = vst.msk [vmem:[%s604 + $0x81] sm:$0xff] %vm516, %v583
        %617 = vst.msk [vmem:[%s604 + $0x91] sm:$0xff] %vm516, %v584
        %618 = vst.msk [vmem:[%s604 + $0x99] sm:$0xff] %vm516, %v585
        %619 = vst.msk [vmem:[%s604 + $0xa9] sm:$0xff] %vm516, %v586
        %620 = vst.msk [vmem:[%s604 + $0xb1] sm:$0xff] %vm516, %v587
        %621 = vst.msk [vmem:[%s604 + $0xc1] sm:$0xff] %vm516, %v588
        %622 = vst.msk [vmem:[%s604 + $0xc9] sm:$0xff] %vm516, %v589
        %623 = vst.msk [vmem:[%s604 + $0xd9] sm:$0xff] %vm516, %v590
        %624 = vst.msk [vmem:[%s604 + $0xe1] sm:$0xff] %vm516, %v591
        %625 = vst.msk [vmem:[%s604 + $0xf1] sm:$0xff] %vm516, %v592
        %626 = vst.msk [vmem:[%s604 + $0xf9] sm:$0xff] %vm516, %v593
        %627 = vst.msk [vmem:[%s604 + $0x109] sm:$0xff] %vm516, %v594
        %628 = vst.msk [vmem:[%s604 + $0x111] sm:$0xff] %vm516, %v595
        %629 = vst.msk [vmem:[%s604 + $0x121] sm:$0xff] %vm516, %v596
        %630 = vst.msk [vmem:[%s604 + $0x129] sm:$0xff] %vm516, %v597
        %631 = vst.msk [vmem:[%s604 + $0x139] sm:$0xff] %vm516, %v598
        %632 = vst.msk [vmem:[%s604 + $0x141] sm:$0xff] %vm516, %v599
        %633 = vst.msk [vmem:[%s604 + $0x151] sm:$0xff] %vm516, %v600
        %634 = vst.msk [vmem:[%s604 + $0x159] sm:$0xff] %vm516, %v601
        %635 = vst.msk [vmem:[%s604 + $0x169] sm:$0xff] %vm516, %v602
        %636 = vst.msk [vmem:[%s604 + $0x171] sm:$0xff] %vm516, %v603
        %v637 = vld [vmem:[#allocation2] sm:$0xff]
        %v638 = vld [vmem:[#allocation2 + $0x8] sm:$0xff]
        %v639 = vld [vmem:[#allocation2 + $0x18] sm:$0xff]
        %v640 = vld [vmem:[#allocation2 + $0x20] sm:$0xff]
        %v641 = vld [vmem:[#allocation2 + $0x30] sm:$0xff]
        %v642 = vld [vmem:[#allocation2 + $0x38] sm:$0xff]
        %v643 = vld [vmem:[#allocation2 + $0x48] sm:$0xff]
        %v644 = vld [vmem:[#allocation2 + $0x50] sm:$0xff]
        %v645 = vld [vmem:[#allocation2 + $0x60] sm:$0xff]
        %v646 = vld [vmem:[#allocation2 + $0x68] sm:$0xff]
        %v647 = vld [vmem:[#allocation2 + $0x78] sm:$0xff]
        %v648 = vld [vmem:[#allocation2 + $0x80] sm:$0xff]
        %v649 = vld [vmem:[#allocation2 + $0x90] sm:$0xff]
        %v650 = vld [vmem:[#allocation2 + $0x98] sm:$0xff]
        %v651 = vld [vmem:[#allocation2 + $0xa8] sm:$0xff]
        %v652 = vld [vmem:[#allocation2 + $0xb0] sm:$0xff]
        %v653 = vld [vmem:[#allocation2 + $0xc0] sm:$0xff]
        %v654 = vld [vmem:[#allocation2 + $0xc8] sm:$0xff]
        %v655 = vld [vmem:[#allocation2 + $0xd8] sm:$0xff]
        %v656 = vld [vmem:[#allocation2 + $0xe0] sm:$0xff]
        %v657 = vld [vmem:[#allocation2 + $0xf0] sm:$0xff]
        %v658 = vld [vmem:[#allocation2 + $0xf8] sm:$0xff]
        %v659 = vld [vmem:[#allocation2 + $0x108] sm:$0xff]
        %v660 = vld [vmem:[#allocation2 + $0x110] sm:$0xff]
        %v661 = vld [vmem:[#allocation2 + $0x120] sm:$0xff]
        %v662 = vld [vmem:[#allocation2 + $0x128] sm:$0xff]
        %v663 = vld [vmem:[#allocation2 + $0x138] sm:$0xff]
        %v664 = vld [vmem:[#allocation2 + $0x140] sm:$0xff]
        %v665 = vld [vmem:[#allocation2 + $0x150] sm:$0xff]
        %v666 = vld [vmem:[#allocation2 + $0x158] sm:$0xff]
        %v667 = vld [vmem:[#allocation2 + $0x168] sm:$0xff]
        %v668 = vld [vmem:[#allocation2 + $0x170] sm:$0xff]
        %669 = vst.msk [vmem:[#allocation8] sm:$0xff] %vm516, %v637
        %670 = vst.msk [vmem:[#allocation8 + $0x10] sm:$0xff] %vm516, %v638
        %671 = vst.msk [vmem:[#allocation8 + $0x20] sm:$0xff] %vm516, %v639
        %672 = vst.msk [vmem:[#allocation8 + $0x30] sm:$0xff] %vm516, %v640
        %673 = vst.msk [vmem:[#allocation8 + $0x40] sm:$0xff] %vm516, %v641
        %674 = vst.msk [vmem:[#allocation8 + $0x50] sm:$0xff] %vm516, %v642
        %675 = vst.msk [vmem:[#allocation8 + $0x60] sm:$0xff] %vm516, %v643
        %676 = vst.msk [vmem:[#allocation8 + $0x70] sm:$0xff] %vm516, %v644
        %677 = vst.msk [vmem:[#allocation8 + $0x80] sm:$0xff] %vm516, %v645
        %678 = vst.msk [vmem:[#allocation8 + $0x90] sm:$0xff] %vm516, %v646
        %679 = vst.msk [vmem:[#allocation8 + $0xa0] sm:$0xff] %vm516, %v647
        %680 = vst.msk [vmem:[#allocation8 + $0xb0] sm:$0xff] %vm516, %v648
        %681 = vst.msk [vmem:[#allocation8 + $0xc0] sm:$0xff] %vm516, %v649
        %682 = vst.msk [vmem:[#allocation8 + $0xd0] sm:$0xff] %vm516, %v650
        %683 = vst.msk [vmem:[#allocation8 + $0xe0] sm:$0xff] %vm516, %v651
        %684 = vst.msk [vmem:[#allocation8 + $0xf0] sm:$0xff] %vm516, %v652
        %685 = vst.msk [vmem:[#allocation8 + $0x100] sm:$0xff] %vm516, %v653
        %686 = vst.msk [vmem:[#allocation8 + $0x110] sm:$0xff] %vm516, %v654
        %687 = vst.msk [vmem:[#allocation8 + $0x120] sm:$0xff] %vm516, %v655
        %688 = vst.msk [vmem:[#allocation8 + $0x130] sm:$0xff] %vm516, %v656
        %689 = vst.msk [vmem:[#allocation8 + $0x140] sm:$0xff] %vm516, %v657
        %690 = vst.msk [vmem:[#allocation8 + $0x150] sm:$0xff] %vm516, %v658
        %691 = vst.msk [vmem:[#allocation8 + $0x160] sm:$0xff] %vm516, %v659
        %692 = vst.msk [vmem:[#allocation8 + $0x170] sm:$0xff] %vm516, %v660
        %693 = vst.msk [vmem:[#allocation8 + $0x180] sm:$0xff] %vm516, %v661
        %694 = vst.msk [vmem:[#allocation8 + $0x190] sm:$0xff] %vm516, %v662
        %695 = vst.msk [vmem:[#allocation8 + $0x1a0] sm:$0xff] %vm516, %v663
        %696 = vst.msk [vmem:[#allocation8 + $0x1b0] sm:$0xff] %vm516, %v664
        %697 = vst.msk [vmem:[#allocation8 + $0x1c0] sm:$0xff] %vm516, %v665
        %698 = vst.msk [vmem:[#allocation8 + $0x1d0] sm:$0xff] %vm516, %v666
        %699 = vst.msk [vmem:[#allocation8 + $0x1e0] sm:$0xff] %vm516, %v667
        %700 = vst.msk [vmem:[#allocation8 + $0x1f0] sm:$0xff] %vm516, %v668
        %v701 = vld [vmem:[#allocation2 + $0x1] sm:$0xff]
        %v702 = vld [vmem:[#allocation2 + $0x9] sm:$0xff]
        %v703 = vld [vmem:[#allocation2 + $0x19] sm:$0xff]
        %v704 = vld [vmem:[#allocation2 + $0x21] sm:$0xff]
        %v705 = vld [vmem:[#allocation2 + $0x31] sm:$0xff]
        %v706 = vld [vmem:[#allocation2 + $0x39] sm:$0xff]
        %v707 = vld [vmem:[#allocation2 + $0x49] sm:$0xff]
        %v708 = vld [vmem:[#allocation2 + $0x51] sm:$0xff]
        %v709 = vld [vmem:[#allocation2 + $0x61] sm:$0xff]
        %v710 = vld [vmem:[#allocation2 + $0x69] sm:$0xff]
        %v711 = vld [vmem:[#allocation2 + $0x79] sm:$0xff]
        %v712 = vld [vmem:[#allocation2 + $0x81] sm:$0xff]
        %v713 = vld [vmem:[#allocation2 + $0x91] sm:$0xff]
        %v714 = vld [vmem:[#allocation2 + $0x99] sm:$0xff]
        %v715 = vld [vmem:[#allocation2 + $0xa9] sm:$0xff]
        %v716 = vld [vmem:[#allocation2 + $0xb1] sm:$0xff]
        %v717 = vld [vmem:[#allocation2 + $0xc1] sm:$0xff]
        %v718 = vld [vmem:[#allocation2 + $0xc9] sm:$0xff]
        %v719 = vld [vmem:[#allocation2 + $0xd9] sm:$0xff]
        %v720 = vld [vmem:[#allocation2 + $0xe1] sm:$0xff]
        %v721 = vld [vmem:[#allocation2 + $0xf1] sm:$0xff]
        %v722 = vld [vmem:[#allocation2 + $0xf9] sm:$0xff]
        %v723 = vld [vmem:[#allocation2 + $0x109] sm:$0xff]
        %v724 = vld [vmem:[#allocation2 + $0x111] sm:$0xff]
        %v725 = vld [vmem:[#allocation2 + $0x121] sm:$0xff]
        %v726 = vld [vmem:[#allocation2 + $0x129] sm:$0xff]
        %v727 = vld [vmem:[#allocation2 + $0x139] sm:$0xff]
        %v728 = vld [vmem:[#allocation2 + $0x141] sm:$0xff]
        %v729 = vld [vmem:[#allocation2 + $0x151] sm:$0xff]
        %v730 = vld [vmem:[#allocation2 + $0x159] sm:$0xff]
        %v731 = vld [vmem:[#allocation2 + $0x169] sm:$0xff]
        %v732 = vld [vmem:[#allocation2 + $0x171] sm:$0xff]
        %765 = vrot.lane.b32.xlu0 %v701, 16
        %v766 = vpop.permute.xlu0 %765
        %767 = vrot.lane.b32.xlu0 %v702, 16
        %v768 = vpop.permute.xlu0 %767
        %769 = vrot.lane.b32.xlu0 %v703, 16
        %v770 = vpop.permute.xlu0 %769
        %771 = vrot.lane.b32.xlu0 %v704, 16
        %v772 = vpop.permute.xlu0 %771
        %773 = vrot.lane.b32.xlu0 %v705, 16
        %v774 = vpop.permute.xlu0 %773
        %775 = vrot.lane.b32.xlu0 %v706, 16
        %v776 = vpop.permute.xlu0 %775
        %777 = vrot.lane.b32.xlu0 %v707, 16
        %v778 = vpop.permute.xlu0 %777
        %779 = vrot.lane.b32.xlu0 %v708, 16
        %v780 = vpop.permute.xlu0 %779
        %781 = vrot.lane.b32.xlu0 %v709, 16
        %v782 = vpop.permute.xlu0 %781
        %783 = vrot.lane.b32.xlu0 %v710, 16
        %v784 = vpop.permute.xlu0 %783
        %785 = vrot.lane.b32.xlu0 %v711, 16
        %v786 = vpop.permute.xlu0 %785
        %787 = vrot.lane.b32.xlu0 %v712, 16
        %v788 = vpop.permute.xlu0 %787
        %789 = vrot.lane.b32.xlu0 %v713, 16
        %v790 = vpop.permute.xlu0 %789
        %791 = vrot.lane.b32.xlu0 %v714, 16
        %v792 = vpop.permute.xlu0 %791
        %793 = vrot.lane.b32.xlu0 %v715, 16
        %v794 = vpop.permute.xlu0 %793
        %795 = vrot.lane.b32.xlu0 %v716, 16
        %v796 = vpop.permute.xlu0 %795
        %797 = vrot.lane.b32.xlu0 %v717, 16
        %v798 = vpop.permute.xlu0 %797
        %799 = vrot.lane.b32.xlu0 %v718, 16
        %v800 = vpop.permute.xlu0 %799
        %801 = vrot.lane.b32.xlu0 %v719, 16
        %v802 = vpop.permute.xlu0 %801
        %803 = vrot.lane.b32.xlu0 %v720, 16
        %v804 = vpop.permute.xlu0 %803
        %805 = vrot.lane.b32.xlu0 %v721, 16
        %v806 = vpop.permute.xlu0 %805
        %807 = vrot.lane.b32.xlu0 %v722, 16
        %v808 = vpop.permute.xlu0 %807
        %809 = vrot.lane.b32.xlu0 %v723, 16
        %v810 = vpop.permute.xlu0 %809
        %811 = vrot.lane.b32.xlu0 %v724, 16
        %v812 = vpop.permute.xlu0 %811
        %813 = vrot.lane.b32.xlu0 %v725, 16
        %v814 = vpop.permute.xlu0 %813
        %815 = vrot.lane.b32.xlu0 %v726, 16
        %v816 = vpop.permute.xlu0 %815
        %817 = vrot.lane.b32.xlu0 %v727, 16
        %v818 = vpop.permute.xlu0 %817
        %819 = vrot.lane.b32.xlu0 %v728, 16
        %v820 = vpop.permute.xlu0 %819
        %821 = vrot.lane.b32.xlu0 %v729, 16
        %v822 = vpop.permute.xlu0 %821
        %823 = vrot.lane.b32.xlu0 %v730, 16
        %v824 = vpop.permute.xlu0 %823
        %825 = vrot.lane.b32.xlu0 %v731, 16
        %v826 = vpop.permute.xlu0 %825
        %827 = vrot.lane.b32.xlu0 %v732, 16
        %v828 = vpop.permute.xlu0 %827
        %vm861 = vcmask 261248
        %862 = vst.msk [vmem:[#allocation8] sm:$0xff] %vm861, %v766
        %863 = vst.msk [vmem:[#allocation8 + $0x10] sm:$0xff] %vm861, %v768
        %864 = vst.msk [vmem:[#allocation8 + $0x20] sm:$0xff] %vm861, %v770
        %865 = vst.msk [vmem:[#allocation8 + $0x30] sm:$0xff] %vm861, %v772
        %866 = vst.msk [vmem:[#allocation8 + $0x40] sm:$0xff] %vm861, %v774
        %867 = vst.msk [vmem:[#allocation8 + $0x50] sm:$0xff] %vm861, %v776
        %868 = vst.msk [vmem:[#allocation8 + $0x60] sm:$0xff] %vm861, %v778
        %869 = vst.msk [vmem:[#allocation8 + $0x70] sm:$0xff] %vm861, %v780
        %870 = vst.msk [vmem:[#allocation8 + $0x80] sm:$0xff] %vm861, %v782
        %871 = vst.msk [vmem:[#allocation8 + $0x90] sm:$0xff] %vm861, %v784
        %872 = vst.msk [vmem:[#allocation8 + $0xa0] sm:$0xff] %vm861, %v786
        %873 = vst.msk [vmem:[#allocation8 + $0xb0] sm:$0xff] %vm861, %v788
        %874 = vst.msk [vmem:[#allocation8 + $0xc0] sm:$0xff] %vm861, %v790
        %875 = vst.msk [vmem:[#allocation8 + $0xd0] sm:$0xff] %vm861, %v792
        %876 = vst.msk [vmem:[#allocation8 + $0xe0] sm:$0xff] %vm861, %v794
        %877 = vst.msk [vmem:[#allocation8 + $0xf0] sm:$0xff] %vm861, %v796
        %878 = vst.msk [vmem:[#allocation8 + $0x100] sm:$0xff] %vm861, %v798
        %879 = vst.msk [vmem:[#allocation8 + $0x110] sm:$0xff] %vm861, %v800
        %880 = vst.msk [vmem:[#allocation8 + $0x120] sm:$0xff] %vm861, %v802
        %881 = vst.msk [vmem:[#allocation8 + $0x130] sm:$0xff] %vm861, %v804
        %882 = vst.msk [vmem:[#allocation8 + $0x140] sm:$0xff] %vm861, %v806
        %883 = vst.msk [vmem:[#allocation8 + $0x150] sm:$0xff] %vm861, %v808
        %884 = vst.msk [vmem:[#allocation8 + $0x160] sm:$0xff] %vm861, %v810
        %885 = vst.msk [vmem:[#allocation8 + $0x170] sm:$0xff] %vm861, %v812
        %886 = vst.msk [vmem:[#allocation8 + $0x180] sm:$0xff] %vm861, %v814
        %887 = vst.msk [vmem:[#allocation8 + $0x190] sm:$0xff] %vm861, %v816
        %888 = vst.msk [vmem:[#allocation8 + $0x1a0] sm:$0xff] %vm861, %v818
        %889 = vst.msk [vmem:[#allocation8 + $0x1b0] sm:$0xff] %vm861, %v820
        %890 = vst.msk [vmem:[#allocation8 + $0x1c0] sm:$0xff] %vm861, %v822
        %891 = vst.msk [vmem:[#allocation8 + $0x1d0] sm:$0xff] %vm861, %v824
        %892 = vst.msk [vmem:[#allocation8 + $0x1e0] sm:$0xff] %vm861, %v826
        %893 = vst.msk [vmem:[#allocation8 + $0x1f0] sm:$0xff] %vm861, %v828
        %v894 = vld [vmem:[#allocation2 + $0x2] sm:$0xff]
        %v895 = vld [vmem:[#allocation2 + $0xa] sm:$0xff]
        %v896 = vld [vmem:[#allocation2 + $0x1a] sm:$0xff]
        %v897 = vld [vmem:[#allocation2 + $0x22] sm:$0xff]
        %v898 = vld [vmem:[#allocation2 + $0x32] sm:$0xff]
        %v899 = vld [vmem:[#allocation2 + $0x3a] sm:$0xff]
        %v900 = vld [vmem:[#allocation2 + $0x4a] sm:$0xff]
        %v901 = vld [vmem:[#allocation2 + $0x52] sm:$0xff]
        %v902 = vld [vmem:[#allocation2 + $0x62] sm:$0xff]
        %v903 = vld [vmem:[#allocation2 + $0x6a] sm:$0xff]
        %v904 = vld [vmem:[#allocation2 + $0x7a] sm:$0xff]
        %v905 = vld [vmem:[#allocation2 + $0x82] sm:$0xff]
        %v906 = vld [vmem:[#allocation2 + $0x92] sm:$0xff]
        %v907 = vld [vmem:[#allocation2 + $0x9a] sm:$0xff]
        %v908 = vld [vmem:[#allocation2 + $0xaa] sm:$0xff]
        %v909 = vld [vmem:[#allocation2 + $0xb2] sm:$0xff]
        %v910 = vld [vmem:[#allocation2 + $0xc2] sm:$0xff]
        %v911 = vld [vmem:[#allocation2 + $0xca] sm:$0xff]
        %v912 = vld [vmem:[#allocation2 + $0xda] sm:$0xff]
        %v913 = vld [vmem:[#allocation2 + $0xe2] sm:$0xff]
        %v914 = vld [vmem:[#allocation2 + $0xf2] sm:$0xff]
        %v915 = vld [vmem:[#allocation2 + $0xfa] sm:$0xff]
        %v916 = vld [vmem:[#allocation2 + $0x10a] sm:$0xff]
        %v917 = vld [vmem:[#allocation2 + $0x112] sm:$0xff]
        %v918 = vld [vmem:[#allocation2 + $0x122] sm:$0xff]
        %v919 = vld [vmem:[#allocation2 + $0x12a] sm:$0xff]
        %v920 = vld [vmem:[#allocation2 + $0x13a] sm:$0xff]
        %v921 = vld [vmem:[#allocation2 + $0x142] sm:$0xff]
        %v922 = vld [vmem:[#allocation2 + $0x152] sm:$0xff]
        %v923 = vld [vmem:[#allocation2 + $0x15a] sm:$0xff]
        %v924 = vld [vmem:[#allocation2 + $0x16a] sm:$0xff]
        %v925 = vld [vmem:[#allocation2 + $0x172] sm:$0xff]
        %958 = vrot.lane.b32.xlu0 %v894, 32
        %v959 = vpop.permute.xlu0 %958
        %960 = vrot.lane.b32.xlu0 %v895, 32
        %v961 = vpop.permute.xlu0 %960
        %962 = vrot.lane.b32.xlu0 %v896, 32
        %v963 = vpop.permute.xlu0 %962
        %964 = vrot.lane.b32.xlu0 %v897, 32
        %v965 = vpop.permute.xlu0 %964
        %966 = vrot.lane.b32.xlu0 %v898, 32
        %v967 = vpop.permute.xlu0 %966
        %968 = vrot.lane.b32.xlu0 %v899, 32
        %v969 = vpop.permute.xlu0 %968
        %970 = vrot.lane.b32.xlu0 %v900, 32
        %v971 = vpop.permute.xlu0 %970
        %972 = vrot.lane.b32.xlu0 %v901, 32
        %v973 = vpop.permute.xlu0 %972
        %974 = vrot.lane.b32.xlu0 %v902, 32
        %v975 = vpop.permute.xlu0 %974
        %976 = vrot.lane.b32.xlu0 %v903, 32
        %v977 = vpop.permute.xlu0 %976
        %978 = vrot.lane.b32.xlu0 %v904, 32
        %v979 = vpop.permute.xlu0 %978
        %980 = vrot.lane.b32.xlu0 %v905, 32
        %v981 = vpop.permute.xlu0 %980
        %982 = vrot.lane.b32.xlu0 %v906, 32
        %v983 = vpop.permute.xlu0 %982
        %984 = vrot.lane.b32.xlu0 %v907, 32
        %v985 = vpop.permute.xlu0 %984
        %986 = vrot.lane.b32.xlu0 %v908, 32
        %v987 = vpop.permute.xlu0 %986
        %988 = vrot.lane.b32.xlu0 %v909, 32
        %v989 = vpop.permute.xlu0 %988
        %990 = vrot.lane.b32.xlu0 %v910, 32
        %v991 = vpop.permute.xlu0 %990
        %992 = vrot.lane.b32.xlu0 %v911, 32
        %v993 = vpop.permute.xlu0 %992
        %994 = vrot.lane.b32.xlu0 %v912, 32
        %v995 = vpop.permute.xlu0 %994
        %996 = vrot.lane.b32.xlu0 %v913, 32
        %v997 = vpop.permute.xlu0 %996
        %998 = vrot.lane.b32.xlu0 %v914, 32
        %v999 = vpop.permute.xlu0 %998
        %1000 = vrot.lane.b32.xlu0 %v915, 32
        %v1001 = vpop.permute.xlu0 %1000
        %1002 = vrot.lane.b32.xlu0 %v916, 32
        %v1003 = vpop.permute.xlu0 %1002
        %1004 = vrot.lane.b32.xlu0 %v917, 32
        %v1005 = vpop.permute.xlu0 %1004
        %1006 = vrot.lane.b32.xlu0 %v918, 32
        %v1007 = vpop.permute.xlu0 %1006
        %1008 = vrot.lane.b32.xlu0 %v919, 32
        %v1009 = vpop.permute.xlu0 %1008
        %1010 = vrot.lane.b32.xlu0 %v920, 32
        %v1011 = vpop.permute.xlu0 %1010
        %1012 = vrot.lane.b32.xlu0 %v921, 32
        %v1013 = vpop.permute.xlu0 %1012
        %1014 = vrot.lane.b32.xlu0 %v922, 32
        %v1015 = vpop.permute.xlu0 %1014
        %1016 = vrot.lane.b32.xlu0 %v923, 32
        %v1017 = vpop.permute.xlu0 %1016
        %1018 = vrot.lane.b32.xlu0 %v924, 32
        %v1019 = vpop.permute.xlu0 %1018
        %1020 = vrot.lane.b32.xlu0 %v925, 32
        %v1021 = vpop.permute.xlu0 %1020
        %vm1054 = vcmask 392448
        %1055 = vst.msk [vmem:[#allocation8] sm:$0xff] %vm1054, %v959
        %1056 = vst.msk [vmem:[#allocation8 + $0x10] sm:$0xff] %vm1054, %v961
        %1057 = vst.msk [vmem:[#allocation8 + $0x20] sm:$0xff] %vm1054, %v963
        %1058 = vst.msk [vmem:[#allocation8 + $0x30] sm:$0xff] %vm1054, %v965
        %1059 = vst.msk [vmem:[#allocation8 + $0x40] sm:$0xff] %vm1054, %v967
        %1060 = vst.msk [vmem:[#allocation8 + $0x50] sm:$0xff] %vm1054, %v969
        %1061 = vst.msk [vmem:[#allocation8 + $0x60] sm:$0xff] %vm1054, %v971
        %1062 = vst.msk [vmem:[#allocation8 + $0x70] sm:$0xff] %vm1054, %v973
        %1063 = vst.msk [vmem:[#allocation8 + $0x80] sm:$0xff] %vm1054, %v975
        %1064 = vst.msk [vmem:[#allocation8 + $0x90] sm:$0xff] %vm1054, %v977
        %1065 = vst.msk [vmem:[#allocation8 + $0xa0] sm:$0xff] %vm1054, %v979
        %1066 = vst.msk [vmem:[#allocation8 + $0xb0] sm:$0xff] %vm1054, %v981
        %1067 = vst.msk [vmem:[#allocation8 + $0xc0] sm:$0xff] %vm1054, %v983
        %1068 = vst.msk [vmem:[#allocation8 + $0xd0] sm:$0xff] %vm1054, %v985
        %1069 = vst.msk [vmem:[#allocation8 + $0xe0] sm:$0xff] %vm1054, %v987
        %1070 = vst.msk [vmem:[#allocation8 + $0xf0] sm:$0xff] %vm1054, %v989
        %1071 = vst.msk [vmem:[#allocation8 + $0x100] sm:$0xff] %vm1054, %v991
        %1072 = vst.msk [vmem:[#allocation8 + $0x110] sm:$0xff] %vm1054, %v993
        %1073 = vst.msk [vmem:[#allocation8 + $0x120] sm:$0xff] %vm1054, %v995
        %1074 = vst.msk [vmem:[#allocation8 + $0x130] sm:$0xff] %vm1054, %v997
        %1075 = vst.msk [vmem:[#allocation8 + $0x140] sm:$0xff] %vm1054, %v999
        %1076 = vst.msk [vmem:[#allocation8 + $0x150] sm:$0xff] %vm1054, %v1001
        %1077 = vst.msk [vmem:[#allocation8 + $0x160] sm:$0xff] %vm1054, %v1003
        %1078 = vst.msk [vmem:[#allocation8 + $0x170] sm:$0xff] %vm1054, %v1005
        %1079 = vst.msk [vmem:[#allocation8 + $0x180] sm:$0xff] %vm1054, %v1007
        %1080 = vst.msk [vmem:[#allocation8 + $0x190] sm:$0xff] %vm1054, %v1009
        %1081 = vst.msk [vmem:[#allocation8 + $0x1a0] sm:$0xff] %vm1054, %v1011
        %1082 = vst.msk [vmem:[#allocation8 + $0x1b0] sm:$0xff] %vm1054, %v1013
        %1083 = vst.msk [vmem:[#allocation8 + $0x1c0] sm:$0xff] %vm1054, %v1015
        %1084 = vst.msk [vmem:[#allocation8 + $0x1d0] sm:$0xff] %vm1054, %v1017
        %1085 = vst.msk [vmem:[#allocation8 + $0x1e0] sm:$0xff] %vm1054, %v1019
        %1086 = vst.msk [vmem:[#allocation8 + $0x1f0] sm:$0xff] %vm1054, %v1021
        %v1087 = vld [vmem:[%s604] sm:$0xff]
        %v1088 = vld [vmem:[%s604 + $0x8] sm:$0xff]
        %v1089 = vld [vmem:[%s604 + $0x18] sm:$0xff]
        %v1090 = vld [vmem:[%s604 + $0x20] sm:$0xff]
        %v1091 = vld [vmem:[%s604 + $0x30] sm:$0xff]
        %v1092 = vld [vmem:[%s604 + $0x38] sm:$0xff]
        %v1093 = vld [vmem:[%s604 + $0x48] sm:$0xff]
        %v1094 = vld [vmem:[%s604 + $0x50] sm:$0xff]
        %v1095 = vld [vmem:[%s604 + $0x60] sm:$0xff]
        %v1096 = vld [vmem:[%s604 + $0x68] sm:$0xff]
        %v1097 = vld [vmem:[%s604 + $0x78] sm:$0xff]
        %v1098 = vld [vmem:[%s604 + $0x80] sm:$0xff]
        %v1099 = vld [vmem:[%s604 + $0x90] sm:$0xff]
        %v1100 = vld [vmem:[%s604 + $0x98] sm:$0xff]
        %v1101 = vld [vmem:[%s604 + $0xa8] sm:$0xff]
        %v1102 = vld [vmem:[%s604 + $0xb0] sm:$0xff]
        %v1103 = vld [vmem:[%s604 + $0xc0] sm:$0xff]
        %v1104 = vld [vmem:[%s604 + $0xc8] sm:$0xff]
        %v1105 = vld [vmem:[%s604 + $0xd8] sm:$0xff]
        %v1106 = vld [vmem:[%s604 + $0xe0] sm:$0xff]
        %v1107 = vld [vmem:[%s604 + $0xf0] sm:$0xff]
        %v1108 = vld [vmem:[%s604 + $0xf8] sm:$0xff]
        %v1109 = vld [vmem:[%s604 + $0x108] sm:$0xff]
        %v1110 = vld [vmem:[%s604 + $0x110] sm:$0xff]
        %v1111 = vld [vmem:[%s604 + $0x120] sm:$0xff]
        %v1112 = vld [vmem:[%s604 + $0x128] sm:$0xff]
        %v1113 = vld [vmem:[%s604 + $0x138] sm:$0xff]
        %v1114 = vld [vmem:[%s604 + $0x140] sm:$0xff]
        %v1115 = vld [vmem:[%s604 + $0x150] sm:$0xff]
        %v1116 = vld [vmem:[%s604 + $0x158] sm:$0xff]
        %v1117 = vld [vmem:[%s604 + $0x168] sm:$0xff]
        %v1118 = vld [vmem:[%s604 + $0x170] sm:$0xff]
        %1151 = vrot.lane.b32.xlu0 %v1087, 48
        %v1152 = vpop.permute.xlu0 %1151
        %1153 = vrot.lane.b32.xlu0 %v1088, 48
        %v1154 = vpop.permute.xlu0 %1153
        %1155 = vrot.lane.b32.xlu0 %v1089, 48
        %v1156 = vpop.permute.xlu0 %1155
        %1157 = vrot.lane.b32.xlu0 %v1090, 48
        %v1158 = vpop.permute.xlu0 %1157
        %1159 = vrot.lane.b32.xlu0 %v1091, 48
        %v1160 = vpop.permute.xlu0 %1159
        %1161 = vrot.lane.b32.xlu0 %v1092, 48
        %v1162 = vpop.permute.xlu0 %1161
        %1163 = vrot.lane.b32.xlu0 %v1093, 48
        %v1164 = vpop.permute.xlu0 %1163
        %1165 = vrot.lane.b32.xlu0 %v1094, 48
        %v1166 = vpop.permute.xlu0 %1165
        %1167 = vrot.lane.b32.xlu0 %v1095, 48
        %v1168 = vpop.permute.xlu0 %1167
        %1169 = vrot.lane.b32.xlu0 %v1096, 48
        %v1170 = vpop.permute.xlu0 %1169
        %1171 = vrot.lane.b32.xlu0 %v1097, 48
        %v1172 = vpop.permute.xlu0 %1171
        %1173 = vrot.lane.b32.xlu0 %v1098, 48
        %v1174 = vpop.permute.xlu0 %1173
        %1175 = vrot.lane.b32.xlu0 %v1099, 48
        %v1176 = vpop.permute.xlu0 %1175
        %1177 = vrot.lane.b32.xlu0 %v1100, 48
        %v1178 = vpop.permute.xlu0 %1177
        %1179 = vrot.lane.b32.xlu0 %v1101, 48
        %v1180 = vpop.permute.xlu0 %1179
        %1181 = vrot.lane.b32.xlu0 %v1102, 48
        %v1182 = vpop.permute.xlu0 %1181
        %1183 = vrot.lane.b32.xlu0 %v1103, 48
        %v1184 = vpop.permute.xlu0 %1183
        %1185 = vrot.lane.b32.xlu0 %v1104, 48
        %v1186 = vpop.permute.xlu0 %1185
        %1187 = vrot.lane.b32.xlu0 %v1105, 48
        %v1188 = vpop.permute.xlu0 %1187
        %1189 = vrot.lane.b32.xlu0 %v1106, 48
        %v1190 = vpop.permute.xlu0 %1189
        %1191 = vrot.lane.b32.xlu0 %v1107, 48
        %v1192 = vpop.permute.xlu0 %1191
        %1193 = vrot.lane.b32.xlu0 %v1108, 48
        %v1194 = vpop.permute.xlu0 %1193
        %1195 = vrot.lane.b32.xlu0 %v1109, 48
        %v1196 = vpop.permute.xlu0 %1195
        %1197 = vrot.lane.b32.xlu0 %v1110, 48
        %v1198 = vpop.permute.xlu0 %1197
        %1199 = vrot.lane.b32.xlu0 %v1111, 48
        %v1200 = vpop.permute.xlu0 %1199
        %1201 = vrot.lane.b32.xlu0 %v1112, 48
        %v1202 = vpop.permute.xlu0 %1201
        %1203 = vrot.lane.b32.xlu0 %v1113, 48
        %v1204 = vpop.permute.xlu0 %1203
        %1205 = vrot.lane.b32.xlu0 %v1114, 48
        %v1206 = vpop.permute.xlu0 %1205
        %1207 = vrot.lane.b32.xlu0 %v1115, 48
        %v1208 = vpop.permute.xlu0 %1207
        %1209 = vrot.lane.b32.xlu0 %v1116, 48
        %v1210 = vpop.permute.xlu0 %1209
        %1211 = vrot.lane.b32.xlu0 %v1117, 48
        %v1212 = vpop.permute.xlu0 %1211
        %1213 = vrot.lane.b32.xlu0 %v1118, 48
        %v1214 = vpop.permute.xlu0 %1213
        %vm1247 = vcmask 523648
        %1248 = vst.msk [vmem:[#allocation8] sm:$0xff] %vm1247, %v1152
        %1249 = vst.msk [vmem:[#allocation8 + $0x10] sm:$0xff] %vm1247, %v1154
        %1250 = vst.msk [vmem:[#allocation8 + $0x20] sm:$0xff] %vm1247, %v1156
        %1251 = vst.msk [vmem:[#allocation8 + $0x30] sm:$0xff] %vm1247, %v1158
        %1252 = vst.msk [vmem:[#allocation8 + $0x40] sm:$0xff] %vm1247, %v1160
        %1253 = vst.msk [vmem:[#allocation8 + $0x50] sm:$0xff] %vm1247, %v1162
        %1254 = vst.msk [vmem:[#allocation8 + $0x60] sm:$0xff] %vm1247, %v1164
        %1255 = vst.msk [vmem:[#allocation8 + $0x70] sm:$0xff] %vm1247, %v1166
        %1256 = vst.msk [vmem:[#allocation8 + $0x80] sm:$0xff] %vm1247, %v1168
        %1257 = vst.msk [vmem:[#allocation8 + $0x90] sm:$0xff] %vm1247, %v1170
        %1258 = vst.msk [vmem:[#allocation8 + $0xa0] sm:$0xff] %vm1247, %v1172
        %1259 = vst.msk [vmem:[#allocation8 + $0xb0] sm:$0xff] %vm1247, %v1174
        %1260 = vst.msk [vmem:[#allocation8 + $0xc0] sm:$0xff] %vm1247, %v1176
        %1261 = vst.msk [vmem:[#allocation8 + $0xd0] sm:$0xff] %vm1247, %v1178
        %1262 = vst.msk [vmem:[#allocation8 + $0xe0] sm:$0xff] %vm1247, %v1180
        %1263 = vst.msk [vmem:[#allocation8 + $0xf0] sm:$0xff] %vm1247, %v1182
        %1264 = vst.msk [vmem:[#allocation8 + $0x100] sm:$0xff] %vm1247, %v1184
        %1265 = vst.msk [vmem:[#allocation8 + $0x110] sm:$0xff] %vm1247, %v1186
        %1266 = vst.msk [vmem:[#allocation8 + $0x120] sm:$0xff] %vm1247, %v1188
        %1267 = vst.msk [vmem:[#allocation8 + $0x130] sm:$0xff] %vm1247, %v1190
        %1268 = vst.msk [vmem:[#allocation8 + $0x140] sm:$0xff] %vm1247, %v1192
        %1269 = vst.msk [vmem:[#allocation8 + $0x150] sm:$0xff] %vm1247, %v1194
        %1270 = vst.msk [vmem:[#allocation8 + $0x160] sm:$0xff] %vm1247, %v1196
        %1271 = vst.msk [vmem:[#allocation8 + $0x170] sm:$0xff] %vm1247, %v1198
        %1272 = vst.msk [vmem:[#allocation8 + $0x180] sm:$0xff] %vm1247, %v1200
        %1273 = vst.msk [vmem:[#allocation8 + $0x190] sm:$0xff] %vm1247, %v1202
        %1274 = vst.msk [vmem:[#allocation8 + $0x1a0] sm:$0xff] %vm1247, %v1204
        %1275 = vst.msk [vmem:[#allocation8 + $0x1b0] sm:$0xff] %vm1247, %v1206
        %1276 = vst.msk [vmem:[#allocation8 + $0x1c0] sm:$0xff] %vm1247, %v1208
        %1277 = vst.msk [vmem:[#allocation8 + $0x1d0] sm:$0xff] %vm1247, %v1210
        %1278 = vst.msk [vmem:[#allocation8 + $0x1e0] sm:$0xff] %vm1247, %v1212
        %1279 = vst.msk [vmem:[#allocation8 + $0x1f0] sm:$0xff] %vm1247, %v1214
        %v1280 = vld [vmem:[%s604 + $0x1] sm:$0xff]
        %v1281 = vld [vmem:[%s604 + $0x9] sm:$0xff]
        %v1282 = vld [vmem:[%s604 + $0x19] sm:$0xff]
        %v1283 = vld [vmem:[%s604 + $0x21] sm:$0xff]
        %v1284 = vld [vmem:[%s604 + $0x31] sm:$0xff]
        %v1285 = vld [vmem:[%s604 + $0x39] sm:$0xff]
        %v1286 = vld [vmem:[%s604 + $0x49] sm:$0xff]
        %v1287 = vld [vmem:[%s604 + $0x51] sm:$0xff]
        %v1288 = vld [vmem:[%s604 + $0x61] sm:$0xff]
        %v1289 = vld [vmem:[%s604 + $0x69] sm:$0xff]
        %v1290 = vld [vmem:[%s604 + $0x79] sm:$0xff]
        %v1291 = vld [vmem:[%s604 + $0x81] sm:$0xff]
        %v1292 = vld [vmem:[%s604 + $0x91] sm:$0xff]
        %v1293 = vld [vmem:[%s604 + $0x99] sm:$0xff]
        %v1294 = vld [vmem:[%s604 + $0xa9] sm:$0xff]
        %v1295 = vld [vmem:[%s604 + $0xb1] sm:$0xff]
        %v1296 = vld [vmem:[%s604 + $0xc1] sm:$0xff]
        %v1297 = vld [vmem:[%s604 + $0xc9] sm:$0xff]
        %v1298 = vld [vmem:[%s604 + $0xd9] sm:$0xff]
        %v1299 = vld [vmem:[%s604 + $0xe1] sm:$0xff]
        %v1300 = vld [vmem:[%s604 + $0xf1] sm:$0xff]
        %v1301 = vld [vmem:[%s604 + $0xf9] sm:$0xff]
        %v1302 = vld [vmem:[%s604 + $0x109] sm:$0xff]
        %v1303 = vld [vmem:[%s604 + $0x111] sm:$0xff]
        %v1304 = vld [vmem:[%s604 + $0x121] sm:$0xff]
        %v1305 = vld [vmem:[%s604 + $0x129] sm:$0xff]
        %v1306 = vld [vmem:[%s604 + $0x139] sm:$0xff]
        %v1307 = vld [vmem:[%s604 + $0x141] sm:$0xff]
        %v1308 = vld [vmem:[%s604 + $0x151] sm:$0xff]
        %v1309 = vld [vmem:[%s604 + $0x159] sm:$0xff]
        %v1310 = vld [vmem:[%s604 + $0x169] sm:$0xff]
        %v1311 = vld [vmem:[%s604 + $0x171] sm:$0xff]
        %1344 = vrot.lane.b32.xlu0 %v1280, 64
        %v1345 = vpop.permute.xlu0 %1344
        %1346 = vrot.lane.b32.xlu0 %v1281, 64
        %v1347 = vpop.permute.xlu0 %1346
        %1348 = vrot.lane.b32.xlu0 %v1282, 64
        %v1349 = vpop.permute.xlu0 %1348
        %1350 = vrot.lane.b32.xlu0 %v1283, 64
        %v1351 = vpop.permute.xlu0 %1350
        %1352 = vrot.lane.b32.xlu0 %v1284, 64
        %v1353 = vpop.permute.xlu0 %1352
        %1354 = vrot.lane.b32.xlu0 %v1285, 64
        %v1355 = vpop.permute.xlu0 %1354
        %1356 = vrot.lane.b32.xlu0 %v1286, 64
        %v1357 = vpop.permute.xlu0 %1356
        %1358 = vrot.lane.b32.xlu0 %v1287, 64
        %v1359 = vpop.permute.xlu0 %1358
        %1360 = vrot.lane.b32.xlu0 %v1288, 64
        %v1361 = vpop.permute.xlu0 %1360
        %1362 = vrot.lane.b32.xlu0 %v1289, 64
        %v1363 = vpop.permute.xlu0 %1362
        %1364 = vrot.lane.b32.xlu0 %v1290, 64
        %v1365 = vpop.permute.xlu0 %1364
        %1366 = vrot.lane.b32.xlu0 %v1291, 64
        %v1367 = vpop.permute.xlu0 %1366
        %1368 = vrot.lane.b32.xlu0 %v1292, 64
        %v1369 = vpop.permute.xlu0 %1368
        %1370 = vrot.lane.b32.xlu0 %v1293, 64
        %v1371 = vpop.permute.xlu0 %1370
        %1372 = vrot.lane.b32.xlu0 %v1294, 64
        %v1373 = vpop.permute.xlu0 %1372
        %1374 = vrot.lane.b32.xlu0 %v1295, 64
        %v1375 = vpop.permute.xlu0 %1374
        %1376 = vrot.lane.b32.xlu0 %v1296, 64
        %v1377 = vpop.permute.xlu0 %1376
        %1378 = vrot.lane.b32.xlu0 %v1297, 64
        %v1379 = vpop.permute.xlu0 %1378
        %1380 = vrot.lane.b32.xlu0 %v1298, 64
        %v1381 = vpop.permute.xlu0 %1380
        %1382 = vrot.lane.b32.xlu0 %v1299, 64
        %v1383 = vpop.permute.xlu0 %1382
        %1384 = vrot.lane.b32.xlu0 %v1300, 64
        %v1385 = vpop.permute.xlu0 %1384
        %1386 = vrot.lane.b32.xlu0 %v1301, 64
        %v1387 = vpop.permute.xlu0 %1386
        %1388 = vrot.lane.b32.xlu0 %v1302, 64
        %v1389 = vpop.permute.xlu0 %1388
        %1390 = vrot.lane.b32.xlu0 %v1303, 64
        %v1391 = vpop.permute.xlu0 %1390
        %1392 = vrot.lane.b32.xlu0 %v1304, 64
        %v1393 = vpop.permute.xlu0 %1392
        %1394 = vrot.lane.b32.xlu0 %v1305, 64
        %v1395 = vpop.permute.xlu0 %1394
        %1396 = vrot.lane.b32.xlu0 %v1306, 64
        %v1397 = vpop.permute.xlu0 %1396
        %1398 = vrot.lane.b32.xlu0 %v1307, 64
        %v1399 = vpop.permute.xlu0 %1398
        %1400 = vrot.lane.b32.xlu0 %v1308, 64
        %v1401 = vpop.permute.xlu0 %1400
        %1402 = vrot.lane.b32.xlu0 %v1309, 64
        %v1403 = vpop.permute.xlu0 %1402
        %1404 = vrot.lane.b32.xlu0 %v1310, 64
        %v1405 = vpop.permute.xlu0 %1404
        %1406 = vrot.lane.b32.xlu0 %v1311, 64
        %v1407 = vpop.permute.xlu0 %1406
        %vm1440 = vcmask 654848
        %1441 = vst.msk [vmem:[#allocation8] sm:$0xff] %vm1440, %v1345
        %1442 = vst.msk [vmem:[#allocation8 + $0x10] sm:$0xff] %vm1440, %v1347
        %1443 = vst.msk [vmem:[#allocation8 + $0x20] sm:$0xff] %vm1440, %v1349
        %1444 = vst.msk [vmem:[#allocation8 + $0x30] sm:$0xff] %vm1440, %v1351
        %1445 = vst.msk [vmem:[#allocation8 + $0x40] sm:$0xff] %vm1440, %v1353
        %1446 = vst.msk [vmem:[#allocation8 + $0x50] sm:$0xff] %vm1440, %v1355
        %1447 = vst.msk [vmem:[#allocation8 + $0x60] sm:$0xff] %vm1440, %v1357
        %1448 = vst.msk [vmem:[#allocation8 + $0x70] sm:$0xff] %vm1440, %v1359
        %1449 = vst.msk [vmem:[#allocation8 + $0x80] sm:$0xff] %vm1440, %v1361
        %1450 = vst.msk [vmem:[#allocation8 + $0x90] sm:$0xff] %vm1440, %v1363
        %1451 = vst.msk [vmem:[#allocation8 + $0xa0] sm:$0xff] %vm1440, %v1365
        %1452 = vst.msk [vmem:[#allocation8 + $0xb0] sm:$0xff] %vm1440, %v1367
        %1453 = vst.msk [vmem:[#allocation8 + $0xc0] sm:$0xff] %vm1440, %v1369
        %1454 = vst.msk [vmem:[#allocation8 + $0xd0] sm:$0xff] %vm1440, %v1371
        %1455 = vst.msk [vmem:[#allocation8 + $0xe0] sm:$0xff] %vm1440, %v1373
        %1456 = vst.msk [vmem:[#allocation8 + $0xf0] sm:$0xff] %vm1440, %v1375
        %1457 = vst.msk [vmem:[#allocation8 + $0x100] sm:$0xff] %vm1440, %v1377
        %1458 = vst.msk [vmem:[#allocation8 + $0x110] sm:$0xff] %vm1440, %v1379
        %1459 = vst.msk [vmem:[#allocation8 + $0x120] sm:$0xff] %vm1440, %v1381
        %1460 = vst.msk [vmem:[#allocation8 + $0x130] sm:$0xff] %vm1440, %v1383
        %1461 = vst.msk [vmem:[#allocation8 + $0x140] sm:$0xff] %vm1440, %v1385
        %1462 = vst.msk [vmem:[#allocation8 + $0x150] sm:$0xff] %vm1440, %v1387
        %1463 = vst.msk [vmem:[#allocation8 + $0x160] sm:$0xff] %vm1440, %v1389
        %1464 = vst.msk [vmem:[#allocation8 + $0x170] sm:$0xff] %vm1440, %v1391
        %1465 = vst.msk [vmem:[#allocation8 + $0x180] sm:$0xff] %vm1440, %v1393
        %1466 = vst.msk [vmem:[#allocation8 + $0x190] sm:$0xff] %vm1440, %v1395
        %1467 = vst.msk [vmem:[#allocation8 + $0x1a0] sm:$0xff] %vm1440, %v1397
        %1468 = vst.msk [vmem:[#allocation8 + $0x1b0] sm:$0xff] %vm1440, %v1399
        %1469 = vst.msk [vmem:[#allocation8 + $0x1c0] sm:$0xff] %vm1440, %v1401
        %1470 = vst.msk [vmem:[#allocation8 + $0x1d0] sm:$0xff] %vm1440, %v1403
        %1471 = vst.msk [vmem:[#allocation8 + $0x1e0] sm:$0xff] %vm1440, %v1405
        %1472 = vst.msk [vmem:[#allocation8 + $0x1f0] sm:$0xff] %vm1440, %v1407
        %v1473 = vld [vmem:[%s604 + $0x2] sm:$0xff]
        %v1474 = vld [vmem:[%s604 + $0xa] sm:$0xff]
        %v1475 = vld [vmem:[%s604 + $0x1a] sm:$0xff]
        %v1476 = vld [vmem:[%s604 + $0x22] sm:$0xff]
        %v1477 = vld [vmem:[%s604 + $0x32] sm:$0xff]
        %v1478 = vld [vmem:[%s604 + $0x3a] sm:$0xff]
        %v1479 = vld [vmem:[%s604 + $0x4a] sm:$0xff]
        %v1480 = vld [vmem:[%s604 + $0x52] sm:$0xff]
        %v1481 = vld [vmem:[%s604 + $0x62] sm:$0xff]
        %v1482 = vld [vmem:[%s604 + $0x6a] sm:$0xff]
        %v1483 = vld [vmem:[%s604 + $0x7a] sm:$0xff]
        %v1484 = vld [vmem:[%s604 + $0x82] sm:$0xff]
        %v1485 = vld [vmem:[%s604 + $0x92] sm:$0xff]
        %v1486 = vld [vmem:[%s604 + $0x9a] sm:$0xff]
        %v1487 = vld [vmem:[%s604 + $0xaa] sm:$0xff]
        %v1488 = vld [vmem:[%s604 + $0xb2] sm:$0xff]
        %v1489 = vld [vmem:[%s604 + $0xc2] sm:$0xff]
        %v1490 = vld [vmem:[%s604 + $0xca] sm:$0xff]
        %v1491 = vld [vmem:[%s604 + $0xda] sm:$0xff]
        %v1492 = vld [vmem:[%s604 + $0xe2] sm:$0xff]
        %v1493 = vld [vmem:[%s604 + $0xf2] sm:$0xff]
        %v1494 = vld [vmem:[%s604 + $0xfa] sm:$0xff]
        %v1495 = vld [vmem:[%s604 + $0x10a] sm:$0xff]
        %v1496 = vld [vmem:[%s604 + $0x112] sm:$0xff]
        %v1497 = vld [vmem:[%s604 + $0x122] sm:$0xff]
        %v1498 = vld [vmem:[%s604 + $0x12a] sm:$0xff]
        %v1499 = vld [vmem:[%s604 + $0x13a] sm:$0xff]
        %v1500 = vld [vmem:[%s604 + $0x142] sm:$0xff]
        %v1501 = vld [vmem:[%s604 + $0x152] sm:$0xff]
        %v1502 = vld [vmem:[%s604 + $0x15a] sm:$0xff]
        %v1503 = vld [vmem:[%s604 + $0x16a] sm:$0xff]
        %v1504 = vld [vmem:[%s604 + $0x172] sm:$0xff]
        %1537 = vrot.lane.b32.xlu0 %v1473, 80
        %v1538 = vpop.permute.xlu0 %1537
        %1539 = vrot.lane.b32.xlu0 %v1474, 80
        %v1540 = vpop.permute.xlu0 %1539
        %1541 = vrot.lane.b32.xlu0 %v1475, 80
        %v1542 = vpop.permute.xlu0 %1541
        %1543 = vrot.lane.b32.xlu0 %v1476, 80
        %v1544 = vpop.permute.xlu0 %1543
        %1545 = vrot.lane.b32.xlu0 %v1477, 80
        %v1546 = vpop.permute.xlu0 %1545
        %1547 = vrot.lane.b32.xlu0 %v1478, 80
        %v1548 = vpop.permute.xlu0 %1547
        %1549 = vrot.lane.b32.xlu0 %v1479, 80
        %v1550 = vpop.permute.xlu0 %1549
        %1551 = vrot.lane.b32.xlu0 %v1480, 80
        %v1552 = vpop.permute.xlu0 %1551
        %1553 = vrot.lane.b32.xlu0 %v1481, 80
        %v1554 = vpop.permute.xlu0 %1553
        %1555 = vrot.lane.b32.xlu0 %v1482, 80
        %v1556 = vpop.permute.xlu0 %1555
        %1557 = vrot.lane.b32.xlu0 %v1483, 80
        %v1558 = vpop.permute.xlu0 %1557
        %1559 = vrot.lane.b32.xlu0 %v1484, 80
        %v1560 = vpop.permute.xlu0 %1559
        %1561 = vrot.lane.b32.xlu0 %v1485, 80
        %v1562 = vpop.permute.xlu0 %1561
        %1563 = vrot.lane.b32.xlu0 %v1486, 80
        %v1564 = vpop.permute.xlu0 %1563
        %1565 = vrot.lane.b32.xlu0 %v1487, 80
        %v1566 = vpop.permute.xlu0 %1565
        %1567 = vrot.lane.b32.xlu0 %v1488, 80
        %v1568 = vpop.permute.xlu0 %1567
        %1569 = vrot.lane.b32.xlu0 %v1489, 80
        %v1570 = vpop.permute.xlu0 %1569
        %1571 = vrot.lane.b32.xlu0 %v1490, 80
        %v1572 = vpop.permute.xlu0 %1571
        %1573 = vrot.lane.b32.xlu0 %v1491, 80
        %v1574 = vpop.permute.xlu0 %1573
        %1575 = vrot.lane.b32.xlu0 %v1492, 80
        %v1576 = vpop.permute.xlu0 %1575
        %1577 = vrot.lane.b32.xlu0 %v1493, 80
        %v1578 = vpop.permute.xlu0 %1577
        %1579 = vrot.lane.b32.xlu0 %v1494, 80
        %v1580 = vpop.permute.xlu0 %1579
        %1581 = vrot.lane.b32.xlu0 %v1495, 80
        %v1582 = vpop.permute.xlu0 %1581
        %1583 = vrot.lane.b32.xlu0 %v1496, 80
        %v1584 = vpop.permute.xlu0 %1583
        %1585 = vrot.lane.b32.xlu0 %v1497, 80
        %v1586 = vpop.permute.xlu0 %1585
        %1587 = vrot.lane.b32.xlu0 %v1498, 80
        %v1588 = vpop.permute.xlu0 %1587
        %1589 = vrot.lane.b32.xlu0 %v1499, 80
        %v1590 = vpop.permute.xlu0 %1589
        %1591 = vrot.lane.b32.xlu0 %v1500, 80
        %v1592 = vpop.permute.xlu0 %1591
        %1593 = vrot.lane.b32.xlu0 %v1501, 80
        %v1594 = vpop.permute.xlu0 %1593
        %1595 = vrot.lane.b32.xlu0 %v1502, 80
        %v1596 = vpop.permute.xlu0 %1595
        %1597 = vrot.lane.b32.xlu0 %v1503, 80
        %v1598 = vpop.permute.xlu0 %1597
        %1599 = vrot.lane.b32.xlu0 %v1504, 80
        %v1600 = vpop.permute.xlu0 %1599
        %vm1633 = vcmask 786048
        %1634 = vst.msk [vmem:[#allocation8] sm:$0xff] %vm1633, %v1538
        %1635 = vst.msk [vmem:[#allocation8 + $0x10] sm:$0xff] %vm1633, %v1540
        %1636 = vst.msk [vmem:[#allocation8 + $0x20] sm:$0xff] %vm1633, %v1542
        %1637 = vst.msk [vmem:[#allocation8 + $0x30] sm:$0xff] %vm1633, %v1544
        %1638 = vst.msk [vmem:[#allocation8 + $0x40] sm:$0xff] %vm1633, %v1546
        %1639 = vst.msk [vmem:[#allocation8 + $0x50] sm:$0xff] %vm1633, %v1548
        %1640 = vst.msk [vmem:[#allocation8 + $0x60] sm:$0xff] %vm1633, %v1550
        %1641 = vst.msk [vmem:[#allocation8 + $0x70] sm:$0xff] %vm1633, %v1552
        %1642 = vst.msk [vmem:[#allocation8 + $0x80] sm:$0xff] %vm1633, %v1554
        %1643 = vst.msk [vmem:[#allocation8 + $0x90] sm:$0xff] %vm1633, %v1556
        %1644 = vst.msk [vmem:[#allocation8 + $0xa0] sm:$0xff] %vm1633, %v1558
        %1645 = vst.msk [vmem:[#allocation8 + $0xb0] sm:$0xff] %vm1633, %v1560
        %1646 = vst.msk [vmem:[#allocation8 + $0xc0] sm:$0xff] %vm1633, %v1562
        %1647 = vst.msk [vmem:[#allocation8 + $0xd0] sm:$0xff] %vm1633, %v1564
        %1648 = vst.msk [vmem:[#allocation8 + $0xe0] sm:$0xff] %vm1633, %v1566
        %1649 = vst.msk [vmem:[#allocation8 + $0xf0] sm:$0xff] %vm1633, %v1568
        %1650 = vst.msk [vmem:[#allocation8 + $0x100] sm:$0xff] %vm1633, %v1570
        %1651 = vst.msk [vmem:[#allocation8 + $0x110] sm:$0xff] %vm1633, %v1572
        %1652 = vst.msk [vmem:[#allocation8 + $0x120] sm:$0xff] %vm1633, %v1574
        %1653 = vst.msk [vmem:[#allocation8 + $0x130] sm:$0xff] %vm1633, %v1576
        %1654 = vst.msk [vmem:[#allocation8 + $0x140] sm:$0xff] %vm1633, %v1578
        %1655 = vst.msk [vmem:[#allocation8 + $0x150] sm:$0xff] %vm1633, %v1580
        %1656 = vst.msk [vmem:[#allocation8 + $0x160] sm:$0xff] %vm1633, %v1582
        %1657 = vst.msk [vmem:[#allocation8 + $0x170] sm:$0xff] %vm1633, %v1584
        %1658 = vst.msk [vmem:[#allocation8 + $0x180] sm:$0xff] %vm1633, %v1586
        %1659 = vst.msk [vmem:[#allocation8 + $0x190] sm:$0xff] %vm1633, %v1588
        %1660 = vst.msk [vmem:[#allocation8 + $0x1a0] sm:$0xff] %vm1633, %v1590
        %1661 = vst.msk [vmem:[#allocation8 + $0x1b0] sm:$0xff] %vm1633, %v1592
        %1662 = vst.msk [vmem:[#allocation8 + $0x1c0] sm:$0xff] %vm1633, %v1594
        %1663 = vst.msk [vmem:[#allocation8 + $0x1d0] sm:$0xff] %vm1633, %v1596
        %1664 = vst.msk [vmem:[#allocation8 + $0x1e0] sm:$0xff] %vm1633, %v1598
        %1665 = vst.msk [vmem:[#allocation8 + $0x1f0] sm:$0xff] %vm1633, %v1600
        %s1666 = scalar_lea.vmem [#allocation2], 48
        %v1667 = vld [vmem:[%s1666] sm:$0xff]
        %v1668 = vld [vmem:[%s1666 + $0x8] sm:$0xff]
        %v1669 = vld [vmem:[%s1666 + $0x18] sm:$0xff]
        %v1670 = vld [vmem:[%s1666 + $0x20] sm:$0xff]
        %v1671 = vld [vmem:[%s1666 + $0x30] sm:$0xff]
        %v1672 = vld [vmem:[%s1666 + $0x38] sm:$0xff]
        %v1673 = vld [vmem:[%s1666 + $0x48] sm:$0xff]
        %v1674 = vld [vmem:[%s1666 + $0x50] sm:$0xff]
        %v1675 = vld [vmem:[%s1666 + $0x60] sm:$0xff]
        %v1676 = vld [vmem:[%s1666 + $0x68] sm:$0xff]
        %v1677 = vld [vmem:[%s1666 + $0x78] sm:$0xff]
        %v1678 = vld [vmem:[%s1666 + $0x80] sm:$0xff]
        %v1679 = vld [vmem:[%s1666 + $0x90] sm:$0xff]
        %v1680 = vld [vmem:[%s1666 + $0x98] sm:$0xff]
        %v1681 = vld [vmem:[%s1666 + $0xa8] sm:$0xff]
        %v1682 = vld [vmem:[%s1666 + $0xb0] sm:$0xff]
        %v1683 = vld [vmem:[%s1666 + $0xc0] sm:$0xff]
        %v1684 = vld [vmem:[%s1666 + $0xc8] sm:$0xff]
        %v1685 = vld [vmem:[%s1666 + $0xd8] sm:$0xff]
        %v1686 = vld [vmem:[%s1666 + $0xe0] sm:$0xff]
        %v1687 = vld [vmem:[%s1666 + $0xf0] sm:$0xff]
        %v1688 = vld [vmem:[%s1666 + $0xf8] sm:$0xff]
        %v1689 = vld [vmem:[%s1666 + $0x108] sm:$0xff]
        %v1690 = vld [vmem:[%s1666 + $0x110] sm:$0xff]
        %v1691 = vld [vmem:[%s1666 + $0x120] sm:$0xff]
        %v1692 = vld [vmem:[%s1666 + $0x128] sm:$0xff]
        %v1693 = vld [vmem:[%s1666 + $0x138] sm:$0xff]
        %v1694 = vld [vmem:[%s1666 + $0x140] sm:$0xff]
        %v1695 = vld [vmem:[%s1666 + $0x150] sm:$0xff]
        %v1696 = vld [vmem:[%s1666 + $0x158] sm:$0xff]
        %v1697 = vld [vmem:[%s1666 + $0x168] sm:$0xff]
        %v1698 = vld [vmem:[%s1666 + $0x170] sm:$0xff]
        %1731 = vrot.lane.b32.xlu0 %v1667, 96
        %v1732 = vpop.permute.xlu0 %1731
        %1733 = vrot.lane.b32.xlu0 %v1668, 96
        %v1734 = vpop.permute.xlu0 %1733
        %1735 = vrot.lane.b32.xlu0 %v1669, 96
        %v1736 = vpop.permute.xlu0 %1735
        %1737 = vrot.lane.b32.xlu0 %v1670, 96
        %v1738 = vpop.permute.xlu0 %1737
        %1739 = vrot.lane.b32.xlu0 %v1671, 96
        %v1740 = vpop.permute.xlu0 %1739
        %1741 = vrot.lane.b32.xlu0 %v1672, 96
        %v1742 = vpop.permute.xlu0 %1741
        %1743 = vrot.lane.b32.xlu0 %v1673, 96
        %v1744 = vpop.permute.xlu0 %1743
        %1745 = vrot.lane.b32.xlu0 %v1674, 96
        %v1746 = vpop.permute.xlu0 %1745
        %1747 = vrot.lane.b32.xlu0 %v1675, 96
        %v1748 = vpop.permute.xlu0 %1747
        %1749 = vrot.lane.b32.xlu0 %v1676, 96
        %v1750 = vpop.permute.xlu0 %1749
        %1751 = vrot.lane.b32.xlu0 %v1677, 96
        %v1752 = vpop.permute.xlu0 %1751
        %1753 = vrot.lane.b32.xlu0 %v1678, 96
        %v1754 = vpop.permute.xlu0 %1753
        %1755 = vrot.lane.b32.xlu0 %v1679, 96
        %v1756 = vpop.permute.xlu0 %1755
        %1757 = vrot.lane.b32.xlu0 %v1680, 96
        %v1758 = vpop.permute.xlu0 %1757
        %1759 = vrot.lane.b32.xlu0 %v1681, 96
        %v1760 = vpop.permute.xlu0 %1759
        %1761 = vrot.lane.b32.xlu0 %v1682, 96
        %v1762 = vpop.permute.xlu0 %1761
        %1763 = vrot.lane.b32.xlu0 %v1683, 96
        %v1764 = vpop.permute.xlu0 %1763
        %1765 = vrot.lane.b32.xlu0 %v1684, 96
        %v1766 = vpop.permute.xlu0 %1765
        %1767 = vrot.lane.b32.xlu0 %v1685, 96
        %v1768 = vpop.permute.xlu0 %1767
        %1769 = vrot.lane.b32.xlu0 %v1686, 96
        %v1770 = vpop.permute.xlu0 %1769
        %1771 = vrot.lane.b32.xlu0 %v1687, 96
        %v1772 = vpop.permute.xlu0 %1771
        %1773 = vrot.lane.b32.xlu0 %v1688, 96
        %v1774 = vpop.permute.xlu0 %1773
        %1775 = vrot.lane.b32.xlu0 %v1689, 96
        %v1776 = vpop.permute.xlu0 %1775
        %1777 = vrot.lane.b32.xlu0 %v1690, 96
        %v1778 = vpop.permute.xlu0 %1777
        %1779 = vrot.lane.b32.xlu0 %v1691, 96
        %v1780 = vpop.permute.xlu0 %1779
        %1781 = vrot.lane.b32.xlu0 %v1692, 96
        %v1782 = vpop.permute.xlu0 %1781
        %1783 = vrot.lane.b32.xlu0 %v1693, 96
        %v1784 = vpop.permute.xlu0 %1783
        %1785 = vrot.lane.b32.xlu0 %v1694, 96
        %v1786 = vpop.permute.xlu0 %1785
        %1787 = vrot.lane.b32.xlu0 %v1695, 96
        %v1788 = vpop.permute.xlu0 %1787
        %1789 = vrot.lane.b32.xlu0 %v1696, 96
        %v1790 = vpop.permute.xlu0 %1789
        %1791 = vrot.lane.b32.xlu0 %v1697, 96
        %v1792 = vpop.permute.xlu0 %1791
        %1793 = vrot.lane.b32.xlu0 %v1698, 96
        %v1794 = vpop.permute.xlu0 %1793
        %vm1827 = vcmask 917248
        %1828 = vst.msk [vmem:[#allocation8] sm:$0xff] %vm1827, %v1732
        %1829 = vst.msk [vmem:[#allocation8 + $0x10] sm:$0xff] %vm1827, %v1734
        %1830 = vst.msk [vmem:[#allocation8 + $0x20] sm:$0xff] %vm1827, %v1736
        %1831 = vst.msk [vmem:[#allocation8 + $0x30] sm:$0xff] %vm1827, %v1738
        %1832 = vst.msk [vmem:[#allocation8 + $0x40] sm:$0xff] %vm1827, %v1740
        %1833 = vst.msk [vmem:[#allocation8 + $0x50] sm:$0xff] %vm1827, %v1742
        %1834 = vst.msk [vmem:[#allocation8 + $0x60] sm:$0xff] %vm1827, %v1744
        %1835 = vst.msk [vmem:[#allocation8 + $0x70] sm:$0xff] %vm1827, %v1746
        %1836 = vst.msk [vmem:[#allocation8 + $0x80] sm:$0xff] %vm1827, %v1748
        %1837 = vst.msk [vmem:[#allocation8 + $0x90] sm:$0xff] %vm1827, %v1750
        %1838 = vst.msk [vmem:[#allocation8 + $0xa0] sm:$0xff] %vm1827, %v1752
        %1839 = vst.msk [vmem:[#allocation8 + $0xb0] sm:$0xff] %vm1827, %v1754
        %1840 = vst.msk [vmem:[#allocation8 + $0xc0] sm:$0xff] %vm1827, %v1756
        %1841 = vst.msk [vmem:[#allocation8 + $0xd0] sm:$0xff] %vm1827, %v1758
        %1842 = vst.msk [vmem:[#allocation8 + $0xe0] sm:$0xff] %vm1827, %v1760
        %1843 = vst.msk [vmem:[#allocation8 + $0xf0] sm:$0xff] %vm1827, %v1762
        %1844 = vst.msk [vmem:[#allocation8 + $0x100] sm:$0xff] %vm1827, %v1764
        %1845 = vst.msk [vmem:[#allocation8 + $0x110] sm:$0xff] %vm1827, %v1766
        %1846 = vst.msk [vmem:[#allocation8 + $0x120] sm:$0xff] %vm1827, %v1768
        %1847 = vst.msk [vmem:[#allocation8 + $0x130] sm:$0xff] %vm1827, %v1770
        %1848 = vst.msk [vmem:[#allocation8 + $0x140] sm:$0xff] %vm1827, %v1772
        %1849 = vst.msk [vmem:[#allocation8 + $0x150] sm:$0xff] %vm1827, %v1774
        %1850 = vst.msk [vmem:[#allocation8 + $0x160] sm:$0xff] %vm1827, %v1776
        %1851 = vst.msk [vmem:[#allocation8 + $0x170] sm:$0xff] %vm1827, %v1778
        %1852 = vst.msk [vmem:[#allocation8 + $0x180] sm:$0xff] %vm1827, %v1780
        %1853 = vst.msk [vmem:[#allocation8 + $0x190] sm:$0xff] %vm1827, %v1782
        %1854 = vst.msk [vmem:[#allocation8 + $0x1a0] sm:$0xff] %vm1827, %v1784
        %1855 = vst.msk [vmem:[#allocation8 + $0x1b0] sm:$0xff] %vm1827, %v1786
        %1856 = vst.msk [vmem:[#allocation8 + $0x1c0] sm:$0xff] %vm1827, %v1788
        %1857 = vst.msk [vmem:[#allocation8 + $0x1d0] sm:$0xff] %vm1827, %v1790
        %1858 = vst.msk [vmem:[#allocation8 + $0x1e0] sm:$0xff] %vm1827, %v1792
        %1859 = vst.msk [vmem:[#allocation8 + $0x1f0] sm:$0xff] %vm1827, %v1794
        %v1860 = vld [vmem:[%s1666 + $0x1] sm:$0xff]
        %v1861 = vld [vmem:[%s1666 + $0x9] sm:$0xff]
        %v1862 = vld [vmem:[%s1666 + $0x19] sm:$0xff]
        %v1863 = vld [vmem:[%s1666 + $0x21] sm:$0xff]
        %v1864 = vld [vmem:[%s1666 + $0x31] sm:$0xff]
        %v1865 = vld [vmem:[%s1666 + $0x39] sm:$0xff]
        %v1866 = vld [vmem:[%s1666 + $0x49] sm:$0xff]
        %v1867 = vld [vmem:[%s1666 + $0x51] sm:$0xff]
        %v1868 = vld [vmem:[%s1666 + $0x61] sm:$0xff]
        %v1869 = vld [vmem:[%s1666 + $0x69] sm:$0xff]
        %v1870 = vld [vmem:[%s1666 + $0x79] sm:$0xff]
        %v1871 = vld [vmem:[%s1666 + $0x81] sm:$0xff]
        %v1872 = vld [vmem:[%s1666 + $0x91] sm:$0xff]
        %v1873 = vld [vmem:[%s1666 + $0x99] sm:$0xff]
        %v1874 = vld [vmem:[%s1666 + $0xa9] sm:$0xff]
        %v1875 = vld [vmem:[%s1666 + $0xb1] sm:$0xff]
        %v1876 = vld [vmem:[%s1666 + $0xc1] sm:$0xff]
        %v1877 = vld [vmem:[%s1666 + $0xc9] sm:$0xff]
        %v1878 = vld [vmem:[%s1666 + $0xd9] sm:$0xff]
        %v1879 = vld [vmem:[%s1666 + $0xe1] sm:$0xff]
        %v1880 = vld [vmem:[%s1666 + $0xf1] sm:$0xff]
        %v1881 = vld [vmem:[%s1666 + $0xf9] sm:$0xff]
        %v1882 = vld [vmem:[%s1666 + $0x109] sm:$0xff]
        %v1883 = vld [vmem:[%s1666 + $0x111] sm:$0xff]
        %v1884 = vld [vmem:[%s1666 + $0x121] sm:$0xff]
        %v1885 = vld [vmem:[%s1666 + $0x129] sm:$0xff]
        %v1886 = vld [vmem:[%s1666 + $0x139] sm:$0xff]
        %v1887 = vld [vmem:[%s1666 + $0x141] sm:$0xff]
        %v1888 = vld [vmem:[%s1666 + $0x151] sm:$0xff]
        %v1889 = vld [vmem:[%s1666 + $0x159] sm:$0xff]
        %v1890 = vld [vmem:[%s1666 + $0x169] sm:$0xff]
        %v1891 = vld [vmem:[%s1666 + $0x171] sm:$0xff]
        %1924 = vrot.lane.b32.xlu0 %v1860, 112
        %v1925 = vpop.permute.xlu0 %1924
        %1926 = vrot.lane.b32.xlu0 %v1861, 112
        %v1927 = vpop.permute.xlu0 %1926
        %1928 = vrot.lane.b32.xlu0 %v1862, 112
        %v1929 = vpop.permute.xlu0 %1928
        %1930 = vrot.lane.b32.xlu0 %v1863, 112
        %v1931 = vpop.permute.xlu0 %1930
        %1932 = vrot.lane.b32.xlu0 %v1864, 112
        %v1933 = vpop.permute.xlu0 %1932
        %1934 = vrot.lane.b32.xlu0 %v1865, 112
        %v1935 = vpop.permute.xlu0 %1934
        %1936 = vrot.lane.b32.xlu0 %v1866, 112
        %v1937 = vpop.permute.xlu0 %1936
        %1938 = vrot.lane.b32.xlu0 %v1867, 112
        %v1939 = vpop.permute.xlu0 %1938
        %1940 = vrot.lane.b32.xlu0 %v1868, 112
        %v1941 = vpop.permute.xlu0 %1940
        %1942 = vrot.lane.b32.xlu0 %v1869, 112
        %v1943 = vpop.permute.xlu0 %1942
        %1944 = vrot.lane.b32.xlu0 %v1870, 112
        %v1945 = vpop.permute.xlu0 %1944
        %1946 = vrot.lane.b32.xlu0 %v1871, 112
        %v1947 = vpop.permute.xlu0 %1946
        %1948 = vrot.lane.b32.xlu0 %v1872, 112
        %v1949 = vpop.permute.xlu0 %1948
        %1950 = vrot.lane.b32.xlu0 %v1873, 112
        %v1951 = vpop.permute.xlu0 %1950
        %1952 = vrot.lane.b32.xlu0 %v1874, 112
        %v1953 = vpop.permute.xlu0 %1952
        %1954 = vrot.lane.b32.xlu0 %v1875, 112
        %v1955 = vpop.permute.xlu0 %1954
        %1956 = vrot.lane.b32.xlu0 %v1876, 112
        %v1957 = vpop.permute.xlu0 %1956
        %1958 = vrot.lane.b32.xlu0 %v1877, 112
        %v1959 = vpop.permute.xlu0 %1958
        %1960 = vrot.lane.b32.xlu0 %v1878, 112
        %v1961 = vpop.permute.xlu0 %1960
        %1962 = vrot.lane.b32.xlu0 %v1879, 112
        %v1963 = vpop.permute.xlu0 %1962
        %1964 = vrot.lane.b32.xlu0 %v1880, 112
        %v1965 = vpop.permute.xlu0 %1964
        %1966 = vrot.lane.b32.xlu0 %v1881, 112
        %v1967 = vpop.permute.xlu0 %1966
        %1968 = vrot.lane.b32.xlu0 %v1882, 112
        %v1969 = vpop.permute.xlu0 %1968
        %1970 = vrot.lane.b32.xlu0 %v1883, 112
        %v1971 = vpop.permute.xlu0 %1970
        %1972 = vrot.lane.b32.xlu0 %v1884, 112
        %v1973 = vpop.permute.xlu0 %1972
        %1974 = vrot.lane.b32.xlu0 %v1885, 112
        %v1975 = vpop.permute.xlu0 %1974
        %1976 = vrot.lane.b32.xlu0 %v1886, 112
        %v1977 = vpop.permute.xlu0 %1976
        %1978 = vrot.lane.b32.xlu0 %v1887, 112
        %v1979 = vpop.permute.xlu0 %1978
        %1980 = vrot.lane.b32.xlu0 %v1888, 112
        %v1981 = vpop.permute.xlu0 %1980
        %1982 = vrot.lane.b32.xlu0 %v1889, 112
        %v1983 = vpop.permute.xlu0 %1982
        %1984 = vrot.lane.b32.xlu0 %v1890, 112
        %v1985 = vpop.permute.xlu0 %1984
        %1986 = vrot.lane.b32.xlu0 %v1891, 112
        %v1987 = vpop.permute.xlu0 %1986
        %vm2020 = vcmask 1048448
        %2021 = vst.msk [vmem:[#allocation8] sm:$0xff] %vm2020, %v1925
        %2022 = vst.msk [vmem:[#allocation8 + $0x10] sm:$0xff] %vm2020, %v1927
        %2023 = vst.msk [vmem:[#allocation8 + $0x20] sm:$0xff] %vm2020, %v1929
        %2024 = vst.msk [vmem:[#allocation8 + $0x30] sm:$0xff] %vm2020, %v1931
        %2025 = vst.msk [vmem:[#allocation8 + $0x40] sm:$0xff] %vm2020, %v1933
        %2026 = vst.msk [vmem:[#allocation8 + $0x50] sm:$0xff] %vm2020, %v1935
        %2027 = vst.msk [vmem:[#allocation8 + $0x60] sm:$0xff] %vm2020, %v1937
        %2028 = vst.msk [vmem:[#allocation8 + $0x70] sm:$0xff] %vm2020, %v1939
        %2029 = vst.msk [vmem:[#allocation8 + $0x80] sm:$0xff] %vm2020, %v1941
        %2030 = vst.msk [vmem:[#allocation8 + $0x90] sm:$0xff] %vm2020, %v1943
        %2031 = vst.msk [vmem:[#allocation8 + $0xa0] sm:$0xff] %vm2020, %v1945
        %2032 = vst.msk [vmem:[#allocation8 + $0xb0] sm:$0xff] %vm2020, %v1947
        %2033 = vst.msk [vmem:[#allocation8 + $0xc0] sm:$0xff] %vm2020, %v1949
        %2034 = vst.msk [vmem:[#allocation8 + $0xd0] sm:$0xff] %vm2020, %v1951
        %2035 = vst.msk [vmem:[#allocation8 + $0xe0] sm:$0xff] %vm2020, %v1953
        %2036 = vst.msk [vmem:[#allocation8 + $0xf0] sm:$0xff] %vm2020, %v1955
        %2037 = vst.msk [vmem:[#allocation8 + $0x100] sm:$0xff] %vm2020, %v1957
        %2038 = vst.msk [vmem:[#allocation8 + $0x110] sm:$0xff] %vm2020, %v1959
        %2039 = vst.msk [vmem:[#allocation8 + $0x120] sm:$0xff] %vm2020, %v1961
        %2040 = vst.msk [vmem:[#allocation8 + $0x130] sm:$0xff] %vm2020, %v1963
        %2041 = vst.msk [vmem:[#allocation8 + $0x140] sm:$0xff] %vm2020, %v1965
        %2042 = vst.msk [vmem:[#allocation8 + $0x150] sm:$0xff] %vm2020, %v1967
        %2043 = vst.msk [vmem:[#allocation8 + $0x160] sm:$0xff] %vm2020, %v1969
        %2044 = vst.msk [vmem:[#allocation8 + $0x170] sm:$0xff] %vm2020, %v1971
        %2045 = vst.msk [vmem:[#allocation8 + $0x180] sm:$0xff] %vm2020, %v1973
        %2046 = vst.msk [vmem:[#allocation8 + $0x190] sm:$0xff] %vm2020, %v1975
        %2047 = vst.msk [vmem:[#allocation8 + $0x1a0] sm:$0xff] %vm2020, %v1977
        %2048 = vst.msk [vmem:[#allocation8 + $0x1b0] sm:$0xff] %vm2020, %v1979
        %2049 = vst.msk [vmem:[#allocation8 + $0x1c0] sm:$0xff] %vm2020, %v1981
        %2050 = vst.msk [vmem:[#allocation8 + $0x1d0] sm:$0xff] %vm2020, %v1983
        %2051 = vst.msk [vmem:[#allocation8 + $0x1e0] sm:$0xff] %vm2020, %v1985
        %2052 = vst.msk [vmem:[#allocation8 + $0x1f0] sm:$0xff] %vm2020, %v1987
        %v2053 = vld [vmem:[%s1666 + $0x2] sm:$0xff]
        %v2054 = vld [vmem:[%s1666 + $0xa] sm:$0xff]
        %v2055 = vld [vmem:[%s1666 + $0x1a] sm:$0xff]
        %v2056 = vld [vmem:[%s1666 + $0x22] sm:$0xff]
        %v2057 = vld [vmem:[%s1666 + $0x32] sm:$0xff]
        %v2058 = vld [vmem:[%s1666 + $0x3a] sm:$0xff]
        %v2059 = vld [vmem:[%s1666 + $0x4a] sm:$0xff]
        %v2060 = vld [vmem:[%s1666 + $0x52] sm:$0xff]
        %v2061 = vld [vmem:[%s1666 + $0x62] sm:$0xff]
        %v2062 = vld [vmem:[%s1666 + $0x6a] sm:$0xff]
        %v2063 = vld [vmem:[%s1666 + $0x7a] sm:$0xff]
        %v2064 = vld [vmem:[%s1666 + $0x82] sm:$0xff]
        %v2065 = vld [vmem:[%s1666 + $0x92] sm:$0xff]
        %v2066 = vld [vmem:[%s1666 + $0x9a] sm:$0xff]
        %v2067 = vld [vmem:[%s1666 + $0xaa] sm:$0xff]
        %v2068 = vld [vmem:[%s1666 + $0xb2] sm:$0xff]
        %v2069 = vld [vmem:[%s1666 + $0xc2] sm:$0xff]
        %v2070 = vld [vmem:[%s1666 + $0xca] sm:$0xff]
        %v2071 = vld [vmem:[%s1666 + $0xda] sm:$0xff]
        %v2072 = vld [vmem:[%s1666 + $0xe2] sm:$0xff]
        %v2073 = vld [vmem:[%s1666 + $0xf2] sm:$0xff]
        %v2074 = vld [vmem:[%s1666 + $0xfa] sm:$0xff]
        %v2075 = vld [vmem:[%s1666 + $0x10a] sm:$0xff]
        %v2076 = vld [vmem:[%s1666 + $0x112] sm:$0xff]
        %v2077 = vld [vmem:[%s1666 + $0x122] sm:$0xff]
        %v2078 = vld [vmem:[%s1666 + $0x12a] sm:$0xff]
        %v2079 = vld [vmem:[%s1666 + $0x13a] sm:$0xff]
        %v2080 = vld [vmem:[%s1666 + $0x142] sm:$0xff]
        %v2081 = vld [vmem:[%s1666 + $0x152] sm:$0xff]
        %v2082 = vld [vmem:[%s1666 + $0x15a] sm:$0xff]
        %v2083 = vld [vmem:[%s1666 + $0x16a] sm:$0xff]
        %v2084 = vld [vmem:[%s1666 + $0x172] sm:$0xff]
        %2085 = vst.msk [vmem:[#allocation8 + $0x8] sm:$0xff] %vm516, %v2053
        %2086 = vst.msk [vmem:[#allocation8 + $0x18] sm:$0xff] %vm516, %v2054
        %2087 = vst.msk [vmem:[#allocation8 + $0x28] sm:$0xff] %vm516, %v2055
        %2088 = vst.msk [vmem:[#allocation8 + $0x38] sm:$0xff] %vm516, %v2056
        %2089 = vst.msk [vmem:[#allocation8 + $0x48] sm:$0xff] %vm516, %v2057
        %2090 = vst.msk [vmem:[#allocation8 + $0x58] sm:$0xff] %vm516, %v2058
        %2091 = vst.msk [vmem:[#allocation8 + $0x68] sm:$0xff] %vm516, %v2059
        %2092 = vst.msk [vmem:[#allocation8 + $0x78] sm:$0xff] %vm516, %v2060
        %2093 = vst.msk [vmem:[#allocation8 + $0x88] sm:$0xff] %vm516, %v2061
        %2094 = vst.msk [vmem:[#allocation8 + $0x98] sm:$0xff] %vm516, %v2062
        %2095 = vst.msk [vmem:[#allocation8 + $0xa8] sm:$0xff] %vm516, %v2063
        %2096 = vst.msk [vmem:[#allocation8 + $0xb8] sm:$0xff] %vm516, %v2064
        %2097 = vst.msk [vmem:[#allocation8 + $0xc8] sm:$0xff] %vm516, %v2065
        %2098 = vst.msk [vmem:[#allocation8 + $0xd8] sm:$0xff] %vm516, %v2066
        %2099 = vst.msk [vmem:[#allocation8 + $0xe8] sm:$0xff] %vm516, %v2067
        %2100 = vst.msk [vmem:[#allocation8 + $0xf8] sm:$0xff] %vm516, %v2068
        %2101 = vst.msk [vmem:[#allocation8 + $0x108] sm:$0xff] %vm516, %v2069
        %2102 = vst.msk [vmem:[#allocation8 + $0x118] sm:$0xff] %vm516, %v2070
        %2103 = vst.msk [vmem:[#allocation8 + $0x128] sm:$0xff] %vm516, %v2071
        %2104 = vst.msk [vmem:[#allocation8 + $0x138] sm:$0xff] %vm516, %v2072
        %2105 = vst.msk [vmem:[#allocation8 + $0x148] sm:$0xff] %vm516, %v2073
        %2106 = vst.msk [vmem:[#allocation8 + $0x158] sm:$0xff] %vm516, %v2074
        %2107 = vst.msk [vmem:[#allocation8 + $0x168] sm:$0xff] %vm516, %v2075
        %2108 = vst.msk [vmem:[#allocation8 + $0x178] sm:$0xff] %vm516, %v2076
        %2109 = vst.msk [vmem:[#allocation8 + $0x188] sm:$0xff] %vm516, %v2077
        %2110 = vst.msk [vmem:[#allocation8 + $0x198] sm:$0xff] %vm516, %v2078
        %2111 = vst.msk [vmem:[#allocation8 + $0x1a8] sm:$0xff] %vm516, %v2079
        %2112 = vst.msk [vmem:[#allocation8 + $0x1b8] sm:$0xff] %vm516, %v2080
        %2113 = vst.msk [vmem:[#allocation8 + $0x1c8] sm:$0xff] %vm516, %v2081
        %2114 = vst.msk [vmem:[#allocation8 + $0x1d8] sm:$0xff] %vm516, %v2082
        %2115 = vst.msk [vmem:[#allocation8 + $0x1e8] sm:$0xff] %vm516, %v2083
        %2116 = vst.msk [vmem:[#allocation8 + $0x1f8] sm:$0xff] %vm516, %v2084
        %v2117 = vld [vmem:[#allocation8] sm:$0xff]
        %v2118 = vld [vmem:[#allocation8 + $0x8] sm:$0xff]
        %v2119 = vld [vmem:[#allocation8 + $0x10] sm:$0xff]
        %v2120 = vld [vmem:[#allocation8 + $0x18] sm:$0xff]
        %v2121 = vld [vmem:[#allocation8 + $0x20] sm:$0xff]
        %v2122 = vld [vmem:[#allocation8 + $0x28] sm:$0xff]
        %v2123 = vld [vmem:[#allocation8 + $0x30] sm:$0xff]
        %v2124 = vld [vmem:[#allocation8 + $0x38] sm:$0xff]
        %v2125 = vld [vmem:[#allocation8 + $0x40] sm:$0xff]
        %v2126 = vld [vmem:[#allocation8 + $0x48] sm:$0xff]
        %v2127 = vld [vmem:[#allocation8 + $0x50] sm:$0xff]
        %v2128 = vld [vmem:[#allocation8 + $0x58] sm:$0xff]
        %v2129 = vld [vmem:[#allocation8 + $0x60] sm:$0xff]
        %v2130 = vld [vmem:[#allocation8 + $0x68] sm:$0xff]
        %v2131 = vld [vmem:[#allocation8 + $0x70] sm:$0xff]
        %v2132 = vld [vmem:[#allocation8 + $0x78] sm:$0xff]
        %v2133 = vld [vmem:[#allocation8 + $0x80] sm:$0xff]
        %v2134 = vld [vmem:[#allocation8 + $0x88] sm:$0xff]
        %v2135 = vld [vmem:[#allocation8 + $0x90] sm:$0xff]
        %v2136 = vld [vmem:[#allocation8 + $0x98] sm:$0xff]
        %v2137 = vld [vmem:[#allocation8 + $0xa0] sm:$0xff]
        %v2138 = vld [vmem:[#allocation8 + $0xa8] sm:$0xff]
        %v2139 = vld [vmem:[#allocation8 + $0xb0] sm:$0xff]
        %v2140 = vld [vmem:[#allocation8 + $0xb8] sm:$0xff]
        %v2141 = vld [vmem:[#allocation8 + $0xc0] sm:$0xff]
        %v2142 = vld [vmem:[#allocation8 + $0xc8] sm:$0xff]
        %v2143 = vld [vmem:[#allocation8 + $0xd0] sm:$0xff]
        %v2144 = vld [vmem:[#allocation8 + $0xd8] sm:$0xff]
        %v2145 = vld [vmem:[#allocation8 + $0xe0] sm:$0xff]
        %v2146 = vld [vmem:[#allocation8 + $0xe8] sm:$0xff]
        %v2147 = vld [vmem:[#allocation8 + $0xf0] sm:$0xff]
        %v2148 = vld [vmem:[#allocation8 + $0xf8] sm:$0xff]
        %v2149 = vld [vmem:[#allocation8 + $0x100] sm:$0xff]
        %v2150 = vld [vmem:[#allocation8 + $0x108] sm:$0xff]
        %v2151 = vld [vmem:[#allocation8 + $0x110] sm:$0xff]
        %v2152 = vld [vmem:[#allocation8 + $0x118] sm:$0xff]
        %v2153 = vld [vmem:[#allocation8 + $0x120] sm:$0xff]
        %v2154 = vld [vmem:[#allocation8 + $0x128] sm:$0xff]
        %v2155 = vld [vmem:[#allocation8 + $0x130] sm:$0xff]
        %v2156 = vld [vmem:[#allocation8 + $0x138] sm:$0xff]
        %v2157 = vld [vmem:[#allocation8 + $0x140] sm:$0xff]
        %v2158 = vld [vmem:[#allocation8 + $0x148] sm:$0xff]
        %v2159 = vld [vmem:[#allocation8 + $0x150] sm:$0xff]
        %v2160 = vld [vmem:[#allocation8 + $0x158] sm:$0xff]
        %v2161 = vld [vmem:[#allocation8 + $0x160] sm:$0xff]
        %v2162 = vld [vmem:[#allocation8 + $0x168] sm:$0xff]
        %v2163 = vld [vmem:[#allocation8 + $0x170] sm:$0xff]
        %v2164 = vld [vmem:[#allocation8 + $0x178] sm:$0xff]
        %v2165 = vld [vmem:[#allocation8 + $0x180] sm:$0xff]
        %v2166 = vld [vmem:[#allocation8 + $0x188] sm:$0xff]
        %v2167 = vld [vmem:[#allocation8 + $0x190] sm:$0xff]
        %v2168 = vld [vmem:[#allocation8 + $0x198] sm:$0xff]
        %v2169 = vld [vmem:[#allocation8 + $0x1a0] sm:$0xff]
        %v2170 = vld [vmem:[#allocation8 + $0x1a8] sm:$0xff]
        %v2171 = vld [vmem:[#allocation8 + $0x1b0] sm:$0xff]
        %v2172 = vld [vmem:[#allocation8 + $0x1b8] sm:$0xff]
        %v2173 = vld [vmem:[#allocation8 + $0x1c0] sm:$0xff]
        %v2174 = vld [vmem:[#allocation8 + $0x1c8] sm:$0xff]
        %v2175 = vld [vmem:[#allocation8 + $0x1d0] sm:$0xff]
        %v2176 = vld [vmem:[#allocation8 + $0x1d8] sm:$0xff]
        %v2177 = vld [vmem:[#allocation8 + $0x1e0] sm:$0xff]
        %v2178 = vld [vmem:[#allocation8 + $0x1e8] sm:$0xff]
        %v2179 = vld [vmem:[#allocation8 + $0x1f0] sm:$0xff]
        %v2180 = vld [vmem:[#allocation8 + $0x1f8] sm:$0xff]
        %v2181 = vld [vmem:[%s1] sm:$0xff]
        %v2182 = vld [vmem:[%s1 + $0x8] sm:$0xff]
        %v2183 = vld [vmem:[%s1 + $0x10] sm:$0xff]
        %v2184 = vld [vmem:[%s1 + $0x18] sm:$0xff]
        %v2185 = vld [vmem:[%s1 + $0x20] sm:$0xff]
        %v2186 = vld [vmem:[%s1 + $0x28] sm:$0xff]
        %v2187 = vld [vmem:[%s1 + $0x30] sm:$0xff]
        %v2188 = vld [vmem:[%s1 + $0x38] sm:$0xff]
        %v2189 = vld [vmem:[%s1 + $0x40] sm:$0xff]
        %v2190 = vld [vmem:[%s1 + $0x48] sm:$0xff]
        %v2191 = vld [vmem:[%s1 + $0x50] sm:$0xff]
        %v2192 = vld [vmem:[%s1 + $0x58] sm:$0xff]
        %v2193 = vld [vmem:[%s1 + $0x60] sm:$0xff]
        %v2194 = vld [vmem:[%s1 + $0x68] sm:$0xff]
        %v2195 = vld [vmem:[%s1 + $0x70] sm:$0xff]
        %v2196 = vld [vmem:[%s1 + $0x78] sm:$0xff]
        %v2197 = vld [vmem:[%s1 + $0x80] sm:$0xff]
        %v2198 = vld [vmem:[%s1 + $0x88] sm:$0xff]
        %v2199 = vld [vmem:[%s2] sm:$0x1]
        %v2201 = vlaneseq
        %v2202 = vshrl.u32 %v2201, 7
        %v2203 = vsub.s32 0, %v2202
        %v2204 = vrot.slane %v2199, %v2203
        %v2207 = vsel %vm516, %v2118, 0
        %v2210 = vsel %vm516, %v2120, 0
        %v2213 = vsel %vm516, %v2122, 0
        %v2216 = vsel %vm516, %v2124, 0
        %v2219 = vsel %vm516, %v2126, 0
        %v2222 = vsel %vm516, %v2128, 0
        %v2225 = vsel %vm516, %v2130, 0
        %v2228 = vsel %vm516, %v2132, 0
        %v2231 = vsel %vm516, %v2134, 0
        %v2234 = vsel %vm516, %v2136, 0
        %v2237 = vsel %vm516, %v2138, 0
        %v2240 = vsel %vm516, %v2140, 0
        %v2243 = vsel %vm516, %v2142, 0
        %v2246 = vsel %vm516, %v2144, 0
        %v2249 = vsel %vm516, %v2146, 0
        %v2252 = vsel %vm516, %v2148, 0
        %v2255 = vsel %vm516, %v2150, 0
        %v2258 = vsel %vm516, %v2152, 0
        %v2261 = vsel %vm516, %v2154, 0
        %v2264 = vsel %vm516, %v2156, 0
        %v2267 = vsel %vm516, %v2158, 0
        %v2270 = vsel %vm516, %v2160, 0
        %v2273 = vsel %vm516, %v2162, 0
        %v2276 = vsel %vm516, %v2164, 0
        %v2279 = vsel %vm516, %v2166, 0
        %v2282 = vsel %vm516, %v2168, 0
        %v2285 = vsel %vm516, %v2170, 0
        %v2288 = vsel %vm516, %v2172, 0
        %v2291 = vsel %vm516, %v2174, 0
        %v2294 = vsel %vm516, %v2176, 0
        %v2297 = vsel %vm516, %v2178, 0
        %v2300 = vsel %vm516, %v2180, 0
        %2302 = vmatprep.subr.mxu0 0.0
        %2303 = vmatpush1.msra.mxu0 %v2181
        %2304 = vmatprep.subr.mxu0 0.0
        %2305 = vmatpush1.msra.mxu0 %v2182
        %2306 = vmatprep.subr.mxu0 0.0
        %2307 = vmatpush1.msra.mxu0 %v2183
        %2308 = vmatprep.subr.mxu0 0.0
        %2309 = vmatpush1.msra.mxu0 %v2184
        %2310 = vmatprep.subr.mxu0 0.0
        %2311 = vmatpush1.msra.mxu0 %v2185
        %2312 = vmatprep.subr.mxu0 0.0
        %2313 = vmatpush1.msra.mxu0 %v2186
        %2314 = vmatprep.subr.mxu0 0.0
        %2315 = vmatpush1.msra.mxu0 %v2187
        %2316 = vmatprep.subr.mxu0 0.0
        %2317 = vmatpush1.msra.mxu0 %v2188
        %2318 = vmatprep.subr.mxu0 0.0
        %2319 = vmatpush1.msra.mxu0 %v2189
        %2320 = vmatprep.subr.mxu0 0.0
        %2321 = vmatpush1.msra.mxu0 %v2190
        %2322 = vmatprep.subr.mxu0 0.0
        %2323 = vmatpush1.msra.mxu0 %v2191
        %2324 = vmatprep.subr.mxu0 0.0
        %2325 = vmatpush1.msra.mxu0 %v2192
        %2326 = vmatprep.subr.mxu0 0.0
        %2327 = vmatpush1.msra.mxu0 %v2193
        %2328 = vmatprep.subr.mxu0 0.0
        %2329 = vmatpush1.msra.mxu0 %v2194
        %2330 = vmatprep.subr.mxu0 0.0
        %2331 = vmatpush1.msra.mxu0 %v2195
        %2332 = vmatprep.subr.mxu0 0.0
        %2333 = vmatpush1.msra.mxu0 %v2196
        %2334 = vmatprep.subr.mxu0 0.0
        %2335 = vmatpush1.msra.mxu0 %v2197
        %2336 = vmatprep.subr.mxu0 0.0
        %2337 = vmatpush1.msra.mxu0 %v2198
        %2338 = vmatprep.subr.mxu0 0.0
        %2339 = vmatpush1.msra.mxu0 0.0
        %2340 = vmatprep.subr.mxu0 0.0
        %2341 = vmatpush1.msra.mxu0 0.0
        %2342 = vmatprep.subr.mxu0 0.0
        %2343 = vmatpush1.msra.mxu0 0.0
        %2344 = vmatprep.subr.mxu0 0.0
        %2345 = vmatpush1.msra.mxu0 0.0
        %2346 = vmatprep.subr.mxu0 0.0
        %2347 = vmatpush1.msra.mxu0 0.0
        %2348 = vmatprep.subr.mxu0 0.0
        %2349 = vmatpush1.msra.mxu0 0.0
        %2350 = vmatprep.subr.mxu0 0.0
        %2351 = vmatpush1.msra.mxu0 0.0
        %2352 = vmatprep.subr.mxu0 0.0
        %2353 = vmatpush1.msra.mxu0 0.0
        %2354 = vmatprep.subr.mxu0 0.0
        %2355 = vmatpush1.msra.mxu0 0.0
        %2356 = vmatprep.subr.mxu0 0.0
        %2357 = vmatpush1.msra.mxu0 0.0
        %2358 = vmatprep.subr.mxu0 0.0
        %2359 = vmatpush1.msra.mxu0 0.0
        %2360 = vmatprep.subr.mxu0 0.0
        %2361 = vmatpush1.msra.mxu0 0.0
        %2362 = vmatprep.subr.mxu0 0.0
        %2363 = vmatpush1.msra.mxu0 0.0
        %2364 = vmatprep.subr.mxu0 0.0
        %2365 = vmatpush1.msra.mxu0 0.0
        %2366 = vmatprep.mubr.f32.mxu0 %v2207
        %2367 = vmatmul.mubr.f32.gmra.mrb[0].mxu0 %v2117
        %v2368 = vpop.f32.mrb[0].mxu0
        %v2369 = vadd.f32 %v2204, %v2368
        %v2370 = vpop.f32.mrb[0].mxu0
        %2371 = vmatprep.mubr.f32.mxu0 %v2210
        %2372 = vmatmul.mubr.f32.gmra.mrb[0].mxu0 %v2119
        %v2373 = vpop.f32.mrb[0].mxu0
        %v2374 = vadd.f32 %v2204, %v2373
        %v2375 = vpop.f32.mrb[0].mxu0
        %2376 = vmatprep.mubr.f32.mxu0 %v2213
        %2377 = vmatmul.mubr.f32.gmra.mrb[0].mxu0 %v2121
        %v2378 = vpop.f32.mrb[0].mxu0
        %v2379 = vadd.f32 %v2204, %v2378
        %v2380 = vpop.f32.mrb[0].mxu0
        %2381 = vmatprep.mubr.f32.mxu0 %v2216
        %2382 = vmatmul.mubr.f32.gmra.mrb[0].mxu0 %v2123
        %v2383 = vpop.f32.mrb[0].mxu0
        %v2384 = vadd.f32 %v2204, %v2383
        %v2385 = vpop.f32.mrb[0].mxu0
        %2386 = vmatprep.mubr.f32.mxu0 %v2219
        %2387 = vmatmul.mubr.f32.gmra.mrb[0].mxu0 %v2125
        %v2388 = vpop.f32.mrb[0].mxu0
        %v2389 = vadd.f32 %v2204, %v2388
        %v2390 = vpop.f32.mrb[0].mxu0
        %2391 = vmatprep.mubr.f32.mxu0 %v2222
        %2392 = vmatmul.mubr.f32.gmra.mrb[0].mxu0 %v2127
        %v2393 = vpop.f32.mrb[0].mxu0
        %v2394 = vadd.f32 %v2204, %v2393
        %v2395 = vpop.f32.mrb[0].mxu0
        %2396 = vmatprep.mubr.f32.mxu0 %v2225
        %2397 = vmatmul.mubr.f32.gmra.mrb[0].mxu0 %v2129
        %v2398 = vpop.f32.mrb[0].mxu0
        %v2399 = vadd.f32 %v2204, %v2398
        %v2400 = vpop.f32.mrb[0].mxu0
        %2401 = vmatprep.mubr.f32.mxu0 %v2228
        %2402 = vmatmul.mubr.f32.gmra.mrb[0].mxu0 %v2131
        %v2403 = vpop.f32.mrb[0].mxu0
        %v2404 = vadd.f32 %v2204, %v2403
        %v2405 = vpop.f32.mrb[0].mxu0
        %2406 = vmatprep.mubr.f32.mxu0 %v2231
        %2407 = vmatmul.mubr.f32.gmra.mrb[0].mxu0 %v2133
        %v2408 = vpop.f32.mrb[0].mxu0
        %v2409 = vadd.f32 %v2204, %v2408
        %v2410 = vpop.f32.mrb[0].mxu0
        %2411 = vmatprep.mubr.f32.mxu0 %v2234
        %2412 = vmatmul.mubr.f32.gmra.mrb[0].mxu0 %v2135
        %v2413 = vpop.f32.mrb[0].mxu0
        %v2414 = vadd.f32 %v2204, %v2413
        %v2415 = vpop.f32.mrb[0].mxu0
        %2416 = vmatprep.mubr.f32.mxu0 %v2237
        %2417 = vmatmul.mubr.f32.gmra.mrb[0].mxu0 %v2137
        %v2418 = vpop.f32.mrb[0].mxu0
        %v2419 = vadd.f32 %v2204, %v2418
        %v2420 = vpop.f32.mrb[0].mxu0
        %2421 = vmatprep.mubr.f32.mxu0 %v2240
        %2422 = vmatmul.mubr.f32.gmra.mrb[0].mxu0 %v2139
        %v2423 = vpop.f32.mrb[0].mxu0
        %v2424 = vadd.f32 %v2204, %v2423
        %v2425 = vpop.f32.mrb[0].mxu0
        %2426 = vmatprep.mubr.f32.mxu0 %v2243
        %2427 = vmatmul.mubr.f32.gmra.mrb[0].mxu0 %v2141
        %v2428 = vpop.f32.mrb[0].mxu0
        %v2429 = vadd.f32 %v2204, %v2428
        %v2430 = vpop.f32.mrb[0].mxu0
        %2431 = vmatprep.mubr.f32.mxu0 %v2246
        %2432 = vmatmul.mubr.f32.gmra.mrb[0].mxu0 %v2143
        %v2433 = vpop.f32.mrb[0].mxu0
        %v2434 = vadd.f32 %v2204, %v2433
        %v2435 = vpop.f32.mrb[0].mxu0
        %2436 = vmatprep.mubr.f32.mxu0 %v2249
        %2437 = vmatmul.mubr.f32.gmra.mrb[0].mxu0 %v2145
        %v2438 = vpop.f32.mrb[0].mxu0
        %v2439 = vadd.f32 %v2204, %v2438
        %v2440 = vpop.f32.mrb[0].mxu0
        %2441 = vmatprep.mubr.f32.mxu0 %v2252
        %2442 = vmatmul.mubr.f32.gmra.mrb[0].mxu0 %v2147
        %v2443 = vpop.f32.mrb[0].mxu0
        %v2444 = vadd.f32 %v2204, %v2443
        %v2445 = vpop.f32.mrb[0].mxu0
        %2446 = vmatprep.mubr.f32.mxu0 %v2255
        %2447 = vmatmul.mubr.f32.gmra.mrb[0].mxu0 %v2149
        %v2448 = vpop.f32.mrb[0].mxu0
        %v2449 = vadd.f32 %v2204, %v2448
        %v2450 = vpop.f32.mrb[0].mxu0
        %2451 = vmatprep.mubr.f32.mxu0 %v2258
        %2452 = vmatmul.mubr.f32.gmra.mrb[0].mxu0 %v2151
        %v2453 = vpop.f32.mrb[0].mxu0
        %v2454 = vadd.f32 %v2204, %v2453
        %v2455 = vpop.f32.mrb[0].mxu0
        %2456 = vmatprep.mubr.f32.mxu0 %v2261
        %2457 = vmatmul.mubr.f32.gmra.mrb[0].mxu0 %v2153
        %v2458 = vpop.f32.mrb[0].mxu0
        %v2459 = vadd.f32 %v2204, %v2458
        %v2460 = vpop.f32.mrb[0].mxu0
        %2461 = vmatprep.mubr.f32.mxu0 %v2264
        %2462 = vmatmul.mubr.f32.gmra.mrb[0].mxu0 %v2155
        %v2463 = vpop.f32.mrb[0].mxu0
        %v2464 = vadd.f32 %v2204, %v2463
        %v2465 = vpop.f32.mrb[0].mxu0
        %2466 = vmatprep.mubr.f32.mxu0 %v2267
        %2467 = vmatmul.mubr.f32.gmra.mrb[0].mxu0 %v2157
        %v2468 = vpop.f32.mrb[0].mxu0
        %v2469 = vadd.f32 %v2204, %v2468
        %v2470 = vpop.f32.mrb[0].mxu0
        %2471 = vmatprep.mubr.f32.mxu0 %v2270
        %2472 = vmatmul.mubr.f32.gmra.mrb[0].mxu0 %v2159
        %v2473 = vpop.f32.mrb[0].mxu0
        %v2474 = vadd.f32 %v2204, %v2473
        %v2475 = vpop.f32.mrb[0].mxu0
        %2476 = vmatprep.mubr.f32.mxu0 %v2273
        %2477 = vmatmul.mubr.f32.gmra.mrb[0].mxu0 %v2161
        %v2478 = vpop.f32.mrb[0].mxu0
        %v2479 = vadd.f32 %v2204, %v2478
        %v2480 = vpop.f32.mrb[0].mxu0
        %2481 = vmatprep.mubr.f32.mxu0 %v2276
        %2482 = vmatmul.mubr.f32.gmra.mrb[0].mxu0 %v2163
        %v2483 = vpop.f32.mrb[0].mxu0
        %v2484 = vadd.f32 %v2204, %v2483
        %v2485 = vpop.f32.mrb[0].mxu0
        %2486 = vmatprep.mubr.f32.mxu0 %v2279
        %2487 = vmatmul.mubr.f32.gmra.mrb[0].mxu0 %v2165
        %v2488 = vpop.f32.mrb[0].mxu0
        %v2489 = vadd.f32 %v2204, %v2488
        %v2490 = vpop.f32.mrb[0].mxu0
        %2491 = vmatprep.mubr.f32.mxu0 %v2282
        %2492 = vmatmul.mubr.f32.gmra.mrb[0].mxu0 %v2167
        %v2493 = vpop.f32.mrb[0].mxu0
        %v2494 = vadd.f32 %v2204, %v2493
        %v2495 = vpop.f32.mrb[0].mxu0
        %2496 = vmatprep.mubr.f32.mxu0 %v2285
        %2497 = vmatmul.mubr.f32.gmra.mrb[0].mxu0 %v2169
        %v2498 = vpop.f32.mrb[0].mxu0
        %v2499 = vadd.f32 %v2204, %v2498
        %v2500 = vpop.f32.mrb[0].mxu0
        %2501 = vmatprep.mubr.f32.mxu0 %v2288
        %2502 = vmatmul.mubr.f32.gmra.mrb[0].mxu0 %v2171
        %v2503 = vpop.f32.mrb[0].mxu0
        %v2504 = vadd.f32 %v2204, %v2503
        %v2505 = vpop.f32.mrb[0].mxu0
        %2506 = vmatprep.mubr.f32.mxu0 %v2291
        %2507 = vmatmul.mubr.f32.gmra.mrb[0].mxu0 %v2173
        %v2508 = vpop.f32.mrb[0].mxu0
        %v2509 = vadd.f32 %v2204, %v2508
        %v2510 = vpop.f32.mrb[0].mxu0
        %2511 = vmatprep.mubr.f32.mxu0 %v2294
        %2512 = vmatmul.mubr.f32.gmra.mrb[0].mxu0 %v2175
        %v2513 = vpop.f32.mrb[0].mxu0
        %v2514 = vadd.f32 %v2204, %v2513
        %v2515 = vpop.f32.mrb[0].mxu0
        %2516 = vmatprep.mubr.f32.mxu0 %v2297
        %2517 = vmatmul.mubr.f32.gmra.mrb[0].mxu0 %v2177
        %v2518 = vpop.f32.mrb[0].mxu0
        %v2519 = vadd.f32 %v2204, %v2518
        %v2520 = vpop.f32.mrb[0].mxu0
        %2521 = vmatprep.mubr.f32.mxu0 %v2300
        %2522 = vmatmul.mubr.f32.gmra.mrb[0].mxu0 %v2179
        %v2523 = vpop.f32.mrb[0].mxu0
        %v2524 = vadd.f32 %v2204, %v2523
        %v2525 = vpop.f32.mrb[0].mxu0
        %2526 = vdwg.mxu0
        %v2527 = vmax.f32 %v2369, 0.0
        %v2528 = vmax.f32 %v2374, 0.0
        %v2529 = vmax.f32 %v2379, 0.0
        %v2530 = vmax.f32 %v2384, 0.0
        %v2531 = vmax.f32 %v2389, 0.0
        %v2532 = vmax.f32 %v2394, 0.0
        %v2533 = vmax.f32 %v2399, 0.0
        %v2534 = vmax.f32 %v2404, 0.0
        %v2535 = vmax.f32 %v2409, 0.0
        %v2536 = vmax.f32 %v2414, 0.0
        %v2537 = vmax.f32 %v2419, 0.0
        %v2538 = vmax.f32 %v2424, 0.0
        %v2539 = vmax.f32 %v2429, 0.0
        %v2540 = vmax.f32 %v2434, 0.0
        %v2541 = vmax.f32 %v2439, 0.0
        %v2542 = vmax.f32 %v2444, 0.0
        %v2543 = vmax.f32 %v2449, 0.0
        %v2544 = vmax.f32 %v2454, 0.0
        %v2545 = vmax.f32 %v2459, 0.0
        %v2546 = vmax.f32 %v2464, 0.0
        %v2547 = vmax.f32 %v2469, 0.0
        %v2548 = vmax.f32 %v2474, 0.0
        %v2549 = vmax.f32 %v2479, 0.0
        %v2550 = vmax.f32 %v2484, 0.0
        %v2551 = vmax.f32 %v2489, 0.0
        %v2552 = vmax.f32 %v2494, 0.0
        %v2553 = vmax.f32 %v2499, 0.0
        %v2554 = vmax.f32 %v2504, 0.0
        %v2555 = vmax.f32 %v2509, 0.0
        %v2556 = vmax.f32 %v2514, 0.0
        %v2557 = vmax.f32 %v2519, 0.0
        %v2558 = vmax.f32 %v2524, 0.0
        %2559 = vst.msk [vmem:[#allocation3] sm:$0xff] %vm516, 0.0
        %2560 = vst.msk [vmem:[#allocation3 + $0x8] sm:$0xff] %vm516, 0.0
        %2561 = vst.msk [vmem:[#allocation3 + $0x10] sm:$0x3] %vm519, 0.0
        %2562 = vst.msk [vmem:[#allocation3 + $0x18] sm:$0xff] %vm516, 0.0
        %2563 = vst.msk [vmem:[#allocation3 + $0x20] sm:$0xff] %vm516, 0.0
        %2564 = vst.msk [vmem:[#allocation3 + $0x28] sm:$0x3] %vm519, 0.0
        %2565 = vst.msk [vmem:[#allocation3 + $0x30] sm:$0xff] %vm516, 0.0
        %2566 = vst.msk [vmem:[#allocation3 + $0x38] sm:$0xff] %vm516, 0.0
        %2567 = vst.msk [vmem:[#allocation3 + $0x40] sm:$0x3] %vm519, 0.0
        %2568 = vst.msk [vmem:[#allocation3 + $0x48] sm:$0xff] %vm516, 0.0
        %2569 = vst.msk [vmem:[#allocation3 + $0x50] sm:$0xff] %vm516, 0.0
        %2570 = vst.msk [vmem:[#allocation3 + $0x58] sm:$0x3] %vm519, 0.0
        %2571 = vst.msk [vmem:[#allocation3 + $0x60] sm:$0xff] %vm516, 0.0
        %2572 = vst.msk [vmem:[#allocation3 + $0x68] sm:$0xff] %vm516, 0.0
        %2573 = vst.msk [vmem:[#allocation3 + $0x70] sm:$0x3] %vm519, 0.0
        %2574 = vst.msk [vmem:[#allocation3 + $0x78] sm:$0xff] %vm516, 0.0
        %2575 = vst.msk [vmem:[#allocation3 + $0x80] sm:$0xff] %vm516, 0.0
        %2576 = vst.msk [vmem:[#allocation3 + $0x88] sm:$0x3] %vm519, 0.0
        %2577 = vst.msk [vmem:[#allocation3 + $0x90] sm:$0xff] %vm516, 0.0
        %2578 = vst.msk [vmem:[#allocation3 + $0x98] sm:$0xff] %vm516, 0.0
        %2579 = vst.msk [vmem:[#allocation3 + $0xa0] sm:$0x3] %vm519, 0.0
        %2580 = vst.msk [vmem:[#allocation3 + $0xa8] sm:$0xff] %vm516, 0.0
        %2581 = vst.msk [vmem:[#allocation3 + $0xb0] sm:$0xff] %vm516, 0.0
        %2582 = vst.msk [vmem:[#allocation3 + $0xb8] sm:$0x3] %vm519, 0.0
        %2583 = vst.msk [vmem:[#allocation3 + $0xc0] sm:$0xff] %vm516, 0.0
        %2584 = vst.msk [vmem:[#allocation3 + $0xc8] sm:$0xff] %vm516, 0.0
        %2585 = vst.msk [vmem:[#allocation3 + $0xd0] sm:$0x3] %vm519, 0.0
        %2586 = vst.msk [vmem:[#allocation3 + $0xd8] sm:$0xff] %vm516, 0.0
        %2587 = vst.msk [vmem:[#allocation3 + $0xe0] sm:$0xff] %vm516, 0.0
        %2588 = vst.msk [vmem:[#allocation3 + $0xe8] sm:$0x3] %vm519, 0.0
        %2589 = vst.msk [vmem:[#allocation3 + $0xf0] sm:$0xff] %vm516, 0.0
        %2590 = vst.msk [vmem:[#allocation3 + $0xf8] sm:$0xff] %vm516, 0.0
        %2591 = vst.msk [vmem:[#allocation3 + $0x100] sm:$0x3] %vm519, 0.0
        %2592 = vst.msk [vmem:[#allocation3 + $0x108] sm:$0xff] %vm516, 0.0
        %2593 = vst.msk [vmem:[#allocation3 + $0x110] sm:$0xff] %vm516, 0.0
        %2594 = vst.msk [vmem:[#allocation3 + $0x118] sm:$0x3] %vm519, 0.0
        %2595 = vst.msk [vmem:[#allocation3 + $0x120] sm:$0xff] %vm516, 0.0
        %2596 = vst.msk [vmem:[#allocation3 + $0x128] sm:$0xff] %vm516, 0.0
        %2597 = vst.msk [vmem:[#allocation3 + $0x130] sm:$0x3] %vm519, 0.0
        %2598 = vst.msk [vmem:[#allocation3 + $0x138] sm:$0xff] %vm516, 0.0
        %2599 = vst.msk [vmem:[#allocation3 + $0x140] sm:$0xff] %vm516, 0.0
        %2600 = vst.msk [vmem:[#allocation3 + $0x148] sm:$0x3] %vm519, 0.0
        %2601 = vst.msk [vmem:[#allocation3 + $0x150] sm:$0xff] %vm516, 0.0
        %2602 = vst.msk [vmem:[#allocation3 + $0x158] sm:$0xff] %vm516, 0.0
        %2603 = vst.msk [vmem:[#allocation3 + $0x160] sm:$0x3] %vm519, 0.0
        %2604 = vst.msk [vmem:[#allocation3 + $0x168] sm:$0xff] %vm516, 0.0
        %2605 = vst.msk [vmem:[#allocation3 + $0x170] sm:$0xff] %vm516, 0.0
        %2606 = vst.msk [vmem:[#allocation3 + $0x178] sm:$0x3] %vm519, 0.0
        %2607 = vst.msk [vmem:[#allocation3 + $0x180] sm:$0xff] %vm516, 0.0
        %2608 = vst.msk [vmem:[#allocation3 + $0x188] sm:$0xff] %vm516, 0.0
        %2609 = vst.msk [vmem:[#allocation3 + $0x190] sm:$0x3] %vm519, 0.0
        %2610 = vst.msk [vmem:[#allocation3 + $0x198] sm:$0xff] %vm516, 0.0
        %2611 = vst.msk [vmem:[#allocation3 + $0x1a0] sm:$0xff] %vm516, 0.0
        %2612 = vst.msk [vmem:[#allocation3 + $0x1a8] sm:$0x3] %vm519, 0.0
        %s2613 = scalar_lea.vmem [#allocation3], 24
        %2614 = vst.msk [vmem:[%s2613 + $0x1] sm:$0xff] %vm516, %v2527
        %2615 = vst.msk [vmem:[%s2613 + $0x9] sm:$0xff] %vm516, %v2528
        %2616 = vst.msk [vmem:[%s2613 + $0x19] sm:$0xff] %vm516, %v2529
        %2617 = vst.msk [vmem:[%s2613 + $0x21] sm:$0xff] %vm516, %v2530
        %2618 = vst.msk [vmem:[%s2613 + $0x31] sm:$0xff] %vm516, %v2531
        %2619 = vst.msk [vmem:[%s2613 + $0x39] sm:$0xff] %vm516, %v2532
        %2620 = vst.msk [vmem:[%s2613 + $0x49] sm:$0xff] %vm516, %v2533
        %2621 = vst.msk [vmem:[%s2613 + $0x51] sm:$0xff] %vm516, %v2534
        %2622 = vst.msk [vmem:[%s2613 + $0x61] sm:$0xff] %vm516, %v2535
        %2623 = vst.msk [vmem:[%s2613 + $0x69] sm:$0xff] %vm516, %v2536
        %2624 = vst.msk [vmem:[%s2613 + $0x79] sm:$0xff] %vm516, %v2537
        %2625 = vst.msk [vmem:[%s2613 + $0x81] sm:$0xff] %vm516, %v2538
        %2626 = vst.msk [vmem:[%s2613 + $0x91] sm:$0xff] %vm516, %v2539
        %2627 = vst.msk [vmem:[%s2613 + $0x99] sm:$0xff] %vm516, %v2540
        %2628 = vst.msk [vmem:[%s2613 + $0xa9] sm:$0xff] %vm516, %v2541
        %2629 = vst.msk [vmem:[%s2613 + $0xb1] sm:$0xff] %vm516, %v2542
        %2630 = vst.msk [vmem:[%s2613 + $0xc1] sm:$0xff] %vm516, %v2543
        %2631 = vst.msk [vmem:[%s2613 + $0xc9] sm:$0xff] %vm516, %v2544
        %2632 = vst.msk [vmem:[%s2613 + $0xd9] sm:$0xff] %vm516, %v2545
        %2633 = vst.msk [vmem:[%s2613 + $0xe1] sm:$0xff] %vm516, %v2546
        %2634 = vst.msk [vmem:[%s2613 + $0xf1] sm:$0xff] %vm516, %v2547
        %2635 = vst.msk [vmem:[%s2613 + $0xf9] sm:$0xff] %vm516, %v2548
        %2636 = vst.msk [vmem:[%s2613 + $0x109] sm:$0xff] %vm516, %v2549
        %2637 = vst.msk [vmem:[%s2613 + $0x111] sm:$0xff] %vm516, %v2550
        %2638 = vst.msk [vmem:[%s2613 + $0x121] sm:$0xff] %vm516, %v2551
        %2639 = vst.msk [vmem:[%s2613 + $0x129] sm:$0xff] %vm516, %v2552
        %2640 = vst.msk [vmem:[%s2613 + $0x139] sm:$0xff] %vm516, %v2553
        %2641 = vst.msk [vmem:[%s2613 + $0x141] sm:$0xff] %vm516, %v2554
        %2642 = vst.msk [vmem:[%s2613 + $0x151] sm:$0xff] %vm516, %v2555
        %2643 = vst.msk [vmem:[%s2613 + $0x159] sm:$0xff] %vm516, %v2556
        %2644 = vst.msk [vmem:[%s2613 + $0x169] sm:$0xff] %vm516, %v2557
        %2645 = vst.msk [vmem:[%s2613 + $0x171] sm:$0xff] %vm516, %v2558
        %v2646 = vld [vmem:[#allocation3] sm:$0xff]
        %v2647 = vld [vmem:[#allocation3 + $0x8] sm:$0xff]
        %v2648 = vld [vmem:[#allocation3 + $0x18] sm:$0xff]
        %v2649 = vld [vmem:[#allocation3 + $0x20] sm:$0xff]
        %v2650 = vld [vmem:[#allocation3 + $0x30] sm:$0xff]
        %v2651 = vld [vmem:[#allocation3 + $0x38] sm:$0xff]
        %v2652 = vld [vmem:[#allocation3 + $0x48] sm:$0xff]
        %v2653 = vld [vmem:[#allocation3 + $0x50] sm:$0xff]
        %v2654 = vld [vmem:[#allocation3 + $0x60] sm:$0xff]
        %v2655 = vld [vmem:[#allocation3 + $0x68] sm:$0xff]
        %v2656 = vld [vmem:[#allocation3 + $0x78] sm:$0xff]
        %v2657 = vld [vmem:[#allocation3 + $0x80] sm:$0xff]
        %v2658 = vld [vmem:[#allocation3 + $0x90] sm:$0xff]
        %v2659 = vld [vmem:[#allocation3 + $0x98] sm:$0xff]
        %v2660 = vld [vmem:[#allocation3 + $0xa8] sm:$0xff]
        %v2661 = vld [vmem:[#allocation3 + $0xb0] sm:$0xff]
        %v2662 = vld [vmem:[#allocation3 + $0xc0] sm:$0xff]
        %v2663 = vld [vmem:[#allocation3 + $0xc8] sm:$0xff]
        %v2664 = vld [vmem:[#allocation3 + $0xd8] sm:$0xff]
        %v2665 = vld [vmem:[#allocation3 + $0xe0] sm:$0xff]
        %v2666 = vld [vmem:[#allocation3 + $0xf0] sm:$0xff]
        %v2667 = vld [vmem:[#allocation3 + $0xf8] sm:$0xff]
        %v2668 = vld [vmem:[#allocation3 + $0x108] sm:$0xff]
        %v2669 = vld [vmem:[#allocation3 + $0x110] sm:$0xff]
        %v2670 = vld [vmem:[#allocation3 + $0x120] sm:$0xff]
        %v2671 = vld [vmem:[#allocation3 + $0x128] sm:$0xff]
        %v2672 = vld [vmem:[#allocation3 + $0x138] sm:$0xff]
        %v2673 = vld [vmem:[#allocation3 + $0x140] sm:$0xff]
        %v2674 = vld [vmem:[#allocation3 + $0x150] sm:$0xff]
        %v2675 = vld [vmem:[#allocation3 + $0x158] sm:$0xff]
        %v2676 = vld [vmem:[#allocation3 + $0x168] sm:$0xff]
        %v2677 = vld [vmem:[#allocation3 + $0x170] sm:$0xff]
        %2678 = vst.msk [vmem:[#allocation8] sm:$0xff] %vm516, %v2646
        %2679 = vst.msk [vmem:[#allocation8 + $0x10] sm:$0xff] %vm516, %v2647
        %2680 = vst.msk [vmem:[#allocation8 + $0x20] sm:$0xff] %vm516, %v2648
        %2681 = vst.msk [vmem:[#allocation8 + $0x30] sm:$0xff] %vm516, %v2649
        %2682 = vst.msk [vmem:[#allocation8 + $0x40] sm:$0xff] %vm516, %v2650
        %2683 = vst.msk [vmem:[#allocation8 + $0x50] sm:$0xff] %vm516, %v2651
        %2684 = vst.msk [vmem:[#allocation8 + $0x60] sm:$0xff] %vm516, %v2652
        %2685 = vst.msk [vmem:[#allocation8 + $0x70] sm:$0xff] %vm516, %v2653
        %2686 = vst.msk [vmem:[#allocation8 + $0x80] sm:$0xff] %vm516, %v2654
        %2687 = vst.msk [vmem:[#allocation8 + $0x90] sm:$0xff] %vm516, %v2655
        %2688 = vst.msk [vmem:[#allocation8 + $0xa0] sm:$0xff] %vm516, %v2656
        %2689 = vst.msk [vmem:[#allocation8 + $0xb0] sm:$0xff] %vm516, %v2657
        %2690 = vst.msk [vmem:[#allocation8 + $0xc0] sm:$0xff] %vm516, %v2658
        %2691 = vst.msk [vmem:[#allocation8 + $0xd0] sm:$0xff] %vm516, %v2659
        %2692 = vst.msk [vmem:[#allocation8 + $0xe0] sm:$0xff] %vm516, %v2660
        %2693 = vst.msk [vmem:[#allocation8 + $0xf0] sm:$0xff] %vm516, %v2661
        %2694 = vst.msk [vmem:[#allocation8 + $0x100] sm:$0xff] %vm516, %v2662
        %2695 = vst.msk [vmem:[#allocation8 + $0x110] sm:$0xff] %vm516, %v2663
        %2696 = vst.msk [vmem:[#allocation8 + $0x120] sm:$0xff] %vm516, %v2664
        %2697 = vst.msk [vmem:[#allocation8 + $0x130] sm:$0xff] %vm516, %v2665
        %2698 = vst.msk [vmem:[#allocation8 + $0x140] sm:$0xff] %vm516, %v2666
        %2699 = vst.msk [vmem:[#allocation8 + $0x150] sm:$0xff] %vm516, %v2667
        %2700 = vst.msk [vmem:[#allocation8 + $0x160] sm:$0xff] %vm516, %v2668
        %2701 = vst.msk [vmem:[#allocation8 + $0x170] sm:$0xff] %vm516, %v2669
        %2702 = vst.msk [vmem:[#allocation8 + $0x180] sm:$0xff] %vm516, %v2670
        %2703 = vst.msk [vmem:[#allocation8 + $0x190] sm:$0xff] %vm516, %v2671
        %2704 = vst.msk [vmem:[#allocation8 + $0x1a0] sm:$0xff] %vm516, %v2672
        %2705 = vst.msk [vmem:[#allocation8 + $0x1b0] sm:$0xff] %vm516, %v2673
        %2706 = vst.msk [vmem:[#allocation8 + $0x1c0] sm:$0xff] %vm516, %v2674
        %2707 = vst.msk [vmem:[#allocation8 + $0x1d0] sm:$0xff] %vm516, %v2675
        %2708 = vst.msk [vmem:[#allocation8 + $0x1e0] sm:$0xff] %vm516, %v2676
        %2709 = vst.msk [vmem:[#allocation8 + $0x1f0] sm:$0xff] %vm516, %v2677
        %v2710 = vld [vmem:[#allocation3 + $0x1] sm:$0xff]
        %v2711 = vld [vmem:[#allocation3 + $0x9] sm:$0xff]
        %v2712 = vld [vmem:[#allocation3 + $0x19] sm:$0xff]
        %v2713 = vld [vmem:[#allocation3 + $0x21] sm:$0xff]
        %v2714 = vld [vmem:[#allocation3 + $0x31] sm:$0xff]
        %v2715 = vld [vmem:[#allocation3 + $0x39] sm:$0xff]
        %v2716 = vld [vmem:[#allocation3 + $0x49] sm:$0xff]
        %v2717 = vld [vmem:[#allocation3 + $0x51] sm:$0xff]
        %v2718 = vld [vmem:[#allocation3 + $0x61] sm:$0xff]
        %v2719 = vld [vmem:[#allocation3 + $0x69] sm:$0xff]
        %v2720 = vld [vmem:[#allocation3 + $0x79] sm:$0xff]
        %v2721 = vld [vmem:[#allocation3 + $0x81] sm:$0xff]
        %v2722 = vld [vmem:[#allocation3 + $0x91] sm:$0xff]
        %v2723 = vld [vmem:[#allocation3 + $0x99] sm:$0xff]
        %v2724 = vld [vmem:[#allocation3 + $0xa9] sm:$0xff]
        %v2725 = vld [vmem:[#allocation3 + $0xb1] sm:$0xff]
        %v2726 = vld [vmem:[#allocation3 + $0xc1] sm:$0xff]
        %v2727 = vld [vmem:[#allocation3 + $0xc9] sm:$0xff]
        %v2728 = vld [vmem:[#allocation3 + $0xd9] sm:$0xff]
        %v2729 = vld [vmem:[#allocation3 + $0xe1] sm:$0xff]
        %v2730 = vld [vmem:[#allocation3 + $0xf1] sm:$0xff]
        %v2731 = vld [vmem:[#allocation3 + $0xf9] sm:$0xff]
        %v2732 = vld [vmem:[#allocation3 + $0x109] sm:$0xff]
        %v2733 = vld [vmem:[#allocation3 + $0x111] sm:$0xff]
        %v2734 = vld [vmem:[#allocation3 + $0x121] sm:$0xff]
        %v2735 = vld [vmem:[#allocation3 + $0x129] sm:$0xff]
        %v2736 = vld [vmem:[#allocation3 + $0x139] sm:$0xff]
        %v2737 = vld [vmem:[#allocation3 + $0x141] sm:$0xff]
        %v2738 = vld [vmem:[#allocation3 + $0x151] sm:$0xff]
        %v2739 = vld [vmem:[#allocation3 + $0x159] sm:$0xff]
        %v2740 = vld [vmem:[#allocation3 + $0x169] sm:$0xff]
        %v2741 = vld [vmem:[#allocation3 + $0x171] sm:$0xff]
        %2774 = vrot.lane.b32.xlu0 %v2710, 16
        %v2775 = vpop.permute.xlu0 %2774
        %2776 = vrot.lane.b32.xlu0 %v2711, 16
        %v2777 = vpop.permute.xlu0 %2776
        %2778 = vrot.lane.b32.xlu0 %v2712, 16
        %v2779 = vpop.permute.xlu0 %2778
        %2780 = vrot.lane.b32.xlu0 %v2713, 16
        %v2781 = vpop.permute.xlu0 %2780
        %2782 = vrot.lane.b32.xlu0 %v2714, 16
        %v2783 = vpop.permute.xlu0 %2782
        %2784 = vrot.lane.b32.xlu0 %v2715, 16
        %v2785 = vpop.permute.xlu0 %2784
        %2786 = vrot.lane.b32.xlu0 %v2716, 16
        %v2787 = vpop.permute.xlu0 %2786
        %2788 = vrot.lane.b32.xlu0 %v2717, 16
        %v2789 = vpop.permute.xlu0 %2788
        %2790 = vrot.lane.b32.xlu0 %v2718, 16
        %v2791 = vpop.permute.xlu0 %2790
        %2792 = vrot.lane.b32.xlu0 %v2719, 16
        %v2793 = vpop.permute.xlu0 %2792
        %2794 = vrot.lane.b32.xlu0 %v2720, 16
        %v2795 = vpop.permute.xlu0 %2794
        %2796 = vrot.lane.b32.xlu0 %v2721, 16
        %v2797 = vpop.permute.xlu0 %2796
        %2798 = vrot.lane.b32.xlu0 %v2722, 16
        %v2799 = vpop.permute.xlu0 %2798
        %2800 = vrot.lane.b32.xlu0 %v2723, 16
        %v2801 = vpop.permute.xlu0 %2800
        %2802 = vrot.lane.b32.xlu0 %v2724, 16
        %v2803 = vpop.permute.xlu0 %2802
        %2804 = vrot.lane.b32.xlu0 %v2725, 16
        %v2805 = vpop.permute.xlu0 %2804
        %2806 = vrot.lane.b32.xlu0 %v2726, 16
        %v2807 = vpop.permute.xlu0 %2806
        %2808 = vrot.lane.b32.xlu0 %v2727, 16
        %v2809 = vpop.permute.xlu0 %2808
        %2810 = vrot.lane.b32.xlu0 %v2728, 16
        %v2811 = vpop.permute.xlu0 %2810
        %2812 = vrot.lane.b32.xlu0 %v2729, 16
        %v2813 = vpop.permute.xlu0 %2812
        %2814 = vrot.lane.b32.xlu0 %v2730, 16
        %v2815 = vpop.permute.xlu0 %2814
        %2816 = vrot.lane.b32.xlu0 %v2731, 16
        %v2817 = vpop.permute.xlu0 %2816
        %2818 = vrot.lane.b32.xlu0 %v2732, 16
        %v2819 = vpop.permute.xlu0 %2818
        %2820 = vrot.lane.b32.xlu0 %v2733, 16
        %v2821 = vpop.permute.xlu0 %2820
        %2822 = vrot.lane.b32.xlu0 %v2734, 16
        %v2823 = vpop.permute.xlu0 %2822
        %2824 = vrot.lane.b32.xlu0 %v2735, 16
        %v2825 = vpop.permute.xlu0 %2824
        %2826 = vrot.lane.b32.xlu0 %v2736, 16
        %v2827 = vpop.permute.xlu0 %2826
        %2828 = vrot.lane.b32.xlu0 %v2737, 16
        %v2829 = vpop.permute.xlu0 %2828
        %2830 = vrot.lane.b32.xlu0 %v2738, 16
        %v2831 = vpop.permute.xlu0 %2830
        %2832 = vrot.lane.b32.xlu0 %v2739, 16
        %v2833 = vpop.permute.xlu0 %2832
        %2834 = vrot.lane.b32.xlu0 %v2740, 16
        %v2835 = vpop.permute.xlu0 %2834
        %2836 = vrot.lane.b32.xlu0 %v2741, 16
        %v2837 = vpop.permute.xlu0 %2836
        %2870 = vst.msk [vmem:[#allocation8] sm:$0xff] %vm861, %v2775
        %2871 = vst.msk [vmem:[#allocation8 + $0x10] sm:$0xff] %vm861, %v2777
        %2872 = vst.msk [vmem:[#allocation8 + $0x20] sm:$0xff] %vm861, %v2779
        %2873 = vst.msk [vmem:[#allocation8 + $0x30] sm:$0xff] %vm861, %v2781
        %2874 = vst.msk [vmem:[#allocation8 + $0x40] sm:$0xff] %vm861, %v2783
        %2875 = vst.msk [vmem:[#allocation8 + $0x50] sm:$0xff] %vm861, %v2785
        %2876 = vst.msk [vmem:[#allocation8 + $0x60] sm:$0xff] %vm861, %v2787
        %2877 = vst.msk [vmem:[#allocation8 + $0x70] sm:$0xff] %vm861, %v2789
        %2878 = vst.msk [vmem:[#allocation8 + $0x80] sm:$0xff] %vm861, %v2791
        %2879 = vst.msk [vmem:[#allocation8 + $0x90] sm:$0xff] %vm861, %v2793
        %2880 = vst.msk [vmem:[#allocation8 + $0xa0] sm:$0xff] %vm861, %v2795
        %2881 = vst.msk [vmem:[#allocation8 + $0xb0] sm:$0xff] %vm861, %v2797
        %2882 = vst.msk [vmem:[#allocation8 + $0xc0] sm:$0xff] %vm861, %v2799
        %2883 = vst.msk [vmem:[#allocation8 + $0xd0] sm:$0xff] %vm861, %v2801
        %2884 = vst.msk [vmem:[#allocation8 + $0xe0] sm:$0xff] %vm861, %v2803
        %2885 = vst.msk [vmem:[#allocation8 + $0xf0] sm:$0xff] %vm861, %v2805
        %2886 = vst.msk [vmem:[#allocation8 + $0x100] sm:$0xff] %vm861, %v2807
        %2887 = vst.msk [vmem:[#allocation8 + $0x110] sm:$0xff] %vm861, %v2809
        %2888 = vst.msk [vmem:[#allocation8 + $0x120] sm:$0xff] %vm861, %v2811
        %2889 = vst.msk [vmem:[#allocation8 + $0x130] sm:$0xff] %vm861, %v2813
        %2890 = vst.msk [vmem:[#allocation8 + $0x140] sm:$0xff] %vm861, %v2815
        %2891 = vst.msk [vmem:[#allocation8 + $0x150] sm:$0xff] %vm861, %v2817
        %2892 = vst.msk [vmem:[#allocation8 + $0x160] sm:$0xff] %vm861, %v2819
        %2893 = vst.msk [vmem:[#allocation8 + $0x170] sm:$0xff] %vm861, %v2821
        %2894 = vst.msk [vmem:[#allocation8 + $0x180] sm:$0xff] %vm861, %v2823
        %2895 = vst.msk [vmem:[#allocation8 + $0x190] sm:$0xff] %vm861, %v2825
        %2896 = vst.msk [vmem:[#allocation8 + $0x1a0] sm:$0xff] %vm861, %v2827
        %2897 = vst.msk [vmem:[#allocation8 + $0x1b0] sm:$0xff] %vm861, %v2829
        %2898 = vst.msk [vmem:[#allocation8 + $0x1c0] sm:$0xff] %vm861, %v2831
        %2899 = vst.msk [vmem:[#allocation8 + $0x1d0] sm:$0xff] %vm861, %v2833
        %2900 = vst.msk [vmem:[#allocation8 + $0x1e0] sm:$0xff] %vm861, %v2835
        %2901 = vst.msk [vmem:[#allocation8 + $0x1f0] sm:$0xff] %vm861, %v2837
        %v2902 = vld [vmem:[#allocation3 + $0x2] sm:$0xff]
        %v2903 = vld [vmem:[#allocation3 + $0xa] sm:$0xff]
        %v2904 = vld [vmem:[#allocation3 + $0x1a] sm:$0xff]
        %v2905 = vld [vmem:[#allocation3 + $0x22] sm:$0xff]
        %v2906 = vld [vmem:[#allocation3 + $0x32] sm:$0xff]
        %v2907 = vld [vmem:[#allocation3 + $0x3a] sm:$0xff]
        %v2908 = vld [vmem:[#allocation3 + $0x4a] sm:$0xff]
        %v2909 = vld [vmem:[#allocation3 + $0x52] sm:$0xff]
        %v2910 = vld [vmem:[#allocation3 + $0x62] sm:$0xff]
        %v2911 = vld [vmem:[#allocation3 + $0x6a] sm:$0xff]
        %v2912 = vld [vmem:[#allocation3 + $0x7a] sm:$0xff]
        %v2913 = vld [vmem:[#allocation3 + $0x82] sm:$0xff]
        %v2914 = vld [vmem:[#allocation3 + $0x92] sm:$0xff]
        %v2915 = vld [vmem:[#allocation3 + $0x9a] sm:$0xff]
        %v2916 = vld [vmem:[#allocation3 + $0xaa] sm:$0xff]
        %v2917 = vld [vmem:[#allocation3 + $0xb2] sm:$0xff]
        %v2918 = vld [vmem:[#allocation3 + $0xc2] sm:$0xff]
        %v2919 = vld [vmem:[#allocation3 + $0xca] sm:$0xff]
        %v2920 = vld [vmem:[#allocation3 + $0xda] sm:$0xff]
        %v2921 = vld [vmem:[#allocation3 + $0xe2] sm:$0xff]
        %v2922 = vld [vmem:[#allocation3 + $0xf2] sm:$0xff]
        %v2923 = vld [vmem:[#allocation3 + $0xfa] sm:$0xff]
        %v2924 = vld [vmem:[#allocation3 + $0x10a] sm:$0xff]
        %v2925 = vld [vmem:[#allocation3 + $0x112] sm:$0xff]
        %v2926 = vld [vmem:[#allocation3 + $0x122] sm:$0xff]
        %v2927 = vld [vmem:[#allocation3 + $0x12a] sm:$0xff]
        %v2928 = vld [vmem:[#allocation3 + $0x13a] sm:$0xff]
        %v2929 = vld [vmem:[#allocation3 + $0x142] sm:$0xff]
        %v2930 = vld [vmem:[#allocation3 + $0x152] sm:$0xff]
        %v2931 = vld [vmem:[#allocation3 + $0x15a] sm:$0xff]
        %v2932 = vld [vmem:[#allocation3 + $0x16a] sm:$0xff]
        %v2933 = vld [vmem:[#allocation3 + $0x172] sm:$0xff]
        %2966 = vrot.lane.b32.xlu0 %v2902, 32
        %v2967 = vpop.permute.xlu0 %2966
        %2968 = vrot.lane.b32.xlu0 %v2903, 32
        %v2969 = vpop.permute.xlu0 %2968
        %2970 = vrot.lane.b32.xlu0 %v2904, 32
        %v2971 = vpop.permute.xlu0 %2970
        %2972 = vrot.lane.b32.xlu0 %v2905, 32
        %v2973 = vpop.permute.xlu0 %2972
        %2974 = vrot.lane.b32.xlu0 %v2906, 32
        %v2975 = vpop.permute.xlu0 %2974
        %2976 = vrot.lane.b32.xlu0 %v2907, 32
        %v2977 = vpop.permute.xlu0 %2976
        %2978 = vrot.lane.b32.xlu0 %v2908, 32
        %v2979 = vpop.permute.xlu0 %2978
        %2980 = vrot.lane.b32.xlu0 %v2909, 32
        %v2981 = vpop.permute.xlu0 %2980
        %2982 = vrot.lane.b32.xlu0 %v2910, 32
        %v2983 = vpop.permute.xlu0 %2982
        %2984 = vrot.lane.b32.xlu0 %v2911, 32
        %v2985 = vpop.permute.xlu0 %2984
        %2986 = vrot.lane.b32.xlu0 %v2912, 32
        %v2987 = vpop.permute.xlu0 %2986
        %2988 = vrot.lane.b32.xlu0 %v2913, 32
        %v2989 = vpop.permute.xlu0 %2988
        %2990 = vrot.lane.b32.xlu0 %v2914, 32
        %v2991 = vpop.permute.xlu0 %2990
        %2992 = vrot.lane.b32.xlu0 %v2915, 32
        %v2993 = vpop.permute.xlu0 %2992
        %2994 = vrot.lane.b32.xlu0 %v2916, 32
        %v2995 = vpop.permute.xlu0 %2994
        %2996 = vrot.lane.b32.xlu0 %v2917, 32
        %v2997 = vpop.permute.xlu0 %2996
        %2998 = vrot.lane.b32.xlu0 %v2918, 32
        %v2999 = vpop.permute.xlu0 %2998
        %3000 = vrot.lane.b32.xlu0 %v2919, 32
        %v3001 = vpop.permute.xlu0 %3000
        %3002 = vrot.lane.b32.xlu0 %v2920, 32
        %v3003 = vpop.permute.xlu0 %3002
        %3004 = vrot.lane.b32.xlu0 %v2921, 32
        %v3005 = vpop.permute.xlu0 %3004
        %3006 = vrot.lane.b32.xlu0 %v2922, 32
        %v3007 = vpop.permute.xlu0 %3006
        %3008 = vrot.lane.b32.xlu0 %v2923, 32
        %v3009 = vpop.permute.xlu0 %3008
        %3010 = vrot.lane.b32.xlu0 %v2924, 32
        %v3011 = vpop.permute.xlu0 %3010
        %3012 = vrot.lane.b32.xlu0 %v2925, 32
        %v3013 = vpop.permute.xlu0 %3012
        %3014 = vrot.lane.b32.xlu0 %v2926, 32
        %v3015 = vpop.permute.xlu0 %3014
        %3016 = vrot.lane.b32.xlu0 %v2927, 32
        %v3017 = vpop.permute.xlu0 %3016
        %3018 = vrot.lane.b32.xlu0 %v2928, 32
        %v3019 = vpop.permute.xlu0 %3018
        %3020 = vrot.lane.b32.xlu0 %v2929, 32
        %v3021 = vpop.permute.xlu0 %3020
        %3022 = vrot.lane.b32.xlu0 %v2930, 32
        %v3023 = vpop.permute.xlu0 %3022
        %3024 = vrot.lane.b32.xlu0 %v2931, 32
        %v3025 = vpop.permute.xlu0 %3024
        %3026 = vrot.lane.b32.xlu0 %v2932, 32
        %v3027 = vpop.permute.xlu0 %3026
        %3028 = vrot.lane.b32.xlu0 %v2933, 32
        %v3029 = vpop.permute.xlu0 %3028
        %3062 = vst.msk [vmem:[#allocation8] sm:$0xff] %vm1054, %v2967
        %3063 = vst.msk [vmem:[#allocation8 + $0x10] sm:$0xff] %vm1054, %v2969
        %3064 = vst.msk [vmem:[#allocation8 + $0x20] sm:$0xff] %vm1054, %v2971
        %3065 = vst.msk [vmem:[#allocation8 + $0x30] sm:$0xff] %vm1054, %v2973
        %3066 = vst.msk [vmem:[#allocation8 + $0x40] sm:$0xff] %vm1054, %v2975
        %3067 = vst.msk [vmem:[#allocation8 + $0x50] sm:$0xff] %vm1054, %v2977
        %3068 = vst.msk [vmem:[#allocation8 + $0x60] sm:$0xff] %vm1054, %v2979
        %3069 = vst.msk [vmem:[#allocation8 + $0x70] sm:$0xff] %vm1054, %v2981
        %3070 = vst.msk [vmem:[#allocation8 + $0x80] sm:$0xff] %vm1054, %v2983
        %3071 = vst.msk [vmem:[#allocation8 + $0x90] sm:$0xff] %vm1054, %v2985
        %3072 = vst.msk [vmem:[#allocation8 + $0xa0] sm:$0xff] %vm1054, %v2987
        %3073 = vst.msk [vmem:[#allocation8 + $0xb0] sm:$0xff] %vm1054, %v2989
        %3074 = vst.msk [vmem:[#allocation8 + $0xc0] sm:$0xff] %vm1054, %v2991
        %3075 = vst.msk [vmem:[#allocation8 + $0xd0] sm:$0xff] %vm1054, %v2993
        %3076 = vst.msk [vmem:[#allocation8 + $0xe0] sm:$0xff] %vm1054, %v2995
        %3077 = vst.msk [vmem:[#allocation8 + $0xf0] sm:$0xff] %vm1054, %v2997
        %3078 = vst.msk [vmem:[#allocation8 + $0x100] sm:$0xff] %vm1054, %v2999
        %3079 = vst.msk [vmem:[#allocation8 + $0x110] sm:$0xff] %vm1054, %v3001
        %3080 = vst.msk [vmem:[#allocation8 + $0x120] sm:$0xff] %vm1054, %v3003
        %3081 = vst.msk [vmem:[#allocation8 + $0x130] sm:$0xff] %vm1054, %v3005
        %3082 = vst.msk [vmem:[#allocation8 + $0x140] sm:$0xff] %vm1054, %v3007
        %3083 = vst.msk [vmem:[#allocation8 + $0x150] sm:$0xff] %vm1054, %v3009
        %3084 = vst.msk [vmem:[#allocation8 + $0x160] sm:$0xff] %vm1054, %v3011
        %3085 = vst.msk [vmem:[#allocation8 + $0x170] sm:$0xff] %vm1054, %v3013
        %3086 = vst.msk [vmem:[#allocation8 + $0x180] sm:$0xff] %vm1054, %v3015
        %3087 = vst.msk [vmem:[#allocation8 + $0x190] sm:$0xff] %vm1054, %v3017
        %3088 = vst.msk [vmem:[#allocation8 + $0x1a0] sm:$0xff] %vm1054, %v3019
        %3089 = vst.msk [vmem:[#allocation8 + $0x1b0] sm:$0xff] %vm1054, %v3021
        %3090 = vst.msk [vmem:[#allocation8 + $0x1c0] sm:$0xff] %vm1054, %v3023
        %3091 = vst.msk [vmem:[#allocation8 + $0x1d0] sm:$0xff] %vm1054, %v3025
        %3092 = vst.msk [vmem:[#allocation8 + $0x1e0] sm:$0xff] %vm1054, %v3027
        %3093 = vst.msk [vmem:[#allocation8 + $0x1f0] sm:$0xff] %vm1054, %v3029
        %v3094 = vld [vmem:[%s2613] sm:$0xff]
        %v3095 = vld [vmem:[%s2613 + $0x8] sm:$0xff]
        %v3096 = vld [vmem:[%s2613 + $0x18] sm:$0xff]
        %v3097 = vld [vmem:[%s2613 + $0x20] sm:$0xff]
        %v3098 = vld [vmem:[%s2613 + $0x30] sm:$0xff]
        %v3099 = vld [vmem:[%s2613 + $0x38] sm:$0xff]
        %v3100 = vld [vmem:[%s2613 + $0x48] sm:$0xff]
        %v3101 = vld [vmem:[%s2613 + $0x50] sm:$0xff]
        %v3102 = vld [vmem:[%s2613 + $0x60] sm:$0xff]
        %v3103 = vld [vmem:[%s2613 + $0x68] sm:$0xff]
        %v3104 = vld [vmem:[%s2613 + $0x78] sm:$0xff]
        %v3105 = vld [vmem:[%s2613 + $0x80] sm:$0xff]
        %v3106 = vld [vmem:[%s2613 + $0x90] sm:$0xff]
        %v3107 = vld [vmem:[%s2613 + $0x98] sm:$0xff]
        %v3108 = vld [vmem:[%s2613 + $0xa8] sm:$0xff]
        %v3109 = vld [vmem:[%s2613 + $0xb0] sm:$0xff]
        %v3110 = vld [vmem:[%s2613 + $0xc0] sm:$0xff]
        %v3111 = vld [vmem:[%s2613 + $0xc8] sm:$0xff]
        %v3112 = vld [vmem:[%s2613 + $0xd8] sm:$0xff]
        %v3113 = vld [vmem:[%s2613 + $0xe0] sm:$0xff]
        %v3114 = vld [vmem:[%s2613 + $0xf0] sm:$0xff]
        %v3115 = vld [vmem:[%s2613 + $0xf8] sm:$0xff]
        %v3116 = vld [vmem:[%s2613 + $0x108] sm:$0xff]
        %v3117 = vld [vmem:[%s2613 + $0x110] sm:$0xff]
        %v3118 = vld [vmem:[%s2613 + $0x120] sm:$0xff]
        %v3119 = vld [vmem:[%s2613 + $0x128] sm:$0xff]
        %v3120 = vld [vmem:[%s2613 + $0x138] sm:$0xff]
        %v3121 = vld [vmem:[%s2613 + $0x140] sm:$0xff]
        %v3122 = vld [vmem:[%s2613 + $0x150] sm:$0xff]
        %v3123 = vld [vmem:[%s2613 + $0x158] sm:$0xff]
        %v3124 = vld [vmem:[%s2613 + $0x168] sm:$0xff]
        %v3125 = vld [vmem:[%s2613 + $0x170] sm:$0xff]
        %3158 = vrot.lane.b32.xlu0 %v3094, 48
        %v3159 = vpop.permute.xlu0 %3158
        %3160 = vrot.lane.b32.xlu0 %v3095, 48
        %v3161 = vpop.permute.xlu0 %3160
        %3162 = vrot.lane.b32.xlu0 %v3096, 48
        %v3163 = vpop.permute.xlu0 %3162
        %3164 = vrot.lane.b32.xlu0 %v3097, 48
        %v3165 = vpop.permute.xlu0 %3164
        %3166 = vrot.lane.b32.xlu0 %v3098, 48
        %v3167 = vpop.permute.xlu0 %3166
        %3168 = vrot.lane.b32.xlu0 %v3099, 48
        %v3169 = vpop.permute.xlu0 %3168
        %3170 = vrot.lane.b32.xlu0 %v3100, 48
        %v3171 = vpop.permute.xlu0 %3170
        %3172 = vrot.lane.b32.xlu0 %v3101, 48
        %v3173 = vpop.permute.xlu0 %3172
        %3174 = vrot.lane.b32.xlu0 %v3102, 48
        %v3175 = vpop.permute.xlu0 %3174
        %3176 = vrot.lane.b32.xlu0 %v3103, 48
        %v3177 = vpop.permute.xlu0 %3176
        %3178 = vrot.lane.b32.xlu0 %v3104, 48
        %v3179 = vpop.permute.xlu0 %3178
        %3180 = vrot.lane.b32.xlu0 %v3105, 48
        %v3181 = vpop.permute.xlu0 %3180
        %3182 = vrot.lane.b32.xlu0 %v3106, 48
        %v3183 = vpop.permute.xlu0 %3182
        %3184 = vrot.lane.b32.xlu0 %v3107, 48
        %v3185 = vpop.permute.xlu0 %3184
        %3186 = vrot.lane.b32.xlu0 %v3108, 48
        %v3187 = vpop.permute.xlu0 %3186
        %3188 = vrot.lane.b32.xlu0 %v3109, 48
        %v3189 = vpop.permute.xlu0 %3188
        %3190 = vrot.lane.b32.xlu0 %v3110, 48
        %v3191 = vpop.permute.xlu0 %3190
        %3192 = vrot.lane.b32.xlu0 %v3111, 48
        %v3193 = vpop.permute.xlu0 %3192
        %3194 = vrot.lane.b32.xlu0 %v3112, 48
        %v3195 = vpop.permute.xlu0 %3194
        %3196 = vrot.lane.b32.xlu0 %v3113, 48
        %v3197 = vpop.permute.xlu0 %3196
        %3198 = vrot.lane.b32.xlu0 %v3114, 48
        %v3199 = vpop.permute.xlu0 %3198
        %3200 = vrot.lane.b32.xlu0 %v3115, 48
        %v3201 = vpop.permute.xlu0 %3200
        %3202 = vrot.lane.b32.xlu0 %v3116, 48
        %v3203 = vpop.permute.xlu0 %3202
        %3204 = vrot.lane.b32.xlu0 %v3117, 48
        %v3205 = vpop.permute.xlu0 %3204
        %3206 = vrot.lane.b32.xlu0 %v3118, 48
        %v3207 = vpop.permute.xlu0 %3206
        %3208 = vrot.lane.b32.xlu0 %v3119, 48
        %v3209 = vpop.permute.xlu0 %3208
        %3210 = vrot.lane.b32.xlu0 %v3120, 48
        %v3211 = vpop.permute.xlu0 %3210
        %3212 = vrot.lane.b32.xlu0 %v3121, 48
        %v3213 = vpop.permute.xlu0 %3212
        %3214 = vrot.lane.b32.xlu0 %v3122, 48
        %v3215 = vpop.permute.xlu0 %3214
        %3216 = vrot.lane.b32.xlu0 %v3123, 48
        %v3217 = vpop.permute.xlu0 %3216
        %3218 = vrot.lane.b32.xlu0 %v3124, 48
        %v3219 = vpop.permute.xlu0 %3218
        %3220 = vrot.lane.b32.xlu0 %v3125, 48
        %v3221 = vpop.permute.xlu0 %3220
        %3254 = vst.msk [vmem:[#allocation8] sm:$0xff] %vm1247, %v3159
        %3255 = vst.msk [vmem:[#allocation8 + $0x10] sm:$0xff] %vm1247, %v3161
        %3256 = vst.msk [vmem:[#allocation8 + $0x20] sm:$0xff] %vm1247, %v3163
        %3257 = vst.msk [vmem:[#allocation8 + $0x30] sm:$0xff] %vm1247, %v3165
        %3258 = vst.msk [vmem:[#allocation8 + $0x40] sm:$0xff] %vm1247, %v3167
        %3259 = vst.msk [vmem:[#allocation8 + $0x50] sm:$0xff] %vm1247, %v3169
        %3260 = vst.msk [vmem:[#allocation8 + $0x60] sm:$0xff] %vm1247, %v3171
        %3261 = vst.msk [vmem:[#allocation8 + $0x70] sm:$0xff] %vm1247, %v3173
        %3262 = vst.msk [vmem:[#allocation8 + $0x80] sm:$0xff] %vm1247, %v3175
        %3263 = vst.msk [vmem:[#allocation8 + $0x90] sm:$0xff] %vm1247, %v3177
        %3264 = vst.msk [vmem:[#allocation8 + $0xa0] sm:$0xff] %vm1247, %v3179
        %3265 = vst.msk [vmem:[#allocation8 + $0xb0] sm:$0xff] %vm1247, %v3181
        %3266 = vst.msk [vmem:[#allocation8 + $0xc0] sm:$0xff] %vm1247, %v3183
        %3267 = vst.msk [vmem:[#allocation8 + $0xd0] sm:$0xff] %vm1247, %v3185
        %3268 = vst.msk [vmem:[#allocation8 + $0xe0] sm:$0xff] %vm1247, %v3187
        %3269 = vst.msk [vmem:[#allocation8 + $0xf0] sm:$0xff] %vm1247, %v3189
        %3270 = vst.msk [vmem:[#allocation8 + $0x100] sm:$0xff] %vm1247, %v3191
        %3271 = vst.msk [vmem:[#allocation8 + $0x110] sm:$0xff] %vm1247, %v3193
        %3272 = vst.msk [vmem:[#allocation8 + $0x120] sm:$0xff] %vm1247, %v3195
        %3273 = vst.msk [vmem:[#allocation8 + $0x130] sm:$0xff] %vm1247, %v3197
        %3274 = vst.msk [vmem:[#allocation8 + $0x140] sm:$0xff] %vm1247, %v3199
        %3275 = vst.msk [vmem:[#allocation8 + $0x150] sm:$0xff] %vm1247, %v3201
        %3276 = vst.msk [vmem:[#allocation8 + $0x160] sm:$0xff] %vm1247, %v3203
        %3277 = vst.msk [vmem:[#allocation8 + $0x170] sm:$0xff] %vm1247, %v3205
        %3278 = vst.msk [vmem:[#allocation8 + $0x180] sm:$0xff] %vm1247, %v3207
        %3279 = vst.msk [vmem:[#allocation8 + $0x190] sm:$0xff] %vm1247, %v3209
        %3280 = vst.msk [vmem:[#allocation8 + $0x1a0] sm:$0xff] %vm1247, %v3211
        %3281 = vst.msk [vmem:[#allocation8 + $0x1b0] sm:$0xff] %vm1247, %v3213
        %3282 = vst.msk [vmem:[#allocation8 + $0x1c0] sm:$0xff] %vm1247, %v3215
        %3283 = vst.msk [vmem:[#allocation8 + $0x1d0] sm:$0xff] %vm1247, %v3217
        %3284 = vst.msk [vmem:[#allocation8 + $0x1e0] sm:$0xff] %vm1247, %v3219
        %3285 = vst.msk [vmem:[#allocation8 + $0x1f0] sm:$0xff] %vm1247, %v3221
        %v3286 = vld [vmem:[%s2613 + $0x1] sm:$0xff]
        %v3287 = vld [vmem:[%s2613 + $0x9] sm:$0xff]
        %v3288 = vld [vmem:[%s2613 + $0x19] sm:$0xff]
        %v3289 = vld [vmem:[%s2613 + $0x21] sm:$0xff]
        %v3290 = vld [vmem:[%s2613 + $0x31] sm:$0xff]
        %v3291 = vld [vmem:[%s2613 + $0x39] sm:$0xff]
        %v3292 = vld [vmem:[%s2613 + $0x49] sm:$0xff]
        %v3293 = vld [vmem:[%s2613 + $0x51] sm:$0xff]
        %v3294 = vld [vmem:[%s2613 + $0x61] sm:$0xff]
        %v3295 = vld [vmem:[%s2613 + $0x69] sm:$0xff]
        %v3296 = vld [vmem:[%s2613 + $0x79] sm:$0xff]
        %v3297 = vld [vmem:[%s2613 + $0x81] sm:$0xff]
        %v3298 = vld [vmem:[%s2613 + $0x91] sm:$0xff]
        %v3299 = vld [vmem:[%s2613 + $0x99] sm:$0xff]
        %v3300 = vld [vmem:[%s2613 + $0xa9] sm:$0xff]
        %v3301 = vld [vmem:[%s2613 + $0xb1] sm:$0xff]
        %v3302 = vld [vmem:[%s2613 + $0xc1] sm:$0xff]
        %v3303 = vld [vmem:[%s2613 + $0xc9] sm:$0xff]
        %v3304 = vld [vmem:[%s2613 + $0xd9] sm:$0xff]
        %v3305 = vld [vmem:[%s2613 + $0xe1] sm:$0xff]
        %v3306 = vld [vmem:[%s2613 + $0xf1] sm:$0xff]
        %v3307 = vld [vmem:[%s2613 + $0xf9] sm:$0xff]
        %v3308 = vld [vmem:[%s2613 + $0x109] sm:$0xff]
        %v3309 = vld [vmem:[%s2613 + $0x111] sm:$0xff]
        %v3310 = vld [vmem:[%s2613 + $0x121] sm:$0xff]
        %v3311 = vld [vmem:[%s2613 + $0x129] sm:$0xff]
        %v3312 = vld [vmem:[%s2613 + $0x139] sm:$0xff]
        %v3313 = vld [vmem:[%s2613 + $0x141] sm:$0xff]
        %v3314 = vld [vmem:[%s2613 + $0x151] sm:$0xff]
        %v3315 = vld [vmem:[%s2613 + $0x159] sm:$0xff]
        %v3316 = vld [vmem:[%s2613 + $0x169] sm:$0xff]
        %v3317 = vld [vmem:[%s2613 + $0x171] sm:$0xff]
        %3350 = vrot.lane.b32.xlu0 %v3286, 64
        %v3351 = vpop.permute.xlu0 %3350
        %3352 = vrot.lane.b32.xlu0 %v3287, 64
        %v3353 = vpop.permute.xlu0 %3352
        %3354 = vrot.lane.b32.xlu0 %v3288, 64
        %v3355 = vpop.permute.xlu0 %3354
        %3356 = vrot.lane.b32.xlu0 %v3289, 64
        %v3357 = vpop.permute.xlu0 %3356
        %3358 = vrot.lane.b32.xlu0 %v3290, 64
        %v3359 = vpop.permute.xlu0 %3358
        %3360 = vrot.lane.b32.xlu0 %v3291, 64
        %v3361 = vpop.permute.xlu0 %3360
        %3362 = vrot.lane.b32.xlu0 %v3292, 64
        %v3363 = vpop.permute.xlu0 %3362
        %3364 = vrot.lane.b32.xlu0 %v3293, 64
        %v3365 = vpop.permute.xlu0 %3364
        %3366 = vrot.lane.b32.xlu0 %v3294, 64
        %v3367 = vpop.permute.xlu0 %3366
        %3368 = vrot.lane.b32.xlu0 %v3295, 64
        %v3369 = vpop.permute.xlu0 %3368
        %3370 = vrot.lane.b32.xlu0 %v3296, 64
        %v3371 = vpop.permute.xlu0 %3370
        %3372 = vrot.lane.b32.xlu0 %v3297, 64
        %v3373 = vpop.permute.xlu0 %3372
        %3374 = vrot.lane.b32.xlu0 %v3298, 64
        %v3375 = vpop.permute.xlu0 %3374
        %3376 = vrot.lane.b32.xlu0 %v3299, 64
        %v3377 = vpop.permute.xlu0 %3376
        %3378 = vrot.lane.b32.xlu0 %v3300, 64
        %v3379 = vpop.permute.xlu0 %3378
        %3380 = vrot.lane.b32.xlu0 %v3301, 64
        %v3381 = vpop.permute.xlu0 %3380
        %3382 = vrot.lane.b32.xlu0 %v3302, 64
        %v3383 = vpop.permute.xlu0 %3382
        %3384 = vrot.lane.b32.xlu0 %v3303, 64
        %v3385 = vpop.permute.xlu0 %3384
        %3386 = vrot.lane.b32.xlu0 %v3304, 64
        %v3387 = vpop.permute.xlu0 %3386
        %3388 = vrot.lane.b32.xlu0 %v3305, 64
        %v3389 = vpop.permute.xlu0 %3388
        %3390 = vrot.lane.b32.xlu0 %v3306, 64
        %v3391 = vpop.permute.xlu0 %3390
        %3392 = vrot.lane.b32.xlu0 %v3307, 64
        %v3393 = vpop.permute.xlu0 %3392
        %3394 = vrot.lane.b32.xlu0 %v3308, 64
        %v3395 = vpop.permute.xlu0 %3394
        %3396 = vrot.lane.b32.xlu0 %v3309, 64
        %v3397 = vpop.permute.xlu0 %3396
        %3398 = vrot.lane.b32.xlu0 %v3310, 64
        %v3399 = vpop.permute.xlu0 %3398
        %3400 = vrot.lane.b32.xlu0 %v3311, 64
        %v3401 = vpop.permute.xlu0 %3400
        %3402 = vrot.lane.b32.xlu0 %v3312, 64
        %v3403 = vpop.permute.xlu0 %3402
        %3404 = vrot.lane.b32.xlu0 %v3313, 64
        %v3405 = vpop.permute.xlu0 %3404
        %3406 = vrot.lane.b32.xlu0 %v3314, 64
        %v3407 = vpop.permute.xlu0 %3406
        %3408 = vrot.lane.b32.xlu0 %v3315, 64
        %v3409 = vpop.permute.xlu0 %3408
        %3410 = vrot.lane.b32.xlu0 %v3316, 64
        %v3411 = vpop.permute.xlu0 %3410
        %3412 = vrot.lane.b32.xlu0 %v3317, 64
        %v3413 = vpop.permute.xlu0 %3412
        %3446 = vst.msk [vmem:[#allocation8] sm:$0xff] %vm1440, %v3351
        %3447 = vst.msk [vmem:[#allocation8 + $0x10] sm:$0xff] %vm1440, %v3353
        %3448 = vst.msk [vmem:[#allocation8 + $0x20] sm:$0xff] %vm1440, %v3355
        %3449 = vst.msk [vmem:[#allocation8 + $0x30] sm:$0xff] %vm1440, %v3357
        %3450 = vst.msk [vmem:[#allocation8 + $0x40] sm:$0xff] %vm1440, %v3359
        %3451 = vst.msk [vmem:[#allocation8 + $0x50] sm:$0xff] %vm1440, %v3361
        %3452 = vst.msk [vmem:[#allocation8 + $0x60] sm:$0xff] %vm1440, %v3363
        %3453 = vst.msk [vmem:[#allocation8 + $0x70] sm:$0xff] %vm1440, %v3365
        %3454 = vst.msk [vmem:[#allocation8 + $0x80] sm:$0xff] %vm1440, %v3367
        %3455 = vst.msk [vmem:[#allocation8 + $0x90] sm:$0xff] %vm1440, %v3369
        %3456 = vst.msk [vmem:[#allocation8 + $0xa0] sm:$0xff] %vm1440, %v3371
        %3457 = vst.msk [vmem:[#allocation8 + $0xb0] sm:$0xff] %vm1440, %v3373
        %3458 = vst.msk [vmem:[#allocation8 + $0xc0] sm:$0xff] %vm1440, %v3375
        %3459 = vst.msk [vmem:[#allocation8 + $0xd0] sm:$0xff] %vm1440, %v3377
        %3460 = vst.msk [vmem:[#allocation8 + $0xe0] sm:$0xff] %vm1440, %v3379
        %3461 = vst.msk [vmem:[#allocation8 + $0xf0] sm:$0xff] %vm1440, %v3381
        %3462 = vst.msk [vmem:[#allocation8 + $0x100] sm:$0xff] %vm1440, %v3383
        %3463 = vst.msk [vmem:[#allocation8 + $0x110] sm:$0xff] %vm1440, %v3385
        %3464 = vst.msk [vmem:[#allocation8 + $0x120] sm:$0xff] %vm1440, %v3387
        %3465 = vst.msk [vmem:[#allocation8 + $0x130] sm:$0xff] %vm1440, %v3389
        %3466 = vst.msk [vmem:[#allocation8 + $0x140] sm:$0xff] %vm1440, %v3391
        %3467 = vst.msk [vmem:[#allocation8 + $0x150] sm:$0xff] %vm1440, %v3393
        %3468 = vst.msk [vmem:[#allocation8 + $0x160] sm:$0xff] %vm1440, %v3395
        %3469 = vst.msk [vmem:[#allocation8 + $0x170] sm:$0xff] %vm1440, %v3397
        %3470 = vst.msk [vmem:[#allocation8 + $0x180] sm:$0xff] %vm1440, %v3399
        %3471 = vst.msk [vmem:[#allocation8 + $0x190] sm:$0xff] %vm1440, %v3401
        %3472 = vst.msk [vmem:[#allocation8 + $0x1a0] sm:$0xff] %vm1440, %v3403
        %3473 = vst.msk [vmem:[#allocation8 + $0x1b0] sm:$0xff] %vm1440, %v3405
        %3474 = vst.msk [vmem:[#allocation8 + $0x1c0] sm:$0xff] %vm1440, %v3407
        %3475 = vst.msk [vmem:[#allocation8 + $0x1d0] sm:$0xff] %vm1440, %v3409
        %3476 = vst.msk [vmem:[#allocation8 + $0x1e0] sm:$0xff] %vm1440, %v3411
        %3477 = vst.msk [vmem:[#allocation8 + $0x1f0] sm:$0xff] %vm1440, %v3413
        %v3478 = vld [vmem:[%s2613 + $0x2] sm:$0xff]
        %v3479 = vld [vmem:[%s2613 + $0xa] sm:$0xff]
        %v3480 = vld [vmem:[%s2613 + $0x1a] sm:$0xff]
        %v3481 = vld [vmem:[%s2613 + $0x22] sm:$0xff]
        %v3482 = vld [vmem:[%s2613 + $0x32] sm:$0xff]
        %v3483 = vld [vmem:[%s2613 + $0x3a] sm:$0xff]
        %v3484 = vld [vmem:[%s2613 + $0x4a] sm:$0xff]
        %v3485 = vld [vmem:[%s2613 + $0x52] sm:$0xff]
        %v3486 = vld [vmem:[%s2613 + $0x62] sm:$0xff]
        %v3487 = vld [vmem:[%s2613 + $0x6a] sm:$0xff]
        %v3488 = vld [vmem:[%s2613 + $0x7a] sm:$0xff]
        %v3489 = vld [vmem:[%s2613 + $0x82] sm:$0xff]
        %v3490 = vld [vmem:[%s2613 + $0x92] sm:$0xff]
        %v3491 = vld [vmem:[%s2613 + $0x9a] sm:$0xff]
        %v3492 = vld [vmem:[%s2613 + $0xaa] sm:$0xff]
        %v3493 = vld [vmem:[%s2613 + $0xb2] sm:$0xff]
        %v3494 = vld [vmem:[%s2613 + $0xc2] sm:$0xff]
        %v3495 = vld [vmem:[%s2613 + $0xca] sm:$0xff]
        %v3496 = vld [vmem:[%s2613 + $0xda] sm:$0xff]
        %v3497 = vld [vmem:[%s2613 + $0xe2] sm:$0xff]
        %v3498 = vld [vmem:[%s2613 + $0xf2] sm:$0xff]
        %v3499 = vld [vmem:[%s2613 + $0xfa] sm:$0xff]
        %v3500 = vld [vmem:[%s2613 + $0x10a] sm:$0xff]
        %v3501 = vld [vmem:[%s2613 + $0x112] sm:$0xff]
        %v3502 = vld [vmem:[%s2613 + $0x122] sm:$0xff]
        %v3503 = vld [vmem:[%s2613 + $0x12a] sm:$0xff]
        %v3504 = vld [vmem:[%s2613 + $0x13a] sm:$0xff]
        %v3505 = vld [vmem:[%s2613 + $0x142] sm:$0xff]
        %v3506 = vld [vmem:[%s2613 + $0x152] sm:$0xff]
        %v3507 = vld [vmem:[%s2613 + $0x15a] sm:$0xff]
        %v3508 = vld [vmem:[%s2613 + $0x16a] sm:$0xff]
        %v3509 = vld [vmem:[%s2613 + $0x172] sm:$0xff]
        %3542 = vrot.lane.b32.xlu0 %v3478, 80
        %v3543 = vpop.permute.xlu0 %3542
        %3544 = vrot.lane.b32.xlu0 %v3479, 80
        %v3545 = vpop.permute.xlu0 %3544
        %3546 = vrot.lane.b32.xlu0 %v3480, 80
        %v3547 = vpop.permute.xlu0 %3546
        %3548 = vrot.lane.b32.xlu0 %v3481, 80
        %v3549 = vpop.permute.xlu0 %3548
        %3550 = vrot.lane.b32.xlu0 %v3482, 80
        %v3551 = vpop.permute.xlu0 %3550
        %3552 = vrot.lane.b32.xlu0 %v3483, 80
        %v3553 = vpop.permute.xlu0 %3552
        %3554 = vrot.lane.b32.xlu0 %v3484, 80
        %v3555 = vpop.permute.xlu0 %3554
        %3556 = vrot.lane.b32.xlu0 %v3485, 80
        %v3557 = vpop.permute.xlu0 %3556
        %3558 = vrot.lane.b32.xlu0 %v3486, 80
        %v3559 = vpop.permute.xlu0 %3558
        %3560 = vrot.lane.b32.xlu0 %v3487, 80
        %v3561 = vpop.permute.xlu0 %3560
        %3562 = vrot.lane.b32.xlu0 %v3488, 80
        %v3563 = vpop.permute.xlu0 %3562
        %3564 = vrot.lane.b32.xlu0 %v3489, 80
        %v3565 = vpop.permute.xlu0 %3564
        %3566 = vrot.lane.b32.xlu0 %v3490, 80
        %v3567 = vpop.permute.xlu0 %3566
        %3568 = vrot.lane.b32.xlu0 %v3491, 80
        %v3569 = vpop.permute.xlu0 %3568
        %3570 = vrot.lane.b32.xlu0 %v3492, 80
        %v3571 = vpop.permute.xlu0 %3570
        %3572 = vrot.lane.b32.xlu0 %v3493, 80
        %v3573 = vpop.permute.xlu0 %3572
        %3574 = vrot.lane.b32.xlu0 %v3494, 80
        %v3575 = vpop.permute.xlu0 %3574
        %3576 = vrot.lane.b32.xlu0 %v3495, 80
        %v3577 = vpop.permute.xlu0 %3576
        %3578 = vrot.lane.b32.xlu0 %v3496, 80
        %v3579 = vpop.permute.xlu0 %3578
        %3580 = vrot.lane.b32.xlu0 %v3497, 80
        %v3581 = vpop.permute.xlu0 %3580
        %3582 = vrot.lane.b32.xlu0 %v3498, 80
        %v3583 = vpop.permute.xlu0 %3582
        %3584 = vrot.lane.b32.xlu0 %v3499, 80
        %v3585 = vpop.permute.xlu0 %3584
        %3586 = vrot.lane.b32.xlu0 %v3500, 80
        %v3587 = vpop.permute.xlu0 %3586
        %3588 = vrot.lane.b32.xlu0 %v3501, 80
        %v3589 = vpop.permute.xlu0 %3588
        %3590 = vrot.lane.b32.xlu0 %v3502, 80
        %v3591 = vpop.permute.xlu0 %3590
        %3592 = vrot.lane.b32.xlu0 %v3503, 80
        %v3593 = vpop.permute.xlu0 %3592
        %3594 = vrot.lane.b32.xlu0 %v3504, 80
        %v3595 = vpop.permute.xlu0 %3594
        %3596 = vrot.lane.b32.xlu0 %v3505, 80
        %v3597 = vpop.permute.xlu0 %3596
        %3598 = vrot.lane.b32.xlu0 %v3506, 80
        %v3599 = vpop.permute.xlu0 %3598
        %3600 = vrot.lane.b32.xlu0 %v3507, 80
        %v3601 = vpop.permute.xlu0 %3600
        %3602 = vrot.lane.b32.xlu0 %v3508, 80
        %v3603 = vpop.permute.xlu0 %3602
        %3604 = vrot.lane.b32.xlu0 %v3509, 80
        %v3605 = vpop.permute.xlu0 %3604
        %3638 = vst.msk [vmem:[#allocation8] sm:$0xff] %vm1633, %v3543
        %3639 = vst.msk [vmem:[#allocation8 + $0x10] sm:$0xff] %vm1633, %v3545
        %3640 = vst.msk [vmem:[#allocation8 + $0x20] sm:$0xff] %vm1633, %v3547
        %3641 = vst.msk [vmem:[#allocation8 + $0x30] sm:$0xff] %vm1633, %v3549
        %3642 = vst.msk [vmem:[#allocation8 + $0x40] sm:$0xff] %vm1633, %v3551
        %3643 = vst.msk [vmem:[#allocation8 + $0x50] sm:$0xff] %vm1633, %v3553
        %3644 = vst.msk [vmem:[#allocation8 + $0x60] sm:$0xff] %vm1633, %v3555
        %3645 = vst.msk [vmem:[#allocation8 + $0x70] sm:$0xff] %vm1633, %v3557
        %3646 = vst.msk [vmem:[#allocation8 + $0x80] sm:$0xff] %vm1633, %v3559
        %3647 = vst.msk [vmem:[#allocation8 + $0x90] sm:$0xff] %vm1633, %v3561
        %3648 = vst.msk [vmem:[#allocation8 + $0xa0] sm:$0xff] %vm1633, %v3563
        %3649 = vst.msk [vmem:[#allocation8 + $0xb0] sm:$0xff] %vm1633, %v3565
        %3650 = vst.msk [vmem:[#allocation8 + $0xc0] sm:$0xff] %vm1633, %v3567
        %3651 = vst.msk [vmem:[#allocation8 + $0xd0] sm:$0xff] %vm1633, %v3569
        %3652 = vst.msk [vmem:[#allocation8 + $0xe0] sm:$0xff] %vm1633, %v3571
        %3653 = vst.msk [vmem:[#allocation8 + $0xf0] sm:$0xff] %vm1633, %v3573
        %3654 = vst.msk [vmem:[#allocation8 + $0x100] sm:$0xff] %vm1633, %v3575
        %3655 = vst.msk [vmem:[#allocation8 + $0x110] sm:$0xff] %vm1633, %v3577
        %3656 = vst.msk [vmem:[#allocation8 + $0x120] sm:$0xff] %vm1633, %v3579
        %3657 = vst.msk [vmem:[#allocation8 + $0x130] sm:$0xff] %vm1633, %v3581
        %3658 = vst.msk [vmem:[#allocation8 + $0x140] sm:$0xff] %vm1633, %v3583
        %3659 = vst.msk [vmem:[#allocation8 + $0x150] sm:$0xff] %vm1633, %v3585
        %3660 = vst.msk [vmem:[#allocation8 + $0x160] sm:$0xff] %vm1633, %v3587
        %3661 = vst.msk [vmem:[#allocation8 + $0x170] sm:$0xff] %vm1633, %v3589
        %3662 = vst.msk [vmem:[#allocation8 + $0x180] sm:$0xff] %vm1633, %v3591
        %3663 = vst.msk [vmem:[#allocation8 + $0x190] sm:$0xff] %vm1633, %v3593
        %3664 = vst.msk [vmem:[#allocation8 + $0x1a0] sm:$0xff] %vm1633, %v3595
        %3665 = vst.msk [vmem:[#allocation8 + $0x1b0] sm:$0xff] %vm1633, %v3597
        %3666 = vst.msk [vmem:[#allocation8 + $0x1c0] sm:$0xff] %vm1633, %v3599
        %3667 = vst.msk [vmem:[#allocation8 + $0x1d0] sm:$0xff] %vm1633, %v3601
        %3668 = vst.msk [vmem:[#allocation8 + $0x1e0] sm:$0xff] %vm1633, %v3603
        %3669 = vst.msk [vmem:[#allocation8 + $0x1f0] sm:$0xff] %vm1633, %v3605
        %s3670 = scalar_lea.vmem [#allocation3], 48
        %v3671 = vld [vmem:[%s3670] sm:$0xff]
        %v3672 = vld [vmem:[%s3670 + $0x8] sm:$0xff]
        %v3673 = vld [vmem:[%s3670 + $0x18] sm:$0xff]
        %v3674 = vld [vmem:[%s3670 + $0x20] sm:$0xff]
        %v3675 = vld [vmem:[%s3670 + $0x30] sm:$0xff]
        %v3676 = vld [vmem:[%s3670 + $0x38] sm:$0xff]
        %v3677 = vld [vmem:[%s3670 + $0x48] sm:$0xff]
        %v3678 = vld [vmem:[%s3670 + $0x50] sm:$0xff]
        %v3679 = vld [vmem:[%s3670 + $0x60] sm:$0xff]
        %v3680 = vld [vmem:[%s3670 + $0x68] sm:$0xff]
        %v3681 = vld [vmem:[%s3670 + $0x78] sm:$0xff]
        %v3682 = vld [vmem:[%s3670 + $0x80] sm:$0xff]
        %v3683 = vld [vmem:[%s3670 + $0x90] sm:$0xff]
        %v3684 = vld [vmem:[%s3670 + $0x98] sm:$0xff]
        %v3685 = vld [vmem:[%s3670 + $0xa8] sm:$0xff]
        %v3686 = vld [vmem:[%s3670 + $0xb0] sm:$0xff]
        %v3687 = vld [vmem:[%s3670 + $0xc0] sm:$0xff]
        %v3688 = vld [vmem:[%s3670 + $0xc8] sm:$0xff]
        %v3689 = vld [vmem:[%s3670 + $0xd8] sm:$0xff]
        %v3690 = vld [vmem:[%s3670 + $0xe0] sm:$0xff]
        %v3691 = vld [vmem:[%s3670 + $0xf0] sm:$0xff]
        %v3692 = vld [vmem:[%s3670 + $0xf8] sm:$0xff]
        %v3693 = vld [vmem:[%s3670 + $0x108] sm:$0xff]
        %v3694 = vld [vmem:[%s3670 + $0x110] sm:$0xff]
        %v3695 = vld [vmem:[%s3670 + $0x120] sm:$0xff]
        %v3696 = vld [vmem:[%s3670 + $0x128] sm:$0xff]
        %v3697 = vld [vmem:[%s3670 + $0x138] sm:$0xff]
        %v3698 = vld [vmem:[%s3670 + $0x140] sm:$0xff]
        %v3699 = vld [vmem:[%s3670 + $0x150] sm:$0xff]
        %v3700 = vld [vmem:[%s3670 + $0x158] sm:$0xff]
        %v3701 = vld [vmem:[%s3670 + $0x168] sm:$0xff]
        %v3702 = vld [vmem:[%s3670 + $0x170] sm:$0xff]
        %3735 = vrot.lane.b32.xlu0 %v3671, 96
        %v3736 = vpop.permute.xlu0 %3735
        %3737 = vrot.lane.b32.xlu0 %v3672, 96
        %v3738 = vpop.permute.xlu0 %3737
        %3739 = vrot.lane.b32.xlu0 %v3673, 96
        %v3740 = vpop.permute.xlu0 %3739
        %3741 = vrot.lane.b32.xlu0 %v3674, 96
        %v3742 = vpop.permute.xlu0 %3741
        %3743 = vrot.lane.b32.xlu0 %v3675, 96
        %v3744 = vpop.permute.xlu0 %3743
        %3745 = vrot.lane.b32.xlu0 %v3676, 96
        %v3746 = vpop.permute.xlu0 %3745
        %3747 = vrot.lane.b32.xlu0 %v3677, 96
        %v3748 = vpop.permute.xlu0 %3747
        %3749 = vrot.lane.b32.xlu0 %v3678, 96
        %v3750 = vpop.permute.xlu0 %3749
        %3751 = vrot.lane.b32.xlu0 %v3679, 96
        %v3752 = vpop.permute.xlu0 %3751
        %3753 = vrot.lane.b32.xlu0 %v3680, 96
        %v3754 = vpop.permute.xlu0 %3753
        %3755 = vrot.lane.b32.xlu0 %v3681, 96
        %v3756 = vpop.permute.xlu0 %3755
        %3757 = vrot.lane.b32.xlu0 %v3682, 96
        %v3758 = vpop.permute.xlu0 %3757
        %3759 = vrot.lane.b32.xlu0 %v3683, 96
        %v3760 = vpop.permute.xlu0 %3759
        %3761 = vrot.lane.b32.xlu0 %v3684, 96
        %v3762 = vpop.permute.xlu0 %3761
        %3763 = vrot.lane.b32.xlu0 %v3685, 96
        %v3764 = vpop.permute.xlu0 %3763
        %3765 = vrot.lane.b32.xlu0 %v3686, 96
        %v3766 = vpop.permute.xlu0 %3765
        %3767 = vrot.lane.b32.xlu0 %v3687, 96
        %v3768 = vpop.permute.xlu0 %3767
        %3769 = vrot.lane.b32.xlu0 %v3688, 96
        %v3770 = vpop.permute.xlu0 %3769
        %3771 = vrot.lane.b32.xlu0 %v3689, 96
        %v3772 = vpop.permute.xlu0 %3771
        %3773 = vrot.lane.b32.xlu0 %v3690, 96
        %v3774 = vpop.permute.xlu0 %3773
        %3775 = vrot.lane.b32.xlu0 %v3691, 96
        %v3776 = vpop.permute.xlu0 %3775
        %3777 = vrot.lane.b32.xlu0 %v3692, 96
        %v3778 = vpop.permute.xlu0 %3777
        %3779 = vrot.lane.b32.xlu0 %v3693, 96
        %v3780 = vpop.permute.xlu0 %3779
        %3781 = vrot.lane.b32.xlu0 %v3694, 96
        %v3782 = vpop.permute.xlu0 %3781
        %3783 = vrot.lane.b32.xlu0 %v3695, 96
        %v3784 = vpop.permute.xlu0 %3783
        %3785 = vrot.lane.b32.xlu0 %v3696, 96
        %v3786 = vpop.permute.xlu0 %3785
        %3787 = vrot.lane.b32.xlu0 %v3697, 96
        %v3788 = vpop.permute.xlu0 %3787
        %3789 = vrot.lane.b32.xlu0 %v3698, 96
        %v3790 = vpop.permute.xlu0 %3789
        %3791 = vrot.lane.b32.xlu0 %v3699, 96
        %v3792 = vpop.permute.xlu0 %3791
        %3793 = vrot.lane.b32.xlu0 %v3700, 96
        %v3794 = vpop.permute.xlu0 %3793
        %3795 = vrot.lane.b32.xlu0 %v3701, 96
        %v3796 = vpop.permute.xlu0 %3795
        %3797 = vrot.lane.b32.xlu0 %v3702, 96
        %v3798 = vpop.permute.xlu0 %3797
        %3831 = vst.msk [vmem:[#allocation8] sm:$0xff] %vm1827, %v3736
        %3832 = vst.msk [vmem:[#allocation8 + $0x10] sm:$0xff] %vm1827, %v3738
        %3833 = vst.msk [vmem:[#allocation8 + $0x20] sm:$0xff] %vm1827, %v3740
        %3834 = vst.msk [vmem:[#allocation8 + $0x30] sm:$0xff] %vm1827, %v3742
        %3835 = vst.msk [vmem:[#allocation8 + $0x40] sm:$0xff] %vm1827, %v3744
        %3836 = vst.msk [vmem:[#allocation8 + $0x50] sm:$0xff] %vm1827, %v3746
        %3837 = vst.msk [vmem:[#allocation8 + $0x60] sm:$0xff] %vm1827, %v3748
        %3838 = vst.msk [vmem:[#allocation8 + $0x70] sm:$0xff] %vm1827, %v3750
        %3839 = vst.msk [vmem:[#allocation8 + $0x80] sm:$0xff] %vm1827, %v3752
        %3840 = vst.msk [vmem:[#allocation8 + $0x90] sm:$0xff] %vm1827, %v3754
        %3841 = vst.msk [vmem:[#allocation8 + $0xa0] sm:$0xff] %vm1827, %v3756
        %3842 = vst.msk [vmem:[#allocation8 + $0xb0] sm:$0xff] %vm1827, %v3758
        %3843 = vst.msk [vmem:[#allocation8 + $0xc0] sm:$0xff] %vm1827, %v3760
        %3844 = vst.msk [vmem:[#allocation8 + $0xd0] sm:$0xff] %vm1827, %v3762
        %3845 = vst.msk [vmem:[#allocation8 + $0xe0] sm:$0xff] %vm1827, %v3764
        %3846 = vst.msk [vmem:[#allocation8 + $0xf0] sm:$0xff] %vm1827, %v3766
        %3847 = vst.msk [vmem:[#allocation8 + $0x100] sm:$0xff] %vm1827, %v3768
        %3848 = vst.msk [vmem:[#allocation8 + $0x110] sm:$0xff] %vm1827, %v3770
        %3849 = vst.msk [vmem:[#allocation8 + $0x120] sm:$0xff] %vm1827, %v3772
        %3850 = vst.msk [vmem:[#allocation8 + $0x130] sm:$0xff] %vm1827, %v3774
        %3851 = vst.msk [vmem:[#allocation8 + $0x140] sm:$0xff] %vm1827, %v3776
        %3852 = vst.msk [vmem:[#allocation8 + $0x150] sm:$0xff] %vm1827, %v3778
        %3853 = vst.msk [vmem:[#allocation8 + $0x160] sm:$0xff] %vm1827, %v3780
        %3854 = vst.msk [vmem:[#allocation8 + $0x170] sm:$0xff] %vm1827, %v3782
        %3855 = vst.msk [vmem:[#allocation8 + $0x180] sm:$0xff] %vm1827, %v3784
        %3856 = vst.msk [vmem:[#allocation8 + $0x190] sm:$0xff] %vm1827, %v3786
        %3857 = vst.msk [vmem:[#allocation8 + $0x1a0] sm:$0xff] %vm1827, %v3788
        %3858 = vst.msk [vmem:[#allocation8 + $0x1b0] sm:$0xff] %vm1827, %v3790
        %3859 = vst.msk [vmem:[#allocation8 + $0x1c0] sm:$0xff] %vm1827, %v3792
        %3860 = vst.msk [vmem:[#allocation8 + $0x1d0] sm:$0xff] %vm1827, %v3794
        %3861 = vst.msk [vmem:[#allocation8 + $0x1e0] sm:$0xff] %vm1827, %v3796
        %3862 = vst.msk [vmem:[#allocation8 + $0x1f0] sm:$0xff] %vm1827, %v3798
        %v3863 = vld [vmem:[%s3670 + $0x1] sm:$0xff]
        %v3864 = vld [vmem:[%s3670 + $0x9] sm:$0xff]
        %v3865 = vld [vmem:[%s3670 + $0x19] sm:$0xff]
        %v3866 = vld [vmem:[%s3670 + $0x21] sm:$0xff]
        %v3867 = vld [vmem:[%s3670 + $0x31] sm:$0xff]
        %v3868 = vld [vmem:[%s3670 + $0x39] sm:$0xff]
        %v3869 = vld [vmem:[%s3670 + $0x49] sm:$0xff]
        %v3870 = vld [vmem:[%s3670 + $0x51] sm:$0xff]
        %v3871 = vld [vmem:[%s3670 + $0x61] sm:$0xff]
        %v3872 = vld [vmem:[%s3670 + $0x69] sm:$0xff]
        %v3873 = vld [vmem:[%s3670 + $0x79] sm:$0xff]
        %v3874 = vld [vmem:[%s3670 + $0x81] sm:$0xff]
        %v3875 = vld [vmem:[%s3670 + $0x91] sm:$0xff]
        %v3876 = vld [vmem:[%s3670 + $0x99] sm:$0xff]
        %v3877 = vld [vmem:[%s3670 + $0xa9] sm:$0xff]
        %v3878 = vld [vmem:[%s3670 + $0xb1] sm:$0xff]
        %v3879 = vld [vmem:[%s3670 + $0xc1] sm:$0xff]
        %v3880 = vld [vmem:[%s3670 + $0xc9] sm:$0xff]
        %v3881 = vld [vmem:[%s3670 + $0xd9] sm:$0xff]
        %v3882 = vld [vmem:[%s3670 + $0xe1] sm:$0xff]
        %v3883 = vld [vmem:[%s3670 + $0xf1] sm:$0xff]
        %v3884 = vld [vmem:[%s3670 + $0xf9] sm:$0xff]
        %v3885 = vld [vmem:[%s3670 + $0x109] sm:$0xff]
        %v3886 = vld [vmem:[%s3670 + $0x111] sm:$0xff]
        %v3887 = vld [vmem:[%s3670 + $0x121] sm:$0xff]
        %v3888 = vld [vmem:[%s3670 + $0x129] sm:$0xff]
        %v3889 = vld [vmem:[%s3670 + $0x139] sm:$0xff]
        %v3890 = vld [vmem:[%s3670 + $0x141] sm:$0xff]
        %v3891 = vld [vmem:[%s3670 + $0x151] sm:$0xff]
        %v3892 = vld [vmem:[%s3670 + $0x159] sm:$0xff]
        %v3893 = vld [vmem:[%s3670 + $0x169] sm:$0xff]
        %v3894 = vld [vmem:[%s3670 + $0x171] sm:$0xff]
        %3927 = vrot.lane.b32.xlu0 %v3863, 112
        %v3928 = vpop.permute.xlu0 %3927
        %3929 = vrot.lane.b32.xlu0 %v3864, 112
        %v3930 = vpop.permute.xlu0 %3929
        %3931 = vrot.lane.b32.xlu0 %v3865, 112
        %v3932 = vpop.permute.xlu0 %3931
        %3933 = vrot.lane.b32.xlu0 %v3866, 112
        %v3934 = vpop.permute.xlu0 %3933
        %3935 = vrot.lane.b32.xlu0 %v3867, 112
        %v3936 = vpop.permute.xlu0 %3935
        %3937 = vrot.lane.b32.xlu0 %v3868, 112
        %v3938 = vpop.permute.xlu0 %3937
        %3939 = vrot.lane.b32.xlu0 %v3869, 112
        %v3940 = vpop.permute.xlu0 %3939
        %3941 = vrot.lane.b32.xlu0 %v3870, 112
        %v3942 = vpop.permute.xlu0 %3941
        %3943 = vrot.lane.b32.xlu0 %v3871, 112
        %v3944 = vpop.permute.xlu0 %3943
        %3945 = vrot.lane.b32.xlu0 %v3872, 112
        %v3946 = vpop.permute.xlu0 %3945
        %3947 = vrot.lane.b32.xlu0 %v3873, 112
        %v3948 = vpop.permute.xlu0 %3947
        %3949 = vrot.lane.b32.xlu0 %v3874, 112
        %v3950 = vpop.permute.xlu0 %3949
        %3951 = vrot.lane.b32.xlu0 %v3875, 112
        %v3952 = vpop.permute.xlu0 %3951
        %3953 = vrot.lane.b32.xlu0 %v3876, 112
        %v3954 = vpop.permute.xlu0 %3953
        %3955 = vrot.lane.b32.xlu0 %v3877, 112
        %v3956 = vpop.permute.xlu0 %3955
        %3957 = vrot.lane.b32.xlu0 %v3878, 112
        %v3958 = vpop.permute.xlu0 %3957
        %3959 = vrot.lane.b32.xlu0 %v3879, 112
        %v3960 = vpop.permute.xlu0 %3959
        %3961 = vrot.lane.b32.xlu0 %v3880, 112
        %v3962 = vpop.permute.xlu0 %3961
        %3963 = vrot.lane.b32.xlu0 %v3881, 112
        %v3964 = vpop.permute.xlu0 %3963
        %3965 = vrot.lane.b32.xlu0 %v3882, 112
        %v3966 = vpop.permute.xlu0 %3965
        %3967 = vrot.lane.b32.xlu0 %v3883, 112
        %v3968 = vpop.permute.xlu0 %3967
        %3969 = vrot.lane.b32.xlu0 %v3884, 112
        %v3970 = vpop.permute.xlu0 %3969
        %3971 = vrot.lane.b32.xlu0 %v3885, 112
        %v3972 = vpop.permute.xlu0 %3971
        %3973 = vrot.lane.b32.xlu0 %v3886, 112
        %v3974 = vpop.permute.xlu0 %3973
        %3975 = vrot.lane.b32.xlu0 %v3887, 112
        %v3976 = vpop.permute.xlu0 %3975
        %3977 = vrot.lane.b32.xlu0 %v3888, 112
        %v3978 = vpop.permute.xlu0 %3977
        %3979 = vrot.lane.b32.xlu0 %v3889, 112
        %v3980 = vpop.permute.xlu0 %3979
        %3981 = vrot.lane.b32.xlu0 %v3890, 112
        %v3982 = vpop.permute.xlu0 %3981
        %3983 = vrot.lane.b32.xlu0 %v3891, 112
        %v3984 = vpop.permute.xlu0 %3983
        %3985 = vrot.lane.b32.xlu0 %v3892, 112
        %v3986 = vpop.permute.xlu0 %3985
        %3987 = vrot.lane.b32.xlu0 %v3893, 112
        %v3988 = vpop.permute.xlu0 %3987
        %3989 = vrot.lane.b32.xlu0 %v3894, 112
        %v3990 = vpop.permute.xlu0 %3989
        %4023 = vst.msk [vmem:[#allocation8] sm:$0xff] %vm2020, %v3928
        %4024 = vst.msk [vmem:[#allocation8 + $0x10] sm:$0xff] %vm2020, %v3930
        %4025 = vst.msk [vmem:[#allocation8 + $0x20] sm:$0xff] %vm2020, %v3932
        %4026 = vst.msk [vmem:[#allocation8 + $0x30] sm:$0xff] %vm2020, %v3934
        %4027 = vst.msk [vmem:[#allocation8 + $0x40] sm:$0xff] %vm2020, %v3936
        %4028 = vst.msk [vmem:[#allocation8 + $0x50] sm:$0xff] %vm2020, %v3938
        %4029 = vst.msk [vmem:[#allocation8 + $0x60] sm:$0xff] %vm2020, %v3940
        %4030 = vst.msk [vmem:[#allocation8 + $0x70] sm:$0xff] %vm2020, %v3942
        %4031 = vst.msk [vmem:[#allocation8 + $0x80] sm:$0xff] %vm2020, %v3944
        %4032 = vst.msk [vmem:[#allocation8 + $0x90] sm:$0xff] %vm2020, %v3946
        %4033 = vst.msk [vmem:[#allocation8 + $0xa0] sm:$0xff] %vm2020, %v3948
        %4034 = vst.msk [vmem:[#allocation8 + $0xb0] sm:$0xff] %vm2020, %v3950
        %4035 = vst.msk [vmem:[#allocation8 + $0xc0] sm:$0xff] %vm2020, %v3952
        %4036 = vst.msk [vmem:[#allocation8 + $0xd0] sm:$0xff] %vm2020, %v3954
        %4037 = vst.msk [vmem:[#allocation8 + $0xe0] sm:$0xff] %vm2020, %v3956
        %4038 = vst.msk [vmem:[#allocation8 + $0xf0] sm:$0xff] %vm2020, %v3958
        %4039 = vst.msk [vmem:[#allocation8 + $0x100] sm:$0xff] %vm2020, %v3960
        %4040 = vst.msk [vmem:[#allocation8 + $0x110] sm:$0xff] %vm2020, %v3962
        %4041 = vst.msk [vmem:[#allocation8 + $0x120] sm:$0xff] %vm2020, %v3964
        %4042 = vst.msk [vmem:[#allocation8 + $0x130] sm:$0xff] %vm2020, %v3966
        %4043 = vst.msk [vmem:[#allocation8 + $0x140] sm:$0xff] %vm2020, %v3968
        %4044 = vst.msk [vmem:[#allocation8 + $0x150] sm:$0xff] %vm2020, %v3970
        %4045 = vst.msk [vmem:[#allocation8 + $0x160] sm:$0xff] %vm2020, %v3972
        %4046 = vst.msk [vmem:[#allocation8 + $0x170] sm:$0xff] %vm2020, %v3974
        %4047 = vst.msk [vmem:[#allocation8 + $0x180] sm:$0xff] %vm2020, %v3976
        %4048 = vst.msk [vmem:[#allocation8 + $0x190] sm:$0xff] %vm2020, %v3978
        %4049 = vst.msk [vmem:[#allocation8 + $0x1a0] sm:$0xff] %vm2020, %v3980
        %4050 = vst.msk [vmem:[#allocation8 + $0x1b0] sm:$0xff] %vm2020, %v3982
        %4051 = vst.msk [vmem:[#allocation8 + $0x1c0] sm:$0xff] %vm2020, %v3984
        %4052 = vst.msk [vmem:[#allocation8 + $0x1d0] sm:$0xff] %vm2020, %v3986
        %4053 = vst.msk [vmem:[#allocation8 + $0x1e0] sm:$0xff] %vm2020, %v3988
        %4054 = vst.msk [vmem:[#allocation8 + $0x1f0] sm:$0xff] %vm2020, %v3990
        %v4055 = vld [vmem:[%s3670 + $0x2] sm:$0xff]
        %v4056 = vld [vmem:[%s3670 + $0xa] sm:$0xff]
        %v4057 = vld [vmem:[%s3670 + $0x1a] sm:$0xff]
        %v4058 = vld [vmem:[%s3670 + $0x22] sm:$0xff]
        %v4059 = vld [vmem:[%s3670 + $0x32] sm:$0xff]
        %v4060 = vld [vmem:[%s3670 + $0x3a] sm:$0xff]
        %v4061 = vld [vmem:[%s3670 + $0x4a] sm:$0xff]
        %v4062 = vld [vmem:[%s3670 + $0x52] sm:$0xff]
        %v4063 = vld [vmem:[%s3670 + $0x62] sm:$0xff]
        %v4064 = vld [vmem:[%s3670 + $0x6a] sm:$0xff]
        %v4065 = vld [vmem:[%s3670 + $0x7a] sm:$0xff]
        %v4066 = vld [vmem:[%s3670 + $0x82] sm:$0xff]
        %v4067 = vld [vmem:[%s3670 + $0x92] sm:$0xff]
        %v4068 = vld [vmem:[%s3670 + $0x9a] sm:$0xff]
        %v4069 = vld [vmem:[%s3670 + $0xaa] sm:$0xff]
        %v4070 = vld [vmem:[%s3670 + $0xb2] sm:$0xff]
        %v4071 = vld [vmem:[%s3670 + $0xc2] sm:$0xff]
        %v4072 = vld [vmem:[%s3670 + $0xca] sm:$0xff]
        %v4073 = vld [vmem:[%s3670 + $0xda] sm:$0xff]
        %v4074 = vld [vmem:[%s3670 + $0xe2] sm:$0xff]
        %v4075 = vld [vmem:[%s3670 + $0xf2] sm:$0xff]
        %v4076 = vld [vmem:[%s3670 + $0xfa] sm:$0xff]
        %v4077 = vld [vmem:[%s3670 + $0x10a] sm:$0xff]
        %v4078 = vld [vmem:[%s3670 + $0x112] sm:$0xff]
        %v4079 = vld [vmem:[%s3670 + $0x122] sm:$0xff]
        %v4080 = vld [vmem:[%s3670 + $0x12a] sm:$0xff]
        %v4081 = vld [vmem:[%s3670 + $0x13a] sm:$0xff]
        %v4082 = vld [vmem:[%s3670 + $0x142] sm:$0xff]
        %v4083 = vld [vmem:[%s3670 + $0x152] sm:$0xff]
        %v4084 = vld [vmem:[%s3670 + $0x15a] sm:$0xff]
        %v4085 = vld [vmem:[%s3670 + $0x16a] sm:$0xff]
        %v4086 = vld [vmem:[%s3670 + $0x172] sm:$0xff]
        %4087 = vst.msk [vmem:[#allocation8 + $0x8] sm:$0xff] %vm516, %v4055
        %4088 = vst.msk [vmem:[#allocation8 + $0x18] sm:$0xff] %vm516, %v4056
        %4089 = vst.msk [vmem:[#allocation8 + $0x28] sm:$0xff] %vm516, %v4057
        %4090 = vst.msk [vmem:[#allocation8 + $0x38] sm:$0xff] %vm516, %v4058
        %4091 = vst.msk [vmem:[#allocation8 + $0x48] sm:$0xff] %vm516, %v4059
        %4092 = vst.msk [vmem:[#allocation8 + $0x58] sm:$0xff] %vm516, %v4060
        %4093 = vst.msk [vmem:[#allocation8 + $0x68] sm:$0xff] %vm516, %v4061
        %4094 = vst.msk [vmem:[#allocation8 + $0x78] sm:$0xff] %vm516, %v4062
        %4095 = vst.msk [vmem:[#allocation8 + $0x88] sm:$0xff] %vm516, %v4063
        %4096 = vst.msk [vmem:[#allocation8 + $0x98] sm:$0xff] %vm516, %v4064
        %4097 = vst.msk [vmem:[#allocation8 + $0xa8] sm:$0xff] %vm516, %v4065
        %4098 = vst.msk [vmem:[#allocation8 + $0xb8] sm:$0xff] %vm516, %v4066
        %4099 = vst.msk [vmem:[#allocation8 + $0xc8] sm:$0xff] %vm516, %v4067
        %4100 = vst.msk [vmem:[#allocation8 + $0xd8] sm:$0xff] %vm516, %v4068
        %4101 = vst.msk [vmem:[#allocation8 + $0xe8] sm:$0xff] %vm516, %v4069
        %4102 = vst.msk [vmem:[#allocation8 + $0xf8] sm:$0xff] %vm516, %v4070
        %4103 = vst.msk [vmem:[#allocation8 + $0x108] sm:$0xff] %vm516, %v4071
        %4104 = vst.msk [vmem:[#allocation8 + $0x118] sm:$0xff] %vm516, %v4072
        %4105 = vst.msk [vmem:[#allocation8 + $0x128] sm:$0xff] %vm516, %v4073
        %4106 = vst.msk [vmem:[#allocation8 + $0x138] sm:$0xff] %vm516, %v4074
        %4107 = vst.msk [vmem:[#allocation8 + $0x148] sm:$0xff] %vm516, %v4075
        %4108 = vst.msk [vmem:[#allocation8 + $0x158] sm:$0xff] %vm516, %v4076
        %4109 = vst.msk [vmem:[#allocation8 + $0x168] sm:$0xff] %vm516, %v4077
        %4110 = vst.msk [vmem:[#allocation8 + $0x178] sm:$0xff] %vm516, %v4078
        %4111 = vst.msk [vmem:[#allocation8 + $0x188] sm:$0xff] %vm516, %v4079
        %4112 = vst.msk [vmem:[#allocation8 + $0x198] sm:$0xff] %vm516, %v4080
        %4113 = vst.msk [vmem:[#allocation8 + $0x1a8] sm:$0xff] %vm516, %v4081
        %4114 = vst.msk [vmem:[#allocation8 + $0x1b8] sm:$0xff] %vm516, %v4082
        %4115 = vst.msk [vmem:[#allocation8 + $0x1c8] sm:$0xff] %vm516, %v4083
        %4116 = vst.msk [vmem:[#allocation8 + $0x1d8] sm:$0xff] %vm516, %v4084
        %4117 = vst.msk [vmem:[#allocation8 + $0x1e8] sm:$0xff] %vm516, %v4085
        %4118 = vst.msk [vmem:[#allocation8 + $0x1f8] sm:$0xff] %vm516, %v4086
        %v4119 = vld [vmem:[#allocation8] sm:$0xff]
        %v4120 = vld [vmem:[#allocation8 + $0x8] sm:$0xff]
        %v4121 = vld [vmem:[#allocation8 + $0x10] sm:$0xff]
        %v4122 = vld [vmem:[#allocation8 + $0x18] sm:$0xff]
        %v4123 = vld [vmem:[#allocation8 + $0x20] sm:$0xff]
        %v4124 = vld [vmem:[#allocation8 + $0x28] sm:$0xff]
        %v4125 = vld [vmem:[#allocation8 + $0x30] sm:$0xff]
        %v4126 = vld [vmem:[#allocation8 + $0x38] sm:$0xff]
        %v4127 = vld [vmem:[#allocation8 + $0x40] sm:$0xff]
        %v4128 = vld [vmem:[#allocation8 + $0x48] sm:$0xff]
        %v4129 = vld [vmem:[#allocation8 + $0x50] sm:$0xff]
        %v4130 = vld [vmem:[#allocation8 + $0x58] sm:$0xff]
        %v4131 = vld [vmem:[#allocation8 + $0x60] sm:$0xff]
        %v4132 = vld [vmem:[#allocation8 + $0x68] sm:$0xff]
        %v4133 = vld [vmem:[#allocation8 + $0x70] sm:$0xff]
        %v4134 = vld [vmem:[#allocation8 + $0x78] sm:$0xff]
        %v4135 = vld [vmem:[#allocation8 + $0x80] sm:$0xff]
        %v4136 = vld [vmem:[#allocation8 + $0x88] sm:$0xff]
        %v4137 = vld [vmem:[#allocation8 + $0x90] sm:$0xff]
        %v4138 = vld [vmem:[#allocation8 + $0x98] sm:$0xff]
        %v4139 = vld [vmem:[#allocation8 + $0xa0] sm:$0xff]
        %v4140 = vld [vmem:[#allocation8 + $0xa8] sm:$0xff]
        %v4141 = vld [vmem:[#allocation8 + $0xb0] sm:$0xff]
        %v4142 = vld [vmem:[#allocation8 + $0xb8] sm:$0xff]
        %v4143 = vld [vmem:[#allocation8 + $0xc0] sm:$0xff]
        %v4144 = vld [vmem:[#allocation8 + $0xc8] sm:$0xff]
        %v4145 = vld [vmem:[#allocation8 + $0xd0] sm:$0xff]
        %v4146 = vld [vmem:[#allocation8 + $0xd8] sm:$0xff]
        %v4147 = vld [vmem:[#allocation8 + $0xe0] sm:$0xff]
        %v4148 = vld [vmem:[#allocation8 + $0xe8] sm:$0xff]
        %v4149 = vld [vmem:[#allocation8 + $0xf0] sm:$0xff]
        %v4150 = vld [vmem:[#allocation8 + $0xf8] sm:$0xff]
        %v4151 = vld [vmem:[#allocation8 + $0x100] sm:$0xff]
        %v4152 = vld [vmem:[#allocation8 + $0x108] sm:$0xff]
        %v4153 = vld [vmem:[#allocation8 + $0x110] sm:$0xff]
        %v4154 = vld [vmem:[#allocation8 + $0x118] sm:$0xff]
        %v4155 = vld [vmem:[#allocation8 + $0x120] sm:$0xff]
        %v4156 = vld [vmem:[#allocation8 + $0x128] sm:$0xff]
        %v4157 = vld [vmem:[#allocation8 + $0x130] sm:$0xff]
        %v4158 = vld [vmem:[#allocation8 + $0x138] sm:$0xff]
        %v4159 = vld [vmem:[#allocation8 + $0x140] sm:$0xff]
        %v4160 = vld [vmem:[#allocation8 + $0x148] sm:$0xff]
        %v4161 = vld [vmem:[#allocation8 + $0x150] sm:$0xff]
        %v4162 = vld [vmem:[#allocation8 + $0x158] sm:$0xff]
        %v4163 = vld [vmem:[#allocation8 + $0x160] sm:$0xff]
        %v4164 = vld [vmem:[#allocation8 + $0x168] sm:$0xff]
        %v4165 = vld [vmem:[#allocation8 + $0x170] sm:$0xff]
        %v4166 = vld [vmem:[#allocation8 + $0x178] sm:$0xff]
        %v4167 = vld [vmem:[#allocation8 + $0x180] sm:$0xff]
        %v4168 = vld [vmem:[#allocation8 + $0x188] sm:$0xff]
        %v4169 = vld [vmem:[#allocation8 + $0x190] sm:$0xff]
        %v4170 = vld [vmem:[#allocation8 + $0x198] sm:$0xff]
        %v4171 = vld [vmem:[#allocation8 + $0x1a0] sm:$0xff]
        %v4172 = vld [vmem:[#allocation8 + $0x1a8] sm:$0xff]
        %v4173 = vld [vmem:[#allocation8 + $0x1b0] sm:$0xff]
        %v4174 = vld [vmem:[#allocation8 + $0x1b8] sm:$0xff]
        %v4175 = vld [vmem:[#allocation8 + $0x1c0] sm:$0xff]
        %v4176 = vld [vmem:[#allocation8 + $0x1c8] sm:$0xff]
        %v4177 = vld [vmem:[#allocation8 + $0x1d0] sm:$0xff]
        %v4178 = vld [vmem:[#allocation8 + $0x1d8] sm:$0xff]
        %v4179 = vld [vmem:[#allocation8 + $0x1e0] sm:$0xff]
        %v4180 = vld [vmem:[#allocation8 + $0x1e8] sm:$0xff]
        %v4181 = vld [vmem:[#allocation8 + $0x1f0] sm:$0xff]
        %v4182 = vld [vmem:[#allocation8 + $0x1f8] sm:$0xff]
        %v4183 = vld [vmem:[%s3] sm:$0xff]
        %v4184 = vld [vmem:[%s3 + $0x8] sm:$0xff]
        %v4185 = vld [vmem:[%s3 + $0x10] sm:$0xff]
        %v4186 = vld [vmem:[%s3 + $0x18] sm:$0xff]
        %v4187 = vld [vmem:[%s3 + $0x20] sm:$0xff]
        %v4188 = vld [vmem:[%s3 + $0x28] sm:$0xff]
        %v4189 = vld [vmem:[%s3 + $0x30] sm:$0xff]
        %v4190 = vld [vmem:[%s3 + $0x38] sm:$0xff]
        %v4191 = vld [vmem:[%s3 + $0x40] sm:$0xff]
        %v4192 = vld [vmem:[%s3 + $0x48] sm:$0xff]
        %v4193 = vld [vmem:[%s3 + $0x50] sm:$0xff]
        %v4194 = vld [vmem:[%s3 + $0x58] sm:$0xff]
        %v4195 = vld [vmem:[%s3 + $0x60] sm:$0xff]
        %v4196 = vld [vmem:[%s3 + $0x68] sm:$0xff]
        %v4197 = vld [vmem:[%s3 + $0x70] sm:$0xff]
        %v4198 = vld [vmem:[%s3 + $0x78] sm:$0xff]
        %v4199 = vld [vmem:[%s3 + $0x80] sm:$0xff]
        %v4200 = vld [vmem:[%s3 + $0x88] sm:$0xff]
        %v4201 = vld [vmem:[%s4] sm:$0x1]
        %v4203 = vlaneseq
        %v4204 = vshrl.u32 %v4203, 7
        %v4205 = vsub.s32 0, %v4204
        %v4206 = vrot.slane %v4201, %v4205
        %v4209 = vsel %vm516, %v4120, 0
        %v4212 = vsel %vm516, %v4122, 0
        %v4215 = vsel %vm516, %v4124, 0
        %v4218 = vsel %vm516, %v4126, 0
        %v4221 = vsel %vm516, %v4128, 0
        %v4224 = vsel %vm516, %v4130, 0
        %v4227 = vsel %vm516, %v4132, 0
        %v4230 = vsel %vm516, %v4134, 0
        %v4233 = vsel %vm516, %v4136, 0
        %v4236 = vsel %vm516, %v4138, 0
        %v4239 = vsel %vm516, %v4140, 0
        %v4242 = vsel %vm516, %v4142, 0
        %v4245 = vsel %vm516, %v4144, 0
        %v4248 = vsel %vm516, %v4146, 0
        %v4251 = vsel %vm516, %v4148, 0
        %v4254 = vsel %vm516, %v4150, 0
        %v4257 = vsel %vm516, %v4152, 0
        %v4260 = vsel %vm516, %v4154, 0
        %v4263 = vsel %vm516, %v4156, 0
        %v4266 = vsel %vm516, %v4158, 0
        %v4269 = vsel %vm516, %v4160, 0
        %v4272 = vsel %vm516, %v4162, 0
        %v4275 = vsel %vm516, %v4164, 0
        %v4278 = vsel %vm516, %v4166, 0
        %v4281 = vsel %vm516, %v4168, 0
        %v4284 = vsel %vm516, %v4170, 0
        %v4287 = vsel %vm516, %v4172, 0
        %v4290 = vsel %vm516, %v4174, 0
        %v4293 = vsel %vm516, %v4176, 0
        %v4296 = vsel %vm516, %v4178, 0
        %v4299 = vsel %vm516, %v4180, 0
        %v4302 = vsel %vm516, %v4182, 0
        %4304 = vmatprep.subr.mxu0 0.0
        %4305 = vmatpush1.msra.mxu0 %v4183
        %4306 = vmatprep.subr.mxu0 0.0
        %4307 = vmatpush1.msra.mxu0 %v4184
        %4308 = vmatprep.subr.mxu0 0.0
        %4309 = vmatpush1.msra.mxu0 %v4185
        %4310 = vmatprep.subr.mxu0 0.0
        %4311 = vmatpush1.msra.mxu0 %v4186
        %4312 = vmatprep.subr.mxu0 0.0
        %4313 = vmatpush1.msra.mxu0 %v4187
        %4314 = vmatprep.subr.mxu0 0.0
        %4315 = vmatpush1.msra.mxu0 %v4188
        %4316 = vmatprep.subr.mxu0 0.0
        %4317 = vmatpush1.msra.mxu0 %v4189
        %4318 = vmatprep.subr.mxu0 0.0
        %4319 = vmatpush1.msra.mxu0 %v4190
        %4320 = vmatprep.subr.mxu0 0.0
        %4321 = vmatpush1.msra.mxu0 %v4191
        %4322 = vmatprep.subr.mxu0 0.0
        %4323 = vmatpush1.msra.mxu0 %v4192
        %4324 = vmatprep.subr.mxu0 0.0
        %4325 = vmatpush1.msra.mxu0 %v4193
        %4326 = vmatprep.subr.mxu0 0.0
        %4327 = vmatpush1.msra.mxu0 %v4194
        %4328 = vmatprep.subr.mxu0 0.0
        %4329 = vmatpush1.msra.mxu0 %v4195
        %4330 = vmatprep.subr.mxu0 0.0
        %4331 = vmatpush1.msra.mxu0 %v4196
        %4332 = vmatprep.subr.mxu0 0.0
        %4333 = vmatpush1.msra.mxu0 %v4197
        %4334 = vmatprep.subr.mxu0 0.0
        %4335 = vmatpush1.msra.mxu0 %v4198
        %4336 = vmatprep.subr.mxu0 0.0
        %4337 = vmatpush1.msra.mxu0 %v4199
        %4338 = vmatprep.subr.mxu0 0.0
        %4339 = vmatpush1.msra.mxu0 %v4200
        %4340 = vmatprep.subr.mxu0 0.0
        %4341 = vmatpush1.msra.mxu0 0.0
        %4342 = vmatprep.subr.mxu0 0.0
        %4343 = vmatpush1.msra.mxu0 0.0
        %4344 = vmatprep.subr.mxu0 0.0
        %4345 = vmatpush1.msra.mxu0 0.0
        %4346 = vmatprep.subr.mxu0 0.0
        %4347 = vmatpush1.msra.mxu0 0.0
        %4348 = vmatprep.subr.mxu0 0.0
        %4349 = vmatpush1.msra.mxu0 0.0
        %4350 = vmatprep.subr.mxu0 0.0
        %4351 = vmatpush1.msra.mxu0 0.0
        %4352 = vmatprep.subr.mxu0 0.0
        %4353 = vmatpush1.msra.mxu0 0.0
        %4354 = vmatprep.subr.mxu0 0.0
        %4355 = vmatpush1.msra.mxu0 0.0
        %4356 = vmatprep.subr.mxu0 0.0
        %4357 = vmatpush1.msra.mxu0 0.0
        %4358 = vmatprep.subr.mxu0 0.0
        %4359 = vmatpush1.msra.mxu0 0.0
        %4360 = vmatprep.subr.mxu0 0.0
        %4361 = vmatpush1.msra.mxu0 0.0
        %4362 = vmatprep.subr.mxu0 0.0
        %4363 = vmatpush1.msra.mxu0 0.0
        %4364 = vmatprep.subr.mxu0 0.0
        %4365 = vmatpush1.msra.mxu0 0.0
        %4366 = vmatprep.subr.mxu0 0.0
        %4367 = vmatpush1.msra.mxu0 0.0
        %4368 = vmatprep.mubr.f32.mxu0 %v4209
        %4369 = vmatmul.mubr.f32.gmra.mrb[0].mxu0 %v4119
        %v4370 = vpop.f32.mrb[0].mxu0
        %v4371 = vadd.f32 %v4206, %v4370
        %v4372 = vpop.f32.mrb[0].mxu0
        %4373 = vmatprep.mubr.f32.mxu0 %v4212
        %4374 = vmatmul.mubr.f32.gmra.mrb[0].mxu0 %v4121
        %v4375 = vpop.f32.mrb[0].mxu0
        %v4376 = vadd.f32 %v4206, %v4375
        %v4377 = vpop.f32.mrb[0].mxu0
        %4378 = vmatprep.mubr.f32.mxu0 %v4215
        %4379 = vmatmul.mubr.f32.gmra.mrb[0].mxu0 %v4123
        %v4380 = vpop.f32.mrb[0].mxu0
        %v4381 = vadd.f32 %v4206, %v4380
        %v4382 = vpop.f32.mrb[0].mxu0
        %4383 = vmatprep.mubr.f32.mxu0 %v4218
        %4384 = vmatmul.mubr.f32.gmra.mrb[0].mxu0 %v4125
        %v4385 = vpop.f32.mrb[0].mxu0
        %v4386 = vadd.f32 %v4206, %v4385
        %v4387 = vpop.f32.mrb[0].mxu0
        %4388 = vmatprep.mubr.f32.mxu0 %v4221
        %4389 = vmatmul.mubr.f32.gmra.mrb[0].mxu0 %v4127
        %v4390 = vpop.f32.mrb[0].mxu0
        %v4391 = vadd.f32 %v4206, %v4390
        %v4392 = vpop.f32.mrb[0].mxu0
        %4393 = vmatprep.mubr.f32.mxu0 %v4224
        %4394 = vmatmul.mubr.f32.gmra.mrb[0].mxu0 %v4129
        %v4395 = vpop.f32.mrb[0].mxu0
        %v4396 = vadd.f32 %v4206, %v4395
        %v4397 = vpop.f32.mrb[0].mxu0
        %4398 = vmatprep.mubr.f32.mxu0 %v4227
        %4399 = vmatmul.mubr.f32.gmra.mrb[0].mxu0 %v4131
        %v4400 = vpop.f32.mrb[0].mxu0
        %v4401 = vadd.f32 %v4206, %v4400
        %v4402 = vpop.f32.mrb[0].mxu0
        %4403 = vmatprep.mubr.f32.mxu0 %v4230
        %4404 = vmatmul.mubr.f32.gmra.mrb[0].mxu0 %v4133
        %v4405 = vpop.f32.mrb[0].mxu0
        %v4406 = vadd.f32 %v4206, %v4405
        %v4407 = vpop.f32.mrb[0].mxu0
        %4408 = vmatprep.mubr.f32.mxu0 %v4233
        %4409 = vmatmul.mubr.f32.gmra.mrb[0].mxu0 %v4135
        %v4410 = vpop.f32.mrb[0].mxu0
        %v4411 = vadd.f32 %v4206, %v4410
        %v4412 = vpop.f32.mrb[0].mxu0
        %4413 = vmatprep.mubr.f32.mxu0 %v4236
        %4414 = vmatmul.mubr.f32.gmra.mrb[0].mxu0 %v4137
        %v4415 = vpop.f32.mrb[0].mxu0
        %v4416 = vadd.f32 %v4206, %v4415
        %v4417 = vpop.f32.mrb[0].mxu0
        %4418 = vmatprep.mubr.f32.mxu0 %v4239
        %4419 = vmatmul.mubr.f32.gmra.mrb[0].mxu0 %v4139
        %v4420 = vpop.f32.mrb[0].mxu0
        %v4421 = vadd.f32 %v4206, %v4420
        %v4422 = vpop.f32.mrb[0].mxu0
        %4423 = vmatprep.mubr.f32.mxu0 %v4242
        %4424 = vmatmul.mubr.f32.gmra.mrb[0].mxu0 %v4141
        %v4425 = vpop.f32.mrb[0].mxu0
        %v4426 = vadd.f32 %v4206, %v4425
        %v4427 = vpop.f32.mrb[0].mxu0
        %4428 = vmatprep.mubr.f32.mxu0 %v4245
        %4429 = vmatmul.mubr.f32.gmra.mrb[0].mxu0 %v4143
        %v4430 = vpop.f32.mrb[0].mxu0
        %v4431 = vadd.f32 %v4206, %v4430
        %v4432 = vpop.f32.mrb[0].mxu0
        %4433 = vmatprep.mubr.f32.mxu0 %v4248
        %4434 = vmatmul.mubr.f32.gmra.mrb[0].mxu0 %v4145
        %v4435 = vpop.f32.mrb[0].mxu0
        %v4436 = vadd.f32 %v4206, %v4435
        %v4437 = vpop.f32.mrb[0].mxu0
        %4438 = vmatprep.mubr.f32.mxu0 %v4251
        %4439 = vmatmul.mubr.f32.gmra.mrb[0].mxu0 %v4147
        %v4440 = vpop.f32.mrb[0].mxu0
        %v4441 = vadd.f32 %v4206, %v4440
        %v4442 = vpop.f32.mrb[0].mxu0
        %4443 = vmatprep.mubr.f32.mxu0 %v4254
        %4444 = vmatmul.mubr.f32.gmra.mrb[0].mxu0 %v4149
        %v4445 = vpop.f32.mrb[0].mxu0
        %v4446 = vadd.f32 %v4206, %v4445
        %v4447 = vpop.f32.mrb[0].mxu0
        %4448 = vmatprep.mubr.f32.mxu0 %v4257
        %4449 = vmatmul.mubr.f32.gmra.mrb[0].mxu0 %v4151
        %v4450 = vpop.f32.mrb[0].mxu0
        %v4451 = vadd.f32 %v4206, %v4450
        %v4452 = vpop.f32.mrb[0].mxu0
        %4453 = vmatprep.mubr.f32.mxu0 %v4260
        %4454 = vmatmul.mubr.f32.gmra.mrb[0].mxu0 %v4153
        %v4455 = vpop.f32.mrb[0].mxu0
        %v4456 = vadd.f32 %v4206, %v4455
        %v4457 = vpop.f32.mrb[0].mxu0
        %4458 = vmatprep.mubr.f32.mxu0 %v4263
        %4459 = vmatmul.mubr.f32.gmra.mrb[0].mxu0 %v4155
        %v4460 = vpop.f32.mrb[0].mxu0
        %v4461 = vadd.f32 %v4206, %v4460
        %v4462 = vpop.f32.mrb[0].mxu0
        %4463 = vmatprep.mubr.f32.mxu0 %v4266
        %4464 = vmatmul.mubr.f32.gmra.mrb[0].mxu0 %v4157
        %v4465 = vpop.f32.mrb[0].mxu0
        %v4466 = vadd.f32 %v4206, %v4465
        %v4467 = vpop.f32.mrb[0].mxu0
        %4468 = vmatprep.mubr.f32.mxu0 %v4269
        %4469 = vmatmul.mubr.f32.gmra.mrb[0].mxu0 %v4159
        %v4470 = vpop.f32.mrb[0].mxu0
        %v4471 = vadd.f32 %v4206, %v4470
        %v4472 = vpop.f32.mrb[0].mxu0
        %4473 = vmatprep.mubr.f32.mxu0 %v4272
        %4474 = vmatmul.mubr.f32.gmra.mrb[0].mxu0 %v4161
        %v4475 = vpop.f32.mrb[0].mxu0
        %v4476 = vadd.f32 %v4206, %v4475
        %v4477 = vpop.f32.mrb[0].mxu0
        %4478 = vmatprep.mubr.f32.mxu0 %v4275
        %4479 = vmatmul.mubr.f32.gmra.mrb[0].mxu0 %v4163
        %v4480 = vpop.f32.mrb[0].mxu0
        %v4481 = vadd.f32 %v4206, %v4480
        %v4482 = vpop.f32.mrb[0].mxu0
        %4483 = vmatprep.mubr.f32.mxu0 %v4278
        %4484 = vmatmul.mubr.f32.gmra.mrb[0].mxu0 %v4165
        %v4485 = vpop.f32.mrb[0].mxu0
        %v4486 = vadd.f32 %v4206, %v4485
        %v4487 = vpop.f32.mrb[0].mxu0
        %4488 = vmatprep.mubr.f32.mxu0 %v4281
        %4489 = vmatmul.mubr.f32.gmra.mrb[0].mxu0 %v4167
        %v4490 = vpop.f32.mrb[0].mxu0
        %v4491 = vadd.f32 %v4206, %v4490
        %v4492 = vpop.f32.mrb[0].mxu0
        %4493 = vmatprep.mubr.f32.mxu0 %v4284
        %4494 = vmatmul.mubr.f32.gmra.mrb[0].mxu0 %v4169
        %v4495 = vpop.f32.mrb[0].mxu0
        %v4496 = vadd.f32 %v4206, %v4495
        %v4497 = vpop.f32.mrb[0].mxu0
        %4498 = vmatprep.mubr.f32.mxu0 %v4287
        %4499 = vmatmul.mubr.f32.gmra.mrb[0].mxu0 %v4171
        %v4500 = vpop.f32.mrb[0].mxu0
        %v4501 = vadd.f32 %v4206, %v4500
        %v4502 = vpop.f32.mrb[0].mxu0
        %4503 = vmatprep.mubr.f32.mxu0 %v4290
        %4504 = vmatmul.mubr.f32.gmra.mrb[0].mxu0 %v4173
        %v4505 = vpop.f32.mrb[0].mxu0
        %v4506 = vadd.f32 %v4206, %v4505
        %v4507 = vpop.f32.mrb[0].mxu0
        %4508 = vmatprep.mubr.f32.mxu0 %v4293
        %4509 = vmatmul.mubr.f32.gmra.mrb[0].mxu0 %v4175
        %v4510 = vpop.f32.mrb[0].mxu0
        %v4511 = vadd.f32 %v4206, %v4510
        %v4512 = vpop.f32.mrb[0].mxu0
        %4513 = vmatprep.mubr.f32.mxu0 %v4296
        %4514 = vmatmul.mubr.f32.gmra.mrb[0].mxu0 %v4177
        %v4515 = vpop.f32.mrb[0].mxu0
        %v4516 = vadd.f32 %v4206, %v4515
        %v4517 = vpop.f32.mrb[0].mxu0
        %4518 = vmatprep.mubr.f32.mxu0 %v4299
        %4519 = vmatmul.mubr.f32.gmra.mrb[0].mxu0 %v4179
        %v4520 = vpop.f32.mrb[0].mxu0
        %v4521 = vadd.f32 %v4206, %v4520
        %v4522 = vpop.f32.mrb[0].mxu0
        %4523 = vmatprep.mubr.f32.mxu0 %v4302
        %4524 = vmatmul.mubr.f32.gmra.mrb[0].mxu0 %v4181
        %v4525 = vpop.f32.mrb[0].mxu0
        %v4526 = vadd.f32 %v4206, %v4525
        %v4527 = vpop.f32.mrb[0].mxu0
        %4528 = vdwg.mxu0
        %v4529 = vmax.f32 %v4371, 0.0
        %v4530 = vmax.f32 %v4376, 0.0
        %v4531 = vmax.f32 %v4381, 0.0
        %v4532 = vmax.f32 %v4386, 0.0
        %v4533 = vmax.f32 %v4391, 0.0
        %v4534 = vmax.f32 %v4396, 0.0
        %v4535 = vmax.f32 %v4401, 0.0
        %v4536 = vmax.f32 %v4406, 0.0
        %v4537 = vmax.f32 %v4411, 0.0
        %v4538 = vmax.f32 %v4416, 0.0
        %v4539 = vmax.f32 %v4421, 0.0
        %v4540 = vmax.f32 %v4426, 0.0
        %v4541 = vmax.f32 %v4431, 0.0
        %v4542 = vmax.f32 %v4436, 0.0
        %v4543 = vmax.f32 %v4441, 0.0
        %v4544 = vmax.f32 %v4446, 0.0
        %v4545 = vmax.f32 %v4451, 0.0
        %v4546 = vmax.f32 %v4456, 0.0
        %v4547 = vmax.f32 %v4461, 0.0
        %v4548 = vmax.f32 %v4466, 0.0
        %v4549 = vmax.f32 %v4471, 0.0
        %v4550 = vmax.f32 %v4476, 0.0
        %v4551 = vmax.f32 %v4481, 0.0
        %v4552 = vmax.f32 %v4486, 0.0
        %v4553 = vmax.f32 %v4491, 0.0
        %v4554 = vmax.f32 %v4496, 0.0
        %v4555 = vmax.f32 %v4501, 0.0
        %v4556 = vmax.f32 %v4506, 0.0
        %v4557 = vmax.f32 %v4511, 0.0
        %v4558 = vmax.f32 %v4516, 0.0
        %v4559 = vmax.f32 %v4521, 0.0
        %v4560 = vmax.f32 %v4526, 0.0
        %4561 = vst.msk [vmem:[%s515] sm:$0xff] %vm516, %v4529
        %4562 = vst.msk [vmem:[%s515 + $0x8] sm:$0xff] %vm516, %v4530
        %4563 = vst.msk [vmem:[%s515 + $0x10] sm:$0xff] %vm516, %v4531
        %4564 = vst.msk [vmem:[%s515 + $0x18] sm:$0xff] %vm516, %v4532
        %4565 = vst.msk [vmem:[%s515 + $0x20] sm:$0xff] %vm516, %v4533
        %4566 = vst.msk [vmem:[%s515 + $0x28] sm:$0xff] %vm516, %v4534
        %4567 = vst.msk [vmem:[%s515 + $0x30] sm:$0xff] %vm516, %v4535
        %4568 = vst.msk [vmem:[%s515 + $0x38] sm:$0xff] %vm516, %v4536
        %4569 = vst.msk [vmem:[%s515 + $0x40] sm:$0xff] %vm516, %v4537
        %4570 = vst.msk [vmem:[%s515 + $0x48] sm:$0xff] %vm516, %v4538
        %4571 = vst.msk [vmem:[%s515 + $0x50] sm:$0xff] %vm516, %v4539
        %4572 = vst.msk [vmem:[%s515 + $0x58] sm:$0xff] %vm516, %v4540
        %4573 = vst.msk [vmem:[%s515 + $0x60] sm:$0xff] %vm516, %v4541
        %4574 = vst.msk [vmem:[%s515 + $0x68] sm:$0xff] %vm516, %v4542
        %4575 = vst.msk [vmem:[%s515 + $0x70] sm:$0xff] %vm516, %v4543
        %4576 = vst.msk [vmem:[%s515 + $0x78] sm:$0xff] %vm516, %v4544
        %4577 = vst.msk [vmem:[%s515 + $0x80] sm:$0xff] %vm516, %v4545
        %4578 = vst.msk [vmem:[%s515 + $0x88] sm:$0xff] %vm516, %v4546
        %4579 = vst.msk [vmem:[%s515 + $0x90] sm:$0xff] %vm516, %v4547
        %4580 = vst.msk [vmem:[%s515 + $0x98] sm:$0xff] %vm516, %v4548
        %4581 = vst.msk [vmem:[%s515 + $0xa0] sm:$0xff] %vm516, %v4549
        %4582 = vst.msk [vmem:[%s515 + $0xa8] sm:$0xff] %vm516, %v4550
        %4583 = vst.msk [vmem:[%s515 + $0xb0] sm:$0xff] %vm516, %v4551
        %4584 = vst.msk [vmem:[%s515 + $0xb8] sm:$0xff] %vm516, %v4552
        %4585 = vst.msk [vmem:[%s515 + $0xc0] sm:$0xff] %vm516, %v4553
        %4586 = vst.msk [vmem:[%s515 + $0xc8] sm:$0xff] %vm516, %v4554
        %4587 = vst.msk [vmem:[%s515 + $0xd0] sm:$0xff] %vm516, %v4555
        %4588 = vst.msk [vmem:[%s515 + $0xd8] sm:$0xff] %vm516, %v4556
        %4589 = vst.msk [vmem:[%s515 + $0xe0] sm:$0xff] %vm516, %v4557
        %4590 = vst.msk [vmem:[%s515 + $0xe8] sm:$0xff] %vm516, %v4558
        %4591 = vst.msk [vmem:[%s515 + $0xf0] sm:$0xff] %vm516, %v4559
        %4592 = vst.msk [vmem:[%s515 + $0xf8] sm:$0xff] %vm516, %v4560
        %4593 = vst.msk [vmem:[#allocation4] sm:$0xff] %vm516, 0.0
        %4594 = vst.msk [vmem:[#allocation4 + $0x8] sm:$0x3] %vm519, 0.0
        %4595 = vst.msk [vmem:[#allocation4 + $0x10] sm:$0xff] %vm516, 0.0
        %4596 = vst.msk [vmem:[#allocation4 + $0x18] sm:$0x3] %vm519, 0.0
        %4597 = vst.msk [vmem:[#allocation4 + $0x20] sm:$0xff] %vm516, 0.0
        %4598 = vst.msk [vmem:[#allocation4 + $0x28] sm:$0x3] %vm519, 0.0
        %4599 = vst.msk [vmem:[#allocation4 + $0x30] sm:$0xff] %vm516, 0.0
        %4600 = vst.msk [vmem:[#allocation4 + $0x38] sm:$0x3] %vm519, 0.0
        %4601 = vst.msk [vmem:[#allocation4 + $0x40] sm:$0xff] %vm516, 0.0
        %4602 = vst.msk [vmem:[#allocation4 + $0x48] sm:$0x3] %vm519, 0.0
        %4603 = vst.msk [vmem:[#allocation4 + $0x50] sm:$0xff] %vm516, 0.0
        %4604 = vst.msk [vmem:[#allocation4 + $0x58] sm:$0x3] %vm519, 0.0
        %4605 = vst.msk [vmem:[#allocation4 + $0x60] sm:$0xff] %vm516, 0.0
        %4606 = vst.msk [vmem:[#allocation4 + $0x68] sm:$0x3] %vm519, 0.0
        %4607 = vst.msk [vmem:[#allocation4 + $0x70] sm:$0xff] %vm516, 0.0
        %4608 = vst.msk [vmem:[#allocation4 + $0x78] sm:$0x3] %vm519, 0.0
        %4609 = vst.msk [vmem:[#allocation4 + $0x80] sm:$0xff] %vm516, 0.0
        %4610 = vst.msk [vmem:[#allocation4 + $0x88] sm:$0x3] %vm519, 0.0
        %4611 = vst.msk [vmem:[#allocation4 + $0x90] sm:$0xff] %vm516, 0.0
        %4612 = vst.msk [vmem:[#allocation4 + $0x98] sm:$0x3] %vm519, 0.0
        %v4613 = vsel %vm516, %v4529, -inf
        %v4614 = vsel %vm516, %v4531, -inf
        %v4615 = vmax.f32 %v4613, %v4614
        %v4616 = vsel %vm516, %v4530, -inf
        %v4617 = vsel %vm516, %v4532, -inf
        %v4618 = vmax.f32 %v4616, %v4617
        %v4619 = vsel %vm516, %v4533, -inf
        %v4620 = vsel %vm516, %v4535, -inf
        %v4621 = vmax.f32 %v4619, %v4620
        %v4622 = vsel %vm516, %v4534, -inf
        %v4623 = vsel %vm516, %v4536, -inf
        %v4624 = vmax.f32 %v4622, %v4623
        %v4625 = vsel %vm516, %v4537, -inf
        %v4626 = vsel %vm516, %v4539, -inf
        %v4627 = vmax.f32 %v4625, %v4626
        %v4628 = vsel %vm516, %v4538, -inf
        %v4629 = vsel %vm516, %v4540, -inf
        %v4630 = vmax.f32 %v4628, %v4629
        %v4631 = vsel %vm516, %v4541, -inf
        %v4632 = vsel %vm516, %v4543, -inf
        %v4633 = vmax.f32 %v4631, %v4632
        %v4634 = vsel %vm516, %v4542, -inf
        %v4635 = vsel %vm516, %v4544, -inf
        %v4636 = vmax.f32 %v4634, %v4635
        %v4637 = vsel %vm516, %v4545, -inf
        %v4638 = vsel %vm516, %v4547, -inf
        %v4639 = vmax.f32 %v4637, %v4638
        %v4640 = vsel %vm516, %v4546, -inf
        %v4641 = vsel %vm516, %v4548, -inf
        %v4642 = vmax.f32 %v4640, %v4641
        %v4643 = vsel %vm516, %v4549, -inf
        %v4644 = vsel %vm516, %v4551, -inf
        %v4645 = vmax.f32 %v4643, %v4644
        %v4646 = vsel %vm516, %v4550, -inf
        %v4647 = vsel %vm516, %v4552, -inf
        %v4648 = vmax.f32 %v4646, %v4647
        %v4649 = vsel %vm516, %v4553, -inf
        %v4650 = vsel %vm516, %v4555, -inf
        %v4651 = vmax.f32 %v4649, %v4650
        %v4652 = vsel %vm516, %v4554, -inf
        %v4653 = vsel %vm516, %v4556, -inf
        %v4654 = vmax.f32 %v4652, %v4653
        %v4655 = vsel %vm516, %v4557, -inf
        %v4656 = vsel %vm516, %v4559, -inf
        %v4657 = vmax.f32 %v4655, %v4656
        %v4658 = vsel %vm516, %v4558, -inf
        %v4659 = vsel %vm516, %v4560, -inf
        %v4660 = vmax.f32 %v4658, %v4659
        %v4669 = vrot.slane %v4615, 1
        %v4670 = vrot.slane %v4621, 1
        %v4671 = vrot.slane %v4627, 1
        %v4672 = vrot.slane %v4633, 1
        %v4673 = vrot.slane %v4639, 1
        %v4674 = vrot.slane %v4645, 1
        %v4675 = vrot.slane %v4651, 1
        %v4676 = vrot.slane %v4657, 1
        %v4685 = vmax.f32 %v4615, %v4669
        %v4686 = vmax.f32 %v4621, %v4670
        %v4687 = vmax.f32 %v4627, %v4671
        %v4688 = vmax.f32 %v4633, %v4672
        %v4689 = vmax.f32 %v4639, %v4673
        %v4690 = vmax.f32 %v4645, %v4674
        %v4691 = vmax.f32 %v4651, %v4675
        %v4692 = vmax.f32 %v4657, %v4676
        %s4693 = scalar_lea.vmem [#allocation4], 16
        %vm4694 = vcmask 122880
        %4695 = vst.msk [vmem:[%s4693 + $0x1] sm:$0x1] %vm4694, %v4685
        %4696 = vst.msk [vmem:[%s4693 + $0x11] sm:$0x1] %vm4694, %v4686
        %4697 = vst.msk [vmem:[%s4693 + $0x21] sm:$0x1] %vm4694, %v4687
        %4698 = vst.msk [vmem:[%s4693 + $0x31] sm:$0x1] %vm4694, %v4688
        %4699 = vst.msk [vmem:[%s4693 + $0x41] sm:$0x1] %vm4694, %v4689
        %4700 = vst.msk [vmem:[%s4693 + $0x51] sm:$0x1] %vm4694, %v4690
        %4701 = vst.msk [vmem:[%s4693 + $0x61] sm:$0x1] %vm4694, %v4691
        %4702 = vst.msk [vmem:[%s4693 + $0x71] sm:$0x1] %vm4694, %v4692
        %vm4703 = vcmask 124930
        %4704 = vst.msk [vmem:[%s4693] sm:$0x4] %vm4703, %v4685
        %4705 = vst.msk [vmem:[%s4693 + $0x10] sm:$0x4] %vm4703, %v4686
        %4706 = vst.msk [vmem:[%s4693 + $0x20] sm:$0x4] %vm4703, %v4687
        %4707 = vst.msk [vmem:[%s4693 + $0x30] sm:$0x4] %vm4703, %v4688
        %4708 = vst.msk [vmem:[%s4693 + $0x40] sm:$0x4] %vm4703, %v4689
        %4709 = vst.msk [vmem:[%s4693 + $0x50] sm:$0x4] %vm4703, %v4690
        %4710 = vst.msk [vmem:[%s4693 + $0x60] sm:$0x4] %vm4703, %v4691
        %4711 = vst.msk [vmem:[%s4693 + $0x70] sm:$0x4] %vm4703, %v4692
        %vm4712 = vcmask 126980
        %4713 = vst.msk [vmem:[%s4693 - $0x1] sm:$0x10] %vm4712, %v4685
        %4714 = vst.msk [vmem:[%s4693 + $0xf] sm:$0x10] %vm4712, %v4686
        %4715 = vst.msk [vmem:[%s4693 + $0x1f] sm:$0x10] %vm4712, %v4687
        %4716 = vst.msk [vmem:[%s4693 + $0x2f] sm:$0x10] %vm4712, %v4688
        %4717 = vst.msk [vmem:[%s4693 + $0x3f] sm:$0x10] %vm4712, %v4689
        %4718 = vst.msk [vmem:[%s4693 + $0x4f] sm:$0x10] %vm4712, %v4690
        %4719 = vst.msk [vmem:[%s4693 + $0x5f] sm:$0x10] %vm4712, %v4691
        %4720 = vst.msk [vmem:[%s4693 + $0x6f] sm:$0x10] %vm4712, %v4692
        %vm4721 = vcmask 129030
        %4722 = vst.msk [vmem:[%s4693 - $0x2] sm:$0x40] %vm4721, %v4685
        %4723 = vst.msk [vmem:[%s4693 + $0xe] sm:$0x40] %vm4721, %v4686
        %4724 = vst.msk [vmem:[%s4693 + $0x1e] sm:$0x40] %vm4721, %v4687
        %4725 = vst.msk [vmem:[%s4693 + $0x2e] sm:$0x40] %vm4721, %v4688
        %4726 = vst.msk [vmem:[%s4693 + $0x3e] sm:$0x40] %vm4721, %v4689
        %4727 = vst.msk [vmem:[%s4693 + $0x4e] sm:$0x40] %vm4721, %v4690
        %4728 = vst.msk [vmem:[%s4693 + $0x5e] sm:$0x40] %vm4721, %v4691
        %4729 = vst.msk [vmem:[%s4693 + $0x6e] sm:$0x40] %vm4721, %v4692
        %v4738 = vrot.slane %v4618, 1
        %v4739 = vrot.slane %v4624, 1
        %v4740 = vrot.slane %v4630, 1
        %v4741 = vrot.slane %v4636, 1
        %v4742 = vrot.slane %v4642, 1
        %v4743 = vrot.slane %v4648, 1
        %v4744 = vrot.slane %v4654, 1
        %v4745 = vrot.slane %v4660, 1
        %v4754 = vmax.f32 %v4618, %v4738
        %v4755 = vmax.f32 %v4624, %v4739
        %v4756 = vmax.f32 %v4630, %v4740
        %v4757 = vmax.f32 %v4636, %v4741
        %v4758 = vmax.f32 %v4642, %v4742
        %v4759 = vmax.f32 %v4648, %v4743
        %v4760 = vmax.f32 %v4654, %v4744
        %v4761 = vmax.f32 %v4660, %v4745
        %4762 = vst.msk [vmem:[%s4693 + $0x5] sm:$0x1] %vm4694, %v4754
        %4763 = vst.msk [vmem:[%s4693 + $0x15] sm:$0x1] %vm4694, %v4755
        %4764 = vst.msk [vmem:[%s4693 + $0x25] sm:$0x1] %vm4694, %v4756
        %4765 = vst.msk [vmem:[%s4693 + $0x35] sm:$0x1] %vm4694, %v4757
        %4766 = vst.msk [vmem:[%s4693 + $0x45] sm:$0x1] %vm4694, %v4758
        %4767 = vst.msk [vmem:[%s4693 + $0x55] sm:$0x1] %vm4694, %v4759
        %4768 = vst.msk [vmem:[%s4693 + $0x65] sm:$0x1] %vm4694, %v4760
        %4769 = vst.msk [vmem:[%s4693 + $0x75] sm:$0x1] %vm4694, %v4761
        %4770 = vst.msk [vmem:[%s4693 + $0x4] sm:$0x4] %vm4703, %v4754
        %4771 = vst.msk [vmem:[%s4693 + $0x14] sm:$0x4] %vm4703, %v4755
        %4772 = vst.msk [vmem:[%s4693 + $0x24] sm:$0x4] %vm4703, %v4756
        %4773 = vst.msk [vmem:[%s4693 + $0x34] sm:$0x4] %vm4703, %v4757
        %4774 = vst.msk [vmem:[%s4693 + $0x44] sm:$0x4] %vm4703, %v4758
        %4775 = vst.msk [vmem:[%s4693 + $0x54] sm:$0x4] %vm4703, %v4759
        %4776 = vst.msk [vmem:[%s4693 + $0x64] sm:$0x4] %vm4703, %v4760
        %4777 = vst.msk [vmem:[%s4693 + $0x74] sm:$0x4] %vm4703, %v4761
        %4778 = vst.msk [vmem:[%s4693 + $0x3] sm:$0x10] %vm4712, %v4754
        %4779 = vst.msk [vmem:[%s4693 + $0x13] sm:$0x10] %vm4712, %v4755
        %4780 = vst.msk [vmem:[%s4693 + $0x23] sm:$0x10] %vm4712, %v4756
        %4781 = vst.msk [vmem:[%s4693 + $0x33] sm:$0x10] %vm4712, %v4757
        %4782 = vst.msk [vmem:[%s4693 + $0x43] sm:$0x10] %vm4712, %v4758
        %4783 = vst.msk [vmem:[%s4693 + $0x53] sm:$0x10] %vm4712, %v4759
        %4784 = vst.msk [vmem:[%s4693 + $0x63] sm:$0x10] %vm4712, %v4760
        %4785 = vst.msk [vmem:[%s4693 + $0x73] sm:$0x10] %vm4712, %v4761
        %4786 = vst.msk [vmem:[%s4693 + $0x2] sm:$0x40] %vm4721, %v4754
        %4787 = vst.msk [vmem:[%s4693 + $0x12] sm:$0x40] %vm4721, %v4755
        %4788 = vst.msk [vmem:[%s4693 + $0x22] sm:$0x40] %vm4721, %v4756
        %4789 = vst.msk [vmem:[%s4693 + $0x32] sm:$0x40] %vm4721, %v4757
        %4790 = vst.msk [vmem:[%s4693 + $0x42] sm:$0x40] %vm4721, %v4758
        %4791 = vst.msk [vmem:[%s4693 + $0x52] sm:$0x40] %vm4721, %v4759
        %4792 = vst.msk [vmem:[%s4693 + $0x62] sm:$0x40] %vm4721, %v4760
        %4793 = vst.msk [vmem:[%s4693 + $0x72] sm:$0x40] %vm4721, %v4761
        %v4794 = vld [vmem:[#allocation4] sm:$0xff]
        %v4795 = vld [vmem:[#allocation4 + $0x10] sm:$0xff]
        %v4796 = vld [vmem:[#allocation4 + $0x20] sm:$0xff]
        %v4797 = vld [vmem:[#allocation4 + $0x30] sm:$0xff]
        %v4798 = vld [vmem:[#allocation4 + $0x40] sm:$0xff]
        %v4799 = vld [vmem:[#allocation4 + $0x50] sm:$0xff]
        %v4800 = vld [vmem:[#allocation4 + $0x60] sm:$0xff]
        %v4801 = vld [vmem:[#allocation4 + $0x70] sm:$0xff]
        %4802 = vst.msk [vmem:[#allocation9] sm:$0xff] %vm516, %v4794
        %4803 = vst.msk [vmem:[#allocation9 + $0x10] sm:$0xff] %vm516, %v4795
        %4804 = vst.msk [vmem:[#allocation9 + $0x20] sm:$0xff] %vm516, %v4796
        %4805 = vst.msk [vmem:[#allocation9 + $0x30] sm:$0xff] %vm516, %v4797
        %4806 = vst.msk [vmem:[#allocation9 + $0x40] sm:$0xff] %vm516, %v4798
        %4807 = vst.msk [vmem:[#allocation9 + $0x50] sm:$0xff] %vm516, %v4799
        %4808 = vst.msk [vmem:[#allocation9 + $0x60] sm:$0xff] %vm516, %v4800
        %4809 = vst.msk [vmem:[#allocation9 + $0x70] sm:$0xff] %vm516, %v4801
        %v4810 = vld [vmem:[#allocation4 + $0x1] sm:$0xff]
        %v4811 = vld [vmem:[#allocation4 + $0x11] sm:$0xff]
        %v4812 = vld [vmem:[#allocation4 + $0x21] sm:$0xff]
        %v4813 = vld [vmem:[#allocation4 + $0x31] sm:$0xff]
        %v4814 = vld [vmem:[#allocation4 + $0x41] sm:$0xff]
        %v4815 = vld [vmem:[#allocation4 + $0x51] sm:$0xff]
        %v4816 = vld [vmem:[#allocation4 + $0x61] sm:$0xff]
        %v4817 = vld [vmem:[#allocation4 + $0x71] sm:$0xff]
        %4826 = vrot.lane.b32.xlu0 %v4810, 16
        %v4827 = vpop.permute.xlu0 %4826
        %4828 = vrot.lane.b32.xlu0 %v4811, 16
        %v4829 = vpop.permute.xlu0 %4828
        %4830 = vrot.lane.b32.xlu0 %v4812, 16
        %v4831 = vpop.permute.xlu0 %4830
        %4832 = vrot.lane.b32.xlu0 %v4813, 16
        %v4833 = vpop.permute.xlu0 %4832
        %4834 = vrot.lane.b32.xlu0 %v4814, 16
        %v4835 = vpop.permute.xlu0 %4834
        %4836 = vrot.lane.b32.xlu0 %v4815, 16
        %v4837 = vpop.permute.xlu0 %4836
        %4838 = vrot.lane.b32.xlu0 %v4816, 16
        %v4839 = vpop.permute.xlu0 %4838
        %4840 = vrot.lane.b32.xlu0 %v4817, 16
        %v4841 = vpop.permute.xlu0 %4840
        %4850 = vst.msk [vmem:[#allocation9] sm:$0xff] %vm861, %v4827
        %4851 = vst.msk [vmem:[#allocation9 + $0x10] sm:$0xff] %vm861, %v4829
        %4852 = vst.msk [vmem:[#allocation9 + $0x20] sm:$0xff] %vm861, %v4831
        %4853 = vst.msk [vmem:[#allocation9 + $0x30] sm:$0xff] %vm861, %v4833
        %4854 = vst.msk [vmem:[#allocation9 + $0x40] sm:$0xff] %vm861, %v4835
        %4855 = vst.msk [vmem:[#allocation9 + $0x50] sm:$0xff] %vm861, %v4837
        %4856 = vst.msk [vmem:[#allocation9 + $0x60] sm:$0xff] %vm861, %v4839
        %4857 = vst.msk [vmem:[#allocation9 + $0x70] sm:$0xff] %vm861, %v4841
        %v4858 = vld [vmem:[#allocation4 + $0x2] sm:$0xff]
        %v4859 = vld [vmem:[#allocation4 + $0x12] sm:$0xff]
        %v4860 = vld [vmem:[#allocation4 + $0x22] sm:$0xff]
        %v4861 = vld [vmem:[#allocation4 + $0x32] sm:$0xff]
        %v4862 = vld [vmem:[#allocation4 + $0x42] sm:$0xff]
        %v4863 = vld [vmem:[#allocation4 + $0x52] sm:$0xff]
        %v4864 = vld [vmem:[#allocation4 + $0x62] sm:$0xff]
        %v4865 = vld [vmem:[#allocation4 + $0x72] sm:$0xff]
        %4874 = vrot.lane.b32.xlu0 %v4858, 32
        %v4875 = vpop.permute.xlu0 %4874
        %4876 = vrot.lane.b32.xlu0 %v4859, 32
        %v4877 = vpop.permute.xlu0 %4876
        %4878 = vrot.lane.b32.xlu0 %v4860, 32
        %v4879 = vpop.permute.xlu0 %4878
        %4880 = vrot.lane.b32.xlu0 %v4861, 32
        %v4881 = vpop.permute.xlu0 %4880
        %4882 = vrot.lane.b32.xlu0 %v4862, 32
        %v4883 = vpop.permute.xlu0 %4882
        %4884 = vrot.lane.b32.xlu0 %v4863, 32
        %v4885 = vpop.permute.xlu0 %4884
        %4886 = vrot.lane.b32.xlu0 %v4864, 32
        %v4887 = vpop.permute.xlu0 %4886
        %4888 = vrot.lane.b32.xlu0 %v4865, 32
        %v4889 = vpop.permute.xlu0 %4888
        %4898 = vst.msk [vmem:[#allocation9] sm:$0xff] %vm1054, %v4875
        %4899 = vst.msk [vmem:[#allocation9 + $0x10] sm:$0xff] %vm1054, %v4877
        %4900 = vst.msk [vmem:[#allocation9 + $0x20] sm:$0xff] %vm1054, %v4879
        %4901 = vst.msk [vmem:[#allocation9 + $0x30] sm:$0xff] %vm1054, %v4881
        %4902 = vst.msk [vmem:[#allocation9 + $0x40] sm:$0xff] %vm1054, %v4883
        %4903 = vst.msk [vmem:[#allocation9 + $0x50] sm:$0xff] %vm1054, %v4885
        %4904 = vst.msk [vmem:[#allocation9 + $0x60] sm:$0xff] %vm1054, %v4887
        %4905 = vst.msk [vmem:[#allocation9 + $0x70] sm:$0xff] %vm1054, %v4889
        %v4906 = vld [vmem:[%s4693] sm:$0xff]
        %v4907 = vld [vmem:[%s4693 + $0x10] sm:$0xff]
        %v4908 = vld [vmem:[%s4693 + $0x20] sm:$0xff]
        %v4909 = vld [vmem:[%s4693 + $0x30] sm:$0xff]
        %v4910 = vld [vmem:[%s4693 + $0x40] sm:$0xff]
        %v4911 = vld [vmem:[%s4693 + $0x50] sm:$0xff]
        %v4912 = vld [vmem:[%s4693 + $0x60] sm:$0xff]
        %v4913 = vld [vmem:[%s4693 + $0x70] sm:$0xff]
        %4922 = vrot.lane.b32.xlu0 %v4906, 48
        %v4923 = vpop.permute.xlu0 %4922
        %4924 = vrot.lane.b32.xlu0 %v4907, 48
        %v4925 = vpop.permute.xlu0 %4924
        %4926 = vrot.lane.b32.xlu0 %v4908, 48
        %v4927 = vpop.permute.xlu0 %4926
        %4928 = vrot.lane.b32.xlu0 %v4909, 48
        %v4929 = vpop.permute.xlu0 %4928
        %4930 = vrot.lane.b32.xlu0 %v4910, 48
        %v4931 = vpop.permute.xlu0 %4930
        %4932 = vrot.lane.b32.xlu0 %v4911, 48
        %v4933 = vpop.permute.xlu0 %4932
        %4934 = vrot.lane.b32.xlu0 %v4912, 48
        %v4935 = vpop.permute.xlu0 %4934
        %4936 = vrot.lane.b32.xlu0 %v4913, 48
        %v4937 = vpop.permute.xlu0 %4936
        %4946 = vst.msk [vmem:[#allocation9] sm:$0xff] %vm1247, %v4923
        %4947 = vst.msk [vmem:[#allocation9 + $0x10] sm:$0xff] %vm1247, %v4925
        %4948 = vst.msk [vmem:[#allocation9 + $0x20] sm:$0xff] %vm1247, %v4927
        %4949 = vst.msk [vmem:[#allocation9 + $0x30] sm:$0xff] %vm1247, %v4929
        %4950 = vst.msk [vmem:[#allocation9 + $0x40] sm:$0xff] %vm1247, %v4931
        %4951 = vst.msk [vmem:[#allocation9 + $0x50] sm:$0xff] %vm1247, %v4933
        %4952 = vst.msk [vmem:[#allocation9 + $0x60] sm:$0xff] %vm1247, %v4935
        %4953 = vst.msk [vmem:[#allocation9 + $0x70] sm:$0xff] %vm1247, %v4937
        %v4954 = vld [vmem:[%s4693 + $0x1] sm:$0xff]
        %v4955 = vld [vmem:[%s4693 + $0x11] sm:$0xff]
        %v4956 = vld [vmem:[%s4693 + $0x21] sm:$0xff]
        %v4957 = vld [vmem:[%s4693 + $0x31] sm:$0xff]
        %v4958 = vld [vmem:[%s4693 + $0x41] sm:$0xff]
        %v4959 = vld [vmem:[%s4693 + $0x51] sm:$0xff]
        %v4960 = vld [vmem:[%s4693 + $0x61] sm:$0xff]
        %v4961 = vld [vmem:[%s4693 + $0x71] sm:$0xff]
        %4970 = vrot.lane.b32.xlu0 %v4954, 64
        %v4971 = vpop.permute.xlu0 %4970
        %4972 = vrot.lane.b32.xlu0 %v4955, 64
        %v4973 = vpop.permute.xlu0 %4972
        %4974 = vrot.lane.b32.xlu0 %v4956, 64
        %v4975 = vpop.permute.xlu0 %4974
        %4976 = vrot.lane.b32.xlu0 %v4957, 64
        %v4977 = vpop.permute.xlu0 %4976
        %4978 = vrot.lane.b32.xlu0 %v4958, 64
        %v4979 = vpop.permute.xlu0 %4978
        %4980 = vrot.lane.b32.xlu0 %v4959, 64
        %v4981 = vpop.permute.xlu0 %4980
        %4982 = vrot.lane.b32.xlu0 %v4960, 64
        %v4983 = vpop.permute.xlu0 %4982
        %4984 = vrot.lane.b32.xlu0 %v4961, 64
        %v4985 = vpop.permute.xlu0 %4984
        %4994 = vst.msk [vmem:[#allocation9] sm:$0xff] %vm1440, %v4971
        %4995 = vst.msk [vmem:[#allocation9 + $0x10] sm:$0xff] %vm1440, %v4973
        %4996 = vst.msk [vmem:[#allocation9 + $0x20] sm:$0xff] %vm1440, %v4975
        %4997 = vst.msk [vmem:[#allocation9 + $0x30] sm:$0xff] %vm1440, %v4977
        %4998 = vst.msk [vmem:[#allocation9 + $0x40] sm:$0xff] %vm1440, %v4979
        %4999 = vst.msk [vmem:[#allocation9 + $0x50] sm:$0xff] %vm1440, %v4981
        %5000 = vst.msk [vmem:[#allocation9 + $0x60] sm:$0xff] %vm1440, %v4983
        %5001 = vst.msk [vmem:[#allocation9 + $0x70] sm:$0xff] %vm1440, %v4985
        %v5002 = vld [vmem:[%s4693 + $0x2] sm:$0xff]
        %v5003 = vld [vmem:[%s4693 + $0x12] sm:$0xff]
        %v5004 = vld [vmem:[%s4693 + $0x22] sm:$0xff]
        %v5005 = vld [vmem:[%s4693 + $0x32] sm:$0xff]
        %v5006 = vld [vmem:[%s4693 + $0x42] sm:$0xff]
        %v5007 = vld [vmem:[%s4693 + $0x52] sm:$0xff]
        %v5008 = vld [vmem:[%s4693 + $0x62] sm:$0xff]
        %v5009 = vld [vmem:[%s4693 + $0x72] sm:$0xff]
        %5018 = vrot.lane.b32.xlu0 %v5002, 80
        %v5019 = vpop.permute.xlu0 %5018
        %5020 = vrot.lane.b32.xlu0 %v5003, 80
        %v5021 = vpop.permute.xlu0 %5020
        %5022 = vrot.lane.b32.xlu0 %v5004, 80
        %v5023 = vpop.permute.xlu0 %5022
        %5024 = vrot.lane.b32.xlu0 %v5005, 80
        %v5025 = vpop.permute.xlu0 %5024
        %5026 = vrot.lane.b32.xlu0 %v5006, 80
        %v5027 = vpop.permute.xlu0 %5026
        %5028 = vrot.lane.b32.xlu0 %v5007, 80
        %v5029 = vpop.permute.xlu0 %5028
        %5030 = vrot.lane.b32.xlu0 %v5008, 80
        %v5031 = vpop.permute.xlu0 %5030
        %5032 = vrot.lane.b32.xlu0 %v5009, 80
        %v5033 = vpop.permute.xlu0 %5032
        %5042 = vst.msk [vmem:[#allocation9] sm:$0xff] %vm1633, %v5019
        %5043 = vst.msk [vmem:[#allocation9 + $0x10] sm:$0xff] %vm1633, %v5021
        %5044 = vst.msk [vmem:[#allocation9 + $0x20] sm:$0xff] %vm1633, %v5023
        %5045 = vst.msk [vmem:[#allocation9 + $0x30] sm:$0xff] %vm1633, %v5025
        %5046 = vst.msk [vmem:[#allocation9 + $0x40] sm:$0xff] %vm1633, %v5027
        %5047 = vst.msk [vmem:[#allocation9 + $0x50] sm:$0xff] %vm1633, %v5029
        %5048 = vst.msk [vmem:[#allocation9 + $0x60] sm:$0xff] %vm1633, %v5031
        %5049 = vst.msk [vmem:[#allocation9 + $0x70] sm:$0xff] %vm1633, %v5033
        %s5050 = scalar_lea.vmem [#allocation4], 32
        %v5051 = vld [vmem:[%s5050] sm:$0xff]
        %v5052 = vld [vmem:[%s5050 + $0x10] sm:$0xff]
        %v5053 = vld [vmem:[%s5050 + $0x20] sm:$0xff]
        %v5054 = vld [vmem:[%s5050 + $0x30] sm:$0xff]
        %v5055 = vld [vmem:[%s5050 + $0x40] sm:$0xff]
        %v5056 = vld [vmem:[%s5050 + $0x50] sm:$0xff]
        %v5057 = vld [vmem:[%s5050 + $0x60] sm:$0xff]
        %v5058 = vld [vmem:[%s5050 + $0x70] sm:$0xff]
        %5067 = vrot.lane.b32.xlu0 %v5051, 96
        %v5068 = vpop.permute.xlu0 %5067
        %5069 = vrot.lane.b32.xlu0 %v5052, 96
        %v5070 = vpop.permute.xlu0 %5069
        %5071 = vrot.lane.b32.xlu0 %v5053, 96
        %v5072 = vpop.permute.xlu0 %5071
        %5073 = vrot.lane.b32.xlu0 %v5054, 96
        %v5074 = vpop.permute.xlu0 %5073
        %5075 = vrot.lane.b32.xlu0 %v5055, 96
        %v5076 = vpop.permute.xlu0 %5075
        %5077 = vrot.lane.b32.xlu0 %v5056, 96
        %v5078 = vpop.permute.xlu0 %5077
        %5079 = vrot.lane.b32.xlu0 %v5057, 96
        %v5080 = vpop.permute.xlu0 %5079
        %5081 = vrot.lane.b32.xlu0 %v5058, 96
        %v5082 = vpop.permute.xlu0 %5081
        %5091 = vst.msk [vmem:[#allocation9] sm:$0xff] %vm1827, %v5068
        %5092 = vst.msk [vmem:[#allocation9 + $0x10] sm:$0xff] %vm1827, %v5070
        %5093 = vst.msk [vmem:[#allocation9 + $0x20] sm:$0xff] %vm1827, %v5072
        %5094 = vst.msk [vmem:[#allocation9 + $0x30] sm:$0xff] %vm1827, %v5074
        %5095 = vst.msk [vmem:[#allocation9 + $0x40] sm:$0xff] %vm1827, %v5076
        %5096 = vst.msk [vmem:[#allocation9 + $0x50] sm:$0xff] %vm1827, %v5078
        %5097 = vst.msk [vmem:[#allocation9 + $0x60] sm:$0xff] %vm1827, %v5080
        %5098 = vst.msk [vmem:[#allocation9 + $0x70] sm:$0xff] %vm1827, %v5082
        %v5099 = vld [vmem:[%s5050 + $0x1] sm:$0xff]
        %v5100 = vld [vmem:[%s5050 + $0x11] sm:$0xff]
        %v5101 = vld [vmem:[%s5050 + $0x21] sm:$0xff]
        %v5102 = vld [vmem:[%s5050 + $0x31] sm:$0xff]
        %v5103 = vld [vmem:[%s5050 + $0x41] sm:$0xff]
        %v5104 = vld [vmem:[%s5050 + $0x51] sm:$0xff]
        %v5105 = vld [vmem:[%s5050 + $0x61] sm:$0xff]
        %v5106 = vld [vmem:[%s5050 + $0x71] sm:$0xff]
        %5115 = vrot.lane.b32.xlu0 %v5099, 112
        %v5116 = vpop.permute.xlu0 %5115
        %5117 = vrot.lane.b32.xlu0 %v5100, 112
        %v5118 = vpop.permute.xlu0 %5117
        %5119 = vrot.lane.b32.xlu0 %v5101, 112
        %v5120 = vpop.permute.xlu0 %5119
        %5121 = vrot.lane.b32.xlu0 %v5102, 112
        %v5122 = vpop.permute.xlu0 %5121
        %5123 = vrot.lane.b32.xlu0 %v5103, 112
        %v5124 = vpop.permute.xlu0 %5123
        %5125 = vrot.lane.b32.xlu0 %v5104, 112
        %v5126 = vpop.permute.xlu0 %5125
        %5127 = vrot.lane.b32.xlu0 %v5105, 112
        %v5128 = vpop.permute.xlu0 %5127
        %5129 = vrot.lane.b32.xlu0 %v5106, 112
        %v5130 = vpop.permute.xlu0 %5129
        %5139 = vst.msk [vmem:[#allocation9] sm:$0xff] %vm2020, %v5116
        %5140 = vst.msk [vmem:[#allocation9 + $0x10] sm:$0xff] %vm2020, %v5118
        %5141 = vst.msk [vmem:[#allocation9 + $0x20] sm:$0xff] %vm2020, %v5120
        %5142 = vst.msk [vmem:[#allocation9 + $0x30] sm:$0xff] %vm2020, %v5122
        %5143 = vst.msk [vmem:[#allocation9 + $0x40] sm:$0xff] %vm2020, %v5124
        %5144 = vst.msk [vmem:[#allocation9 + $0x50] sm:$0xff] %vm2020, %v5126
        %5145 = vst.msk [vmem:[#allocation9 + $0x60] sm:$0xff] %vm2020, %v5128
        %5146 = vst.msk [vmem:[#allocation9 + $0x70] sm:$0xff] %vm2020, %v5130
        %v5147 = vld [vmem:[%s5050 + $0x2] sm:$0xff]
        %v5148 = vld [vmem:[%s5050 + $0x12] sm:$0xff]
        %v5149 = vld [vmem:[%s5050 + $0x22] sm:$0xff]
        %v5150 = vld [vmem:[%s5050 + $0x32] sm:$0xff]
        %v5151 = vld [vmem:[%s5050 + $0x42] sm:$0xff]
        %v5152 = vld [vmem:[%s5050 + $0x52] sm:$0xff]
        %v5153 = vld [vmem:[%s5050 + $0x62] sm:$0xff]
        %v5154 = vld [vmem:[%s5050 + $0x72] sm:$0xff]
        %5155 = vst.msk [vmem:[#allocation9 + $0x8] sm:$0xff] %vm516, %v5147
        %5156 = vst.msk [vmem:[#allocation9 + $0x18] sm:$0xff] %vm516, %v5148
        %5157 = vst.msk [vmem:[#allocation9 + $0x28] sm:$0xff] %vm516, %v5149
        %5158 = vst.msk [vmem:[#allocation9 + $0x38] sm:$0xff] %vm516, %v5150
        %5159 = vst.msk [vmem:[#allocation9 + $0x48] sm:$0xff] %vm516, %v5151
        %5160 = vst.msk [vmem:[#allocation9 + $0x58] sm:$0xff] %vm516, %v5152
        %5161 = vst.msk [vmem:[#allocation9 + $0x68] sm:$0xff] %vm516, %v5153
        %5162 = vst.msk [vmem:[#allocation9 + $0x78] sm:$0xff] %vm516, %v5154
        %v5163 = vld [vmem:[#allocation9] sm:$0xff]
        %v5164 = vld [vmem:[#allocation9 + $0x8] sm:$0xff]
        %v5165 = vld [vmem:[#allocation9 + $0x10] sm:$0xff]
        %v5166 = vld [vmem:[#allocation9 + $0x18] sm:$0xff]
        %v5167 = vld [vmem:[#allocation9 + $0x20] sm:$0xff]
        %v5168 = vld [vmem:[#allocation9 + $0x28] sm:$0xff]
        %v5169 = vld [vmem:[#allocation9 + $0x30] sm:$0xff]
        %v5170 = vld [vmem:[#allocation9 + $0x38] sm:$0xff]
        %v5171 = vld [vmem:[#allocation9 + $0x40] sm:$0xff]
        %v5172 = vld [vmem:[#allocation9 + $0x48] sm:$0xff]
        %v5173 = vld [vmem:[#allocation9 + $0x50] sm:$0xff]
        %v5174 = vld [vmem:[#allocation9 + $0x58] sm:$0xff]
        %v5175 = vld [vmem:[#allocation9 + $0x60] sm:$0xff]
        %v5176 = vld [vmem:[#allocation9 + $0x68] sm:$0xff]
        %v5177 = vld [vmem:[#allocation9 + $0x70] sm:$0xff]
        %v5178 = vld [vmem:[#allocation9 + $0x78] sm:$0xff]
        %v5179 = vld [vmem:[%s5] sm:$0xff]
        %v5180 = vld [vmem:[%s5 + $0x8] sm:$0xff]
        %v5181 = vld [vmem:[%s5 + $0x10] sm:$0xff]
        %v5182 = vld [vmem:[%s5 + $0x18] sm:$0xff]
        %v5183 = vld [vmem:[%s5 + $0x20] sm:$0xff]
        %v5184 = vld [vmem:[%s5 + $0x28] sm:$0xff]
        %v5185 = vld [vmem:[%s5 + $0x30] sm:$0xff]
        %v5186 = vld [vmem:[%s5 + $0x38] sm:$0xff]
        %v5187 = vld [vmem:[%s5 + $0x40] sm:$0xff]
        %v5188 = vld [vmem:[%s5 + $0x48] sm:$0xff]
        %v5189 = vld [vmem:[%s5 + $0x50] sm:$0xff]
        %v5190 = vld [vmem:[%s5 + $0x58] sm:$0xff]
        %v5191 = vld [vmem:[%s5 + $0x60] sm:$0xff]
        %v5192 = vld [vmem:[%s5 + $0x68] sm:$0xff]
        %v5193 = vld [vmem:[%s5 + $0x70] sm:$0xff]
        %v5194 = vld [vmem:[%s5 + $0x78] sm:$0xff]
        %v5195 = vld [vmem:[%s5 + $0x80] sm:$0xff]
        %v5196 = vld [vmem:[%s5 + $0x88] sm:$0xff]
        %v5197 = vld [vmem:[%s6] sm:$0x1]
        %v5199 = vlaneseq
        %v5200 = vshrl.u32 %v5199, 7
        %v5201 = vsub.s32 0, %v5200
        %v5202 = vrot.slane %v5197, %v5201
        %v5205 = vsel %vm516, %v5164, 0
        %v5208 = vsel %vm516, %v5166, 0
        %v5211 = vsel %vm516, %v5168, 0
        %v5214 = vsel %vm516, %v5170, 0
        %v5217 = vsel %vm516, %v5172, 0
        %v5220 = vsel %vm516, %v5174, 0
        %v5223 = vsel %vm516, %v5176, 0
        %v5226 = vsel %vm516, %v5178, 0
        %5228 = vmatprep.subr.mxu0 0.0
        %5229 = vmatpush1.msra.mxu0 %v5179
        %5230 = vmatprep.subr.mxu0 0.0
        %5231 = vmatpush1.msra.mxu0 %v5180
        %5232 = vmatprep.subr.mxu0 0.0
        %5233 = vmatpush1.msra.mxu0 %v5181
        %5234 = vmatprep.subr.mxu0 0.0
        %5235 = vmatpush1.msra.mxu0 %v5182
        %5236 = vmatprep.subr.mxu0 0.0
        %5237 = vmatpush1.msra.mxu0 %v5183
        %5238 = vmatprep.subr.mxu0 0.0
        %5239 = vmatpush1.msra.mxu0 %v5184
        %5240 = vmatprep.subr.mxu0 0.0
        %5241 = vmatpush1.msra.mxu0 %v5185
        %5242 = vmatprep.subr.mxu0 0.0
        %5243 = vmatpush1.msra.mxu0 %v5186
        %5244 = vmatprep.subr.mxu0 0.0
        %5245 = vmatpush1.msra.mxu0 %v5187
        %5246 = vmatprep.subr.mxu0 0.0
        %5247 = vmatpush1.msra.mxu0 %v5188
        %5248 = vmatprep.subr.mxu0 0.0
        %5249 = vmatpush1.msra.mxu0 %v5189
        %5250 = vmatprep.subr.mxu0 0.0
        %5251 = vmatpush1.msra.mxu0 %v5190
        %5252 = vmatprep.subr.mxu0 0.0
        %5253 = vmatpush1.msra.mxu0 %v5191
        %5254 = vmatprep.subr.mxu0 0.0
        %5255 = vmatpush1.msra.mxu0 %v5192
        %5256 = vmatprep.subr.mxu0 0.0
        %5257 = vmatpush1.msra.mxu0 %v5193
        %5258 = vmatprep.subr.mxu0 0.0
        %5259 = vmatpush1.msra.mxu0 %v5194
        %5260 = vmatprep.subr.mxu0 0.0
        %5261 = vmatpush1.msra.mxu0 %v5195
        %5262 = vmatprep.subr.mxu0 0.0
        %5263 = vmatpush1.msra.mxu0 %v5196
        %5264 = vmatprep.subr.mxu0 0.0
        %5265 = vmatpush1.msra.mxu0 0.0
        %5266 = vmatprep.subr.mxu0 0.0
        %5267 = vmatpush1.msra.mxu0 0.0
        %5268 = vmatprep.subr.mxu0 0.0
        %5269 = vmatpush1.msra.mxu0 0.0
        %5270 = vmatprep.subr.mxu0 0.0
        %5271 = vmatpush1.msra.mxu0 0.0
        %5272 = vmatprep.subr.mxu0 0.0
        %5273 = vmatpush1.msra.mxu0 0.0
        %5274 = vmatprep.subr.mxu0 0.0
        %5275 = vmatpush1.msra.mxu0 0.0
        %5276 = vmatprep.subr.mxu0 0.0
        %5277 = vmatpush1.msra.mxu0 0.0
        %5278 = vmatprep.subr.mxu0 0.0
        %5279 = vmatpush1.msra.mxu0 0.0
        %5280 = vmatprep.subr.mxu0 0.0
        %5281 = vmatpush1.msra.mxu0 0.0
        %5282 = vmatprep.subr.mxu0 0.0
        %5283 = vmatpush1.msra.mxu0 0.0
        %5284 = vmatprep.subr.mxu0 0.0
        %5285 = vmatpush1.msra.mxu0 0.0
        %5286 = vmatprep.subr.mxu0 0.0
        %5287 = vmatpush1.msra.mxu0 0.0
        %5288 = vmatprep.subr.mxu0 0.0
        %5289 = vmatpush1.msra.mxu0 0.0
        %5290 = vmatprep.subr.mxu0 0.0
        %5291 = vmatpush1.msra.mxu0 0.0
        %5292 = vmatprep.mubr.f32.mxu0 %v5205
        %5293 = vmatmul.mubr.f32.gmra.mrb[0].mxu0 %v5163
        %v5294 = vpop.f32.mrb[0].mxu0
        %v5295 = vadd.f32 %v5202, %v5294
        %v5296 = vpop.f32.mrb[0].mxu0
        %5297 = vmatprep.mubr.f32.mxu0 %v5208
        %5298 = vmatmul.mubr.f32.gmra.mrb[0].mxu0 %v5165
        %v5299 = vpop.f32.mrb[0].mxu0
        %v5300 = vadd.f32 %v5202, %v5299
        %v5301 = vpop.f32.mrb[0].mxu0
        %5302 = vmatprep.mubr.f32.mxu0 %v5211
        %5303 = vmatmul.mubr.f32.gmra.mrb[0].mxu0 %v5167
        %v5304 = vpop.f32.mrb[0].mxu0
        %v5305 = vadd.f32 %v5202, %v5304
        %v5306 = vpop.f32.mrb[0].mxu0
        %5307 = vmatprep.mubr.f32.mxu0 %v5214
        %5308 = vmatmul.mubr.f32.gmra.mrb[0].mxu0 %v5169
        %v5309 = vpop.f32.mrb[0].mxu0
        %v5310 = vadd.f32 %v5202, %v5309
        %v5311 = vpop.f32.mrb[0].mxu0
        %5312 = vmatprep.mubr.f32.mxu0 %v5217
        %5313 = vmatmul.mubr.f32.gmra.mrb[0].mxu0 %v5171
        %v5314 = vpop.f32.mrb[0].mxu0
        %v5315 = vadd.f32 %v5202, %v5314
        %v5316 = vpop.f32.mrb[0].mxu0
        %5317 = vmatprep.mubr.f32.mxu0 %v5220
        %5318 = vmatmul.mubr.f32.gmra.mrb[0].mxu0 %v5173
        %v5319 = vpop.f32.mrb[0].mxu0
        %v5320 = vadd.f32 %v5202, %v5319
        %v5321 = vpop.f32.mrb[0].mxu0
        %5322 = vmatprep.mubr.f32.mxu0 %v5223
        %5323 = vmatmul.mubr.f32.gmra.mrb[0].mxu0 %v5175
        %v5324 = vpop.f32.mrb[0].mxu0
        %v5325 = vadd.f32 %v5202, %v5324
        %v5326 = vpop.f32.mrb[0].mxu0
        %5327 = vmatprep.mubr.f32.mxu0 %v5226
        %5328 = vmatmul.mubr.f32.gmra.mrb[0].mxu0 %v5177
        %v5329 = vpop.f32.mrb[0].mxu0
        %v5330 = vadd.f32 %v5202, %v5329
        %v5331 = vpop.f32.mrb[0].mxu0
        %5332 = vdwg.mxu0
        %v5333 = vmax.f32 %v5295, 0.0
        %v5334 = vmax.f32 %v5300, 0.0
        %v5335 = vmax.f32 %v5305, 0.0
        %v5336 = vmax.f32 %v5310, 0.0
        %v5337 = vmax.f32 %v5315, 0.0
        %v5338 = vmax.f32 %v5320, 0.0
        %v5339 = vmax.f32 %v5325, 0.0
        %v5340 = vmax.f32 %v5330, 0.0
        %vm5341 = vcmask 523264
        %5342 = vst.msk [vmem:[#allocation5] sm:$0xff] %vm5341, 0.0
        %vm5343 = vcmask 517120
        %5344 = vst.msk [vmem:[#allocation5 + $0x8] sm:$0x3] %vm5343, 0.0
        %5345 = vst.msk [vmem:[#allocation5 + $0x10] sm:$0xff] %vm5341, 0.0
        %5346 = vst.msk [vmem:[#allocation5 + $0x18] sm:$0x3] %vm5343, 0.0
        %5347 = vst.msk [vmem:[#allocation5 + $0x20] sm:$0xff] %vm5341, 0.0
        %5348 = vst.msk [vmem:[#allocation5 + $0x28] sm:$0x3] %vm5343, 0.0
        %5349 = vst.msk [vmem:[#allocation5 + $0x30] sm:$0xff] %vm5341, 0.0
        %5350 = vst.msk [vmem:[#allocation5 + $0x38] sm:$0x3] %vm5343, 0.0
        %5351 = vst.msk [vmem:[#allocation5 + $0x40] sm:$0xff] %vm5341, 0.0
        %5352 = vst.msk [vmem:[#allocation5 + $0x48] sm:$0x3] %vm5343, 0.0
        %5353 = vst.msk [vmem:[#allocation5 + $0x50] sm:$0xff] %vm5341, 0.0
        %5354 = vst.msk [vmem:[#allocation5 + $0x58] sm:$0x3] %vm5343, 0.0
        %5355 = vst.msk [vmem:[#allocation5 + $0x60] sm:$0xff] %vm5341, 0.0
        %5356 = vst.msk [vmem:[#allocation5 + $0x68] sm:$0x3] %vm5343, 0.0
        %5357 = vst.msk [vmem:[#allocation5 + $0x70] sm:$0xff] %vm5341, 0.0
        %5358 = vst.msk [vmem:[#allocation5 + $0x78] sm:$0x3] %vm5343, 0.0
        %5359 = vst.msk [vmem:[#allocation5 + $0x80] sm:$0xff] %vm5341, 0.0
        %5360 = vst.msk [vmem:[#allocation5 + $0x88] sm:$0x3] %vm5343, 0.0
        %5361 = vst.msk [vmem:[#allocation5 + $0x90] sm:$0xff] %vm5341, 0.0
        %5362 = vst.msk [vmem:[#allocation5 + $0x98] sm:$0x3] %vm5343, 0.0
        %s5363 = scalar_lea.vmem [#allocation5], 16
        %5364 = vst.msk [vmem:[%s5363 + $0x1] sm:$0xff] %vm5341, %v5333
        %5365 = vst.msk [vmem:[%s5363 + $0x11] sm:$0xff] %vm5341, %v5334
        %5366 = vst.msk [vmem:[%s5363 + $0x21] sm:$0xff] %vm5341, %v5335
        %5367 = vst.msk [vmem:[%s5363 + $0x31] sm:$0xff] %vm5341, %v5336
        %5368 = vst.msk [vmem:[%s5363 + $0x41] sm:$0xff] %vm5341, %v5337
        %5369 = vst.msk [vmem:[%s5363 + $0x51] sm:$0xff] %vm5341, %v5338
        %5370 = vst.msk [vmem:[%s5363 + $0x61] sm:$0xff] %vm5341, %v5339
        %5371 = vst.msk [vmem:[%s5363 + $0x71] sm:$0xff] %vm5341, %v5340
        %v5372 = vld [vmem:[#allocation5] sm:$0xff]
        %v5373 = vld [vmem:[#allocation5 + $0x10] sm:$0xff]
        %v5374 = vld [vmem:[#allocation5 + $0x20] sm:$0xff]
        %v5375 = vld [vmem:[#allocation5 + $0x30] sm:$0xff]
        %v5376 = vld [vmem:[#allocation5 + $0x40] sm:$0xff]
        %v5377 = vld [vmem:[#allocation5 + $0x50] sm:$0xff]
        %v5378 = vld [vmem:[#allocation5 + $0x60] sm:$0xff]
        %v5379 = vld [vmem:[#allocation5 + $0x70] sm:$0xff]
        %5380 = vst.msk [vmem:[#allocation10] sm:$0xff] %vm5341, %v5372
        %5381 = vst.msk [vmem:[#allocation10 + $0x28] sm:$0xff] %vm5341, %v5373
        %5382 = vst.msk [vmem:[#allocation10 + $0x50] sm:$0xff] %vm5341, %v5374
        %5383 = vst.msk [vmem:[#allocation10 + $0x78] sm:$0xff] %vm5341, %v5375
        %5384 = vst.msk [vmem:[#allocation10 + $0xa0] sm:$0xff] %vm5341, %v5376
        %5385 = vst.msk [vmem:[#allocation10 + $0xc8] sm:$0xff] %vm5341, %v5377
        %5386 = vst.msk [vmem:[#allocation10 + $0xf0] sm:$0xff] %vm5341, %v5378
        %5387 = vst.msk [vmem:[#allocation10 + $0x118] sm:$0xff] %vm5341, %v5379
        %v5388 = vld [vmem:[#allocation5 + $0x1] sm:$0xff]
        %v5389 = vld [vmem:[#allocation5 + $0x11] sm:$0xff]
        %v5390 = vld [vmem:[#allocation5 + $0x21] sm:$0xff]
        %v5391 = vld [vmem:[#allocation5 + $0x31] sm:$0xff]
        %v5392 = vld [vmem:[#allocation5 + $0x41] sm:$0xff]
        %v5393 = vld [vmem:[#allocation5 + $0x51] sm:$0xff]
        %v5394 = vld [vmem:[#allocation5 + $0x61] sm:$0xff]
        %v5395 = vld [vmem:[#allocation5 + $0x71] sm:$0xff]
        %5404 = vrot.lane.b32.xlu0 %v5388, 64
        %v5405 = vpop.permute.xlu0 %5404
        %5406 = vrot.lane.b32.xlu0 %v5389, 64
        %v5407 = vpop.permute.xlu0 %5406
        %5408 = vrot.lane.b32.xlu0 %v5390, 64
        %v5409 = vpop.permute.xlu0 %5408
        %5410 = vrot.lane.b32.xlu0 %v5391, 64
        %v5411 = vpop.permute.xlu0 %5410
        %5412 = vrot.lane.b32.xlu0 %v5392, 64
        %v5413 = vpop.permute.xlu0 %5412
        %5414 = vrot.lane.b32.xlu0 %v5393, 64
        %v5415 = vpop.permute.xlu0 %5414
        %5416 = vrot.lane.b32.xlu0 %v5394, 64
        %v5417 = vpop.permute.xlu0 %5416
        %5418 = vrot.lane.b32.xlu0 %v5395, 64
        %v5419 = vpop.permute.xlu0 %5418
        %vm5428 = vcmask 1048064
        %5429 = vst.msk [vmem:[#allocation10] sm:$0xff] %vm5428, %v5405
        %5430 = vst.msk [vmem:[#allocation10 + $0x28] sm:$0xff] %vm5428, %v5407
        %5431 = vst.msk [vmem:[#allocation10 + $0x50] sm:$0xff] %vm5428, %v5409
        %5432 = vst.msk [vmem:[#allocation10 + $0x78] sm:$0xff] %vm5428, %v5411
        %5433 = vst.msk [vmem:[#allocation10 + $0xa0] sm:$0xff] %vm5428, %v5413
        %5434 = vst.msk [vmem:[#allocation10 + $0xc8] sm:$0xff] %vm5428, %v5415
        %5435 = vst.msk [vmem:[#allocation10 + $0xf0] sm:$0xff] %vm5428, %v5417
        %5436 = vst.msk [vmem:[#allocation10 + $0x118] sm:$0xff] %vm5428, %v5419
        %v5437 = vld [vmem:[#allocation5 + $0x2] sm:$0xff]
        %v5438 = vld [vmem:[#allocation5 + $0x12] sm:$0xff]
        %v5439 = vld [vmem:[#allocation5 + $0x22] sm:$0xff]
        %v5440 = vld [vmem:[#allocation5 + $0x32] sm:$0xff]
        %v5441 = vld [vmem:[#allocation5 + $0x42] sm:$0xff]
        %v5442 = vld [vmem:[#allocation5 + $0x52] sm:$0xff]
        %v5443 = vld [vmem:[#allocation5 + $0x62] sm:$0xff]
        %v5444 = vld [vmem:[#allocation5 + $0x72] sm:$0xff]
        %5445 = vst.msk [vmem:[#allocation10 + $0x8] sm:$0xff] %vm5341, %v5437
        %5446 = vst.msk [vmem:[#allocation10 + $0x30] sm:$0xff] %vm5341, %v5438
        %5447 = vst.msk [vmem:[#allocation10 + $0x58] sm:$0xff] %vm5341, %v5439
        %5448 = vst.msk [vmem:[#allocation10 + $0x80] sm:$0xff] %vm5341, %v5440
        %5449 = vst.msk [vmem:[#allocation10 + $0xa8] sm:$0xff] %vm5341, %v5441
        %5450 = vst.msk [vmem:[#allocation10 + $0xd0] sm:$0xff] %vm5341, %v5442
        %5451 = vst.msk [vmem:[#allocation10 + $0xf8] sm:$0xff] %vm5341, %v5443
        %5452 = vst.msk [vmem:[#allocation10 + $0x120] sm:$0xff] %vm5341, %v5444
        %v5453 = vld [vmem:[%s5363] sm:$0xff]
        %v5454 = vld [vmem:[%s5363 + $0x10] sm:$0xff]
        %v5455 = vld [vmem:[%s5363 + $0x20] sm:$0xff]
        %v5456 = vld [vmem:[%s5363 + $0x30] sm:$0xff]
        %v5457 = vld [vmem:[%s5363 + $0x40] sm:$0xff]
        %v5458 = vld [vmem:[%s5363 + $0x50] sm:$0xff]
        %v5459 = vld [vmem:[%s5363 + $0x60] sm:$0xff]
        %v5460 = vld [vmem:[%s5363 + $0x70] sm:$0xff]
        %5469 = vrot.lane.b32.xlu0 %v5453, 64
        %v5470 = vpop.permute.xlu0 %5469
        %5471 = vrot.lane.b32.xlu0 %v5454, 64
        %v5472 = vpop.permute.xlu0 %5471
        %5473 = vrot.lane.b32.xlu0 %v5455, 64
        %v5474 = vpop.permute.xlu0 %5473
        %5475 = vrot.lane.b32.xlu0 %v5456, 64
        %v5476 = vpop.permute.xlu0 %5475
        %5477 = vrot.lane.b32.xlu0 %v5457, 64
        %v5478 = vpop.permute.xlu0 %5477
        %5479 = vrot.lane.b32.xlu0 %v5458, 64
        %v5480 = vpop.permute.xlu0 %5479
        %5481 = vrot.lane.b32.xlu0 %v5459, 64
        %v5482 = vpop.permute.xlu0 %5481
        %5483 = vrot.lane.b32.xlu0 %v5460, 64
        %v5484 = vpop.permute.xlu0 %5483
        %5493 = vst.msk [vmem:[#allocation10 + $0x8] sm:$0xff] %vm5428, %v5470
        %5494 = vst.msk [vmem:[#allocation10 + $0x30] sm:$0xff] %vm5428, %v5472
        %5495 = vst.msk [vmem:[#allocation10 + $0x58] sm:$0xff] %vm5428, %v5474
        %5496 = vst.msk [vmem:[#allocation10 + $0x80] sm:$0xff] %vm5428, %v5476
        %5497 = vst.msk [vmem:[#allocation10 + $0xa8] sm:$0xff] %vm5428, %v5478
        %5498 = vst.msk [vmem:[#allocation10 + $0xd0] sm:$0xff] %vm5428, %v5480
        %5499 = vst.msk [vmem:[#allocation10 + $0xf8] sm:$0xff] %vm5428, %v5482
        %5500 = vst.msk [vmem:[#allocation10 + $0x120] sm:$0xff] %vm5428, %v5484
        %v5501 = vld [vmem:[%s5363 + $0x1] sm:$0xff]
        %v5502 = vld [vmem:[%s5363 + $0x11] sm:$0xff]
        %v5503 = vld [vmem:[%s5363 + $0x21] sm:$0xff]
        %v5504 = vld [vmem:[%s5363 + $0x31] sm:$0xff]
        %v5505 = vld [vmem:[%s5363 + $0x41] sm:$0xff]
        %v5506 = vld [vmem:[%s5363 + $0x51] sm:$0xff]
        %v5507 = vld [vmem:[%s5363 + $0x61] sm:$0xff]
        %v5508 = vld [vmem:[%s5363 + $0x71] sm:$0xff]
        %5509 = vst.msk [vmem:[#allocation10 + $0x10] sm:$0xff] %vm5341, %v5501
        %5510 = vst.msk [vmem:[#allocation10 + $0x38] sm:$0xff] %vm5341, %v5502
        %5511 = vst.msk [vmem:[#allocation10 + $0x60] sm:$0xff] %vm5341, %v5503
        %5512 = vst.msk [vmem:[#allocation10 + $0x88] sm:$0xff] %vm5341, %v5504
        %5513 = vst.msk [vmem:[#allocation10 + $0xb0] sm:$0xff] %vm5341, %v5505
        %5514 = vst.msk [vmem:[#allocation10 + $0xd8] sm:$0xff] %vm5341, %v5506
        %5515 = vst.msk [vmem:[#allocation10 + $0x100] sm:$0xff] %vm5341, %v5507
        %5516 = vst.msk [vmem:[#allocation10 + $0x128] sm:$0xff] %vm5341, %v5508
        %v5517 = vld [vmem:[%s5363 + $0x2] sm:$0xff]
        %v5518 = vld [vmem:[%s5363 + $0x12] sm:$0xff]
        %v5519 = vld [vmem:[%s5363 + $0x22] sm:$0xff]
        %v5520 = vld [vmem:[%s5363 + $0x32] sm:$0xff]
        %v5521 = vld [vmem:[%s5363 + $0x42] sm:$0xff]
        %v5522 = vld [vmem:[%s5363 + $0x52] sm:$0xff]
        %v5523 = vld [vmem:[%s5363 + $0x62] sm:$0xff]
        %v5524 = vld [vmem:[%s5363 + $0x72] sm:$0xff]
        %5533 = vrot.lane.b32.xlu0 %v5517, 64
        %v5534 = vpop.permute.xlu0 %5533
        %5535 = vrot.lane.b32.xlu0 %v5518, 64
        %v5536 = vpop.permute.xlu0 %5535
        %5537 = vrot.lane.b32.xlu0 %v5519, 64
        %v5538 = vpop.permute.xlu0 %5537
        %5539 = vrot.lane.b32.xlu0 %v5520, 64
        %v5540 = vpop.permute.xlu0 %5539
        %5541 = vrot.lane.b32.xlu0 %v5521, 64
        %v5542 = vpop.permute.xlu0 %5541
        %5543 = vrot.lane.b32.xlu0 %v5522, 64
        %v5544 = vpop.permute.xlu0 %5543
        %5545 = vrot.lane.b32.xlu0 %v5523, 64
        %v5546 = vpop.permute.xlu0 %5545
        %5547 = vrot.lane.b32.xlu0 %v5524, 64
        %v5548 = vpop.permute.xlu0 %5547
        %5557 = vst.msk [vmem:[#allocation10 + $0x10] sm:$0xff] %vm5428, %v5534
        %5558 = vst.msk [vmem:[#allocation10 + $0x38] sm:$0xff] %vm5428, %v5536
        %5559 = vst.msk [vmem:[#allocation10 + $0x60] sm:$0xff] %vm5428, %v5538
        %5560 = vst.msk [vmem:[#allocation10 + $0x88] sm:$0xff] %vm5428, %v5540
        %5561 = vst.msk [vmem:[#allocation10 + $0xb0] sm:$0xff] %vm5428, %v5542
        %5562 = vst.msk [vmem:[#allocation10 + $0xd8] sm:$0xff] %vm5428, %v5544
        %5563 = vst.msk [vmem:[#allocation10 + $0x100] sm:$0xff] %vm5428, %v5546
        %5564 = vst.msk [vmem:[#allocation10 + $0x128] sm:$0xff] %vm5428, %v5548
        %s5565 = scalar_lea.vmem [#allocation5], 32
        %v5566 = vld [vmem:[%s5565] sm:$0xff]
        %v5567 = vld [vmem:[%s5565 + $0x10] sm:$0xff]
        %v5568 = vld [vmem:[%s5565 + $0x20] sm:$0xff]
        %v5569 = vld [vmem:[%s5565 + $0x30] sm:$0xff]
        %v5570 = vld [vmem:[%s5565 + $0x40] sm:$0xff]
        %v5571 = vld [vmem:[%s5565 + $0x50] sm:$0xff]
        %v5572 = vld [vmem:[%s5565 + $0x60] sm:$0xff]
        %v5573 = vld [vmem:[%s5565 + $0x70] sm:$0xff]
        %5574 = vst.msk [vmem:[#allocation10 + $0x18] sm:$0xff] %vm5341, %v5566
        %5575 = vst.msk [vmem:[#allocation10 + $0x40] sm:$0xff] %vm5341, %v5567
        %5576 = vst.msk [vmem:[#allocation10 + $0x68] sm:$0xff] %vm5341, %v5568
        %5577 = vst.msk [vmem:[#allocation10 + $0x90] sm:$0xff] %vm5341, %v5569
        %5578 = vst.msk [vmem:[#allocation10 + $0xb8] sm:$0xff] %vm5341, %v5570
        %5579 = vst.msk [vmem:[#allocation10 + $0xe0] sm:$0xff] %vm5341, %v5571
        %5580 = vst.msk [vmem:[#allocation10 + $0x108] sm:$0xff] %vm5341, %v5572
        %5581 = vst.msk [vmem:[#allocation10 + $0x130] sm:$0xff] %vm5341, %v5573
        %v5582 = vld [vmem:[%s5565 + $0x1] sm:$0xff]
        %v5583 = vld [vmem:[%s5565 + $0x11] sm:$0xff]
        %v5584 = vld [vmem:[%s5565 + $0x21] sm:$0xff]
        %v5585 = vld [vmem:[%s5565 + $0x31] sm:$0xff]
        %v5586 = vld [vmem:[%s5565 + $0x41] sm:$0xff]
        %v5587 = vld [vmem:[%s5565 + $0x51] sm:$0xff]
        %v5588 = vld [vmem:[%s5565 + $0x61] sm:$0xff]
        %v5589 = vld [vmem:[%s5565 + $0x71] sm:$0xff]
        %5598 = vrot.lane.b32.xlu0 %v5582, 64
        %v5599 = vpop.permute.xlu0 %5598
        %5600 = vrot.lane.b32.xlu0 %v5583, 64
        %v5601 = vpop.permute.xlu0 %5600
        %5602 = vrot.lane.b32.xlu0 %v5584, 64
        %v5603 = vpop.permute.xlu0 %5602
        %5604 = vrot.lane.b32.xlu0 %v5585, 64
        %v5605 = vpop.permute.xlu0 %5604
        %5606 = vrot.lane.b32.xlu0 %v5586, 64
        %v5607 = vpop.permute.xlu0 %5606
        %5608 = vrot.lane.b32.xlu0 %v5587, 64
        %v5609 = vpop.permute.xlu0 %5608
        %5610 = vrot.lane.b32.xlu0 %v5588, 64
        %v5611 = vpop.permute.xlu0 %5610
        %5612 = vrot.lane.b32.xlu0 %v5589, 64
        %v5613 = vpop.permute.xlu0 %5612
        %5622 = vst.msk [vmem:[#allocation10 + $0x18] sm:$0xff] %vm5428, %v5599
        %5623 = vst.msk [vmem:[#allocation10 + $0x40] sm:$0xff] %vm5428, %v5601
        %5624 = vst.msk [vmem:[#allocation10 + $0x68] sm:$0xff] %vm5428, %v5603
        %5625 = vst.msk [vmem:[#allocation10 + $0x90] sm:$0xff] %vm5428, %v5605
        %5626 = vst.msk [vmem:[#allocation10 + $0xb8] sm:$0xff] %vm5428, %v5607
        %5627 = vst.msk [vmem:[#allocation10 + $0xe0] sm:$0xff] %vm5428, %v5609
        %5628 = vst.msk [vmem:[#allocation10 + $0x108] sm:$0xff] %vm5428, %v5611
        %5629 = vst.msk [vmem:[#allocation10 + $0x130] sm:$0xff] %vm5428, %v5613
        %v5630 = vld [vmem:[%s5565 + $0x2] sm:$0xff]
        %v5631 = vld [vmem:[%s5565 + $0x12] sm:$0xff]
        %v5632 = vld [vmem:[%s5565 + $0x22] sm:$0xff]
        %v5633 = vld [vmem:[%s5565 + $0x32] sm:$0xff]
        %v5634 = vld [vmem:[%s5565 + $0x42] sm:$0xff]
        %v5635 = vld [vmem:[%s5565 + $0x52] sm:$0xff]
        %v5636 = vld [vmem:[%s5565 + $0x62] sm:$0xff]
        %v5637 = vld [vmem:[%s5565 + $0x72] sm:$0xff]
        %5638 = vst.msk [vmem:[#allocation10 + $0x20] sm:$0xff] %vm5341, %v5630
        %5639 = vst.msk [vmem:[#allocation10 + $0x48] sm:$0xff] %vm5341, %v5631
        %5640 = vst.msk [vmem:[#allocation10 + $0x70] sm:$0xff] %vm5341, %v5632
        %5641 = vst.msk [vmem:[#allocation10 + $0x98] sm:$0xff] %vm5341, %v5633
        %5642 = vst.msk [vmem:[#allocation10 + $0xc0] sm:$0xff] %vm5341, %v5634
        %5643 = vst.msk [vmem:[#allocation10 + $0xe8] sm:$0xff] %vm5341, %v5635
        %5644 = vst.msk [vmem:[#allocation10 + $0x110] sm:$0xff] %vm5341, %v5636
        %5645 = vst.msk [vmem:[#allocation10 + $0x138] sm:$0xff] %vm5341, %v5637
        %v5646 = vld [vmem:[#allocation10] sm:$0xff]
        %v5647 = vld [vmem:[#allocation10 + $0x8] sm:$0xff]
        %v5648 = vld [vmem:[#allocation10 + $0x10] sm:$0xff]
        %v5649 = vld [vmem:[#allocation10 + $0x18] sm:$0xff]
        %v5650 = vld [vmem:[#allocation10 + $0x20] sm:$0xff]
        %v5651 = vld [vmem:[#allocation10 + $0x28] sm:$0xff]
        %v5652 = vld [vmem:[#allocation10 + $0x30] sm:$0xff]
        %v5653 = vld [vmem:[#allocation10 + $0x38] sm:$0xff]
        %v5654 = vld [vmem:[#allocation10 + $0x40] sm:$0xff]
        %v5655 = vld [vmem:[#allocation10 + $0x48] sm:$0xff]
        %v5656 = vld [vmem:[#allocation10 + $0x50] sm:$0xff]
        %v5657 = vld [vmem:[#allocation10 + $0x58] sm:$0xff]
        %v5658 = vld [vmem:[#allocation10 + $0x60] sm:$0xff]
        %v5659 = vld [vmem:[#allocation10 + $0x68] sm:$0xff]
        %v5660 = vld [vmem:[#allocation10 + $0x70] sm:$0xff]
        %v5661 = vld [vmem:[#allocation10 + $0x78] sm:$0xff]
        %v5662 = vld [vmem:[#allocation10 + $0x80] sm:$0xff]
        %v5663 = vld [vmem:[#allocation10 + $0x88] sm:$0xff]
        %v5664 = vld [vmem:[#allocation10 + $0x90] sm:$0xff]
        %v5665 = vld [vmem:[#allocation10 + $0x98] sm:$0xff]
        %v5666 = vld [vmem:[#allocation10 + $0xa0] sm:$0xff]
        %v5667 = vld [vmem:[#allocation10 + $0xa8] sm:$0xff]
        %v5668 = vld [vmem:[#allocation10 + $0xb0] sm:$0xff]
        %v5669 = vld [vmem:[#allocation10 + $0xb8] sm:$0xff]
        %v5670 = vld [vmem:[#allocation10 + $0xc0] sm:$0xff]
        %v5671 = vld [vmem:[#allocation10 + $0xc8] sm:$0xff]
        %v5672 = vld [vmem:[#allocation10 + $0xd0] sm:$0xff]
        %v5673 = vld [vmem:[#allocation10 + $0xd8] sm:$0xff]
        %v5674 = vld [vmem:[#allocation10 + $0xe0] sm:$0xff]
        %v5675 = vld [vmem:[#allocation10 + $0xe8] sm:$0xff]
        %v5676 = vld [vmem:[#allocation10 + $0xf0] sm:$0xff]
        %v5677 = vld [vmem:[#allocation10 + $0xf8] sm:$0xff]
        %v5678 = vld [vmem:[#allocation10 + $0x100] sm:$0xff]
        %v5679 = vld [vmem:[#allocation10 + $0x108] sm:$0xff]
        %v5680 = vld [vmem:[#allocation10 + $0x110] sm:$0xff]
        %v5681 = vld [vmem:[#allocation10 + $0x118] sm:$0xff]
        %v5682 = vld [vmem:[#allocation10 + $0x120] sm:$0xff]
        %v5683 = vld [vmem:[#allocation10 + $0x128] sm:$0xff]
        %v5684 = vld [vmem:[#allocation10 + $0x130] sm:$0xff]
        %v5685 = vld [vmem:[#allocation10 + $0x138] sm:$0xff]
        %v5686 = vld [vmem:[%s7] sm:$0xff]
        %v5687 = vld [vmem:[%s7 + $0x8] sm:$0xff]
        %v5688 = vld [vmem:[%s7 + $0x10] sm:$0xff]
        %v5689 = vld [vmem:[%s7 + $0x18] sm:$0xff]
        %v5690 = vld [vmem:[%s7 + $0x20] sm:$0xff]
        %v5691 = vld [vmem:[%s7 + $0x28] sm:$0xff]
        %v5692 = vld [vmem:[%s7 + $0x30] sm:$0xff]
        %v5693 = vld [vmem:[%s7 + $0x38] sm:$0xff]
        %v5694 = vld [vmem:[%s7 + $0x40] sm:$0xff]
        %v5695 = vld [vmem:[%s7 + $0x48] sm:$0xff]
        %v5696 = vld [vmem:[%s7 + $0x50] sm:$0xff]
        %v5697 = vld [vmem:[%s7 + $0x58] sm:$0xff]
        %v5698 = vld [vmem:[%s7 + $0x60] sm:$0xff]
        %v5699 = vld [vmem:[%s7 + $0x68] sm:$0xff]
        %v5700 = vld [vmem:[%s7 + $0x70] sm:$0xff]
        %v5701 = vld [vmem:[%s7 + $0x78] sm:$0xff]
        %v5702 = vld [vmem:[%s7 + $0x80] sm:$0xff]
        %v5703 = vld [vmem:[%s7 + $0x88] sm:$0xff]
        %v5704 = vld [vmem:[%s7 + $0x90] sm:$0xff]
        %v5705 = vld [vmem:[%s7 + $0x98] sm:$0xff]
        %v5706 = vld [vmem:[%s7 + $0xa0] sm:$0xff]
        %v5707 = vld [vmem:[%s7 + $0xa8] sm:$0xff]
        %v5708 = vld [vmem:[%s7 + $0xb0] sm:$0xff]
        %v5709 = vld [vmem:[%s7 + $0xb8] sm:$0xff]
        %v5710 = vld [vmem:[%s7 + $0xc0] sm:$0xff]
        %v5711 = vld [vmem:[%s7 + $0xc8] sm:$0xff]
        %v5712 = vld [vmem:[%s7 + $0xd0] sm:$0xff]
        %v5713 = vld [vmem:[%s7 + $0xd8] sm:$0xff]
        %v5714 = vld [vmem:[%s7 + $0xe0] sm:$0xff]
        %v5715 = vld [vmem:[%s7 + $0xe8] sm:$0xff]
        %v5716 = vld [vmem:[%s7 + $0xf0] sm:$0xff]
        %v5717 = vld [vmem:[%s7 + $0xf8] sm:$0xff]
        %v5718 = vld [vmem:[%s7 + $0x100] sm:$0xff]
        %v5719 = vld [vmem:[%s7 + $0x108] sm:$0xff]
        %v5720 = vld [vmem:[%s7 + $0x110] sm:$0xff]
        %v5721 = vld [vmem:[%s7 + $0x118] sm:$0xff]
        %v5722 = vld [vmem:[%s7 + $0x120] sm:$0xff]
        %v5723 = vld [vmem:[%s7 + $0x128] sm:$0xff]
        %v5724 = vld [vmem:[%s7 + $0x130] sm:$0xff]
        %v5725 = vld [vmem:[%s7 + $0x138] sm:$0xff]
        %v5726 = vld [vmem:[%s7 + $0x140] sm:$0xff]
        %v5727 = vld [vmem:[%s7 + $0x148] sm:$0xff]
        %v5728 = vld [vmem:[%s7 + $0x150] sm:$0xff]
        %v5729 = vld [vmem:[%s7 + $0x158] sm:$0xff]
        %v5730 = vld [vmem:[%s7 + $0x160] sm:$0xff]
        %v5731 = vld [vmem:[%s7 + $0x168] sm:$0xff]
        %v5732 = vld [vmem:[%s7 + $0x170] sm:$0xff]
        %v5733 = vld [vmem:[%s7 + $0x178] sm:$0xff]
        %v5734 = vld [vmem:[%s7 + $0x180] sm:$0xff]
        %v5735 = vld [vmem:[%s7 + $0x188] sm:$0xff]
        %v5736 = vld [vmem:[%s7 + $0x190] sm:$0xff]
        %v5737 = vld [vmem:[%s7 + $0x198] sm:$0xff]
        %v5738 = vld [vmem:[%s7 + $0x1a0] sm:$0xff]
        %v5739 = vld [vmem:[%s7 + $0x1a8] sm:$0xff]
        %v5740 = vld [vmem:[%s7 + $0x1b0] sm:$0xff]
        %v5741 = vld [vmem:[%s7 + $0x1b8] sm:$0xff]
        %v5742 = vld [vmem:[%s7 + $0x1c0] sm:$0xff]
        %v5743 = vld [vmem:[%s7 + $0x1c8] sm:$0xff]
        %v5744 = vld [vmem:[%s7 + $0x1d0] sm:$0xff]
        %v5745 = vld [vmem:[%s7 + $0x1d8] sm:$0xff]
        %v5746 = vld [vmem:[%s7 + $0x1e0] sm:$0xff]
        %v5747 = vld [vmem:[%s7 + $0x1e8] sm:$0xff]
        %v5748 = vld [vmem:[%s7 + $0x1f0] sm:$0xff]
        %v5749 = vld [vmem:[%s7 + $0x1f8] sm:$0xff]
        %v5750 = vld [vmem:[%s7 + $0x200] sm:$0xff]
        %v5751 = vld [vmem:[%s7 + $0x208] sm:$0xff]
        %v5752 = vld [vmem:[%s7 + $0x210] sm:$0xff]
        %v5753 = vld [vmem:[%s7 + $0x218] sm:$0xff]
        %v5754 = vld [vmem:[%s7 + $0x220] sm:$0xff]
        %v5755 = vld [vmem:[%s7 + $0x228] sm:$0xff]
        %v5756 = vld [vmem:[%s7 + $0x230] sm:$0xff]
        %v5757 = vld [vmem:[%s7 + $0x238] sm:$0xff]
        %v5758 = vld [vmem:[%s8] sm:$0x1]
        %v5760 = vlaneseq
        %v5761 = vshrl.u32 %v5760, 7
        %v5762 = vsub.s32 0, %v5761
        %v5763 = vrot.slane %v5758, %v5762
        %v5766 = vsel %vm5341, %v5650, 0
        %v5769 = vsel %vm5341, %v5655, 0
        %v5772 = vsel %vm5341, %v5660, 0
        %v5775 = vsel %vm5341, %v5665, 0
        %v5778 = vsel %vm5341, %v5670, 0
        %v5781 = vsel %vm5341, %v5675, 0
        %v5784 = vsel %vm5341, %v5680, 0
        %v5787 = vsel %vm5341, %v5685, 0
        %5789 = vmatprep.subr.mxu0 0.0
        %5790 = vmatpush1.msra.mxu0 %v5686
        %5791 = vmatprep.subr.mxu0 0.0
        %5792 = vmatpush1.msra.mxu0 %v5687
        %5793 = vmatprep.subr.mxu0 0.0
        %5794 = vmatpush1.msra.mxu0 %v5688
        %5795 = vmatprep.subr.mxu0 0.0
        %5796 = vmatpush1.msra.mxu0 %v5689
        %5797 = vmatprep.subr.mxu0 0.0
        %5798 = vmatpush1.msra.mxu0 %v5690
        %5799 = vmatprep.subr.mxu0 0.0
        %5800 = vmatpush1.msra.mxu0 %v5691
        %5801 = vmatprep.subr.mxu0 0.0
        %5802 = vmatpush1.msra.mxu0 %v5692
        %5803 = vmatprep.subr.mxu0 0.0
        %5804 = vmatpush1.msra.mxu0 %v5693
        %5805 = vmatprep.subr.mxu0 0.0
        %5806 = vmatpush1.msra.mxu0 %v5694
        %5807 = vmatprep.subr.mxu0 0.0
        %5808 = vmatpush1.msra.mxu0 %v5695
        %5809 = vmatprep.subr.mxu0 0.0
        %5810 = vmatpush1.msra.mxu0 %v5696
        %5811 = vmatprep.subr.mxu0 0.0
        %5812 = vmatpush1.msra.mxu0 %v5697
        %5813 = vmatprep.subr.mxu0 0.0
        %5814 = vmatpush1.msra.mxu0 %v5698
        %5815 = vmatprep.subr.mxu0 0.0
        %5816 = vmatpush1.msra.mxu0 %v5699
        %5817 = vmatprep.subr.mxu0 0.0
        %5818 = vmatpush1.msra.mxu0 %v5700
        %5819 = vmatprep.subr.mxu0 0.0
        %5820 = vmatpush1.msra.mxu0 %v5701
        %5821 = vmatprep.subr.mxu0 0.0
        %5822 = vmatpush1.msra.mxu0 %v5702
        %5823 = vmatprep.subr.mxu0 0.0
        %5824 = vmatpush1.msra.mxu0 %v5703
        %5825 = vmatprep.subr.mxu0 0.0
        %5826 = vmatpush1.msra.mxu0 %v5704
        %5827 = vmatprep.subr.mxu0 0.0
        %5828 = vmatpush1.msra.mxu0 %v5705
        %5829 = vmatprep.subr.mxu0 0.0
        %5830 = vmatpush1.msra.mxu0 %v5706
        %5831 = vmatprep.subr.mxu0 0.0
        %5832 = vmatpush1.msra.mxu0 %v5707
        %5833 = vmatprep.subr.mxu0 0.0
        %5834 = vmatpush1.msra.mxu0 %v5708
        %5835 = vmatprep.subr.mxu0 0.0
        %5836 = vmatpush1.msra.mxu0 %v5709
        %5837 = vmatprep.subr.mxu0 0.0
        %5838 = vmatpush1.msra.mxu0 %v5710
        %5839 = vmatprep.subr.mxu0 0.0
        %5840 = vmatpush1.msra.mxu0 %v5711
        %5841 = vmatprep.subr.mxu0 0.0
        %5842 = vmatpush1.msra.mxu0 %v5712
        %5843 = vmatprep.subr.mxu0 0.0
        %5844 = vmatpush1.msra.mxu0 %v5713
        %5845 = vmatprep.subr.mxu0 0.0
        %5846 = vmatpush1.msra.mxu0 %v5714
        %5847 = vmatprep.subr.mxu0 0.0
        %5848 = vmatpush1.msra.mxu0 %v5715
        %5849 = vmatprep.subr.mxu0 0.0
        %5850 = vmatpush1.msra.mxu0 %v5716
        %5851 = vmatprep.subr.mxu0 0.0
        %5852 = vmatpush1.msra.mxu0 %v5717
        %5853 = vmatprep.mubr.f32.mxu0 %v5647
        %5854 = vmatmul.mubr.f32.gmra.mrb[0].mxu0 %v5646
        %v5855 = vpop.f32.mrb[0].mxu0
        %v5856 = vadd.f32 %v5763, %v5855
        %v5857 = vpop.f32.mrb[0].mxu0
        %5858 = vmatprep.mubr.f32.mxu0 %v5652
        %5859 = vmatmul.mubr.f32.gmra.mrb[0].mxu0 %v5651
        %v5860 = vpop.f32.mrb[0].mxu0
        %v5861 = vadd.f32 %v5763, %v5860
        %v5862 = vpop.f32.mrb[0].mxu0
        %5863 = vmatprep.mubr.f32.mxu0 %v5657
        %5864 = vmatmul.mubr.f32.gmra.mrb[0].mxu0 %v5656
        %v5865 = vpop.f32.mrb[0].mxu0
        %v5866 = vadd.f32 %v5763, %v5865
        %v5867 = vpop.f32.mrb[0].mxu0
        %5868 = vmatprep.mubr.f32.mxu0 %v5662
        %5869 = vmatmul.mubr.f32.gmra.mrb[0].mxu0 %v5661
        %v5870 = vpop.f32.mrb[0].mxu0
        %v5871 = vadd.f32 %v5763, %v5870
        %v5872 = vpop.f32.mrb[0].mxu0
        %5873 = vmatprep.mubr.f32.mxu0 %v5667
        %5874 = vmatmul.mubr.f32.gmra.mrb[0].mxu0 %v5666
        %v5875 = vpop.f32.mrb[0].mxu0
        %v5876 = vadd.f32 %v5763, %v5875
        %v5877 = vpop.f32.mrb[0].mxu0
        %5878 = vmatprep.mubr.f32.mxu0 %v5672
        %5879 = vmatmul.mubr.f32.gmra.mrb[0].mxu0 %v5671
        %v5880 = vpop.f32.mrb[0].mxu0
        %v5881 = vadd.f32 %v5763, %v5880
        %v5882 = vpop.f32.mrb[0].mxu0
        %5883 = vmatprep.mubr.f32.mxu0 %v5677
        %5884 = vmatmul.mubr.f32.gmra.mrb[0].mxu0 %v5676
        %v5885 = vpop.f32.mrb[0].mxu0
        %v5886 = vadd.f32 %v5763, %v5885
        %v5887 = vpop.f32.mrb[0].mxu0
        %5888 = vmatprep.mubr.f32.mxu0 %v5682
        %5889 = vmatmul.mubr.f32.gmra.mrb[0].mxu0 %v5681
        %v5890 = vpop.f32.mrb[0].mxu0
        %v5891 = vadd.f32 %v5763, %v5890
        %v5892 = vpop.f32.mrb[0].mxu0
        %5893 = vdwg.mxu0
        %5894 = vmatprep.subr.mxu0 0.0
        %5895 = vmatpush1.msra.mxu0 %v5718
        %5896 = vmatprep.subr.mxu0 0.0
        %5897 = vmatpush1.msra.mxu0 %v5719
        %5898 = vmatprep.subr.mxu0 0.0
        %5899 = vmatpush1.msra.mxu0 %v5720
        %5900 = vmatprep.subr.mxu0 0.0
        %5901 = vmatpush1.msra.mxu0 %v5721
        %5902 = vmatprep.subr.mxu0 0.0
        %5903 = vmatpush1.msra.mxu0 %v5722
        %5904 = vmatprep.subr.mxu0 0.0
        %5905 = vmatpush1.msra.mxu0 %v5723
        %5906 = vmatprep.subr.mxu0 0.0
        %5907 = vmatpush1.msra.mxu0 %v5724
        %5908 = vmatprep.subr.mxu0 0.0
        %5909 = vmatpush1.msra.mxu0 %v5725
        %5910 = vmatprep.subr.mxu0 0.0
        %5911 = vmatpush1.msra.mxu0 %v5726
        %5912 = vmatprep.subr.mxu0 0.0
        %5913 = vmatpush1.msra.mxu0 %v5727
        %5914 = vmatprep.subr.mxu0 0.0
        %5915 = vmatpush1.msra.mxu0 %v5728
        %5916 = vmatprep.subr.mxu0 0.0
        %5917 = vmatpush1.msra.mxu0 %v5729
        %5918 = vmatprep.subr.mxu0 0.0
        %5919 = vmatpush1.msra.mxu0 %v5730
        %5920 = vmatprep.subr.mxu0 0.0
        %5921 = vmatpush1.msra.mxu0 %v5731
        %5922 = vmatprep.subr.mxu0 0.0
        %5923 = vmatpush1.msra.mxu0 %v5732
        %5924 = vmatprep.subr.mxu0 0.0
        %5925 = vmatpush1.msra.mxu0 %v5733
        %5926 = vmatprep.subr.mxu0 0.0
        %5927 = vmatpush1.msra.mxu0 %v5734
        %5928 = vmatprep.subr.mxu0 0.0
        %5929 = vmatpush1.msra.mxu0 %v5735
        %5930 = vmatprep.subr.mxu0 0.0
        %5931 = vmatpush1.msra.mxu0 %v5736
        %5932 = vmatprep.subr.mxu0 0.0
        %5933 = vmatpush1.msra.mxu0 %v5737
        %5934 = vmatprep.subr.mxu0 0.0
        %5935 = vmatpush1.msra.mxu0 %v5738
        %5936 = vmatprep.subr.mxu0 0.0
        %5937 = vmatpush1.msra.mxu0 %v5739
        %5938 = vmatprep.subr.mxu0 0.0
        %5939 = vmatpush1.msra.mxu0 %v5740
        %5940 = vmatprep.subr.mxu0 0.0
        %5941 = vmatpush1.msra.mxu0 %v5741
        %5942 = vmatprep.subr.mxu0 0.0
        %5943 = vmatpush1.msra.mxu0 %v5742
        %5944 = vmatprep.subr.mxu0 0.0
        %5945 = vmatpush1.msra.mxu0 %v5743
        %5946 = vmatprep.subr.mxu0 0.0
        %5947 = vmatpush1.msra.mxu0 %v5744
        %5948 = vmatprep.subr.mxu0 0.0
        %5949 = vmatpush1.msra.mxu0 %v5745
        %5950 = vmatprep.subr.mxu0 0.0
        %5951 = vmatpush1.msra.mxu0 %v5746
        %5952 = vmatprep.subr.mxu0 0.0
        %5953 = vmatpush1.msra.mxu0 %v5747
        %5954 = vmatprep.subr.mxu0 0.0
        %5955 = vmatpush1.msra.mxu0 %v5748
        %5956 = vmatprep.subr.mxu0 0.0
        %5957 = vmatpush1.msra.mxu0 %v5749
        %5958 = vmatprep.mubr.f32.mxu0 %v5649
        %5959 = vmatmul.mubr.f32.gmra.mrb[0].mxu0 %v5648
        %v5960 = vpop.f32.mrb[0].mxu0
        %v5961 = vadd.f32 %v5856, %v5960
        %v5962 = vpop.f32.mrb[0].mxu0
        %5963 = vmatprep.mubr.f32.mxu0 %v5654
        %5964 = vmatmul.mubr.f32.gmra.mrb[0].mxu0 %v5653
        %v5965 = vpop.f32.mrb[0].mxu0
        %v5966 = vadd.f32 %v5861, %v5965
        %v5967 = vpop.f32.mrb[0].mxu0
        %5968 = vmatprep.mubr.f32.mxu0 %v5659
        %5969 = vmatmul.mubr.f32.gmra.mrb[0].mxu0 %v5658
        %v5970 = vpop.f32.mrb[0].mxu0
        %v5971 = vadd.f32 %v5866, %v5970
        %v5972 = vpop.f32.mrb[0].mxu0
        %5973 = vmatprep.mubr.f32.mxu0 %v5664
        %5974 = vmatmul.mubr.f32.gmra.mrb[0].mxu0 %v5663
        %v5975 = vpop.f32.mrb[0].mxu0
        %v5976 = vadd.f32 %v5871, %v5975
        %v5977 = vpop.f32.mrb[0].mxu0
        %5978 = vmatprep.mubr.f32.mxu0 %v5669
        %5979 = vmatmul.mubr.f32.gmra.mrb[0].mxu0 %v5668
        %v5980 = vpop.f32.mrb[0].mxu0
        %v5981 = vadd.f32 %v5876, %v5980
        %v5982 = vpop.f32.mrb[0].mxu0
        %5983 = vmatprep.mubr.f32.mxu0 %v5674
        %5984 = vmatmul.mubr.f32.gmra.mrb[0].mxu0 %v5673
        %v5985 = vpop.f32.mrb[0].mxu0
        %v5986 = vadd.f32 %v5881, %v5985
        %v5987 = vpop.f32.mrb[0].mxu0
        %5988 = vmatprep.mubr.f32.mxu0 %v5679
        %5989 = vmatmul.mubr.f32.gmra.mrb[0].mxu0 %v5678
        %v5990 = vpop.f32.mrb[0].mxu0
        %v5991 = vadd.f32 %v5886, %v5990
        %v5992 = vpop.f32.mrb[0].mxu0
        %5993 = vmatprep.mubr.f32.mxu0 %v5684
        %5994 = vmatmul.mubr.f32.gmra.mrb[0].mxu0 %v5683
        %v5995 = vpop.f32.mrb[0].mxu0
        %v5996 = vadd.f32 %v5891, %v5995
        %v5997 = vpop.f32.mrb[0].mxu0
        %5998 = vdwg.mxu0
        %5999 = vmatprep.subr.mxu0 0.0
        %6000 = vmatpush1.msra.mxu0 %v5750
        %6001 = vmatprep.subr.mxu0 0.0
        %6002 = vmatpush1.msra.mxu0 %v5751
        %6003 = vmatprep.subr.mxu0 0.0
        %6004 = vmatpush1.msra.mxu0 %v5752
        %6005 = vmatprep.subr.mxu0 0.0
        %6006 = vmatpush1.msra.mxu0 %v5753
        %6007 = vmatprep.subr.mxu0 0.0
        %6008 = vmatpush1.msra.mxu0 %v5754
        %6009 = vmatprep.subr.mxu0 0.0
        %6010 = vmatpush1.msra.mxu0 %v5755
        %6011 = vmatprep.subr.mxu0 0.0
        %6012 = vmatpush1.msra.mxu0 %v5756
        %6013 = vmatprep.subr.mxu0 0.0
        %6014 = vmatpush1.msra.mxu0 %v5757
        %6015 = vmatprep.subr.mxu0 0.0
        %6016 = vmatpush1.msra.mxu0 0.0
        %6017 = vmatprep.subr.mxu0 0.0
        %6018 = vmatpush1.msra.mxu0 0.0
        %6019 = vmatprep.subr.mxu0 0.0
        %6020 = vmatpush1.msra.mxu0 0.0
        %6021 = vmatprep.subr.mxu0 0.0
        %6022 = vmatpush1.msra.mxu0 0.0
        %6023 = vmatprep.subr.mxu0 0.0
        %6024 = vmatpush1.msra.mxu0 0.0
        %6025 = vmatprep.subr.mxu0 0.0
        %6026 = vmatpush1.msra.mxu0 0.0
        %6027 = vmatprep.subr.mxu0 0.0
        %6028 = vmatpush1.msra.mxu0 0.0
        %6029 = vmatprep.subr.mxu0 0.0
        %6030 = vmatpush1.msra.mxu0 0.0
        %6031 = vmatprep.subr.mxu0 0.0
        %6032 = vmatpush1.msra.mxu0 0.0
        %6033 = vmatprep.subr.mxu0 0.0
        %6034 = vmatpush1.msra.mxu0 0.0
        %6035 = vmatprep.subr.mxu0 0.0
        %6036 = vmatpush1.msra.mxu0 0.0
        %6037 = vmatprep.subr.mxu0 0.0
        %6038 = vmatpush1.msra.mxu0 0.0
        %6039 = vmatprep.subr.mxu0 0.0
        %6040 = vmatpush1.msra.mxu0 0.0
        %6041 = vmatprep.subr.mxu0 0.0
        %6042 = vmatpush1.msra.mxu0 0.0
        %6043 = vmatprep.subr.mxu0 0.0
        %6044 = vmatpush1.msra.mxu0 0.0
        %6045 = vmatprep.subr.mxu0 0.0
        %6046 = vmatpush1.msra.mxu0 0.0
        %6047 = vmatprep.subr.mxu0 0.0
        %6048 = vmatpush1.msra.mxu0 0.0
        %6049 = vmatprep.subr.mxu0 0.0
        %6050 = vmatpush1.msra.mxu0 0.0
        %6051 = vmatprep.subr.mxu0 0.0
        %6052 = vmatpush1.msra.mxu0 0.0
        %6053 = vmatprep.subr.mxu0 0.0
        %6054 = vmatpush1.msra.mxu0 0.0
        %6055 = vmatprep.subr.mxu0 0.0
        %6056 = vmatpush1.msra.mxu0 0.0
        %6057 = vmatprep.subr.mxu0 0.0
        %6058 = vmatpush1.msra.mxu0 0.0
        %6059 = vmatprep.subr.mxu0 0.0
        %6060 = vmatpush1.msra.mxu0 0.0
        %6061 = vmatprep.subr.mxu0 0.0
        %6062 = vmatpush1.msra.mxu0 0.0
        %6063 = vmatprep.mubr.f32.mxu0 0.0
        %6064 = vmatmul.mubr.f32.gmra.mrb[0].mxu0 %v5766
        %v6065 = vpop.f32.mrb[0].mxu0
        %v6066 = vadd.f32 %v5961, %v6065
        %v6067 = vpop.f32.mrb[0].mxu0
        %6068 = vmatprep.mubr.f32.mxu0 0.0
        %6069 = vmatmul.mubr.f32.gmra.mrb[0].mxu0 %v5769
        %v6070 = vpop.f32.mrb[0].mxu0
        %v6071 = vadd.f32 %v5966, %v6070
        %v6072 = vpop.f32.mrb[0].mxu0
        %6073 = vmatprep.mubr.f32.mxu0 0.0
        %6074 = vmatmul.mubr.f32.gmra.mrb[0].mxu0 %v5772
        %v6075 = vpop.f32.mrb[0].mxu0
        %v6076 = vadd.f32 %v5971, %v6075
        %v6077 = vpop.f32.mrb[0].mxu0
        %6078 = vmatprep.mubr.f32.mxu0 0.0
        %6079 = vmatmul.mubr.f32.gmra.mrb[0].mxu0 %v5775
        %v6080 = vpop.f32.mrb[0].mxu0
        %v6081 = vadd.f32 %v5976, %v6080
        %v6082 = vpop.f32.mrb[0].mxu0
        %6083 = vmatprep.mubr.f32.mxu0 0.0
        %6084 = vmatmul.mubr.f32.gmra.mrb[0].mxu0 %v5778
        %v6085 = vpop.f32.mrb[0].mxu0
        %v6086 = vadd.f32 %v5981, %v6085
        %v6087 = vpop.f32.mrb[0].mxu0
        %6088 = vmatprep.mubr.f32.mxu0 0.0
        %6089 = vmatmul.mubr.f32.gmra.mrb[0].mxu0 %v5781
        %v6090 = vpop.f32.mrb[0].mxu0
        %v6091 = vadd.f32 %v5986, %v6090
        %v6092 = vpop.f32.mrb[0].mxu0
        %6093 = vmatprep.mubr.f32.mxu0 0.0
        %6094 = vmatmul.mubr.f32.gmra.mrb[0].mxu0 %v5784
        %v6095 = vpop.f32.mrb[0].mxu0
        %v6096 = vadd.f32 %v5991, %v6095
        %v6097 = vpop.f32.mrb[0].mxu0
        %6098 = vmatprep.mubr.f32.mxu0 0.0
        %6099 = vmatmul.mubr.f32.gmra.mrb[0].mxu0 %v5787
        %v6100 = vpop.f32.mrb[0].mxu0
        %v6101 = vadd.f32 %v5996, %v6100
        %v6102 = vpop.f32.mrb[0].mxu0
        %6103 = vdwg.mxu0
        %v6104 = vmax.f32 %v6066, 0.0
        %v6105 = vmax.f32 %v6071, 0.0
        %v6106 = vmax.f32 %v6076, 0.0
        %v6107 = vmax.f32 %v6081, 0.0
        %v6108 = vmax.f32 %v6086, 0.0
        %v6109 = vmax.f32 %v6091, 0.0
        %v6110 = vmax.f32 %v6096, 0.0
        %v6111 = vmax.f32 %v6101, 0.0
        %6112 = vst.msk [vmem:[%s498] sm:$0xff] %vm5341, %v6104
        %6113 = vst.msk [vmem:[%s498 + $0x8] sm:$0xff] %vm5341, %v6105
        %6114 = vst.msk [vmem:[%s498 + $0x10] sm:$0xff] %vm5341, %v6106
        %6115 = vst.msk [vmem:[%s498 + $0x18] sm:$0xff] %vm5341, %v6107
        %6116 = vst.msk [vmem:[%s498 + $0x20] sm:$0xff] %vm5341, %v6108
        %6117 = vst.msk [vmem:[%s498 + $0x28] sm:$0xff] %vm5341, %v6109
        %6118 = vst.msk [vmem:[%s498 + $0x30] sm:$0xff] %vm5341, %v6110
        %6119 = vst.msk [vmem:[%s498 + $0x38] sm:$0xff] %vm5341, %v6111
        %6120 = vst.msk [vmem:[#allocation6] sm:$0xff] %vm5341, 0.0
        %6121 = vst.msk [vmem:[#allocation6 + $0x8] sm:$0x3] %vm5343, 0.0
        %6122 = vst.msk [vmem:[#allocation6 + $0x10] sm:$0xff] %vm5341, 0.0
        %6123 = vst.msk [vmem:[#allocation6 + $0x18] sm:$0x3] %vm5343, 0.0
        %6124 = vst.msk [vmem:[#allocation6 + $0x20] sm:$0xff] %vm5341, 0.0
        %6125 = vst.msk [vmem:[#allocation6 + $0x28] sm:$0x3] %vm5343, 0.0
        %6126 = vst.msk [vmem:[#allocation6 + $0x30] sm:$0xff] %vm5341, 0.0
        %6127 = vst.msk [vmem:[#allocation6 + $0x38] sm:$0x3] %vm5343, 0.0
        %6128 = vst.msk [vmem:[#allocation6 + $0x40] sm:$0xff] %vm5341, 0.0
        %6129 = vst.msk [vmem:[#allocation6 + $0x48] sm:$0x3] %vm5343, 0.0
        %6130 = vst.msk [vmem:[#allocation6 + $0x50] sm:$0xff] %vm5341, 0.0
        %6131 = vst.msk [vmem:[#allocation6 + $0x58] sm:$0x3] %vm5343, 0.0
        %v6132 = vsel %vm5341, %v6104, -inf
        %v6133 = vsel %vm5341, %v6105, -inf
        %v6134 = vmax.f32 %v6132, %v6133
        %v6135 = vsel %vm5341, %v6106, -inf
        %v6136 = vsel %vm5341, %v6107, -inf
        %v6137 = vmax.f32 %v6135, %v6136
        %v6138 = vsel %vm5341, %v6108, -inf
        %v6139 = vsel %vm5341, %v6109, -inf
        %v6140 = vmax.f32 %v6138, %v6139
        %v6141 = vsel %vm5341, %v6110, -inf
        %v6142 = vsel %vm5341, %v6111, -inf
        %v6143 = vmax.f32 %v6141, %v6142
        %v6148 = vrot.slane %v6134, 1
        %v6149 = vrot.slane %v6137, 1
        %v6150 = vrot.slane %v6140, 1
        %v6151 = vrot.slane %v6143, 1
        %v6156 = vmax.f32 %v6134, %v6148
        %v6157 = vmax.f32 %v6137, %v6149
        %v6158 = vmax.f32 %v6140, %v6150
        %v6159 = vmax.f32 %v6143, %v6151
        %s6160 = scalar_lea.vmem [#allocation6], 16
        %vm6161 = vcmask 516096
        %6162 = vst.msk [vmem:[%s6160 + $0x1] sm:$0x1] %vm6161, %v6156
        %6163 = vst.msk [vmem:[%s6160 + $0x11] sm:$0x1] %vm6161, %v6157
        %6164 = vst.msk [vmem:[%s6160 + $0x21] sm:$0x1] %vm6161, %v6158
        %6165 = vst.msk [vmem:[%s6160 + $0x31] sm:$0x1] %vm6161, %v6159
        %vm6166 = vcmask 518146
        %6167 = vst.msk [vmem:[%s6160] sm:$0x4] %vm6166, %v6156
        %6168 = vst.msk [vmem:[%s6160 + $0x10] sm:$0x4] %vm6166, %v6157
        %6169 = vst.msk [vmem:[%s6160 + $0x20] sm:$0x4] %vm6166, %v6158
        %6170 = vst.msk [vmem:[%s6160 + $0x30] sm:$0x4] %vm6166, %v6159
        %vm6171 = vcmask 520196
        %6172 = vst.msk [vmem:[%s6160 - $0x1] sm:$0x10] %vm6171, %v6156
        %6173 = vst.msk [vmem:[%s6160 + $0xf] sm:$0x10] %vm6171, %v6157
        %6174 = vst.msk [vmem:[%s6160 + $0x1f] sm:$0x10] %vm6171, %v6158
        %6175 = vst.msk [vmem:[%s6160 + $0x2f] sm:$0x10] %vm6171, %v6159
        %vm6176 = vcmask 522246
        %6177 = vst.msk [vmem:[%s6160 - $0x2] sm:$0x40] %vm6176, %v6156
        %6178 = vst.msk [vmem:[%s6160 + $0xe] sm:$0x40] %vm6176, %v6157
        %6179 = vst.msk [vmem:[%s6160 + $0x1e] sm:$0x40] %vm6176, %v6158
        %6180 = vst.msk [vmem:[%s6160 + $0x2e] sm:$0x40] %vm6176, %v6159
        %v6181 = vld [vmem:[#allocation6] sm:$0xff]
        %v6182 = vld [vmem:[#allocation6 + $0x10] sm:$0xff]
        %v6183 = vld [vmem:[#allocation6 + $0x20] sm:$0xff]
        %v6184 = vld [vmem:[#allocation6 + $0x30] sm:$0xff]
        %6185 = vst.msk [vmem:[#allocation11] sm:$0xff] %vm5341, %v6181
        %6186 = vst.msk [vmem:[#allocation11 + $0x28] sm:$0xff] %vm5341, %v6182
        %6187 = vst.msk [vmem:[#allocation11 + $0x50] sm:$0xff] %vm5341, %v6183
        %6188 = vst.msk [vmem:[#allocation11 + $0x78] sm:$0xff] %vm5341, %v6184
        %v6189 = vld [vmem:[#allocation6 + $0x1] sm:$0xff]
        %v6190 = vld [vmem:[#allocation6 + $0x11] sm:$0xff]
        %v6191 = vld [vmem:[#allocation6 + $0x21] sm:$0xff]
        %v6192 = vld [vmem:[#allocation6 + $0x31] sm:$0xff]
        %6197 = vrot.lane.b32.xlu0 %v6189, 64
        %v6198 = vpop.permute.xlu0 %6197
        %6199 = vrot.lane.b32.xlu0 %v6190, 64
        %v6200 = vpop.permute.xlu0 %6199
        %6201 = vrot.lane.b32.xlu0 %v6191, 64
        %v6202 = vpop.permute.xlu0 %6201
        %6203 = vrot.lane.b32.xlu0 %v6192, 64
        %v6204 = vpop.permute.xlu0 %6203
        %6209 = vst.msk [vmem:[#allocation11] sm:$0xff] %vm5428, %v6198
        %6210 = vst.msk [vmem:[#allocation11 + $0x28] sm:$0xff] %vm5428, %v6200
        %6211 = vst.msk [vmem:[#allocation11 + $0x50] sm:$0xff] %vm5428, %v6202
        %6212 = vst.msk [vmem:[#allocation11 + $0x78] sm:$0xff] %vm5428, %v6204
        %v6213 = vld [vmem:[#allocation6 + $0x2] sm:$0xff]
        %v6214 = vld [vmem:[#allocation6 + $0x12] sm:$0xff]
        %v6215 = vld [vmem:[#allocation6 + $0x22] sm:$0xff]
        %v6216 = vld [vmem:[#allocation6 + $0x32] sm:$0xff]
        %6217 = vst.msk [vmem:[#allocation11 + $0x8] sm:$0xff] %vm5341, %v6213
        %6218 = vst.msk [vmem:[#allocation11 + $0x30] sm:$0xff] %vm5341, %v6214
        %6219 = vst.msk [vmem:[#allocation11 + $0x58] sm:$0xff] %vm5341, %v6215
        %6220 = vst.msk [vmem:[#allocation11 + $0x80] sm:$0xff] %vm5341, %v6216
        %v6221 = vld [vmem:[%s6160] sm:$0xff]
        %v6222 = vld [vmem:[%s6160 + $0x10] sm:$0xff]
        %v6223 = vld [vmem:[%s6160 + $0x20] sm:$0xff]
        %v6224 = vld [vmem:[%s6160 + $0x30] sm:$0xff]
        %6229 = vrot.lane.b32.xlu0 %v6221, 64
        %v6230 = vpop.permute.xlu0 %6229
        %6231 = vrot.lane.b32.xlu0 %v6222, 64
        %v6232 = vpop.permute.xlu0 %6231
        %6233 = vrot.lane.b32.xlu0 %v6223, 64
        %v6234 = vpop.permute.xlu0 %6233
        %6235 = vrot.lane.b32.xlu0 %v6224, 64
        %v6236 = vpop.permute.xlu0 %6235
        %6241 = vst.msk [vmem:[#allocation11 + $0x8] sm:$0xff] %vm5428, %v6230
        %6242 = vst.msk [vmem:[#allocation11 + $0x30] sm:$0xff] %vm5428, %v6232
        %6243 = vst.msk [vmem:[#allocation11 + $0x58] sm:$0xff] %vm5428, %v6234
        %6244 = vst.msk [vmem:[#allocation11 + $0x80] sm:$0xff] %vm5428, %v6236
        %v6245 = vld [vmem:[%s6160 + $0x1] sm:$0xff]
        %v6246 = vld [vmem:[%s6160 + $0x11] sm:$0xff]
        %v6247 = vld [vmem:[%s6160 + $0x21] sm:$0xff]
        %v6248 = vld [vmem:[%s6160 + $0x31] sm:$0xff]
        %6249 = vst.msk [vmem:[#allocation11 + $0x10] sm:$0xff] %vm5341, %v6245
        %6250 = vst.msk [vmem:[#allocation11 + $0x38] sm:$0xff] %vm5341, %v6246
        %6251 = vst.msk [vmem:[#allocation11 + $0x60] sm:$0xff] %vm5341, %v6247
        %6252 = vst.msk [vmem:[#allocation11 + $0x88] sm:$0xff] %vm5341, %v6248
        %v6253 = vld [vmem:[%s6160 + $0x2] sm:$0xff]
        %v6254 = vld [vmem:[%s6160 + $0x12] sm:$0xff]
        %v6255 = vld [vmem:[%s6160 + $0x22] sm:$0xff]
        %v6256 = vld [vmem:[%s6160 + $0x32] sm:$0xff]
        %6261 = vrot.lane.b32.xlu0 %v6253, 64
        %v6262 = vpop.permute.xlu0 %6261
        %6263 = vrot.lane.b32.xlu0 %v6254, 64
        %v6264 = vpop.permute.xlu0 %6263
        %6265 = vrot.lane.b32.xlu0 %v6255, 64
        %v6266 = vpop.permute.xlu0 %6265
        %6267 = vrot.lane.b32.xlu0 %v6256, 64
        %v6268 = vpop.permute.xlu0 %6267
        %6273 = vst.msk [vmem:[#allocation11 + $0x10] sm:$0xff] %vm5428, %v6262
        %6274 = vst.msk [vmem:[#allocation11 + $0x38] sm:$0xff] %vm5428, %v6264
        %6275 = vst.msk [vmem:[#allocation11 + $0x60] sm:$0xff] %vm5428, %v6266
        %6276 = vst.msk [vmem:[#allocation11 + $0x88] sm:$0xff] %vm5428, %v6268
        %s6277 = scalar_lea.vmem [#allocation6], 32
        %v6278 = vld [vmem:[%s6277] sm:$0xff]
        %v6279 = vld [vmem:[%s6277 + $0x10] sm:$0xff]
        %v6280 = vld [vmem:[%s6277 + $0x20] sm:$0xff]
        %v6281 = vld [vmem:[%s6277 + $0x30] sm:$0xff]
        %6282 = vst.msk [vmem:[#allocation11 + $0x18] sm:$0xff] %vm5341, %v6278
        %6283 = vst.msk [vmem:[#allocation11 + $0x40] sm:$0xff] %vm5341, %v6279
        %6284 = vst.msk [vmem:[#allocation11 + $0x68] sm:$0xff] %vm5341, %v6280
        %6285 = vst.msk [vmem:[#allocation11 + $0x90] sm:$0xff] %vm5341, %v6281
        %v6286 = vld [vmem:[%s6277 + $0x1] sm:$0xff]
        %v6287 = vld [vmem:[%s6277 + $0x11] sm:$0xff]
        %v6288 = vld [vmem:[%s6277 + $0x21] sm:$0xff]
        %v6289 = vld [vmem:[%s6277 + $0x31] sm:$0xff]
        %6294 = vrot.lane.b32.xlu0 %v6286, 64
        %v6295 = vpop.permute.xlu0 %6294
        %6296 = vrot.lane.b32.xlu0 %v6287, 64
        %v6297 = vpop.permute.xlu0 %6296
        %6298 = vrot.lane.b32.xlu0 %v6288, 64
        %v6299 = vpop.permute.xlu0 %6298
        %6300 = vrot.lane.b32.xlu0 %v6289, 64
        %v6301 = vpop.permute.xlu0 %6300
        %6306 = vst.msk [vmem:[#allocation11 + $0x18] sm:$0xff] %vm5428, %v6295
        %6307 = vst.msk [vmem:[#allocation11 + $0x40] sm:$0xff] %vm5428, %v6297
        %6308 = vst.msk [vmem:[#allocation11 + $0x68] sm:$0xff] %vm5428, %v6299
        %6309 = vst.msk [vmem:[#allocation11 + $0x90] sm:$0xff] %vm5428, %v6301
        %v6310 = vld [vmem:[%s6277 + $0x2] sm:$0xff]
        %v6311 = vld [vmem:[%s6277 + $0x12] sm:$0xff]
        %v6312 = vld [vmem:[%s6277 + $0x22] sm:$0xff]
        %v6313 = vld [vmem:[%s6277 + $0x32] sm:$0xff]
        %6314 = vst.msk [vmem:[#allocation11 + $0x20] sm:$0xff] %vm5341, %v6310
        %6315 = vst.msk [vmem:[#allocation11 + $0x48] sm:$0xff] %vm5341, %v6311
        %6316 = vst.msk [vmem:[#allocation11 + $0x70] sm:$0xff] %vm5341, %v6312
        %6317 = vst.msk [vmem:[#allocation11 + $0x98] sm:$0xff] %vm5341, %v6313
        %v6318 = vld [vmem:[#allocation11] sm:$0xff]
        %v6319 = vld [vmem:[#allocation11 + $0x8] sm:$0xff]
        %v6320 = vld [vmem:[#allocation11 + $0x10] sm:$0xff]
        %v6321 = vld [vmem:[#allocation11 + $0x18] sm:$0xff]
        %v6322 = vld [vmem:[#allocation11 + $0x20] sm:$0xff]
        %v6323 = vld [vmem:[#allocation11 + $0x28] sm:$0xff]
        %v6324 = vld [vmem:[#allocation11 + $0x30] sm:$0xff]
        %v6325 = vld [vmem:[#allocation11 + $0x38] sm:$0xff]
        %v6326 = vld [vmem:[#allocation11 + $0x40] sm:$0xff]
        %v6327 = vld [vmem:[#allocation11 + $0x48] sm:$0xff]
        %v6328 = vld [vmem:[#allocation11 + $0x50] sm:$0xff]
        %v6329 = vld [vmem:[#allocation11 + $0x58] sm:$0xff]
        %v6330 = vld [vmem:[#allocation11 + $0x60] sm:$0xff]
        %v6331 = vld [vmem:[#allocation11 + $0x68] sm:$0xff]
        %v6332 = vld [vmem:[#allocation11 + $0x70] sm:$0xff]
        %v6333 = vld [vmem:[#allocation11 + $0x78] sm:$0xff]
        %v6334 = vld [vmem:[#allocation11 + $0x80] sm:$0xff]
        %v6335 = vld [vmem:[#allocation11 + $0x88] sm:$0xff]
        %v6336 = vld [vmem:[#allocation11 + $0x90] sm:$0xff]
        %v6337 = vld [vmem:[#allocation11 + $0x98] sm:$0xff]
        %v6338 = vld [vmem:[%s9] sm:$0xff]
        %v6339 = vld [vmem:[%s9 + $0x8] sm:$0xff]
        %v6340 = vld [vmem:[%s9 + $0x10] sm:$0xff]
        %v6341 = vld [vmem:[%s9 + $0x18] sm:$0xff]
        %v6342 = vld [vmem:[%s9 + $0x20] sm:$0xff]
        %v6343 = vld [vmem:[%s9 + $0x28] sm:$0xff]
        %v6344 = vld [vmem:[%s9 + $0x30] sm:$0xff]
        %v6345 = vld [vmem:[%s9 + $0x38] sm:$0xff]
        %v6346 = vld [vmem:[%s9 + $0x40] sm:$0xff]
        %v6347 = vld [vmem:[%s9 + $0x48] sm:$0xff]
        %v6348 = vld [vmem:[%s9 + $0x50] sm:$0xff]
        %v6349 = vld [vmem:[%s9 + $0x58] sm:$0xff]
        %v6350 = vld [vmem:[%s9 + $0x60] sm:$0xff]
        %v6351 = vld [vmem:[%s9 + $0x68] sm:$0xff]
        %v6352 = vld [vmem:[%s9 + $0x70] sm:$0xff]
        %v6353 = vld [vmem:[%s9 + $0x78] sm:$0xff]
        %v6354 = vld [vmem:[%s9 + $0x80] sm:$0xff]
        %v6355 = vld [vmem:[%s9 + $0x88] sm:$0xff]
        %v6356 = vld [vmem:[%s9 + $0x90] sm:$0xff]
        %v6357 = vld [vmem:[%s9 + $0x98] sm:$0xff]
        %v6358 = vld [vmem:[%s9 + $0xa0] sm:$0xff]
        %v6359 = vld [vmem:[%s9 + $0xa8] sm:$0xff]
        %v6360 = vld [vmem:[%s9 + $0xb0] sm:$0xff]
        %v6361 = vld [vmem:[%s9 + $0xb8] sm:$0xff]
        %v6362 = vld [vmem:[%s9 + $0xc0] sm:$0xff]
        %v6363 = vld [vmem:[%s9 + $0xc8] sm:$0xff]
        %v6364 = vld [vmem:[%s9 + $0xd0] sm:$0xff]
        %v6365 = vld [vmem:[%s9 + $0xd8] sm:$0xff]
        %v6366 = vld [vmem:[%s9 + $0xe0] sm:$0xff]
        %v6367 = vld [vmem:[%s9 + $0xe8] sm:$0xff]
        %v6368 = vld [vmem:[%s9 + $0xf0] sm:$0xff]
        %v6369 = vld [vmem:[%s9 + $0xf8] sm:$0xff]
        %v6370 = vld [vmem:[%s9 + $0x100] sm:$0xff]
        %v6371 = vld [vmem:[%s9 + $0x108] sm:$0xff]
        %v6372 = vld [vmem:[%s9 + $0x110] sm:$0xff]
        %v6373 = vld [vmem:[%s9 + $0x118] sm:$0xff]
        %v6374 = vld [vmem:[%s9 + $0x120] sm:$0xff]
        %v6375 = vld [vmem:[%s9 + $0x128] sm:$0xff]
        %v6376 = vld [vmem:[%s9 + $0x130] sm:$0xff]
        %v6377 = vld [vmem:[%s9 + $0x138] sm:$0xff]
        %v6378 = vld [vmem:[%s9 + $0x140] sm:$0xff]
        %v6379 = vld [vmem:[%s9 + $0x148] sm:$0xff]
        %v6380 = vld [vmem:[%s9 + $0x150] sm:$0xff]
        %v6381 = vld [vmem:[%s9 + $0x158] sm:$0xff]
        %v6382 = vld [vmem:[%s9 + $0x160] sm:$0xff]
        %v6383 = vld [vmem:[%s9 + $0x168] sm:$0xff]
        %v6384 = vld [vmem:[%s9 + $0x170] sm:$0xff]
        %v6385 = vld [vmem:[%s9 + $0x178] sm:$0xff]
        %v6386 = vld [vmem:[%s9 + $0x180] sm:$0xff]
        %v6387 = vld [vmem:[%s9 + $0x188] sm:$0xff]
        %v6388 = vld [vmem:[%s9 + $0x190] sm:$0xff]
        %v6389 = vld [vmem:[%s9 + $0x198] sm:$0xff]
        %v6390 = vld [vmem:[%s9 + $0x1a0] sm:$0xff]
        %v6391 = vld [vmem:[%s9 + $0x1a8] sm:$0xff]
        %v6392 = vld [vmem:[%s9 + $0x1b0] sm:$0xff]
        %v6393 = vld [vmem:[%s9 + $0x1b8] sm:$0xff]
        %v6394 = vld [vmem:[%s9 + $0x1c0] sm:$0xff]
        %v6395 = vld [vmem:[%s9 + $0x1c8] sm:$0xff]
        %v6396 = vld [vmem:[%s9 + $0x1d0] sm:$0xff]
        %v6397 = vld [vmem:[%s9 + $0x1d8] sm:$0xff]
        %v6398 = vld [vmem:[%s9 + $0x1e0] sm:$0xff]
        %v6399 = vld [vmem:[%s9 + $0x1e8] sm:$0xff]
        %v6400 = vld [vmem:[%s9 + $0x1f0] sm:$0xff]
        %v6401 = vld [vmem:[%s9 + $0x1f8] sm:$0xff]
        %v6402 = vld [vmem:[%s9 + $0x200] sm:$0xff]
        %v6403 = vld [vmem:[%s9 + $0x208] sm:$0xff]
        %v6404 = vld [vmem:[%s9 + $0x210] sm:$0xff]
        %v6405 = vld [vmem:[%s9 + $0x218] sm:$0xff]
        %v6406 = vld [vmem:[%s9 + $0x220] sm:$0xff]
        %v6407 = vld [vmem:[%s9 + $0x228] sm:$0xff]
        %v6408 = vld [vmem:[%s9 + $0x230] sm:$0xff]
        %v6409 = vld [vmem:[%s9 + $0x238] sm:$0xff]
        %v6410 = vld [vmem:[%s10] sm:$0x1]
        %v6412 = vlaneseq
        %v6413 = vshrl.u32 %v6412, 7
        %v6414 = vsub.s32 0, %v6413
        %v6415 = vrot.slane %v6410, %v6414
        %v6418 = vsel %vm5341, %v6322, 0
        %v6421 = vsel %vm5341, %v6327, 0
        %v6424 = vsel %vm5341, %v6332, 0
        %v6427 = vsel %vm5341, %v6337, 0
        %6429 = vmatprep.subr.mxu0 0.0
        %6430 = vmatpush1.msra.mxu0 %v6338
        %6431 = vmatprep.subr.mxu0 0.0
        %6432 = vmatpush1.msra.mxu0 %v6339
        %6433 = vmatprep.subr.mxu0 0.0
        %6434 = vmatpush1.msra.mxu0 %v6340
        %6435 = vmatprep.subr.mxu0 0.0
        %6436 = vmatpush1.msra.mxu0 %v6341
        %6437 = vmatprep.subr.mxu0 0.0
        %6438 = vmatpush1.msra.mxu0 %v6342
        %6439 = vmatprep.subr.mxu0 0.0
        %6440 = vmatpush1.msra.mxu0 %v6343
        %6441 = vmatprep.subr.mxu0 0.0
        %6442 = vmatpush1.msra.mxu0 %v6344
        %6443 = vmatprep.subr.mxu0 0.0
        %6444 = vmatpush1.msra.mxu0 %v6345
        %6445 = vmatprep.subr.mxu0 0.0
        %6446 = vmatpush1.msra.mxu0 %v6346
        %6447 = vmatprep.subr.mxu0 0.0
        %6448 = vmatpush1.msra.mxu0 %v6347
        %6449 = vmatprep.subr.mxu0 0.0
        %6450 = vmatpush1.msra.mxu0 %v6348
        %6451 = vmatprep.subr.mxu0 0.0
        %6452 = vmatpush1.msra.mxu0 %v6349
        %6453 = vmatprep.subr.mxu0 0.0
        %6454 = vmatpush1.msra.mxu0 %v6350
        %6455 = vmatprep.subr.mxu0 0.0
        %6456 = vmatpush1.msra.mxu0 %v6351
        %6457 = vmatprep.subr.mxu0 0.0
        %6458 = vmatpush1.msra.mxu0 %v6352
        %6459 = vmatprep.subr.mxu0 0.0
        %6460 = vmatpush1.msra.mxu0 %v6353
        %6461 = vmatprep.subr.mxu0 0.0
        %6462 = vmatpush1.msra.mxu0 %v6354
        %6463 = vmatprep.subr.mxu0 0.0
        %6464 = vmatpush1.msra.mxu0 %v6355
        %6465 = vmatprep.subr.mxu0 0.0
        %6466 = vmatpush1.msra.mxu0 %v6356
        %6467 = vmatprep.subr.mxu0 0.0
        %6468 = vmatpush1.msra.mxu0 %v6357
        %6469 = vmatprep.subr.mxu0 0.0
        %6470 = vmatpush1.msra.mxu0 %v6358
        %6471 = vmatprep.subr.mxu0 0.0
        %6472 = vmatpush1.msra.mxu0 %v6359
        %6473 = vmatprep.subr.mxu0 0.0
        %6474 = vmatpush1.msra.mxu0 %v6360
        %6475 = vmatprep.subr.mxu0 0.0
        %6476 = vmatpush1.msra.mxu0 %v6361
        %6477 = vmatprep.subr.mxu0 0.0
        %6478 = vmatpush1.msra.mxu0 %v6362
        %6479 = vmatprep.subr.mxu0 0.0
        %6480 = vmatpush1.msra.mxu0 %v6363
        %6481 = vmatprep.subr.mxu0 0.0
        %6482 = vmatpush1.msra.mxu0 %v6364
        %6483 = vmatprep.subr.mxu0 0.0
        %6484 = vmatpush1.msra.mxu0 %v6365
        %6485 = vmatprep.subr.mxu0 0.0
        %6486 = vmatpush1.msra.mxu0 %v6366
        %6487 = vmatprep.subr.mxu0 0.0
        %6488 = vmatpush1.msra.mxu0 %v6367
        %6489 = vmatprep.subr.mxu0 0.0
        %6490 = vmatpush1.msra.mxu0 %v6368
        %6491 = vmatprep.subr.mxu0 0.0
        %6492 = vmatpush1.msra.mxu0 %v6369
        %6493 = vmatprep.mubr.f32.mxu0 %v6319
        %6494 = vmatmul.mubr.f32.gmra.mrb[0].mxu0 %v6318
        %v6495 = vpop.f32.mrb[0].mxu0
        %v6496 = vadd.f32 %v6415, %v6495
        %v6497 = vpop.f32.mrb[0].mxu0
        %6498 = vmatprep.mubr.f32.mxu0 %v6324
        %6499 = vmatmul.mubr.f32.gmra.mrb[0].mxu0 %v6323
        %v6500 = vpop.f32.mrb[0].mxu0
        %v6501 = vadd.f32 %v6415, %v6500
        %v6502 = vpop.f32.mrb[0].mxu0
        %6503 = vmatprep.mubr.f32.mxu0 %v6329
        %6504 = vmatmul.mubr.f32.gmra.mrb[0].mxu0 %v6328
        %v6505 = vpop.f32.mrb[0].mxu0
        %v6506 = vadd.f32 %v6415, %v6505
        %v6507 = vpop.f32.mrb[0].mxu0
        %6508 = vmatprep.mubr.f32.mxu0 %v6334
        %6509 = vmatmul.mubr.f32.gmra.mrb[0].mxu0 %v6333
        %v6510 = vpop.f32.mrb[0].mxu0
        %v6511 = vadd.f32 %v6415, %v6510
        %v6512 = vpop.f32.mrb[0].mxu0
        %6513 = vdwg.mxu0
        %6514 = vmatprep.subr.mxu0 0.0
        %6515 = vmatpush1.msra.mxu0 %v6370
        %6516 = vmatprep.subr.mxu0 0.0
        %6517 = vmatpush1.msra.mxu0 %v6371
        %6518 = vmatprep.subr.mxu0 0.0
        %6519 = vmatpush1.msra.mxu0 %v6372
        %6520 = vmatprep.subr.mxu0 0.0
        %6521 = vmatpush1.msra.mxu0 %v6373
        %6522 = vmatprep.subr.mxu0 0.0
        %6523 = vmatpush1.msra.mxu0 %v6374
        %6524 = vmatprep.subr.mxu0 0.0
        %6525 = vmatpush1.msra.mxu0 %v6375
        %6526 = vmatprep.subr.mxu0 0.0
        %6527 = vmatpush1.msra.mxu0 %v6376
        %6528 = vmatprep.subr.mxu0 0.0
        %6529 = vmatpush1.msra.mxu0 %v6377
        %6530 = vmatprep.subr.mxu0 0.0
        %6531 = vmatpush1.msra.mxu0 %v6378
        %6532 = vmatprep.subr.mxu0 0.0
        %6533 = vmatpush1.msra.mxu0 %v6379
        %6534 = vmatprep.subr.mxu0 0.0
        %6535 = vmatpush1.msra.mxu0 %v6380
        %6536 = vmatprep.subr.mxu0 0.0
        %6537 = vmatpush1.msra.mxu0 %v6381
        %6538 = vmatprep.subr.mxu0 0.0
        %6539 = vmatpush1.msra.mxu0 %v6382
        %6540 = vmatprep.subr.mxu0 0.0
        %6541 = vmatpush1.msra.mxu0 %v6383
        %6542 = vmatprep.subr.mxu0 0.0
        %6543 = vmatpush1.msra.mxu0 %v6384
        %6544 = vmatprep.subr.mxu0 0.0
        %6545 = vmatpush1.msra.mxu0 %v6385
        %6546 = vmatprep.subr.mxu0 0.0
        %6547 = vmatpush1.msra.mxu0 %v6386
        %6548 = vmatprep.subr.mxu0 0.0
        %6549 = vmatpush1.msra.mxu0 %v6387
        %6550 = vmatprep.subr.mxu0 0.0
        %6551 = vmatpush1.msra.mxu0 %v6388
        %6552 = vmatprep.subr.mxu0 0.0
        %6553 = vmatpush1.msra.mxu0 %v6389
        %6554 = vmatprep.subr.mxu0 0.0
        %6555 = vmatpush1.msra.mxu0 %v6390
        %6556 = vmatprep.subr.mxu0 0.0
        %6557 = vmatpush1.msra.mxu0 %v6391
        %6558 = vmatprep.subr.mxu0 0.0
        %6559 = vmatpush1.msra.mxu0 %v6392
        %6560 = vmatprep.subr.mxu0 0.0
        %6561 = vmatpush1.msra.mxu0 %v6393
        %6562 = vmatprep.subr.mxu0 0.0
        %6563 = vmatpush1.msra.mxu0 %v6394
        %6564 = vmatprep.subr.mxu0 0.0
        %6565 = vmatpush1.msra.mxu0 %v6395
        %6566 = vmatprep.subr.mxu0 0.0
        %6567 = vmatpush1.msra.mxu0 %v6396
        %6568 = vmatprep.subr.mxu0 0.0
        %6569 = vmatpush1.msra.mxu0 %v6397
        %6570 = vmatprep.subr.mxu0 0.0
        %6571 = vmatpush1.msra.mxu0 %v6398
        %6572 = vmatprep.subr.mxu0 0.0
        %6573 = vmatpush1.msra.mxu0 %v6399
        %6574 = vmatprep.subr.mxu0 0.0
        %6575 = vmatpush1.msra.mxu0 %v6400
        %6576 = vmatprep.subr.mxu0 0.0
        %6577 = vmatpush1.msra.mxu0 %v6401
        %6578 = vmatprep.mubr.f32.mxu0 %v6321
        %6579 = vmatmul.mubr.f32.gmra.mrb[0].mxu0 %v6320
        %v6580 = vpop.f32.mrb[0].mxu0
        %v6581 = vadd.f32 %v6496, %v6580
        %v6582 = vpop.f32.mrb[0].mxu0
        %6583 = vmatprep.mubr.f32.mxu0 %v6326
        %6584 = vmatmul.mubr.f32.gmra.mrb[0].mxu0 %v6325
        %v6585 = vpop.f32.mrb[0].mxu0
        %v6586 = vadd.f32 %v6501, %v6585
        %v6587 = vpop.f32.mrb[0].mxu0
        %6588 = vmatprep.mubr.f32.mxu0 %v6331
        %6589 = vmatmul.mubr.f32.gmra.mrb[0].mxu0 %v6330
        %v6590 = vpop.f32.mrb[0].mxu0
        %v6591 = vadd.f32 %v6506, %v6590
        %v6592 = vpop.f32.mrb[0].mxu0
        %6593 = vmatprep.mubr.f32.mxu0 %v6336
        %6594 = vmatmul.mubr.f32.gmra.mrb[0].mxu0 %v6335
        %v6595 = vpop.f32.mrb[0].mxu0
        %v6596 = vadd.f32 %v6511, %v6595
        %v6597 = vpop.f32.mrb[0].mxu0
        %6598 = vdwg.mxu0
        %6599 = vmatprep.subr.mxu0 0.0
        %6600 = vmatpush1.msra.mxu0 %v6402
        %6601 = vmatprep.subr.mxu0 0.0
        %6602 = vmatpush1.msra.mxu0 %v6403
        %6603 = vmatprep.subr.mxu0 0.0
        %6604 = vmatpush1.msra.mxu0 %v6404
        %6605 = vmatprep.subr.mxu0 0.0
        %6606 = vmatpush1.msra.mxu0 %v6405
        %6607 = vmatprep.subr.mxu0 0.0
        %6608 = vmatpush1.msra.mxu0 %v6406
        %6609 = vmatprep.subr.mxu0 0.0
        %6610 = vmatpush1.msra.mxu0 %v6407
        %6611 = vmatprep.subr.mxu0 0.0
        %6612 = vmatpush1.msra.mxu0 %v6408
        %6613 = vmatprep.subr.mxu0 0.0
        %6614 = vmatpush1.msra.mxu0 %v6409
        %6615 = vmatprep.subr.mxu0 0.0
        %6616 = vmatpush1.msra.mxu0 0.0
        %6617 = vmatprep.subr.mxu0 0.0
        %6618 = vmatpush1.msra.mxu0 0.0
        %6619 = vmatprep.subr.mxu0 0.0
        %6620 = vmatpush1.msra.mxu0 0.0
        %6621 = vmatprep.subr.mxu0 0.0
        %6622 = vmatpush1.msra.mxu0 0.0
        %6623 = vmatprep.subr.mxu0 0.0
        %6624 = vmatpush1.msra.mxu0 0.0
        %6625 = vmatprep.subr.mxu0 0.0
        %6626 = vmatpush1.msra.mxu0 0.0
        %6627 = vmatprep.subr.mxu0 0.0
        %6628 = vmatpush1.msra.mxu0 0.0
        %6629 = vmatprep.subr.mxu0 0.0
        %6630 = vmatpush1.msra.mxu0 0.0
        %6631 = vmatprep.subr.mxu0 0.0
        %6632 = vmatpush1.msra.mxu0 0.0
        %6633 = vmatprep.subr.mxu0 0.0
        %6634 = vmatpush1.msra.mxu0 0.0
        %6635 = vmatprep.subr.mxu0 0.0
        %6636 = vmatpush1.msra.mxu0 0.0
        %6637 = vmatprep.subr.mxu0 0.0
        %6638 = vmatpush1.msra.mxu0 0.0
        %6639 = vmatprep.subr.mxu0 0.0
        %6640 = vmatpush1.msra.mxu0 0.0
        %6641 = vmatprep.subr.mxu0 0.0
        %6642 = vmatpush1.msra.mxu0 0.0
        %6643 = vmatprep.subr.mxu0 0.0
        %6644 = vmatpush1.msra.mxu0 0.0
        %6645 = vmatprep.subr.mxu0 0.0
        %6646 = vmatpush1.msra.mxu0 0.0
        %6647 = vmatprep.subr.mxu0 0.0
        %6648 = vmatpush1.msra.mxu0 0.0
        %6649 = vmatprep.subr.mxu0 0.0
        %6650 = vmatpush1.msra.mxu0 0.0
        %6651 = vmatprep.subr.mxu0 0.0
        %6652 = vmatpush1.msra.mxu0 0.0
        %6653 = vmatprep.subr.mxu0 0.0
        %6654 = vmatpush1.msra.mxu0 0.0
        %6655 = vmatprep.subr.mxu0 0.0
        %6656 = vmatpush1.msra.mxu0 0.0
        %6657 = vmatprep.subr.mxu0 0.0
        %6658 = vmatpush1.msra.mxu0 0.0
        %6659 = vmatprep.subr.mxu0 0.0
        %6660 = vmatpush1.msra.mxu0 0.0
        %6661 = vmatprep.subr.mxu0 0.0
        %6662 = vmatpush1.msra.mxu0 0.0
        %6663 = vmatprep.mubr.f32.mxu0 0.0
        %6664 = vmatmul.mubr.f32.gmra.mrb[0].mxu0 %v6418
        %v6665 = vpop.f32.mrb[0].mxu0
        %v6666 = vadd.f32 %v6581, %v6665
        %v6667 = vpop.f32.mrb[0].mxu0
        %6668 = vmatprep.mubr.f32.mxu0 0.0
        %6669 = vmatmul.mubr.f32.gmra.mrb[0].mxu0 %v6421
        %v6670 = vpop.f32.mrb[0].mxu0
        %v6671 = vadd.f32 %v6586, %v6670
        %v6672 = vpop.f32.mrb[0].mxu0
        %6673 = vmatprep.mubr.f32.mxu0 0.0
        %6674 = vmatmul.mubr.f32.gmra.mrb[0].mxu0 %v6424
        %v6675 = vpop.f32.mrb[0].mxu0
        %v6676 = vadd.f32 %v6591, %v6675
        %v6677 = vpop.f32.mrb[0].mxu0
        %6678 = vmatprep.mubr.f32.mxu0 0.0
        %6679 = vmatmul.mubr.f32.gmra.mrb[0].mxu0 %v6427
        %v6680 = vpop.f32.mrb[0].mxu0
        %v6681 = vadd.f32 %v6596, %v6680
        %v6682 = vpop.f32.mrb[0].mxu0
        %6683 = vdwg.mxu0
        %v6684 = vmax.f32 %v6666, 0.0
        %v6685 = vmax.f32 %v6671, 0.0
        %v6686 = vmax.f32 %v6676, 0.0
        %v6687 = vmax.f32 %v6681, 0.0
        %6688 = vst [vmem:[#allocation7] sm:$0xff] 0.0
        %6689 = vst [vmem:[#allocation7 + $0x8] sm:$0x3] 0.0
        %6690 = vst [vmem:[#allocation7 + $0x10] sm:$0xff] 0.0
        %6691 = vst [vmem:[#allocation7 + $0x18] sm:$0x3] 0.0
        %6692 = vst [vmem:[#allocation7 + $0x20] sm:$0xff] 0.0
        %6693 = vst [vmem:[#allocation7 + $0x28] sm:$0x3] 0.0
        %6694 = vst [vmem:[#allocation7 + $0x30] sm:$0xff] 0.0
        %6695 = vst [vmem:[#allocation7 + $0x38] sm:$0x3] 0.0
        %6696 = vst [vmem:[#allocation7 + $0x40] sm:$0xff] 0.0
        %6697 = vst [vmem:[#allocation7 + $0x48] sm:$0x3] 0.0
        %6698 = vst [vmem:[#allocation7 + $0x50] sm:$0xff] 0.0
        %6699 = vst [vmem:[#allocation7 + $0x58] sm:$0x3] 0.0
        %s6700 = scalar_lea.vmem [#allocation7], 16
        %6701 = vst [vmem:[%s6700 + $0x1] sm:$0xf] %v6684
        %6702 = vst [vmem:[%s6700 + $0x11] sm:$0xf] %v6685
        %6703 = vst [vmem:[%s6700 + $0x21] sm:$0xf] %v6686
        %6704 = vst [vmem:[%s6700 + $0x31] sm:$0xf] %v6687
        %v6705 = vld [vmem:[#allocation7] sm:$0xff]
        %v6706 = vld [vmem:[#allocation7 + $0x10] sm:$0xff]
        %v6707 = vld [vmem:[#allocation7 + $0x20] sm:$0xff]
        %v6708 = vld [vmem:[#allocation7 + $0x30] sm:$0xff]
        %6709 = vst [vmem:[#allocation12] sm:$0xff] %v6705
        %6710 = vst [vmem:[#allocation12 + $0x48] sm:$0xff] %v6706
        %6711 = vst [vmem:[#allocation12 + $0x90] sm:$0xff] %v6707
        %6712 = vst [vmem:[#allocation12 + $0xd8] sm:$0xff] %v6708
        %v6713 = vld [vmem:[#allocation7 + $0x1] sm:$0xff]
        %v6714 = vld [vmem:[#allocation7 + $0x11] sm:$0xff]
        %v6715 = vld [vmem:[#allocation7 + $0x21] sm:$0xff]
        %v6716 = vld [vmem:[#allocation7 + $0x31] sm:$0xff]
        %6717 = vst [vmem:[#allocation12 + $0x8] sm:$0xff] %v6713
        %6718 = vst [vmem:[#allocation12 + $0x50] sm:$0xff] %v6714
        %6719 = vst [vmem:[#allocation12 + $0x98] sm:$0xff] %v6715
        %6720 = vst [vmem:[#allocation12 + $0xe0] sm:$0xff] %v6716
        %v6721 = vld [vmem:[#allocation7 + $0x2] sm:$0xff]
        %v6722 = vld [vmem:[#allocation7 + $0x12] sm:$0xff]
        %v6723 = vld [vmem:[#allocation7 + $0x22] sm:$0xff]
        %v6724 = vld [vmem:[#allocation7 + $0x32] sm:$0xff]
        %6725 = vst [vmem:[#allocation12 + $0x10] sm:$0xff] %v6721
        %6726 = vst [vmem:[#allocation12 + $0x58] sm:$0xff] %v6722
        %6727 = vst [vmem:[#allocation12 + $0xa0] sm:$0xff] %v6723
        %6728 = vst [vmem:[#allocation12 + $0xe8] sm:$0xff] %v6724
        %v6729 = vld [vmem:[%s6700] sm:$0xff]
        %v6730 = vld [vmem:[%s6700 + $0x10] sm:$0xff]
        %v6731 = vld [vmem:[%s6700 + $0x20] sm:$0xff]
        %v6732 = vld [vmem:[%s6700 + $0x30] sm:$0xff]
        %6733 = vst [vmem:[#allocation12 + $0x18] sm:$0xff] %v6729
        %6734 = vst [vmem:[#allocation12 + $0x60] sm:$0xff] %v6730
        %6735 = vst [vmem:[#allocation12 + $0xa8] sm:$0xff] %v6731
        %6736 = vst [vmem:[#allocation12 + $0xf0] sm:$0xff] %v6732
        %v6737 = vld [vmem:[%s6700 + $0x1] sm:$0xff]
        %v6738 = vld [vmem:[%s6700 + $0x11] sm:$0xff]
        %v6739 = vld [vmem:[%s6700 + $0x21] sm:$0xff]
        %v6740 = vld [vmem:[%s6700 + $0x31] sm:$0xff]
        %6741 = vst [vmem:[#allocation12 + $0x20] sm:$0xff] %v6737
        %6742 = vst [vmem:[#allocation12 + $0x68] sm:$0xff] %v6738
        %6743 = vst [vmem:[#allocation12 + $0xb0] sm:$0xff] %v6739
        %6744 = vst [vmem:[#allocation12 + $0xf8] sm:$0xff] %v6740
        %v6745 = vld [vmem:[%s6700 + $0x2] sm:$0xff]
        %v6746 = vld [vmem:[%s6700 + $0x12] sm:$0xff]
        %v6747 = vld [vmem:[%s6700 + $0x22] sm:$0xff]
        %v6748 = vld [vmem:[%s6700 + $0x32] sm:$0xff]
        %6749 = vst [vmem:[#allocation12 + $0x28] sm:$0xff] %v6745
        %6750 = vst [vmem:[#allocation12 + $0x70] sm:$0xff] %v6746
        %6751 = vst [vmem:[#allocation12 + $0xb8] sm:$0xff] %v6747
        %6752 = vst [vmem:[#allocation12 + $0x100] sm:$0xff] %v6748
        %s6753 = scalar_lea.vmem [#allocation7], 32
        %v6754 = vld [vmem:[%s6753] sm:$0xff]
        %v6755 = vld [vmem:[%s6753 + $0x10] sm:$0xff]
        %v6756 = vld [vmem:[%s6753 + $0x20] sm:$0xff]
        %v6757 = vld [vmem:[%s6753 + $0x30] sm:$0xff]
        %6758 = vst [vmem:[#allocation12 + $0x30] sm:$0xff] %v6754
        %6759 = vst [vmem:[#allocation12 + $0x78] sm:$0xff] %v6755
        %6760 = vst [vmem:[#allocation12 + $0xc0] sm:$0xff] %v6756
        %6761 = vst [vmem:[#allocation12 + $0x108] sm:$0xff] %v6757
        %v6762 = vld [vmem:[%s6753 + $0x1] sm:$0xff]
        %v6763 = vld [vmem:[%s6753 + $0x11] sm:$0xff]
        %v6764 = vld [vmem:[%s6753 + $0x21] sm:$0xff]
        %v6765 = vld [vmem:[%s6753 + $0x31] sm:$0xff]
        %6766 = vst [vmem:[#allocation12 + $0x38] sm:$0xff] %v6762
        %6767 = vst [vmem:[#allocation12 + $0x80] sm:$0xff] %v6763
        %6768 = vst [vmem:[#allocation12 + $0xc8] sm:$0xff] %v6764
        %6769 = vst [vmem:[#allocation12 + $0x110] sm:$0xff] %v6765
        %v6770 = vld [vmem:[%s6753 + $0x2] sm:$0xff]
        %v6771 = vld [vmem:[%s6753 + $0x12] sm:$0xff]
        %v6772 = vld [vmem:[%s6753 + $0x22] sm:$0xff]
        %v6773 = vld [vmem:[%s6753 + $0x32] sm:$0xff]
        %6774 = vst [vmem:[#allocation12 + $0x40] sm:$0xff] %v6770
        %6775 = vst [vmem:[#allocation12 + $0x88] sm:$0xff] %v6771
        %6776 = vst [vmem:[#allocation12 + $0xd0] sm:$0xff] %v6772
        %6777 = vst [vmem:[#allocation12 + $0x118] sm:$0xff] %v6773
        %v6778 = vld [vmem:[#allocation12] sm:$0xff]
        %v6779 = vld [vmem:[#allocation12 + $0x8] sm:$0xff]
        %v6780 = vld [vmem:[#allocation12 + $0x10] sm:$0xff]
        %v6781 = vld [vmem:[#allocation12 + $0x18] sm:$0xff]
        %v6782 = vld [vmem:[#allocation12 + $0x20] sm:$0xff]
        %v6783 = vld [vmem:[#allocation12 + $0x28] sm:$0xff]
        %v6784 = vld [vmem:[#allocation12 + $0x30] sm:$0xff]
        %v6785 = vld [vmem:[#allocation12 + $0x38] sm:$0xff]
        %v6786 = vld [vmem:[#allocation12 + $0x40] sm:$0xff]
        %v6787 = vld [vmem:[#allocation12 + $0x48] sm:$0xff]
        %v6788 = vld [vmem:[#allocation12 + $0x50] sm:$0xff]
        %v6789 = vld [vmem:[#allocation12 + $0x58] sm:$0xff]
        %v6790 = vld [vmem:[#allocation12 + $0x60] sm:$0xff]
        %v6791 = vld [vmem:[#allocation12 + $0x68] sm:$0xff]
        %v6792 = vld [vmem:[#allocation12 + $0x70] sm:$0xff]
        %v6793 = vld [vmem:[#allocation12 + $0x78] sm:$0xff]
        %v6794 = vld [vmem:[#allocation12 + $0x80] sm:$0xff]
        %v6795 = vld [vmem:[#allocation12 + $0x88] sm:$0xff]
        %v6796 = vld [vmem:[#allocation12 + $0x90] sm:$0xff]
        %v6797 = vld [vmem:[#allocation12 + $0x98] sm:$0xff]
        %v6798 = vld [vmem:[#allocation12 + $0xa0] sm:$0xff]
        %v6799 = vld [vmem:[#allocation12 + $0xa8] sm:$0xff]
        %v6800 = vld [vmem:[#allocation12 + $0xb0] sm:$0xff]
        %v6801 = vld [vmem:[#allocation12 + $0xb8] sm:$0xff]
        %v6802 = vld [vmem:[#allocation12 + $0xc0] sm:$0xff]
        %v6803 = vld [vmem:[#allocation12 + $0xc8] sm:$0xff]
        %v6804 = vld [vmem:[#allocation12 + $0xd0] sm:$0xff]
        %v6805 = vld [vmem:[#allocation12 + $0xd8] sm:$0xff]
        %v6806 = vld [vmem:[#allocation12 + $0xe0] sm:$0xff]
        %v6807 = vld [vmem:[#allocation12 + $0xe8] sm:$0xff]
        %v6808 = vld [vmem:[#allocation12 + $0xf0] sm:$0xff]
        %v6809 = vld [vmem:[#allocation12 + $0xf8] sm:$0xff]
        %v6810 = vld [vmem:[#allocation12 + $0x100] sm:$0xff]
        %v6811 = vld [vmem:[#allocation12 + $0x108] sm:$0xff]
        %v6812 = vld [vmem:[#allocation12 + $0x110] sm:$0xff]
        %v6813 = vld [vmem:[#allocation12 + $0x118] sm:$0xff]
        %v6814 = vld [vmem:[%s11] sm:$0xff]
        %v6815 = vld [vmem:[%s11 + $0x8] sm:$0xff]
        %v6816 = vld [vmem:[%s11 + $0x10] sm:$0xff]
        %v6817 = vld [vmem:[%s11 + $0x18] sm:$0xff]
        %v6818 = vld [vmem:[%s11 + $0x20] sm:$0xff]
        %v6819 = vld [vmem:[%s11 + $0x28] sm:$0xff]
        %v6820 = vld [vmem:[%s11 + $0x30] sm:$0xff]
        %v6821 = vld [vmem:[%s11 + $0x38] sm:$0xff]
        %v6822 = vld [vmem:[%s11 + $0x40] sm:$0xff]
        %v6823 = vld [vmem:[%s11 + $0x48] sm:$0xff]
        %v6824 = vld [vmem:[%s11 + $0x50] sm:$0xff]
        %v6825 = vld [vmem:[%s11 + $0x58] sm:$0xff]
        %v6826 = vld [vmem:[%s11 + $0x60] sm:$0xff]
        %v6827 = vld [vmem:[%s11 + $0x68] sm:$0xff]
        %v6828 = vld [vmem:[%s11 + $0x70] sm:$0xff]
        %v6829 = vld [vmem:[%s11 + $0x78] sm:$0xff]
        %v6830 = vld [vmem:[%s11 + $0x80] sm:$0xff]
        %v6831 = vld [vmem:[%s11 + $0x88] sm:$0xff]
        %v6832 = vld [vmem:[%s11 + $0x90] sm:$0xff]
        %v6833 = vld [vmem:[%s11 + $0x98] sm:$0xff]
        %v6834 = vld [vmem:[%s11 + $0xa0] sm:$0xff]
        %v6835 = vld [vmem:[%s11 + $0xa8] sm:$0xff]
        %v6836 = vld [vmem:[%s11 + $0xb0] sm:$0xff]
        %v6837 = vld [vmem:[%s11 + $0xb8] sm:$0xff]
        %v6838 = vld [vmem:[%s11 + $0xc0] sm:$0xff]
        %v6839 = vld [vmem:[%s11 + $0xc8] sm:$0xff]
        %v6840 = vld [vmem:[%s11 + $0xd0] sm:$0xff]
        %v6841 = vld [vmem:[%s11 + $0xd8] sm:$0xff]
        %v6842 = vld [vmem:[%s11 + $0xe0] sm:$0xff]
        %v6843 = vld [vmem:[%s11 + $0xe8] sm:$0xff]
        %v6844 = vld [vmem:[%s11 + $0xf0] sm:$0xff]
        %v6845 = vld [vmem:[%s11 + $0xf8] sm:$0xff]
        %v6846 = vld [vmem:[%s11 + $0x100] sm:$0xff]
        %v6847 = vld [vmem:[%s11 + $0x108] sm:$0xff]
        %v6848 = vld [vmem:[%s11 + $0x110] sm:$0xff]
        %v6849 = vld [vmem:[%s11 + $0x118] sm:$0xff]
        %v6850 = vld [vmem:[%s11 + $0x120] sm:$0xff]
        %v6851 = vld [vmem:[%s11 + $0x128] sm:$0xff]
        %v6852 = vld [vmem:[%s11 + $0x130] sm:$0xff]
        %v6853 = vld [vmem:[%s11 + $0x138] sm:$0xff]
        %v6854 = vld [vmem:[%s11 + $0x140] sm:$0xff]
        %v6855 = vld [vmem:[%s11 + $0x148] sm:$0xff]
        %v6856 = vld [vmem:[%s11 + $0x150] sm:$0xff]
        %v6857 = vld [vmem:[%s11 + $0x158] sm:$0xff]
        %v6858 = vld [vmem:[%s11 + $0x160] sm:$0xff]
        %v6859 = vld [vmem:[%s11 + $0x168] sm:$0xff]
        %v6860 = vld [vmem:[%s11 + $0x170] sm:$0xff]
        %v6861 = vld [vmem:[%s11 + $0x178] sm:$0xff]
        %v6862 = vld [vmem:[%s11 + $0x180] sm:$0xff]
        %v6863 = vld [vmem:[%s11 + $0x188] sm:$0xff]
        %v6864 = vld [vmem:[%s11 + $0x190] sm:$0xff]
        %v6865 = vld [vmem:[%s11 + $0x198] sm:$0xff]
        %v6866 = vld [vmem:[%s11 + $0x1a0] sm:$0xff]
        %v6867 = vld [vmem:[%s11 + $0x1a8] sm:$0xff]
        %v6868 = vld [vmem:[%s11 + $0x1b0] sm:$0xff]
        %v6869 = vld [vmem:[%s11 + $0x1b8] sm:$0xff]
        %v6870 = vld [vmem:[%s11 + $0x1c0] sm:$0xff]
        %v6871 = vld [vmem:[%s11 + $0x1c8] sm:$0xff]
        %v6872 = vld [vmem:[%s11 + $0x1d0] sm:$0xff]
        %v6873 = vld [vmem:[%s11 + $0x1d8] sm:$0xff]
        %v6874 = vld [vmem:[%s11 + $0x1e0] sm:$0xff]
        %v6875 = vld [vmem:[%s11 + $0x1e8] sm:$0xff]
        %v6876 = vld [vmem:[%s11 + $0x1f0] sm:$0xff]
        %v6877 = vld [vmem:[%s11 + $0x1f8] sm:$0xff]
        %v6878 = vld [vmem:[%s11 + $0x200] sm:$0xff]
        %v6879 = vld [vmem:[%s11 + $0x208] sm:$0xff]
        %v6880 = vld [vmem:[%s11 + $0x210] sm:$0xff]
        %v6881 = vld [vmem:[%s11 + $0x218] sm:$0xff]
        %v6882 = vld [vmem:[%s11 + $0x220] sm:$0xff]
        %v6883 = vld [vmem:[%s11 + $0x228] sm:$0xff]
        %v6884 = vld [vmem:[%s11 + $0x230] sm:$0xff]
        %v6885 = vld [vmem:[%s11 + $0x238] sm:$0xff]
        %v6886 = vld [vmem:[%s11 + $0x240] sm:$0xff]
        %v6887 = vld [vmem:[%s11 + $0x248] sm:$0xff]
        %v6888 = vld [vmem:[%s11 + $0x250] sm:$0xff]
        %v6889 = vld [vmem:[%s11 + $0x258] sm:$0xff]
        %v6890 = vld [vmem:[%s11 + $0x260] sm:$0xff]
        %v6891 = vld [vmem:[%s11 + $0x268] sm:$0xff]
        %v6892 = vld [vmem:[%s11 + $0x270] sm:$0xff]
        %v6893 = vld [vmem:[%s11 + $0x278] sm:$0xff]
        %v6894 = vld [vmem:[%s11 + $0x280] sm:$0xff]
        %v6895 = vld [vmem:[%s11 + $0x288] sm:$0xff]
        %v6896 = vld [vmem:[%s11 + $0x290] sm:$0xff]
        %v6897 = vld [vmem:[%s11 + $0x298] sm:$0xff]
        %v6898 = vld [vmem:[%s11 + $0x2a0] sm:$0xff]
        %v6899 = vld [vmem:[%s11 + $0x2a8] sm:$0xff]
        %v6900 = vld [vmem:[%s11 + $0x2b0] sm:$0xff]
        %v6901 = vld [vmem:[%s11 + $0x2b8] sm:$0xff]
        %v6902 = vld [vmem:[%s11 + $0x2c0] sm:$0xff]
        %v6903 = vld [vmem:[%s11 + $0x2c8] sm:$0xff]
        %v6904 = vld [vmem:[%s11 + $0x2d0] sm:$0xff]
        %v6905 = vld [vmem:[%s11 + $0x2d8] sm:$0xff]
        %v6906 = vld [vmem:[%s11 + $0x2e0] sm:$0xff]
        %v6907 = vld [vmem:[%s11 + $0x2e8] sm:$0xff]
        %v6908 = vld [vmem:[%s11 + $0x2f0] sm:$0xff]
        %v6909 = vld [vmem:[%s11 + $0x2f8] sm:$0xff]
        %v6910 = vld [vmem:[%s11 + $0x300] sm:$0xff]
        %v6911 = vld [vmem:[%s11 + $0x308] sm:$0xff]
        %v6912 = vld [vmem:[%s11 + $0x310] sm:$0xff]
        %v6913 = vld [vmem:[%s11 + $0x318] sm:$0xff]
        %v6914 = vld [vmem:[%s11 + $0x320] sm:$0xff]
        %v6915 = vld [vmem:[%s11 + $0x328] sm:$0xff]
        %v6916 = vld [vmem:[%s11 + $0x330] sm:$0xff]
        %v6917 = vld [vmem:[%s11 + $0x338] sm:$0xff]
        %v6918 = vld [vmem:[%s11 + $0x340] sm:$0xff]
        %v6919 = vld [vmem:[%s11 + $0x348] sm:$0xff]
        %v6920 = vld [vmem:[%s11 + $0x350] sm:$0xff]
        %v6921 = vld [vmem:[%s11 + $0x358] sm:$0xff]
        %v6922 = vld [vmem:[%s11 + $0x360] sm:$0xff]
        %v6923 = vld [vmem:[%s11 + $0x368] sm:$0xff]
        %v6924 = vld [vmem:[%s11 + $0x370] sm:$0xff]
        %v6925 = vld [vmem:[%s11 + $0x378] sm:$0xff]
        %v6926 = vld [vmem:[%s11 + $0x380] sm:$0xff]
        %v6927 = vld [vmem:[%s11 + $0x388] sm:$0xff]
        %v6928 = vld [vmem:[%s11 + $0x390] sm:$0xff]
        %v6929 = vld [vmem:[%s11 + $0x398] sm:$0xff]
        %v6930 = vld [vmem:[%s11 + $0x3a0] sm:$0xff]
        %v6931 = vld [vmem:[%s11 + $0x3a8] sm:$0xff]
        %v6932 = vld [vmem:[%s11 + $0x3b0] sm:$0xff]
        %v6933 = vld [vmem:[%s11 + $0x3b8] sm:$0xff]
        %v6934 = vld [vmem:[%s11 + $0x3c0] sm:$0xff]
        %v6935 = vld [vmem:[%s11 + $0x3c8] sm:$0xff]
        %v6936 = vld [vmem:[%s11 + $0x3d0] sm:$0xff]
        %v6937 = vld [vmem:[%s11 + $0x3d8] sm:$0xff]
        %v6938 = vld [vmem:[%s11 + $0x3e0] sm:$0xff]
        %v6939 = vld [vmem:[%s11 + $0x3e8] sm:$0xff]
        %v6940 = vld [vmem:[%s11 + $0x3f0] sm:$0xff]
        %v6941 = vld [vmem:[%s11 + $0x3f8] sm:$0xff]
        %v6942 = vld [vmem:[%s11 + $0x400] sm:$0xff]
        %v6943 = vld [vmem:[%s11 + $0x408] sm:$0xff]
        %v6944 = vld [vmem:[%s11 + $0x410] sm:$0xff]
        %v6945 = vld [vmem:[%s11 + $0x418] sm:$0xff]
        %v6946 = vld [vmem:[%s11 + $0x420] sm:$0xff]
        %v6947 = vld [vmem:[%s11 + $0x428] sm:$0xff]
        %v6948 = vld [vmem:[%s11 + $0x430] sm:$0xff]
        %v6949 = vld [vmem:[%s11 + $0x438] sm:$0xff]
        %v6950 = vld [vmem:[%s11 + $0x440] sm:$0xff]
        %v6951 = vld [vmem:[%s11 + $0x448] sm:$0xff]
        %v6952 = vld [vmem:[%s11 + $0x450] sm:$0xff]
        %v6953 = vld [vmem:[%s11 + $0x458] sm:$0xff]
        %v6954 = vld [vmem:[%s11 + $0x460] sm:$0xff]
        %v6955 = vld [vmem:[%s11 + $0x468] sm:$0xff]
        %v6956 = vld [vmem:[%s11 + $0x470] sm:$0xff]
        %v6957 = vld [vmem:[%s11 + $0x478] sm:$0xff]
        %v6958 = vld [vmem:[%s12] sm:$0x1]
        %v6960 = vlaneseq
        %v6961 = vshrl.u32 %v6960, 7
        %v6962 = vsub.s32 0, %v6961
        %v6963 = vrot.slane %v6958, %v6962
        %6965 = vmatprep.subr.mxu0 0.0
        %6966 = vmatpush1.msra.mxu0 %v6814
        %6967 = vmatprep.subr.mxu0 0.0
        %6968 = vmatpush1.msra.mxu0 %v6815
        %6969 = vmatprep.subr.mxu0 0.0
        %6970 = vmatpush1.msra.mxu0 %v6816
        %6971 = vmatprep.subr.mxu0 0.0
        %6972 = vmatpush1.msra.mxu0 %v6817
        %6973 = vmatprep.subr.mxu0 0.0
        %6974 = vmatpush1.msra.mxu0 %v6818
        %6975 = vmatprep.subr.mxu0 0.0
        %6976 = vmatpush1.msra.mxu0 %v6819
        %6977 = vmatprep.subr.mxu0 0.0
        %6978 = vmatpush1.msra.mxu0 %v6820
        %6979 = vmatprep.subr.mxu0 0.0
        %6980 = vmatpush1.msra.mxu0 %v6821
        %6981 = vmatprep.subr.mxu0 0.0
        %6982 = vmatpush1.msra.mxu0 %v6822
        %6983 = vmatprep.subr.mxu0 0.0
        %6984 = vmatpush1.msra.mxu0 %v6823
        %6985 = vmatprep.subr.mxu0 0.0
        %6986 = vmatpush1.msra.mxu0 %v6824
        %6987 = vmatprep.subr.mxu0 0.0
        %6988 = vmatpush1.msra.mxu0 %v6825
        %6989 = vmatprep.subr.mxu0 0.0
        %6990 = vmatpush1.msra.mxu0 %v6826
        %6991 = vmatprep.subr.mxu0 0.0
        %6992 = vmatpush1.msra.mxu0 %v6827
        %6993 = vmatprep.subr.mxu0 0.0
        %6994 = vmatpush1.msra.mxu0 %v6828
        %6995 = vmatprep.subr.mxu0 0.0
        %6996 = vmatpush1.msra.mxu0 %v6829
        %6997 = vmatprep.subr.mxu0 0.0
        %6998 = vmatpush1.msra.mxu0 %v6830
        %6999 = vmatprep.subr.mxu0 0.0
        %7000 = vmatpush1.msra.mxu0 %v6831
        %7001 = vmatprep.subr.mxu0 0.0
        %7002 = vmatpush1.msra.mxu0 %v6832
        %7003 = vmatprep.subr.mxu0 0.0
        %7004 = vmatpush1.msra.mxu0 %v6833
        %7005 = vmatprep.subr.mxu0 0.0
        %7006 = vmatpush1.msra.mxu0 %v6834
        %7007 = vmatprep.subr.mxu0 0.0
        %7008 = vmatpush1.msra.mxu0 %v6835
        %7009 = vmatprep.subr.mxu0 0.0
        %7010 = vmatpush1.msra.mxu0 %v6836
        %7011 = vmatprep.subr.mxu0 0.0
        %7012 = vmatpush1.msra.mxu0 %v6837
        %7013 = vmatprep.subr.mxu0 0.0
        %7014 = vmatpush1.msra.mxu0 %v6838
        %7015 = vmatprep.subr.mxu0 0.0
        %7016 = vmatpush1.msra.mxu0 %v6839
        %7017 = vmatprep.subr.mxu0 0.0
        %7018 = vmatpush1.msra.mxu0 %v6840
        %7019 = vmatprep.subr.mxu0 0.0
        %7020 = vmatpush1.msra.mxu0 %v6841
        %7021 = vmatprep.subr.mxu0 0.0
        %7022 = vmatpush1.msra.mxu0 %v6842
        %7023 = vmatprep.subr.mxu0 0.0
        %7024 = vmatpush1.msra.mxu0 %v6843
        %7025 = vmatprep.subr.mxu0 0.0
        %7026 = vmatpush1.msra.mxu0 %v6844
        %7027 = vmatprep.subr.mxu0 0.0
        %7028 = vmatpush1.msra.mxu0 %v6845
        %7029 = vmatprep.mubr.f32.mxu0 %v6779
        %7030 = vmatmul.mubr.f32.gmra.mrb[0].mxu0 %v6778
        %v7031 = vpop.f32.mrb[0].mxu0
        %v7032 = vadd.f32 %v6963, %v7031
        %v7033 = vpop.f32.mrb[0].mxu0
        %7034 = vmatprep.mubr.f32.mxu0 %v6788
        %7035 = vmatmul.mubr.f32.gmra.mrb[0].mxu0 %v6787
        %v7036 = vpop.f32.mrb[0].mxu0
        %v7037 = vadd.f32 %v6963, %v7036
        %v7038 = vpop.f32.mrb[0].mxu0
        %7039 = vmatprep.mubr.f32.mxu0 %v6797
        %7040 = vmatmul.mubr.f32.gmra.mrb[0].mxu0 %v6796
        %v7041 = vpop.f32.mrb[0].mxu0
        %v7042 = vadd.f32 %v6963, %v7041
        %v7043 = vpop.f32.mrb[0].mxu0
        %7044 = vmatprep.mubr.f32.mxu0 %v6806
        %7045 = vmatmul.mubr.f32.gmra.mrb[0].mxu0 %v6805
        %v7046 = vpop.f32.mrb[0].mxu0
        %v7047 = vadd.f32 %v6963, %v7046
        %v7048 = vpop.f32.mrb[0].mxu0
        %7049 = vdwg.mxu0
        %7050 = vmatprep.subr.mxu0 0.0
        %7051 = vmatpush1.msra.mxu0 %v6846
        %7052 = vmatprep.subr.mxu0 0.0
        %7053 = vmatpush1.msra.mxu0 %v6847
        %7054 = vmatprep.subr.mxu0 0.0
        %7055 = vmatpush1.msra.mxu0 %v6848
        %7056 = vmatprep.subr.mxu0 0.0
        %7057 = vmatpush1.msra.mxu0 %v6849
        %7058 = vmatprep.subr.mxu0 0.0
        %7059 = vmatpush1.msra.mxu0 %v6850
        %7060 = vmatprep.subr.mxu0 0.0
        %7061 = vmatpush1.msra.mxu0 %v6851
        %7062 = vmatprep.subr.mxu0 0.0
        %7063 = vmatpush1.msra.mxu0 %v6852
        %7064 = vmatprep.subr.mxu0 0.0
        %7065 = vmatpush1.msra.mxu0 %v6853
        %7066 = vmatprep.subr.mxu0 0.0
        %7067 = vmatpush1.msra.mxu0 %v6854
        %7068 = vmatprep.subr.mxu0 0.0
        %7069 = vmatpush1.msra.mxu0 %v6855
        %7070 = vmatprep.subr.mxu0 0.0
        %7071 = vmatpush1.msra.mxu0 %v6856
        %7072 = vmatprep.subr.mxu0 0.0
        %7073 = vmatpush1.msra.mxu0 %v6857
        %7074 = vmatprep.subr.mxu0 0.0
        %7075 = vmatpush1.msra.mxu0 %v6858
        %7076 = vmatprep.subr.mxu0 0.0
        %7077 = vmatpush1.msra.mxu0 %v6859
        %7078 = vmatprep.subr.mxu0 0.0
        %7079 = vmatpush1.msra.mxu0 %v6860
        %7080 = vmatprep.subr.mxu0 0.0
        %7081 = vmatpush1.msra.mxu0 %v6861
        %7082 = vmatprep.subr.mxu0 0.0
        %7083 = vmatpush1.msra.mxu0 %v6862
        %7084 = vmatprep.subr.mxu0 0.0
        %7085 = vmatpush1.msra.mxu0 %v6863
        %7086 = vmatprep.subr.mxu0 0.0
        %7087 = vmatpush1.msra.mxu0 %v6864
        %7088 = vmatprep.subr.mxu0 0.0
        %7089 = vmatpush1.msra.mxu0 %v6865
        %7090 = vmatprep.subr.mxu0 0.0
        %7091 = vmatpush1.msra.mxu0 %v6866
        %7092 = vmatprep.subr.mxu0 0.0
        %7093 = vmatpush1.msra.mxu0 %v6867
        %7094 = vmatprep.subr.mxu0 0.0
        %7095 = vmatpush1.msra.mxu0 %v6868
        %7096 = vmatprep.subr.mxu0 0.0
        %7097 = vmatpush1.msra.mxu0 %v6869
        %7098 = vmatprep.subr.mxu0 0.0
        %7099 = vmatpush1.msra.mxu0 %v6870
        %7100 = vmatprep.subr.mxu0 0.0
        %7101 = vmatpush1.msra.mxu0 %v6871
        %7102 = vmatprep.subr.mxu0 0.0
        %7103 = vmatpush1.msra.mxu0 %v6872
        %7104 = vmatprep.subr.mxu0 0.0
        %7105 = vmatpush1.msra.mxu0 %v6873
        %7106 = vmatprep.subr.mxu0 0.0
        %7107 = vmatpush1.msra.mxu0 %v6874
        %7108 = vmatprep.subr.mxu0 0.0
        %7109 = vmatpush1.msra.mxu0 %v6875
        %7110 = vmatprep.subr.mxu0 0.0
        %7111 = vmatpush1.msra.mxu0 %v6876
        %7112 = vmatprep.subr.mxu0 0.0
        %7113 = vmatpush1.msra.mxu0 %v6877
        %7114 = vmatprep.mubr.f32.mxu0 %v6781
        %7115 = vmatmul.mubr.f32.gmra.mrb[0].mxu0 %v6780
        %v7116 = vpop.f32.mrb[0].mxu0
        %v7117 = vadd.f32 %v7032, %v7116
        %v7118 = vpop.f32.mrb[0].mxu0
        %7119 = vmatprep.mubr.f32.mxu0 %v6790
        %7120 = vmatmul.mubr.f32.gmra.mrb[0].mxu0 %v6789
        %v7121 = vpop.f32.mrb[0].mxu0
        %v7122 = vadd.f32 %v7037, %v7121
        %v7123 = vpop.f32.mrb[0].mxu0
        %7124 = vmatprep.mubr.f32.mxu0 %v6799
        %7125 = vmatmul.mubr.f32.gmra.mrb[0].mxu0 %v6798
        %v7126 = vpop.f32.mrb[0].mxu0
        %v7127 = vadd.f32 %v7042, %v7126
        %v7128 = vpop.f32.mrb[0].mxu0
        %7129 = vmatprep.mubr.f32.mxu0 %v6808
        %7130 = vmatmul.mubr.f32.gmra.mrb[0].mxu0 %v6807
        %v7131 = vpop.f32.mrb[0].mxu0
        %v7132 = vadd.f32 %v7047, %v7131
        %v7133 = vpop.f32.mrb[0].mxu0
        %7134 = vdwg.mxu0
        %7135 = vmatprep.subr.mxu0 0.0
        %7136 = vmatpush1.msra.mxu0 %v6878
        %7137 = vmatprep.subr.mxu0 0.0
        %7138 = vmatpush1.msra.mxu0 %v6879
        %7139 = vmatprep.subr.mxu0 0.0
        %7140 = vmatpush1.msra.mxu0 %v6880
        %7141 = vmatprep.subr.mxu0 0.0
        %7142 = vmatpush1.msra.mxu0 %v6881
        %7143 = vmatprep.subr.mxu0 0.0
        %7144 = vmatpush1.msra.mxu0 %v6882
        %7145 = vmatprep.subr.mxu0 0.0
        %7146 = vmatpush1.msra.mxu0 %v6883
        %7147 = vmatprep.subr.mxu0 0.0
        %7148 = vmatpush1.msra.mxu0 %v6884
        %7149 = vmatprep.subr.mxu0 0.0
        %7150 = vmatpush1.msra.mxu0 %v6885
        %7151 = vmatprep.subr.mxu0 0.0
        %7152 = vmatpush1.msra.mxu0 %v6886
        %7153 = vmatprep.subr.mxu0 0.0
        %7154 = vmatpush1.msra.mxu0 %v6887
        %7155 = vmatprep.subr.mxu0 0.0
        %7156 = vmatpush1.msra.mxu0 %v6888
        %7157 = vmatprep.subr.mxu0 0.0
        %7158 = vmatpush1.msra.mxu0 %v6889
        %7159 = vmatprep.subr.mxu0 0.0
        %7160 = vmatpush1.msra.mxu0 %v6890
        %7161 = vmatprep.subr.mxu0 0.0
        %7162 = vmatpush1.msra.mxu0 %v6891
        %7163 = vmatprep.subr.mxu0 0.0
        %7164 = vmatpush1.msra.mxu0 %v6892
        %7165 = vmatprep.subr.mxu0 0.0
        %7166 = vmatpush1.msra.mxu0 %v6893
        %7167 = vmatprep.subr.mxu0 0.0
        %7168 = vmatpush1.msra.mxu0 %v6894
        %7169 = vmatprep.subr.mxu0 0.0
        %7170 = vmatpush1.msra.mxu0 %v6895
        %7171 = vmatprep.subr.mxu0 0.0
        %7172 = vmatpush1.msra.mxu0 %v6896
        %7173 = vmatprep.subr.mxu0 0.0
        %7174 = vmatpush1.msra.mxu0 %v6897
        %7175 = vmatprep.subr.mxu0 0.0
        %7176 = vmatpush1.msra.mxu0 %v6898
        %7177 = vmatprep.subr.mxu0 0.0
        %7178 = vmatpush1.msra.mxu0 %v6899
        %7179 = vmatprep.subr.mxu0 0.0
        %7180 = vmatpush1.msra.mxu0 %v6900
        %7181 = vmatprep.subr.mxu0 0.0
        %7182 = vmatpush1.msra.mxu0 %v6901
        %7183 = vmatprep.subr.mxu0 0.0
        %7184 = vmatpush1.msra.mxu0 %v6902
        %7185 = vmatprep.subr.mxu0 0.0
        %7186 = vmatpush1.msra.mxu0 %v6903
        %7187 = vmatprep.subr.mxu0 0.0
        %7188 = vmatpush1.msra.mxu0 %v6904
        %7189 = vmatprep.subr.mxu0 0.0
        %7190 = vmatpush1.msra.mxu0 %v6905
        %7191 = vmatprep.subr.mxu0 0.0
        %7192 = vmatpush1.msra.mxu0 %v6906
        %7193 = vmatprep.subr.mxu0 0.0
        %7194 = vmatpush1.msra.mxu0 %v6907
        %7195 = vmatprep.subr.mxu0 0.0
        %7196 = vmatpush1.msra.mxu0 %v6908
        %7197 = vmatprep.subr.mxu0 0.0
        %7198 = vmatpush1.msra.mxu0 %v6909
        %7199 = vmatprep.mubr.f32.mxu0 %v6783
        %7200 = vmatmul.mubr.f32.gmra.mrb[0].mxu0 %v6782
        %v7201 = vpop.f32.mrb[0].mxu0
        %v7202 = vadd.f32 %v7117, %v7201
        %v7203 = vpop.f32.mrb[0].mxu0
        %7204 = vmatprep.mubr.f32.mxu0 %v6792
        %7205 = vmatmul.mubr.f32.gmra.mrb[0].mxu0 %v6791
        %v7206 = vpop.f32.mrb[0].mxu0
        %v7207 = vadd.f32 %v7122, %v7206
        %v7208 = vpop.f32.mrb[0].mxu0
        %7209 = vmatprep.mubr.f32.mxu0 %v6801
        %7210 = vmatmul.mubr.f32.gmra.mrb[0].mxu0 %v6800
        %v7211 = vpop.f32.mrb[0].mxu0
        %v7212 = vadd.f32 %v7127, %v7211
        %v7213 = vpop.f32.mrb[0].mxu0
        %7214 = vmatprep.mubr.f32.mxu0 %v6810
        %7215 = vmatmul.mubr.f32.gmra.mrb[0].mxu0 %v6809
        %v7216 = vpop.f32.mrb[0].mxu0
        %v7217 = vadd.f32 %v7132, %v7216
        %v7218 = vpop.f32.mrb[0].mxu0
        %7219 = vdwg.mxu0
        %7220 = vmatprep.subr.mxu0 0.0
        %7221 = vmatpush1.msra.mxu0 %v6910
        %7222 = vmatprep.subr.mxu0 0.0
        %7223 = vmatpush1.msra.mxu0 %v6911
        %7224 = vmatprep.subr.mxu0 0.0
        %7225 = vmatpush1.msra.mxu0 %v6912
        %7226 = vmatprep.subr.mxu0 0.0
        %7227 = vmatpush1.msra.mxu0 %v6913
        %7228 = vmatprep.subr.mxu0 0.0
        %7229 = vmatpush1.msra.mxu0 %v6914
        %7230 = vmatprep.subr.mxu0 0.0
        %7231 = vmatpush1.msra.mxu0 %v6915
        %7232 = vmatprep.subr.mxu0 0.0
        %7233 = vmatpush1.msra.mxu0 %v6916
        %7234 = vmatprep.subr.mxu0 0.0
        %7235 = vmatpush1.msra.mxu0 %v6917
        %7236 = vmatprep.subr.mxu0 0.0
        %7237 = vmatpush1.msra.mxu0 %v6918
        %7238 = vmatprep.subr.mxu0 0.0
        %7239 = vmatpush1.msra.mxu0 %v6919
        %7240 = vmatprep.subr.mxu0 0.0
        %7241 = vmatpush1.msra.mxu0 %v6920
        %7242 = vmatprep.subr.mxu0 0.0
        %7243 = vmatpush1.msra.mxu0 %v6921
        %7244 = vmatprep.subr.mxu0 0.0
        %7245 = vmatpush1.msra.mxu0 %v6922
        %7246 = vmatprep.subr.mxu0 0.0
        %7247 = vmatpush1.msra.mxu0 %v6923
        %7248 = vmatprep.subr.mxu0 0.0
        %7249 = vmatpush1.msra.mxu0 %v6924
        %7250 = vmatprep.subr.mxu0 0.0
        %7251 = vmatpush1.msra.mxu0 %v6925
        %7252 = vmatprep.subr.mxu0 0.0
        %7253 = vmatpush1.msra.mxu0 %v6926
        %7254 = vmatprep.subr.mxu0 0.0
        %7255 = vmatpush1.msra.mxu0 %v6927
        %7256 = vmatprep.subr.mxu0 0.0
        %7257 = vmatpush1.msra.mxu0 %v6928
        %7258 = vmatprep.subr.mxu0 0.0
        %7259 = vmatpush1.msra.mxu0 %v6929
        %7260 = vmatprep.subr.mxu0 0.0
        %7261 = vmatpush1.msra.mxu0 %v6930
        %7262 = vmatprep.subr.mxu0 0.0
        %7263 = vmatpush1.msra.mxu0 %v6931
        %7264 = vmatprep.subr.mxu0 0.0
        %7265 = vmatpush1.msra.mxu0 %v6932
        %7266 = vmatprep.subr.mxu0 0.0
        %7267 = vmatpush1.msra.mxu0 %v6933
        %7268 = vmatprep.subr.mxu0 0.0
        %7269 = vmatpush1.msra.mxu0 %v6934
        %7270 = vmatprep.subr.mxu0 0.0
        %7271 = vmatpush1.msra.mxu0 %v6935
        %7272 = vmatprep.subr.mxu0 0.0
        %7273 = vmatpush1.msra.mxu0 %v6936
        %7274 = vmatprep.subr.mxu0 0.0
        %7275 = vmatpush1.msra.mxu0 %v6937
        %7276 = vmatprep.subr.mxu0 0.0
        %7277 = vmatpush1.msra.mxu0 %v6938
        %7278 = vmatprep.subr.mxu0 0.0
        %7279 = vmatpush1.msra.mxu0 %v6939
        %7280 = vmatprep.subr.mxu0 0.0
        %7281 = vmatpush1.msra.mxu0 %v6940
        %7282 = vmatprep.subr.mxu0 0.0
        %7283 = vmatpush1.msra.mxu0 %v6941
        %7284 = vmatprep.mubr.f32.mxu0 %v6785
        %7285 = vmatmul.mubr.f32.gmra.mrb[0].mxu0 %v6784
        %v7286 = vpop.f32.mrb[0].mxu0
        %v7287 = vadd.f32 %v7202, %v7286
        %v7288 = vpop.f32.mrb[0].mxu0
        %7289 = vmatprep.mubr.f32.mxu0 %v6794
        %7290 = vmatmul.mubr.f32.gmra.mrb[0].mxu0 %v6793
        %v7291 = vpop.f32.mrb[0].mxu0
        %v7292 = vadd.f32 %v7207, %v7291
        %v7293 = vpop.f32.mrb[0].mxu0
        %7294 = vmatprep.mubr.f32.mxu0 %v6803
        %7295 = vmatmul.mubr.f32.gmra.mrb[0].mxu0 %v6802
        %v7296 = vpop.f32.mrb[0].mxu0
        %v7297 = vadd.f32 %v7212, %v7296
        %v7298 = vpop.f32.mrb[0].mxu0
        %7299 = vmatprep.mubr.f32.mxu0 %v6812
        %7300 = vmatmul.mubr.f32.gmra.mrb[0].mxu0 %v6811
        %v7301 = vpop.f32.mrb[0].mxu0
        %v7302 = vadd.f32 %v7217, %v7301
        %v7303 = vpop.f32.mrb[0].mxu0
        %7304 = vdwg.mxu0
        %7305 = vmatprep.subr.mxu0 0.0
        %7306 = vmatpush1.msra.mxu0 %v6942
        %7307 = vmatprep.subr.mxu0 0.0
        %7308 = vmatpush1.msra.mxu0 %v6943
        %7309 = vmatprep.subr.mxu0 0.0
        %7310 = vmatpush1.msra.mxu0 %v6944
        %7311 = vmatprep.subr.mxu0 0.0
        %7312 = vmatpush1.msra.mxu0 %v6945
        %7313 = vmatprep.subr.mxu0 0.0
        %7314 = vmatpush1.msra.mxu0 %v6946
        %7315 = vmatprep.subr.mxu0 0.0
        %7316 = vmatpush1.msra.mxu0 %v6947
        %7317 = vmatprep.subr.mxu0 0.0
        %7318 = vmatpush1.msra.mxu0 %v6948
        %7319 = vmatprep.subr.mxu0 0.0
        %7320 = vmatpush1.msra.mxu0 %v6949
        %7321 = vmatprep.subr.mxu0 0.0
        %7322 = vmatpush1.msra.mxu0 %v6950
        %7323 = vmatprep.subr.mxu0 0.0
        %7324 = vmatpush1.msra.mxu0 %v6951
        %7325 = vmatprep.subr.mxu0 0.0
        %7326 = vmatpush1.msra.mxu0 %v6952
        %7327 = vmatprep.subr.mxu0 0.0
        %7328 = vmatpush1.msra.mxu0 %v6953
        %7329 = vmatprep.subr.mxu0 0.0
        %7330 = vmatpush1.msra.mxu0 %v6954
        %7331 = vmatprep.subr.mxu0 0.0
        %7332 = vmatpush1.msra.mxu0 %v6955
        %7333 = vmatprep.subr.mxu0 0.0
        %7334 = vmatpush1.msra.mxu0 %v6956
        %7335 = vmatprep.subr.mxu0 0.0
        %7336 = vmatpush1.msra.mxu0 %v6957
        %7337 = vmatprep.subr.mxu0 0.0
        %7338 = vmatpush1.msra.mxu0 0.0
        %7339 = vmatprep.subr.mxu0 0.0
        %7340 = vmatpush1.msra.mxu0 0.0
        %7341 = vmatprep.subr.mxu0 0.0
        %7342 = vmatpush1.msra.mxu0 0.0
        %7343 = vmatprep.subr.mxu0 0.0
        %7344 = vmatpush1.msra.mxu0 0.0
        %7345 = vmatprep.subr.mxu0 0.0
        %7346 = vmatpush1.msra.mxu0 0.0
        %7347 = vmatprep.subr.mxu0 0.0
        %7348 = vmatpush1.msra.mxu0 0.0
        %7349 = vmatprep.subr.mxu0 0.0
        %7350 = vmatpush1.msra.mxu0 0.0
        %7351 = vmatprep.subr.mxu0 0.0
        %7352 = vmatpush1.msra.mxu0 0.0
        %7353 = vmatprep.subr.mxu0 0.0
        %7354 = vmatpush1.msra.mxu0 0.0
        %7355 = vmatprep.subr.mxu0 0.0
        %7356 = vmatpush1.msra.mxu0 0.0
        %7357 = vmatprep.subr.mxu0 0.0
        %7358 = vmatpush1.msra.mxu0 0.0
        %7359 = vmatprep.subr.mxu0 0.0
        %7360 = vmatpush1.msra.mxu0 0.0
        %7361 = vmatprep.subr.mxu0 0.0
        %7362 = vmatpush1.msra.mxu0 0.0
        %7363 = vmatprep.subr.mxu0 0.0
        %7364 = vmatpush1.msra.mxu0 0.0
        %7365 = vmatprep.subr.mxu0 0.0
        %7366 = vmatpush1.msra.mxu0 0.0
        %7367 = vmatprep.subr.mxu0 0.0
        %7368 = vmatpush1.msra.mxu0 0.0
        %7369 = vmatprep.mubr.f32.mxu0 0.0
        %7370 = vmatmul.mubr.f32.gmra.mrb[0].mxu0 %v6786
        %v7371 = vpop.f32.mrb[0].mxu0
        %v7372 = vadd.f32 %v7287, %v7371
        %v7373 = vpop.f32.mrb[0].mxu0
        %7374 = vmatprep.mubr.f32.mxu0 0.0
        %7375 = vmatmul.mubr.f32.gmra.mrb[0].mxu0 %v6795
        %v7376 = vpop.f32.mrb[0].mxu0
        %v7377 = vadd.f32 %v7292, %v7376
        %v7378 = vpop.f32.mrb[0].mxu0
        %7379 = vmatprep.mubr.f32.mxu0 0.0
        %7380 = vmatmul.mubr.f32.gmra.mrb[0].mxu0 %v6804
        %v7381 = vpop.f32.mrb[0].mxu0
        %v7382 = vadd.f32 %v7297, %v7381
        %v7383 = vpop.f32.mrb[0].mxu0
        %7384 = vmatprep.mubr.f32.mxu0 0.0
        %7385 = vmatmul.mubr.f32.gmra.mrb[0].mxu0 %v6813
        %v7386 = vpop.f32.mrb[0].mxu0
        %v7387 = vadd.f32 %v7302, %v7386
        %v7388 = vpop.f32.mrb[0].mxu0
        %7389 = vdwg.mxu0
        %v7390 = vmax.f32 %v7372, 0.0
        %v7391 = vmax.f32 %v7377, 0.0
        %v7392 = vmax.f32 %v7382, 0.0
        %v7393 = vmax.f32 %v7387, 0.0
        %7394 = vst [vmem:[%s505] sm:$0xf] %v7390
        %7395 = vst [vmem:[%s505 + $0x4] sm:$0xf] %v7391
        %7396 = vst [vmem:[%s505 + $0x8] sm:$0xf] %v7392
        %7397 = vst [vmem:[%s505 + $0xc] sm:$0xf] %v7393
        %p7398 = scmp.lt.s32.totalorder %s33, 1
        %s7399 = scalar_select %p7398, %s33, 1
        %s7400 = smul.addr %s7399, 32
        %s7401 = smul.addr %s7400, 8
        %s7402 = scalar_lea.vmem %s13, %s7401
        %s7403 = sand.u32 %s345, 1
        %s7404 = scalar_lea.sflag [#allocation14], %s7403
        %s7405 = sand.u32 %s345, 1
        %s7406 = smul.addr %s7405, 64
        %s7407 = scalar_lea.vmem [#allocation13], %s7406
        %s7408 = sand.u32 %s371, 1
        %s7409 = scalar_lea.sflag [#allocation16], %s7408
        %s7410 = sand.u32 %s371, 1
        %s7411 = smul.addr %s7410, 16
        %s7412 = scalar_lea.vmem [#allocation15], %s7411
        // Predicated region
        $region73: #{vgg_channel2_forward.1} parent=71 // pred_check
          %p7413 = pneg %p329
        $region74: #{vgg_channel2_forward.1} parent=71 // pred_check_branch
          %7415 = sbr.rel (%p7413) target = $region76
        $region75: #{vgg_channel2_forward.1} parent=71 // pred_region
          _
        $region76: #{vgg_channel2_forward.1} parent=71 // pred_fallthru
          _
        // Predicated region
        $region77: #{vgg_channel2_forward.1} parent=71 // pred_check
          %p7416 = pneg %p355
        $region78: #{vgg_channel2_forward.1} parent=71 // pred_check_branch
          %7418 = sbr.rel (%p7416) target = $region80
        $region79: #{vgg_channel2_forward.1} parent=71 // pred_region
          %s7420 = ssub.s32 1024, 1024
          %7421 = vsyncadd %s7404, %s7420
          %s7422 = smul.addr %s33, 8
          %s7423 = smul.addr %s7422, 128
          %s7424 = scalar_lea.hbm %s14, %s7423
          %s7425 = sshll.u32 %s7407, 4
          %s7426 = int_to_ptr.vmem [resolvable:$true] %s7425
          %7431 = dma.vmem_to_hbm [thread:$0]  %s7426, 1024, %s7424, %s7404, 128, 128, 8
        $region80: #{vgg_channel2_forward.1} parent=71 // pred_fallthru
          _
        // Predicated region
        $region81: #{vgg_channel2_forward.1} parent=71 // pred_check
          %p7432 = pneg %p381
        $region82: #{vgg_channel2_forward.1} parent=71 // pred_check_branch
          %7434 = sbr.rel (%p7432) target = $region84
        $region83: #{vgg_channel2_forward.1} parent=71 // pred_region
          %s7436 = ssub.s32 256, 256
          %7437 = vsyncadd %s7409, %s7436
          %s7438 = smul.addr %s33, 4
          %s7439 = smul.addr %s7438, 64
          %s7440 = scalar_lea.hbm %s15, %s7439
          %s7441 = sshll.u32 %s7412, 4
          %s7442 = int_to_ptr.vmem [resolvable:$true] %s7441
          %7447 = dma.vmem_to_hbm [thread:$0]  %s7442, 256, %s7440, %s7409, 64, 64, 4
        $region84: #{vgg_channel2_forward.1} parent=71 // pred_fallthru
          _
      $region72: #{vgg_channel2_forward.1} parent=5 // pred_fallthru
        _
      %p7448 = scmp.le.s32.totalorder 2, %s28
      // Predicated region
      $region85: #{vgg_channel2_forward.1} parent=5 // pred_check
        %p7449 = pneg %p7448
      $region86: #{vgg_channel2_forward.1} parent=5 // pred_check_branch
        %7451 = sbr.rel (%p7449) target = $region88
      $region87: #{vgg_channel2_forward.1} parent=5 // pred_region
        %s7452 = ssub.s32 %s28, 2
        // Predicated region
        $region89: #{vgg_channel2_forward.1} parent=87 // pred_check
          %p7453 = pneg %p335
        $region90: #{vgg_channel2_forward.1} parent=87 // pred_check_branch
          %7455 = sbr.rel (%p7453) target = $region92
        $region91: #{vgg_channel2_forward.1} parent=87 // pred_region
          %p7456 = scmp.lt.s32.totalorder %s34, 1
          %s7457 = scalar_select %p7456, %s34, 1
          %s7458 = smul.addr %s7457, 32
          %s7459 = smul.addr %s7458, 8
          %s7460 = scalar_lea.vmem %s13, %s7459
        $region92: #{vgg_channel2_forward.1} parent=87 // pred_fallthru
          _
        // Predicated region
        $region93: #{vgg_channel2_forward.1} parent=87 // pred_check
          %p7461 = pneg %p361
        $region94: #{vgg_channel2_forward.1} parent=87 // pred_check_branch
          %7463 = sbr.rel (%p7461) target = $region96
        $region95: #{vgg_channel2_forward.1} parent=87 // pred_region
          %s7464 = sand.u32 %s346, 1
          %s7465 = scalar_lea.sflag [#allocation14], %s7464
          %s7466 = sand.u32 %s346, 1
          %s7467 = smul.addr %s7466, 64
          %s7468 = scalar_lea.vmem [#allocation13], %s7467
          %7469 = dma.done %s7465, 1024
        $region96: #{vgg_channel2_forward.1} parent=87 // pred_fallthru
          _
        // Predicated region
        $region97: #{vgg_channel2_forward.1} parent=87 // pred_check
          %p7470 = pneg %p387
        $region98: #{vgg_channel2_forward.1} parent=87 // pred_check_branch
          %7472 = sbr.rel (%p7470) target = $region100
        $region99: #{vgg_channel2_forward.1} parent=87 // pred_region
          %s7473 = sand.u32 %s372, 1
          %s7474 = scalar_lea.sflag [#allocation16], %s7473
          %s7475 = sand.u32 %s372, 1
          %s7476 = smul.addr %s7475, 16
          %s7477 = scalar_lea.vmem [#allocation15], %s7476
          %7478 = dma.done %s7474, 256
        $region100: #{vgg_channel2_forward.1} parent=87 // pred_fallthru
          _
      $region88: #{vgg_channel2_forward.1} parent=5 // pred_fallthru
        _
    $region6: #{vgg_channel2_forward.1} parent=1 // loop_footer
      %s32 = sadd.s32 1, %s28
    $region7: #{vgg_channel2_forward.1} parent=1 // loop_footer_branch
      %27 = sbr.rel target = $region3
    $region8: #{vgg_channel2_forward.1} parent=1 // loop_exit
      _
    %7479 = vsyncpa [#allocation14], 1
    %s7480 = scalar_lea.sflag [#allocation14], 1
    %7481 = vsyncpa %s7480, 1
    %7482 = vsyncpa [#allocation16], 1
    %s7483 = scalar_lea.sflag [#allocation16], 1
    %7484 = vsyncpa %s7483, 1

</llo_original>
